<compile_context>
chip_gen: v5e
topology: v5e:2x2
jax: 0.10.0
libtpu: 0.0.40
codegen_flags: <defaults>
</compile_context>

<pallas_src>
from functools import partial

import jax
import jax.numpy as jnp
from jax.experimental import pallas as pl
from jax.experimental.pallas import tpu as pltpu


def _round_up(x, m):
    return ((x + m - 1) // m) * m


def _news_encoder_kernel(x_ref, wqkv_ref, watt_ref, batt_ref, qatt_ref,
                         out_ref, *, head_num, head_dim):
    Bb, T, D = x_ref.shape
    O = head_num * head_dim
    N = Bb * T
    mxu_dtype = wqkv_ref.dtype

    # (Bb, T, D) -> (N, D): merge of leading dims only (T is a sublane
    # multiple for the configs used here), essentially layout-free.
    x = x_ref[...].reshape(N, D)

    # ---- fused QKV projection: one (N, D) @ (D, 3O) bf16 MXU matmul ----
    qkv = jnp.dot(x, wqkv_ref[...], preferred_element_type=jnp.float32)   # (N, 3O) f32

    # ---- multi-head scaled dot-product attention (Bb-batched per head) ----
    scale = 1.0 / (float(head_dim) ** 0.5)
    o_heads = []
    for h in range(head_num):                       # static, small head loop
        lo = h * head_dim
        hi = lo + head_dim
        q3 = qkv[:, lo:hi].reshape(Bb, T, head_dim).astype(mxu_dtype)
        k3 = qkv[:, O + lo:O + hi].reshape(Bb, T, head_dim).astype(mxu_dtype)
        v3 = qkv[:, 2 * O + lo:2 * O + hi].reshape(Bb, T, head_dim).astype(mxu_dtype)
        s = jnp.einsum('bqd,bkd->bqk', q3, k3,
                       preferred_element_type=jnp.float32) * scale        # (Bb, T, T)
        s = s - jnp.max(s, axis=-1, keepdims=True)
        p = jnp.exp(s)
        p = p / jnp.sum(p, axis=-1, keepdims=True)   # exact softmax (matches reference)
        o3 = jnp.einsum('bqk,bkd->bqd', p.astype(mxu_dtype), v3,
                        preferred_element_type=jnp.float32)               # (Bb, T, Dh)
        o_heads.append(o3.reshape(N, head_dim))

    # Concatenate heads ONCE -> y (N, O); all following work is full width.
    y = jnp.concatenate(o_heads, axis=-1)                                  # (N, O) f32

    # ---- AttLayer2: additive attention pooling over T ----
    a = jnp.tanh(jnp.dot(y.astype(mxu_dtype), watt_ref[...],
                         preferred_element_type=jnp.float32)
                 + batt_ref[...])                                          # (N, A)
    # a . q via VPU multiply + XLU lane reduction (no 1-lane MXU output).
    e = jnp.exp(jnp.sum(a * qatt_ref[...], axis=-1, keepdims=True))        # (N, 1)
    # NOTE: no max-subtraction, matching the reference exactly.

    e3 = e.reshape(Bb, T, 1)
    y3 = y.reshape(Bb, T, O)
    denom = jnp.sum(e3, axis=1) + 1e-8                                     # (Bb, 1)
    pooled = jnp.sum(e3 * y3, axis=1)                                      # (Bb, O)
    inv_denom = pl.reciprocal(denom, approx=True)                          # EUP slot
    # Single full-width store (one (Bb, O) block per grid step).
    out_ref[...] = (pooled * inv_denom).astype(out_ref.dtype)


def news_encoder_forward(tokens, params, *, head_num, head_dim, block_b=64,
                         mxu_dtype=jnp.bfloat16):
    """tokens: (B, T) int.  Returns (B, head_num*head_dim) float32."""
    tokens = tokens.astype(jnp.int32)
    emb = params["embedding"].astype(jnp.float32)                          # (V, D)
    B, T = tokens.shape
    V, D = emb.shape
    O = head_num * head_dim
    A = params["att_W"].shape[1]

    # Embedding lookup via XLA's native gather (scales to any vocab size; the
    # table never needs to live in VMEM).  Cast to bf16 so the streamed
    # activations use half the HBM bandwidth and feed the bf16 MXU path.
    x = jnp.take(emb, tokens, axis=0).astype(mxu_dtype)                    # (B, T, D)

    # Fused projection weights -> one MXU matmul per block inside the kernel.
    wqkv = jnp.concatenate([params["WQ"], params["WK"], params["WV"]],
                           axis=1).astype(mxu_dtype)                       # (D, 3O)
    watt = params["att_W"].astype(mxu_dtype)                               # (O, A)
    batt = params["att_b"].astype(jnp.float32)                             # (1, A)
    qatt = params["att_q"].astype(jnp.float32)                             # (1, A)
    # dropout1 / dropout2 are identity at inference (eval mode).
    # TODO(synk): training-mode dropout (random masking) not implemented.

    # ---- batch blocking: Bb rows * T tokens per grid step ----
    Bb = int(min(block_b, _round_up(B, 8)))
    Bb = _round_up(Bb, 8)
    num_blocks = int(pl.cdiv(B, Bb))
    # NOTE(v7x): with 2 TensorCores, padding num_blocks to an even count keeps
    # both cores busy; skipped here to avoid wasted serial work on v5e/v6e.
    B_pad = num_blocks * Bb
    if B_pad != B:
        x = jnp.pad(x, ((0, B_pad - B), (0, 0), (0, 0)))

    kernel = partial(_news_encoder_kernel, head_num=head_num, head_dim=head_dim)

    # Cost estimate (one-hot gather term removed).
    flops = B_pad * (2 * T * D * 3 * O                    # fused QKV projection
                     + head_num * 4 * T * T * head_dim    # QK^T and PV
                     + 2 * T * O * A                      # y @ W_att
                     + 2 * T * A                          # a . q
                     + 2 * T * O)                         # pooling
    transcendentals = B_pad * (head_num * T * T + T * A + T)
    itemsize = jnp.dtype(mxu_dtype).itemsize
    bytes_accessed = (B_pad * T * D * itemsize            # streamed activations
                      + (D * 3 * O + O * A) * itemsize    # resident weights
                      + 2 * A * 4                         # bias / query vectors
                      + B_pad * O * 4)                    # output

    # Explicit VMEM budget: double-buffered x / out blocks + resident weights,
    # with generous headroom for intermediates and spills.
    block_bytes = (2 * Bb * T * D * itemsize
                   + 2 * Bb * O * 4
                   + 2 * ((D * 3 * O + O * A) * itemsize + 2 * A * 4))
    vmem_limit = int(min(48 * 2 ** 20, max(16 * 2 ** 20, 8 * block_bytes)))

    out = pl.pallas_call(
        kernel,
        out_shape=jax.ShapeDtypeStruct((B_pad, O), jnp.float32),
        grid_spec=pltpu.PrefetchScalarGridSpec(
            num_scalar_prefetch=0,
            grid=(num_blocks,),
            in_specs=[
                pl.BlockSpec((Bb, T, D), lambda b: (b, 0, 0)),   # activations block
                pl.BlockSpec((D, 3 * O), lambda b: (0, 0)),      # fused WQ|WK|WV (resident)
                pl.BlockSpec((O, A), lambda b: (0, 0)),          # AttLayer2 W (resident)
                pl.BlockSpec((1, A), lambda b: (0, 0)),          # AttLayer2 b
                pl.BlockSpec((1, A), lambda b: (0, 0)),          # AttLayer2 q
            ],
            out_specs=pl.BlockSpec((Bb, O), lambda b: (b, 0)),
        ),
        compiler_params=pltpu.CompilerParams(
            dimension_semantics=("parallel",),
            vmem_limit_bytes=vmem_limit),
        cost_estimate=pl.CostEstimate(flops=flops,
                                      transcendentals=transcendentals,
                                      bytes_accessed=bytes_accessed),
    )(x, wqkv, watt, batt, qatt)
    return out[:B]


def _reference_forward(tokens, params, *, head_num, head_dim):
    """Pure-JAX reference mirroring the PyTorch forward (eval mode, f32)."""
    x = jnp.take(params["embedding"], tokens, axis=0).astype(jnp.float32)
    q = jnp.einsum("btd,do->bto", x, params["WQ"])
    k = jnp.einsum("btd,do->bto", x, params["WK"])
    v = jnp.einsum("btd,do->bto", x, params["WV"])
    B, T, _ = x.shape
    qh = q.reshape(B, T, head_num, head_dim).transpose(0, 2, 1, 3)
    kh = k.reshape(B, T, head_num, head_dim).transpose(0, 2, 1, 3)
    vh = v.reshape(B, T, head_num, head_dim).transpose(0, 2, 1, 3)
    s = jnp.einsum("bhqd,bhkd->bhqk", qh, kh) / (float(head_dim) ** 0.5)
    p = jax.nn.softmax(s, axis=-1)
    o = jnp.einsum("bhqk,bhkd->bhqd", p, vh)
    y = o.transpose(0, 2, 1, 3).reshape(B, T, head_num * head_dim)
    a = jnp.tanh(jnp.einsum("bto,oa->bta", y, params["att_W"]) + params["att_b"][0])
    e = jnp.exp(jnp.einsum("bta,a->bt", a, params["att_q"][0]))[..., None]
    w = e / (jnp.sum(e, axis=1, keepdims=True) + 1e-8)
    return jnp.sum(y * w, axis=1)


def _xavier_uniform(key, shape):
    fan_in, fan_out = shape[-2], shape[-1]
    limit = (6.0 / (fan_in + fan_out)) ** 0.5
    return jax.random.uniform(key, shape, jnp.float32, -limit, limit)


def init_params(key, *, vocab_size, embedding_dim, head_num, head_dim,
                attention_hidden_dim):
    O = head_num * head_dim
    keys = jax.random.split(key, 6)
    return {
        "embedding": jax.random.normal(keys[0], (vocab_size, embedding_dim),
                                       jnp.float32) * 0.1,
        "WQ": _xavier_uniform(keys[1], (embedding_dim, O)),
        "WK": _xavier_uniform(keys[2], (embedding_dim, O)),
        "WV": _xavier_uniform(keys[3], (embedding_dim, O)),
        "att_W": _xavier_uniform(keys[4], (O, attention_hidden_dim)),
        "att_b": jnp.zeros((1, attention_hidden_dim), jnp.float32),
        "att_q": _xavier_uniform(keys[5], (1, attention_hidden_dim)),
    }


if __name__ == "__main__":
    # Small, deterministic configuration.
    vocab_size = 50
    embedding_dim = 32
    title_size = 16          # T
    head_num = 4
    head_dim = 8             # -> output dim 32
    attention_hidden_dim = 32
    batch = 12               # not a multiple of 8 -> exercises batch padding
    block_b = 64             # capped/rounded to 16 here -> one grid step

    key = jax.random.PRNGKey(0)
    pkey, tkey = jax.random.split(key)
    params = init_params(pkey, vocab_size=vocab_size, embedding_dim=embedding_dim,
                         head_num=head_num, head_dim=head_dim,
                         attention_hidden_dim=attention_hidden_dim)
    tokens = jax.random.randint(tkey, (batch, title_size), 0, vocab_size,
                                dtype=jnp.int32)

    out = news_encoder_forward(tokens, params, head_num=head_num,
                               head_dim=head_dim, block_b=block_b)
    out = jax.block_until_ready(out)

    ref = _reference_forward(tokens, params, head_num=head_num,
                             head_dim=head_dim)
    assert out.shape == (batch, head_num * head_dim)
    assert jnp.allclose(out, ref, atol=2e-2, rtol=2e-2), "kernel/reference mismatch"

    print("KERNEL_OK")
</pallas_src>

<mosaic_0001>
module attributes {stable_mosaic.version = 11 : i64} {
  func.func @_news_encoder_kernel(%arg0: i32, %arg1: memref<16x16x32xbf16, #tpu.memory_space<vmem>>, %arg2: memref<32x96xbf16, #tpu.memory_space<vmem>>, %arg3: memref<32x32xbf16, #tpu.memory_space<vmem>>, %arg4: memref<1x32xf32, #tpu.memory_space<vmem>>, %arg5: memref<1x32xf32, #tpu.memory_space<vmem>>, %arg6: memref<16x32xf32, #tpu.memory_space<vmem>>) attributes {dimension_semantics = [#tpu.dimension_semantics<parallel>], iteration_bounds = array<i64: 1>, scalar_prefetch = 0 : i64, scratch_operands = 0 : i64, tpu.core_type = #tpu.core_type<tc>, window_params = [{transform_indices = @transform_0, window_bounds = array<i64: 16, 16, 32>}, {pipeline_mode = #tpu.pipeline_mode<synchronous>, transform_indices = @transform_1, window_bounds = array<i64: 32, 96>}, {pipeline_mode = #tpu.pipeline_mode<synchronous>, transform_indices = @transform_2, window_bounds = array<i64: 32, 32>}, {pipeline_mode = #tpu.pipeline_mode<synchronous>, transform_indices = @transform_3, window_bounds = array<i64: 1, 32>}, {pipeline_mode = #tpu.pipeline_mode<synchronous>, transform_indices = @transform_4, window_bounds = array<i64: 1, 32>}, {transform_indices = @transform_5, window_bounds = array<i64: 16, 32>}]} {
    %c0 = arith.constant 0 : index
    %c0_0 = arith.constant 0 : index
    %c0_1 = arith.constant 0 : index
    %0 = vector.load %arg1[%c0, %c0_0, %c0_1] : memref<16x16x32xbf16, #tpu.memory_space<vmem>>, vector<16x16x32xbf16>
    %1 = vector.shape_cast %0 : vector<16x16x32xbf16> to vector<256x32xbf16>
    %c0_2 = arith.constant 0 : index
    %c0_3 = arith.constant 0 : index
    %2 = vector.load %arg2[%c0_2, %c0_3] : memref<32x96xbf16, #tpu.memory_space<vmem>>, vector<32x96xbf16>
    %cst = arith.constant dense<0.000000e+00> : vector<256x96xf32>
    %3 = tpu.matmul %1, %2, %cst {dimension_numbers = #tpu.dot_dimension_numbers<[1], [0], [0], [1], [0, 0, 1, 1], [], []>} : vector<256x32xbf16>, vector<32x96xbf16>, vector<256x96xf32> -> vector<256x96xf32>
    %4 = vector.extract_strided_slice %3 {offsets = [0, 0], sizes = [256, 8], strides = [1, 1]} : vector<256x96xf32> to vector<256x8xf32>
    %5 = vector.shape_cast %4 : vector<256x8xf32> to vector<16x16x8xf32>
    %6 = arith.truncf %5 : vector<16x16x8xf32> to vector<16x16x8xbf16>
    %7 = vector.extract_strided_slice %3 {offsets = [0, 32], sizes = [256, 8], strides = [1, 1]} : vector<256x96xf32> to vector<256x8xf32>
    %8 = vector.shape_cast %7 : vector<256x8xf32> to vector<16x16x8xf32>
    %9 = arith.truncf %8 : vector<16x16x8xf32> to vector<16x16x8xbf16>
    %10 = vector.extract_strided_slice %3 {offsets = [0, 64], sizes = [256, 8], strides = [1, 1]} : vector<256x96xf32> to vector<256x8xf32>
    %11 = vector.shape_cast %10 : vector<256x8xf32> to vector<16x16x8xf32>
    %12 = arith.truncf %11 : vector<16x16x8xf32> to vector<16x16x8xbf16>
    "tpu.trace_start"() <{level = 10 : i32, message = "bqd,bkd->bqk"}> : () -> ()
    %cst_4 = arith.constant dense<0.000000e+00> : vector<16x16x16xf32>
    %13 = tpu.matmul %6, %9, %cst_4 {dimension_numbers = #tpu.dot_dimension_numbers<[2], [2], [1], [1], [0, 0, 0, 1, 1, 1], [0], [0]>} : vector<16x16x8xbf16>, vector<16x16x8xbf16>, vector<16x16x16xf32> -> vector<16x16x16xf32>
    "tpu.trace_stop"() : () -> ()
    %cst_5 = arith.constant 0.353553385 : f32
    %14 = vector.broadcast %cst_5 : f32 to vector<16x16x16xf32>
    %15 = arith.mulf %13, %14 : vector<16x16x16xf32>
    %cst_6 = arith.constant dense<0xFF800000> : vector<16x16xf32>
    %16 = vector.multi_reduction <maximumf>, %15, %cst_6 [2] : vector<16x16x16xf32> to vector<16x16xf32>
    %17 = vector.shape_cast %16 : vector<16x16xf32> to vector<16x16x1xf32>
    %18 = vector.broadcast %17 : vector<16x16x1xf32> to vector<16x16x16xf32>
    %19 = arith.subf %15, %18 : vector<16x16x16xf32>
    %20 = math.exp %19 : vector<16x16x16xf32>
    %cst_7 = arith.constant dense<0.000000e+00> : vector<16x16xf32>
    %21 = vector.multi_reduction <add>, %20, %cst_7 [2] : vector<16x16x16xf32> to vector<16x16xf32>
    %22 = vector.shape_cast %21 : vector<16x16xf32> to vector<16x16x1xf32>
    %23 = vector.broadcast %22 : vector<16x16x1xf32> to vector<16x16x16xf32>
    %24 = arith.divf %20, %23 : vector<16x16x16xf32>
    %25 = arith.truncf %24 : vector<16x16x16xf32> to vector<16x16x16xbf16>
    "tpu.trace_start"() <{level = 10 : i32, message = "bqk,bkd->bqd"}> : () -> ()
    %cst_8 = arith.constant dense<0.000000e+00> : vector<16x16x8xf32>
    %26 = tpu.matmul %25, %12, %cst_8 {dimension_numbers = #tpu.dot_dimension_numbers<[2], [1], [1], [2], [0, 0, 0, 1, 1, 2], [0], [0]>} : vector<16x16x16xbf16>, vector<16x16x8xbf16>, vector<16x16x8xf32> -> vector<16x16x8xf32>
    "tpu.trace_stop"() : () -> ()
    %27 = vector.shape_cast %26 : vector<16x16x8xf32> to vector<256x8xf32>
    %28 = vector.extract_strided_slice %3 {offsets = [0, 8], sizes = [256, 8], strides = [1, 1]} : vector<256x96xf32> to vector<256x8xf32>
    %29 = vector.shape_cast %28 : vector<256x8xf32> to vector<16x16x8xf32>
    %30 = arith.truncf %29 : vector<16x16x8xf32> to vector<16x16x8xbf16>
    %31 = vector.extract_strided_slice %3 {offsets = [0, 40], sizes = [256, 8], strides = [1, 1]} : vector<256x96xf32> to vector<256x8xf32>
    %32 = vector.shape_cast %31 : vector<256x8xf32> to vector<16x16x8xf32>
    %33 = arith.truncf %32 : vector<16x16x8xf32> to vector<16x16x8xbf16>
    %34 = vector.extract_strided_slice %3 {offsets = [0, 72], sizes = [256, 8], strides = [1, 1]} : vector<256x96xf32> to vector<256x8xf32>
    %35 = vector.shape_cast %34 : vector<256x8xf32> to vector<16x16x8xf32>
    %36 = arith.truncf %35 : vector<16x16x8xf32> to vector<16x16x8xbf16>
    "tpu.trace_start"() <{level = 10 : i32, message = "bqd,bkd->bqk"}> : () -> ()
    %cst_9 = arith.constant dense<0.000000e+00> : vector<16x16x16xf32>
    %37 = tpu.matmul %30, %33, %cst_9 {dimension_numbers = #tpu.dot_dimension_numbers<[2], [2], [1], [1], [0, 0, 0, 1, 1, 1], [0], [0]>} : vector<16x16x8xbf16>, vector<16x16x8xbf16>, vector<16x16x16xf32> -> vector<16x16x16xf32>
    "tpu.trace_stop"() : () -> ()
    %cst_10 = arith.constant 0.353553385 : f32
    %38 = vector.broadcast %cst_10 : f32 to vector<16x16x16xf32>
    %39 = arith.mulf %37, %38 : vector<16x16x16xf32>
    %cst_11 = arith.constant dense<0xFF800000> : vector<16x16xf32>
    %40 = vector.multi_reduction <maximumf>, %39, %cst_11 [2] : vector<16x16x16xf32> to vector<16x16xf32>
    %41 = vector.shape_cast %40 : vector<16x16xf32> to vector<16x16x1xf32>
    %42 = vector.broadcast %41 : vector<16x16x1xf32> to vector<16x16x16xf32>
    %43 = arith.subf %39, %42 : vector<16x16x16xf32>
    %44 = math.exp %43 : vector<16x16x16xf32>
    %cst_12 = arith.constant dense<0.000000e+00> : vector<16x16xf32>
    %45 = vector.multi_reduction <add>, %44, %cst_12 [2] : vector<16x16x16xf32> to vector<16x16xf32>
    %46 = vector.shape_cast %45 : vector<16x16xf32> to vector<16x16x1xf32>
    %47 = vector.broadcast %46 : vector<16x16x1xf32> to vector<16x16x16xf32>
    %48 = arith.divf %44, %47 : vector<16x16x16xf32>
    %49 = arith.truncf %48 : vector<16x16x16xf32> to vector<16x16x16xbf16>
    "tpu.trace_start"() <{level = 10 : i32, message = "bqk,bkd->bqd"}> : () -> ()
    %cst_13 = arith.constant dense<0.000000e+00> : vector<16x16x8xf32>
    %50 = tpu.matmul %49, %36, %cst_13 {dimension_numbers = #tpu.dot_dimension_numbers<[2], [1], [1], [2], [0, 0, 0, 1, 1, 2], [0], [0]>} : vector<16x16x16xbf16>, vector<16x16x8xbf16>, vector<16x16x8xf32> -> vector<16x16x8xf32>
    "tpu.trace_stop"() : () -> ()
    %51 = vector.shape_cast %50 : vector<16x16x8xf32> to vector<256x8xf32>
    %52 = vector.extract_strided_slice %3 {offsets = [0, 16], sizes = [256, 8], strides = [1, 1]} : vector<256x96xf32> to vector<256x8xf32>
    %53 = vector.shape_cast %52 : vector<256x8xf32> to vector<16x16x8xf32>
    %54 = arith.truncf %53 : vector<16x16x8xf32> to vector<16x16x8xbf16>
    %55 = vector.extract_strided_slice %3 {offsets = [0, 48], sizes = [256, 8], strides = [1, 1]} : vector<256x96xf32> to vector<256x8xf32>
    %56 = vector.shape_cast %55 : vector<256x8xf32> to vector<16x16x8xf32>
    %57 = arith.truncf %56 : vector<16x16x8xf32> to vector<16x16x8xbf16>
    %58 = vector.extract_strided_slice %3 {offsets = [0, 80], sizes = [256, 8], strides = [1, 1]} : vector<256x96xf32> to vector<256x8xf32>
    %59 = vector.shape_cast %58 : vector<256x8xf32> to vector<16x16x8xf32>
    %60 = arith.truncf %59 : vector<16x16x8xf32> to vector<16x16x8xbf16>
    "tpu.trace_start"() <{level = 10 : i32, message = "bqd,bkd->bqk"}> : () -> ()
    %cst_14 = arith.constant dense<0.000000e+00> : vector<16x16x16xf32>
    %61 = tpu.matmul %54, %57, %cst_14 {dimension_numbers = #tpu.dot_dimension_numbers<[2], [2], [1], [1], [0, 0, 0, 1, 1, 1], [0], [0]>} : vector<16x16x8xbf16>, vector<16x16x8xbf16>, vector<16x16x16xf32> -> vector<16x16x16xf32>
    "tpu.trace_stop"() : () -> ()
    %cst_15 = arith.constant 0.353553385 : f32
    %62 = vector.broadcast %cst_15 : f32 to vector<16x16x16xf32>
    %63 = arith.mulf %61, %62 : vector<16x16x16xf32>
    %cst_16 = arith.constant dense<0xFF800000> : vector<16x16xf32>
    %64 = vector.multi_reduction <maximumf>, %63, %cst_16 [2] : vector<16x16x16xf32> to vector<16x16xf32>
    %65 = vector.shape_cast %64 : vector<16x16xf32> to vector<16x16x1xf32>
    %66 = vector.broadcast %65 : vector<16x16x1xf32> to vector<16x16x16xf32>
    %67 = arith.subf %63, %66 : vector<16x16x16xf32>
    %68 = math.exp %67 : vector<16x16x16xf32>
    %cst_17 = arith.constant dense<0.000000e+00> : vector<16x16xf32>
    %69 = vector.multi_reduction <add>, %68, %cst_17 [2] : vector<16x16x16xf32> to vector<16x16xf32>
    %70 = vector.shape_cast %69 : vector<16x16xf32> to vector<16x16x1xf32>
    %71 = vector.broadcast %70 : vector<16x16x1xf32> to vector<16x16x16xf32>
    %72 = arith.divf %68, %71 : vector<16x16x16xf32>
    %73 = arith.truncf %72 : vector<16x16x16xf32> to vector<16x16x16xbf16>
    "tpu.trace_start"() <{level = 10 : i32, message = "bqk,bkd->bqd"}> : () -> ()
    %cst_18 = arith.constant dense<0.000000e+00> : vector<16x16x8xf32>
    %74 = tpu.matmul %73, %60, %cst_18 {dimension_numbers = #tpu.dot_dimension_numbers<[2], [1], [1], [2], [0, 0, 0, 1, 1, 2], [0], [0]>} : vector<16x16x16xbf16>, vector<16x16x8xbf16>, vector<16x16x8xf32> -> vector<16x16x8xf32>
    "tpu.trace_stop"() : () -> ()
    %75 = vector.shape_cast %74 : vector<16x16x8xf32> to vector<256x8xf32>
    %76 = vector.extract_strided_slice %3 {offsets = [0, 24], sizes = [256, 8], strides = [1, 1]} : vector<256x96xf32> to vector<256x8xf32>
    %77 = vector.shape_cast %76 : vector<256x8xf32> to vector<16x16x8xf32>
    %78 = arith.truncf %77 : vector<16x16x8xf32> to vector<16x16x8xbf16>
    %79 = vector.extract_strided_slice %3 {offsets = [0, 56], sizes = [256, 8], strides = [1, 1]} : vector<256x96xf32> to vector<256x8xf32>
    %80 = vector.shape_cast %79 : vector<256x8xf32> to vector<16x16x8xf32>
    %81 = arith.truncf %80 : vector<16x16x8xf32> to vector<16x16x8xbf16>
    %82 = vector.extract_strided_slice %3 {offsets = [0, 88], sizes = [256, 8], strides = [1, 1]} : vector<256x96xf32> to vector<256x8xf32>
    %83 = vector.shape_cast %82 : vector<256x8xf32> to vector<16x16x8xf32>
    %84 = arith.truncf %83 : vector<16x16x8xf32> to vector<16x16x8xbf16>
    "tpu.trace_start"() <{level = 10 : i32, message = "bqd,bkd->bqk"}> : () -> ()
    %cst_19 = arith.constant dense<0.000000e+00> : vector<16x16x16xf32>
    %85 = tpu.matmul %78, %81, %cst_19 {dimension_numbers = #tpu.dot_dimension_numbers<[2], [2], [1], [1], [0, 0, 0, 1, 1, 1], [0], [0]>} : vector<16x16x8xbf16>, vector<16x16x8xbf16>, vector<16x16x16xf32> -> vector<16x16x16xf32>
    "tpu.trace_stop"() : () -> ()
    %cst_20 = arith.constant 0.353553385 : f32
    %86 = vector.broadcast %cst_20 : f32 to vector<16x16x16xf32>
    %87 = arith.mulf %85, %86 : vector<16x16x16xf32>
    %cst_21 = arith.constant dense<0xFF800000> : vector<16x16xf32>
    %88 = vector.multi_reduction <maximumf>, %87, %cst_21 [2] : vector<16x16x16xf32> to vector<16x16xf32>
    %89 = vector.shape_cast %88 : vector<16x16xf32> to vector<16x16x1xf32>
    %90 = vector.broadcast %89 : vector<16x16x1xf32> to vector<16x16x16xf32>
    %91 = arith.subf %87, %90 : vector<16x16x16xf32>
    %92 = math.exp %91 : vector<16x16x16xf32>
    %cst_22 = arith.constant dense<0.000000e+00> : vector<16x16xf32>
    %93 = vector.multi_reduction <add>, %92, %cst_22 [2] : vector<16x16x16xf32> to vector<16x16xf32>
    %94 = vector.shape_cast %93 : vector<16x16xf32> to vector<16x16x1xf32>
    %95 = vector.broadcast %94 : vector<16x16x1xf32> to vector<16x16x16xf32>
    %96 = arith.divf %92, %95 : vector<16x16x16xf32>
    %97 = arith.truncf %96 : vector<16x16x16xf32> to vector<16x16x16xbf16>
    "tpu.trace_start"() <{level = 10 : i32, message = "bqk,bkd->bqd"}> : () -> ()
    %cst_23 = arith.constant dense<0.000000e+00> : vector<16x16x8xf32>
    %98 = tpu.matmul %97, %84, %cst_23 {dimension_numbers = #tpu.dot_dimension_numbers<[2], [1], [1], [2], [0, 0, 0, 1, 1, 2], [0], [0]>} : vector<16x16x16xbf16>, vector<16x16x8xbf16>, vector<16x16x8xf32> -> vector<16x16x8xf32>
    "tpu.trace_stop"() : () -> ()
    %99 = vector.shape_cast %98 : vector<16x16x8xf32> to vector<256x8xf32>
    %100 = tpu.concatenate %27, %51, %75, %99 in 1 : vector<256x8xf32>, vector<256x8xf32>, vector<256x8xf32>, vector<256x8xf32> -> vector<256x32xf32>
    %101 = arith.truncf %100 : vector<256x32xf32> to vector<256x32xbf16>
    %c0_24 = arith.constant 0 : index
    %c0_25 = arith.constant 0 : index
    %102 = vector.load %arg3[%c0_24, %c0_25] : memref<32x32xbf16, #tpu.memory_space<vmem>>, vector<32x32xbf16>
    %cst_26 = arith.constant dense<0.000000e+00> : vector<256x32xf32>
    %103 = tpu.matmul %101, %102, %cst_26 {dimension_numbers = #tpu.dot_dimension_numbers<[1], [0], [0], [1], [0, 0, 1, 1], [], []>} : vector<256x32xbf16>, vector<32x32xbf16>, vector<256x32xf32> -> vector<256x32xf32>
    %c0_27 = arith.constant 0 : index
    %c0_28 = arith.constant 0 : index
    %104 = vector.load %arg4[%c0_27, %c0_28] : memref<1x32xf32, #tpu.memory_space<vmem>>, vector<1x32xf32>
    %105 = vector.broadcast %104 : vector<1x32xf32> to vector<256x32xf32>
    %106 = arith.addf %103, %105 : vector<256x32xf32>
    %107 = math.tanh %106 : vector<256x32xf32>
    %c0_29 = arith.constant 0 : index
    %c0_30 = arith.constant 0 : index
    %108 = vector.load %arg5[%c0_29, %c0_30] : memref<1x32xf32, #tpu.memory_space<vmem>>, vector<1x32xf32>
    %109 = vector.broadcast %108 : vector<1x32xf32> to vector<256x32xf32>
    %110 = arith.mulf %107, %109 : vector<256x32xf32>
    %cst_31 = arith.constant dense<0.000000e+00> : vector<256xf32>
    %111 = vector.multi_reduction <add>, %110, %cst_31 [1] : vector<256x32xf32> to vector<256xf32>
    %112 = vector.shape_cast %111 : vector<256xf32> to vector<256x1xf32>
    %113 = math.exp %112 : vector<256x1xf32>
    %114 = vector.shape_cast %113 : vector<256x1xf32> to vector<16x16x1xf32>
    %115 = vector.shape_cast %100 : vector<256x32xf32> to vector<16x16x32xf32>
    %cst_32 = arith.constant dense<0.000000e+00> : vector<16x1xf32>
    %116 = vector.multi_reduction <add>, %114, %cst_32 [1] : vector<16x16x1xf32> to vector<16x1xf32>
    %cst_33 = arith.constant 9.99999993E-9 : f32
    %117 = vector.broadcast %cst_33 : f32 to vector<16x1xf32>
    %118 = arith.addf %116, %117 : vector<16x1xf32>
    %119 = vector.broadcast %114 : vector<16x16x1xf32> to vector<16x16x32xf32>
    %120 = arith.mulf %119, %115 : vector<16x16x32xf32>
    %cst_34 = arith.constant dense<0.000000e+00> : vector<16x32xf32>
    %121 = vector.multi_reduction <add>, %120, %cst_34 [1] : vector<16x16x32xf32> to vector<16x32xf32>
    %122 = tpu.reciprocal %118 {approx = true} : vector<16x1xf32> -> vector<16x1xf32>
    %123 = vector.broadcast %122 : vector<16x1xf32> to vector<16x32xf32>
    %124 = arith.mulf %121, %123 : vector<16x32xf32>
    %c0_35 = arith.constant 0 : index
    %c0_36 = arith.constant 0 : index
    %125 = vector.load %arg6[%c0_35, %c0_36] : memref<16x32xf32, #tpu.memory_space<vmem>>, vector<16x32xf32>
    tpu.vector_store %arg6[%c0_35, %c0_36], %124 {strides = array<i32>} : memref<16x32xf32, #tpu.memory_space<vmem>>, vector<16x32xf32>,
    return
  }
  func.func @transform_0(%arg0: i32) -> (i32, i32, i32) {
    %c0_i32 = arith.constant 0 : i32
    %c0_i32_0 = arith.constant 0 : i32
    %c0_i32_1 = arith.constant 0 : i32
    return %arg0, %c0_i32, %c0_i32_0 : i32, i32, i32
  }
  func.func @transform_1(%arg0: i32) -> (i32, i32) {
    %c0_i32 = arith.constant 0 : i32
    %c0_i32_0 = arith.constant 0 : i32
    %c0_i32_1 = arith.constant 0 : i32
    return %c0_i32, %c0_i32_0 : i32, i32
  }
  func.func @transform_2(%arg0: i32) -> (i32, i32) {
    %c0_i32 = arith.constant 0 : i32
    %c0_i32_0 = arith.constant 0 : i32
    %c0_i32_1 = arith.constant 0 : i32
    return %c0_i32, %c0_i32_0 : i32, i32
  }
  func.func @transform_3(%arg0: i32) -> (i32, i32) {
    %c0_i32 = arith.constant 0 : i32
    %c0_i32_0 = arith.constant 0 : i32
    %c0_i32_1 = arith.constant 0 : i32
    return %c0_i32, %c0_i32_0 : i32, i32
  }
  func.func @transform_4(%arg0: i32) -> (i32, i32) {
    %c0_i32 = arith.constant 0 : i32
    %c0_i32_0 = arith.constant 0 : i32
    %c0_i32_1 = arith.constant 0 : i32
    return %c0_i32, %c0_i32_0 : i32, i32
  }
  func.func @transform_5(%arg0: i32) -> (i32, i32) {
    %c0_i32 = arith.constant 0 : i32
    %c0_i32_0 = arith.constant 0 : i32
    return %arg0, %c0_i32 : i32, i32
  }
}

</mosaic_0001>

<llo_original>
// kernel: tpu_custom_call.1
$region0: #{tpu_custom_call.1}
  #allocation0 [shape = 'u32[]', space=smem, size = 0x4, offset = 0x4, fixed_abs, tag = 'smem constant byte address 0x4 - core index']
  #allocation1 [shape = 'u32[72,128]{1,0:T(1,128)}', space=vmem, size = 0x9000, scoped, tag = 'internal scratch']
  %s0 = inlined_call_operand.hbm [shape: bf16[16,16,32], index: 0, kind: input, shape index: {}]
  %s1 = inlined_call_operand.hbm [shape: bf16[32,96], index: 1, kind: input, shape index: {}]
  %s2 = inlined_call_operand.hbm [shape: bf16[32,32], index: 2, kind: input, shape index: {}]
  %s3 = inlined_call_operand.vmem [shape: f32[1,32], index: 3, kind: input, shape index: {}]
  %s4 = inlined_call_operand.vmem [shape: f32[1,32], index: 4, kind: input, shape index: {}]
  %s5 = inlined_call_operand.hbm [shape: f32[16,32], index: 5, kind: output, shape index: {}]
  %s6 = sld [smem:[#allocation0]]
  $region42: #{tpu_custom_call.1} parent=0
    _
  %s8 = ssub.s32 1, %s6
  %s9 = scalar_select 0, %s8, %s6
  $region1: #{tpu_custom_call.1} parent=0
    #allocation2 [shape = 'u8[65536]{0}', space=vmem, size = 0x10000, scoped, tag = 'input window, operand 0, single buffered']
    #allocation3 [shape = 's32[1]{0}', space=sflag, size = 0x4, scoped, tag = 'scoped memory for tpu_custom_call.1']
    #allocation4 [shape = 's32[1]{0}', space=sflag, size = 0x4, scoped, tag = 'scoped memory for tpu_custom_call.1']
    #allocation5 [shape = 'u8[8192]{0}', space=vmem, size = 0x2000, scoped, tag = 'input window, operand 1, single buffered']
    #allocation6 [shape = 's32[1]{0}', space=sflag, size = 0x4, scoped, tag = 'scoped memory for tpu_custom_call.1']
    #allocation7 [shape = 'u8[8192]{0}', space=vmem, size = 0x2000, scoped, tag = 'input window, operand 2, single buffered']
    #allocation8 [shape = 'u8[8192]{0}', space=vmem, size = 0x2000, scoped, tag = 'output window, operand 0, single buffered']
    %10 = vsyncpa [#allocation3], 0
    %11 = vsyncpa [#allocation6], 0
    %12 = vsyncpa [#allocation4], 0
    // Predicated region
    $region2: #{tpu_custom_call.1} parent=1 // pred_check
      _
    $region3: #{tpu_custom_call.1} parent=1 // pred_check_branch
      %14 = sbr.rel (0) target = $region5
    $region4: #{tpu_custom_call.1} parent=1 // pred_region
      %16 = vsyncadd [#allocation3], 0
      %s17 = sshll.u32 %s0, 4
      %s18 = int_to_ptr.hbm [resolvable:$true] %s17
      %s19 = sshll.u32 [#allocation2], 4
      %s20 = int_to_ptr.vmem [resolvable:$true] %s19
      %25 = dma.hbm_to_vmem [thread:$0]  %s18, 2048, %s20, [#allocation3], 64, 64, 4
    $region5: #{tpu_custom_call.1} parent=1 // pred_fallthru
      _
    // Predicated region
    $region6: #{tpu_custom_call.1} parent=1 // pred_check
      _
    $region7: #{tpu_custom_call.1} parent=1 // pred_check_branch
      %27 = sbr.rel (0) target = $region9
    $region8: #{tpu_custom_call.1} parent=1 // pred_region
      %29 = vsyncadd [#allocation6], 0
      %s30 = sshll.u32 %s1, 4
      %s31 = int_to_ptr.hbm [resolvable:$true] %s30
      %s32 = sshll.u32 [#allocation5], 4
      %s33 = int_to_ptr.vmem [resolvable:$true] %s32
      %38 = dma.hbm_to_vmem [thread:$0]  %s31, 256, %s33, [#allocation6], 64, 64, 4
    $region9: #{tpu_custom_call.1} parent=1 // pred_fallthru
      _
    // Predicated region
    $region10: #{tpu_custom_call.1} parent=1 // pred_check
      _
    $region11: #{tpu_custom_call.1} parent=1 // pred_check_branch
      %40 = sbr.rel (0) target = $region13
    $region12: #{tpu_custom_call.1} parent=1 // pred_region
      %42 = vsyncadd [#allocation6], 0
      %s43 = sshll.u32 %s2, 4
      %s44 = int_to_ptr.hbm [resolvable:$true] %s43
      %s45 = sshll.u32 [#allocation7], 4
      %s46 = int_to_ptr.vmem [resolvable:$true] %s45
      %51 = dma.hbm_to_vmem [thread:$0]  %s44, 256, %s46, [#allocation6], 64, 64, 4
    $region13: #{tpu_custom_call.1} parent=1 // pred_fallthru
      _
    // Predicated region
    $region14: #{tpu_custom_call.1} parent=1 // pred_check
      _
    $region15: #{tpu_custom_call.1} parent=1 // pred_check_branch
      %53 = sbr.rel (0) target = $region17
    $region16: #{tpu_custom_call.1} parent=1 // pred_region
      _
    $region17: #{tpu_custom_call.1} parent=1 // pred_fallthru
      _
    // Predicated region
    $region18: #{tpu_custom_call.1} parent=1 // pred_check
      _
    $region19: #{tpu_custom_call.1} parent=1 // pred_check_branch
      %55 = sbr.rel (0) target = $region21
    $region20: #{tpu_custom_call.1} parent=1 // pred_region
      _
    $region21: #{tpu_custom_call.1} parent=1 // pred_fallthru
      _
    // Predicated region
    $region22: #{tpu_custom_call.1} parent=1 // pred_check
      _
    $region23: #{tpu_custom_call.1} parent=1 // pred_check_branch
      %57 = sbr.rel (0) target = $region25
    $region24: #{tpu_custom_call.1} parent=1 // pred_region
      %59 = dma.done [#allocation3], 2048
    $region25: #{tpu_custom_call.1} parent=1 // pred_fallthru
      _
    // Predicated region
    $region26: #{tpu_custom_call.1} parent=1 // pred_check
      _
    $region27: #{tpu_custom_call.1} parent=1 // pred_check_branch
      %61 = sbr.rel (0) target = $region29
    $region28: #{tpu_custom_call.1} parent=1 // pred_region
      %63 = dma.done [#allocation6], 256
    $region29: #{tpu_custom_call.1} parent=1 // pred_fallthru
      _
    // Predicated region
    $region30: #{tpu_custom_call.1} parent=1 // pred_check
      _
    $region31: #{tpu_custom_call.1} parent=1 // pred_check_branch
      %65 = sbr.rel (0) target = $region33
    $region32: #{tpu_custom_call.1} parent=1 // pred_region
      %67 = dma.done [#allocation6], 256
    $region33: #{tpu_custom_call.1} parent=1 // pred_fallthru
      _
    %v69 = vld [vmem:[#allocation2] sm:$0xf]
    %v70 = vld [vmem:[#allocation2 + $0x4] sm:$0xf]
    %v71 = vld [vmem:[#allocation2 + $0x8] sm:$0xf]
    %v72 = vld [vmem:[#allocation2 + $0xc] sm:$0xf]
    %v73 = vld [vmem:[#allocation2 + $0x10] sm:$0xf]
    %v74 = vld [vmem:[#allocation2 + $0x14] sm:$0xf]
    %v75 = vld [vmem:[#allocation2 + $0x18] sm:$0xf]
    %v76 = vld [vmem:[#allocation2 + $0x1c] sm:$0xf]
    %v77 = vld [vmem:[#allocation2 + $0x20] sm:$0xf]
    %v78 = vld [vmem:[#allocation2 + $0x24] sm:$0xf]
    %v79 = vld [vmem:[#allocation2 + $0x28] sm:$0xf]
    %v80 = vld [vmem:[#allocation2 + $0x2c] sm:$0xf]
    %v81 = vld [vmem:[#allocation2 + $0x30] sm:$0xf]
    %v82 = vld [vmem:[#allocation2 + $0x34] sm:$0xf]
    %v83 = vld [vmem:[#allocation2 + $0x38] sm:$0xf]
    %v84 = vld [vmem:[#allocation2 + $0x3c] sm:$0xf]
    %v85 = vld [vmem:[#allocation2 + $0x40] sm:$0xf]
    %v86 = vld [vmem:[#allocation2 + $0x44] sm:$0xf]
    %v87 = vld [vmem:[#allocation2 + $0x48] sm:$0xf]
    %v88 = vld [vmem:[#allocation2 + $0x4c] sm:$0xf]
    %v89 = vld [vmem:[#allocation2 + $0x50] sm:$0xf]
    %v90 = vld [vmem:[#allocation2 + $0x54] sm:$0xf]
    %v91 = vld [vmem:[#allocation2 + $0x58] sm:$0xf]
    %v92 = vld [vmem:[#allocation2 + $0x5c] sm:$0xf]
    %v93 = vld [vmem:[#allocation2 + $0x60] sm:$0xf]
    %v94 = vld [vmem:[#allocation2 + $0x64] sm:$0xf]
    %v95 = vld [vmem:[#allocation2 + $0x68] sm:$0xf]
    %v96 = vld [vmem:[#allocation2 + $0x6c] sm:$0xf]
    %v97 = vld [vmem:[#allocation2 + $0x70] sm:$0xf]
    %v98 = vld [vmem:[#allocation2 + $0x74] sm:$0xf]
    %v99 = vld [vmem:[#allocation2 + $0x78] sm:$0xf]
    %v100 = vld [vmem:[#allocation2 + $0x7c] sm:$0xf]
    %v101 = vld [vmem:[#allocation5] sm:$0xf]
    %v102 = vld [vmem:[#allocation5 + $0x4] sm:$0xf]
    %v103 = vld [vmem:[#allocation5 + $0x8] sm:$0xf]
    %v104 = vld [vmem:[#allocation5 + $0xc] sm:$0xf]
    %v137 = vunpack.c.l.b16 %v69
    %v138 = vunpack.c.l.b16 %v70
    %v139 = vunpack.c.l.b16 %v71
    %v140 = vunpack.c.l.b16 %v72
    %v141 = vunpack.c.l.b16 %v73
    %v142 = vunpack.c.l.b16 %v74
    %v143 = vunpack.c.l.b16 %v75
    %v144 = vunpack.c.l.b16 %v76
    %v145 = vunpack.c.l.b16 %v77
    %v146 = vunpack.c.l.b16 %v78
    %v147 = vunpack.c.l.b16 %v79
    %v148 = vunpack.c.l.b16 %v80
    %v149 = vunpack.c.l.b16 %v81
    %v150 = vunpack.c.l.b16 %v82
    %v151 = vunpack.c.l.b16 %v83
    %v152 = vunpack.c.l.b16 %v84
    %v153 = vunpack.c.l.b16 %v85
    %v154 = vunpack.c.l.b16 %v86
    %v155 = vunpack.c.l.b16 %v87
    %v156 = vunpack.c.l.b16 %v88
    %v157 = vunpack.c.l.b16 %v89
    %v158 = vunpack.c.l.b16 %v90
    %v159 = vunpack.c.l.b16 %v91
    %v160 = vunpack.c.l.b16 %v92
    %v161 = vunpack.c.l.b16 %v93
    %v162 = vunpack.c.l.b16 %v94
    %v163 = vunpack.c.l.b16 %v95
    %v164 = vunpack.c.l.b16 %v96
    %v165 = vunpack.c.l.b16 %v97
    %v166 = vunpack.c.l.b16 %v98
    %v167 = vunpack.c.l.b16 %v99
    %v168 = vunpack.c.l.b16 %v100
    %v169 = vpack.c.b16 %v138, %v137
    %v170 = vpack.c.b16 %v140, %v139
    %v171 = vpack.c.b16 %v142, %v141
    %v172 = vpack.c.b16 %v144, %v143
    %v173 = vpack.c.b16 %v146, %v145
    %v174 = vpack.c.b16 %v148, %v147
    %v175 = vpack.c.b16 %v150, %v149
    %v176 = vpack.c.b16 %v152, %v151
    %v177 = vpack.c.b16 %v154, %v153
    %v178 = vpack.c.b16 %v156, %v155
    %v179 = vpack.c.b16 %v158, %v157
    %v180 = vpack.c.b16 %v160, %v159
    %v181 = vpack.c.b16 %v162, %v161
    %v182 = vpack.c.b16 %v164, %v163
    %v183 = vpack.c.b16 %v166, %v165
    %v184 = vpack.c.b16 %v168, %v167
    %v189 = vunpack.c.l.b16 %v101
    %v190 = vunpack.c.l.b16 %v102
    %v191 = vunpack.c.l.b16 %v103
    %v192 = vunpack.c.l.b16 %v104
    %v193 = vpack.c.b16 %v190, %v189
    %v194 = vpack.c.b16 %v192, %v191
    %vm197 = vcmask 261120
    %v199 = vsel %vm197, %v169, 0
    %v202 = vsel %vm197, %v170, 0
    %v205 = vsel %vm197, %v171, 0
    %v208 = vsel %vm197, %v172, 0
    %v211 = vsel %vm197, %v173, 0
    %v214 = vsel %vm197, %v174, 0
    %v217 = vsel %vm197, %v175, 0
    %v220 = vsel %vm197, %v176, 0
    %v223 = vsel %vm197, %v177, 0
    %v226 = vsel %vm197, %v178, 0
    %v229 = vsel %vm197, %v179, 0
    %v232 = vsel %vm197, %v180, 0
    %v235 = vsel %vm197, %v181, 0
    %v238 = vsel %vm197, %v182, 0
    %v241 = vsel %vm197, %v183, 0
    %v244 = vsel %vm197, %v184, 0
    %246 = vmatpush.bf16.msra.mxu0 0
    %247 = vmatpush.bf16.msra.mxu0 0
    %248 = vmatpush.bf16.msra.mxu0 0
    %249 = vmatpush.bf16.msra.mxu0 0
    %250 = vmatpush.bf16.msra.mxu0 0
    %251 = vmatpush.bf16.msra.mxu0 0
    %252 = vmatpush.bf16.msra.mxu0 %v194
    %253 = vmatpush.bf16.msra.mxu0 %v193
    %254 = vmatmul.bf16.gmra.mxu0 %v199
    %v255 = vpop.f32.mrf.mxu0
    %v256 = vadd.f32 0.0, %v255
    %v257 = vpop.f32.mrf.mxu0
    %v258 = vadd.f32 0.0, %v257
    %259 = vmatmul.bf16.gmra.mxu0 %v202
    %v260 = vpop.f32.mrf.mxu0
    %v261 = vadd.f32 0.0, %v260
    %v262 = vpop.f32.mrf.mxu0
    %v263 = vadd.f32 0.0, %v262
    %264 = vmatmul.bf16.gmra.mxu0 %v205
    %v265 = vpop.f32.mrf.mxu0
    %v266 = vadd.f32 0.0, %v265
    %v267 = vpop.f32.mrf.mxu0
    %v268 = vadd.f32 0.0, %v267
    %269 = vmatmul.bf16.gmra.mxu0 %v208
    %v270 = vpop.f32.mrf.mxu0
    %v271 = vadd.f32 0.0, %v270
    %v272 = vpop.f32.mrf.mxu0
    %v273 = vadd.f32 0.0, %v272
    %274 = vmatmul.bf16.gmra.mxu0 %v211
    %v275 = vpop.f32.mrf.mxu0
    %v276 = vadd.f32 0.0, %v275
    %v277 = vpop.f32.mrf.mxu0
    %v278 = vadd.f32 0.0, %v277
    %279 = vmatmul.bf16.gmra.mxu0 %v214
    %v280 = vpop.f32.mrf.mxu0
    %v281 = vadd.f32 0.0, %v280
    %v282 = vpop.f32.mrf.mxu0
    %v283 = vadd.f32 0.0, %v282
    %284 = vmatmul.bf16.gmra.mxu0 %v217
    %v285 = vpop.f32.mrf.mxu0
    %v286 = vadd.f32 0.0, %v285
    %v287 = vpop.f32.mrf.mxu0
    %v288 = vadd.f32 0.0, %v287
    %289 = vmatmul.bf16.gmra.mxu0 %v220
    %v290 = vpop.f32.mrf.mxu0
    %v291 = vadd.f32 0.0, %v290
    %v292 = vpop.f32.mrf.mxu0
    %v293 = vadd.f32 0.0, %v292
    %294 = vmatmul.bf16.gmra.mxu0 %v223
    %v295 = vpop.f32.mrf.mxu0
    %v296 = vadd.f32 0.0, %v295
    %v297 = vpop.f32.mrf.mxu0
    %v298 = vadd.f32 0.0, %v297
    %299 = vmatmul.bf16.gmra.mxu0 %v226
    %v300 = vpop.f32.mrf.mxu0
    %v301 = vadd.f32 0.0, %v300
    %v302 = vpop.f32.mrf.mxu0
    %v303 = vadd.f32 0.0, %v302
    %304 = vmatmul.bf16.gmra.mxu0 %v229
    %v305 = vpop.f32.mrf.mxu0
    %v306 = vadd.f32 0.0, %v305
    %v307 = vpop.f32.mrf.mxu0
    %v308 = vadd.f32 0.0, %v307
    %309 = vmatmul.bf16.gmra.mxu0 %v232
    %v310 = vpop.f32.mrf.mxu0
    %v311 = vadd.f32 0.0, %v310
    %v312 = vpop.f32.mrf.mxu0
    %v313 = vadd.f32 0.0, %v312
    %314 = vmatmul.bf16.gmra.mxu0 %v235
    %v315 = vpop.f32.mrf.mxu0
    %v316 = vadd.f32 0.0, %v315
    %v317 = vpop.f32.mrf.mxu0
    %v318 = vadd.f32 0.0, %v317
    %319 = vmatmul.bf16.gmra.mxu0 %v238
    %v320 = vpop.f32.mrf.mxu0
    %v321 = vadd.f32 0.0, %v320
    %v322 = vpop.f32.mrf.mxu0
    %v323 = vadd.f32 0.0, %v322
    %324 = vmatmul.bf16.gmra.mxu0 %v241
    %v325 = vpop.f32.mrf.mxu0
    %v326 = vadd.f32 0.0, %v325
    %v327 = vpop.f32.mrf.mxu0
    %v328 = vadd.f32 0.0, %v327
    %329 = vmatmul.bf16.gmra.mxu0 %v244
    %v330 = vpop.f32.mrf.mxu0
    %v331 = vadd.f32 0.0, %v330
    %v332 = vpop.f32.mrf.mxu0
    %v333 = vadd.f32 0.0, %v332
    %334 = vdwg.mxu0
    %v335 = vpack.c.bf16 %v256, %v256
    %v336 = vpack.c.bf16 %v258, %v258
    %v337 = vpack.c.bf16 %v261, %v261
    %v338 = vpack.c.bf16 %v263, %v263
    %v339 = vpack.c.bf16 %v266, %v266
    %v340 = vpack.c.bf16 %v268, %v268
    %v341 = vpack.c.bf16 %v271, %v271
    %v342 = vpack.c.bf16 %v273, %v273
    %v343 = vpack.c.bf16 %v276, %v276
    %v344 = vpack.c.bf16 %v278, %v278
    %v345 = vpack.c.bf16 %v281, %v281
    %v346 = vpack.c.bf16 %v283, %v283
    %v347 = vpack.c.bf16 %v286, %v286
    %v348 = vpack.c.bf16 %v288, %v288
    %v349 = vpack.c.bf16 %v291, %v291
    %v350 = vpack.c.bf16 %v293, %v293
    %v351 = vpack.c.bf16 %v296, %v296
    %v352 = vpack.c.bf16 %v298, %v298
    %v353 = vpack.c.bf16 %v301, %v301
    %v354 = vpack.c.bf16 %v303, %v303
    %v355 = vpack.c.bf16 %v306, %v306
    %v356 = vpack.c.bf16 %v308, %v308
    %v357 = vpack.c.bf16 %v311, %v311
    %v358 = vpack.c.bf16 %v313, %v313
    %v359 = vpack.c.bf16 %v316, %v316
    %v360 = vpack.c.bf16 %v318, %v318
    %v361 = vpack.c.bf16 %v321, %v321
    %v362 = vpack.c.bf16 %v323, %v323
    %v363 = vpack.c.bf16 %v326, %v326
    %v364 = vpack.c.bf16 %v328, %v328
    %v365 = vpack.c.bf16 %v331, %v331
    %v366 = vpack.c.bf16 %v333, %v333
    %v369 = vunpack.c.l.b16 %v335
    %v370 = vunpack.c.l.b16 %v336
    %v371 = vpack.c.b16 %v370, %v369
    %372 = vrot.lane.b32.xlu0 %v371, 96
    %v373 = vpop.permute.xlu0 %372
    %vm374 = vcmask 64512
    %v376 = vsel %vm374, %v371, 0
    %v379 = vsel %vm374, %v373, 0
    %381 = vmatpush.bf16.xpose.msra.mxu0 0
    %382 = vmatpush.bf16.xpose.msra.mxu0 0
    %383 = vmatpush.bf16.xpose.msra.mxu0 0
    %384 = vmatpush.bf16.xpose.msra.mxu0 0
    %385 = vmatpush.bf16.xpose.msra.mxu0 0
    %386 = vmatpush.bf16.xpose.msra.mxu0 0
    %387 = vmatpush.bf16.xpose.msra.mxu0 0
    %388 = vmatpush.bf16.xpose.msra.mxu0 %v379
    %389 = vmatmul.bf16.gmra.mxu0 %v376
    %v390 = vpop.f32.mrf.mxu0
    %v391 = vadd.f32 0.0, %v390
    %v392 = vpop.f32.mrf.mxu0
    %v393 = vadd.f32 0.0, %v392
    %394 = vdwg.mxu0
    %v397 = vunpack.c.l.b16 %v337
    %v398 = vunpack.c.l.b16 %v338
    %v399 = vpack.c.b16 %v398, %v397
    %400 = vrot.lane.b32.xlu0 %v399, 96
    %v401 = vpop.permute.xlu0 %400
    %v403 = vsel %vm374, %v399, 0
    %v406 = vsel %vm374, %v401, 0
    %408 = vmatpush.bf16.xpose.msra.mxu0 0
    %409 = vmatpush.bf16.xpose.msra.mxu0 0
    %410 = vmatpush.bf16.xpose.msra.mxu0 0
    %411 = vmatpush.bf16.xpose.msra.mxu0 0
    %412 = vmatpush.bf16.xpose.msra.mxu0 0
    %413 = vmatpush.bf16.xpose.msra.mxu0 0
    %414 = vmatpush.bf16.xpose.msra.mxu0 0
    %415 = vmatpush.bf16.xpose.msra.mxu0 %v406
    %416 = vmatmul.bf16.gmra.mxu0 %v403
    %v417 = vpop.f32.mrf.mxu0
    %v418 = vadd.f32 0.0, %v417
    %v419 = vpop.f32.mrf.mxu0
    %v420 = vadd.f32 0.0, %v419
    %421 = vdwg.mxu0
    %v424 = vunpack.c.l.b16 %v339
    %v425 = vunpack.c.l.b16 %v340
    %v426 = vpack.c.b16 %v425, %v424
    %427 = vrot.lane.b32.xlu0 %v426, 96
    %v428 = vpop.permute.xlu0 %427
    %v430 = vsel %vm374, %v426, 0
    %v433 = vsel %vm374, %v428, 0
    %435 = vmatpush.bf16.xpose.msra.mxu0 0
    %436 = vmatpush.bf16.xpose.msra.mxu0 0
    %437 = vmatpush.bf16.xpose.msra.mxu0 0
    %438 = vmatpush.bf16.xpose.msra.mxu0 0
    %439 = vmatpush.bf16.xpose.msra.mxu0 0
    %440 = vmatpush.bf16.xpose.msra.mxu0 0
    %441 = vmatpush.bf16.xpose.msra.mxu0 0
    %442 = vmatpush.bf16.xpose.msra.mxu0 %v433
    %443 = vmatmul.bf16.gmra.mxu0 %v430
    %v444 = vpop.f32.mrf.mxu0
    %v445 = vadd.f32 0.0, %v444
    %v446 = vpop.f32.mrf.mxu0
    %v447 = vadd.f32 0.0, %v446
    %448 = vdwg.mxu0
    %v451 = vunpack.c.l.b16 %v341
    %v452 = vunpack.c.l.b16 %v342
    %v453 = vpack.c.b16 %v452, %v451
    %454 = vrot.lane.b32.xlu0 %v453, 96
    %v455 = vpop.permute.xlu0 %454
    %v457 = vsel %vm374, %v453, 0
    %v460 = vsel %vm374, %v455, 0
    %462 = vmatpush.bf16.xpose.msra.mxu0 0
    %463 = vmatpush.bf16.xpose.msra.mxu0 0
    %464 = vmatpush.bf16.xpose.msra.mxu0 0
    %465 = vmatpush.bf16.xpose.msra.mxu0 0
    %466 = vmatpush.bf16.xpose.msra.mxu0 0
    %467 = vmatpush.bf16.xpose.msra.mxu0 0
    %468 = vmatpush.bf16.xpose.msra.mxu0 0
    %469 = vmatpush.bf16.xpose.msra.mxu0 %v460
    %470 = vmatmul.bf16.gmra.mxu0 %v457
    %v471 = vpop.f32.mrf.mxu0
    %v472 = vadd.f32 0.0, %v471
    %v473 = vpop.f32.mrf.mxu0
    %v474 = vadd.f32 0.0, %v473
    %475 = vdwg.mxu0
    %v478 = vunpack.c.l.b16 %v343
    %v479 = vunpack.c.l.b16 %v344
    %v480 = vpack.c.b16 %v479, %v478
    %481 = vrot.lane.b32.xlu0 %v480, 96
    %v482 = vpop.permute.xlu0 %481
    %v484 = vsel %vm374, %v480, 0
    %v487 = vsel %vm374, %v482, 0
    %489 = vmatpush.bf16.xpose.msra.mxu0 0
    %490 = vmatpush.bf16.xpose.msra.mxu0 0
    %491 = vmatpush.bf16.xpose.msra.mxu0 0
    %492 = vmatpush.bf16.xpose.msra.mxu0 0
    %493 = vmatpush.bf16.xpose.msra.mxu0 0
    %494 = vmatpush.bf16.xpose.msra.mxu0 0
    %495 = vmatpush.bf16.xpose.msra.mxu0 0
    %496 = vmatpush.bf16.xpose.msra.mxu0 %v487
    %497 = vmatmul.bf16.gmra.mxu0 %v484
    %v498 = vpop.f32.mrf.mxu0
    %v499 = vadd.f32 0.0, %v498
    %v500 = vpop.f32.mrf.mxu0
    %v501 = vadd.f32 0.0, %v500
    %502 = vdwg.mxu0
    %v505 = vunpack.c.l.b16 %v345
    %v506 = vunpack.c.l.b16 %v346
    %v507 = vpack.c.b16 %v506, %v505
    %508 = vrot.lane.b32.xlu0 %v507, 96
    %v509 = vpop.permute.xlu0 %508
    %v511 = vsel %vm374, %v507, 0
    %v514 = vsel %vm374, %v509, 0
    %516 = vmatpush.bf16.xpose.msra.mxu0 0
    %517 = vmatpush.bf16.xpose.msra.mxu0 0
    %518 = vmatpush.bf16.xpose.msra.mxu0 0
    %519 = vmatpush.bf16.xpose.msra.mxu0 0
    %520 = vmatpush.bf16.xpose.msra.mxu0 0
    %521 = vmatpush.bf16.xpose.msra.mxu0 0
    %522 = vmatpush.bf16.xpose.msra.mxu0 0
    %523 = vmatpush.bf16.xpose.msra.mxu0 %v514
    %524 = vmatmul.bf16.gmra.mxu0 %v511
    %v525 = vpop.f32.mrf.mxu0
    %v526 = vadd.f32 0.0, %v525
    %v527 = vpop.f32.mrf.mxu0
    %v528 = vadd.f32 0.0, %v527
    %529 = vdwg.mxu0
    %v532 = vunpack.c.l.b16 %v347
    %v533 = vunpack.c.l.b16 %v348
    %v534 = vpack.c.b16 %v533, %v532
    %535 = vrot.lane.b32.xlu0 %v534, 96
    %v536 = vpop.permute.xlu0 %535
    %v538 = vsel %vm374, %v534, 0
    %v541 = vsel %vm374, %v536, 0
    %543 = vmatpush.bf16.xpose.msra.mxu0 0
    %544 = vmatpush.bf16.xpose.msra.mxu0 0
    %545 = vmatpush.bf16.xpose.msra.mxu0 0
    %546 = vmatpush.bf16.xpose.msra.mxu0 0
    %547 = vmatpush.bf16.xpose.msra.mxu0 0
    %548 = vmatpush.bf16.xpose.msra.mxu0 0
    %549 = vmatpush.bf16.xpose.msra.mxu0 0
    %550 = vmatpush.bf16.xpose.msra.mxu0 %v541
    %551 = vmatmul.bf16.gmra.mxu0 %v538
    %v552 = vpop.f32.mrf.mxu0
    %v553 = vadd.f32 0.0, %v552
    %v554 = vpop.f32.mrf.mxu0
    %v555 = vadd.f32 0.0, %v554
    %556 = vdwg.mxu0
    %v559 = vunpack.c.l.b16 %v349
    %v560 = vunpack.c.l.b16 %v350
    %v561 = vpack.c.b16 %v560, %v559
    %562 = vrot.lane.b32.xlu0 %v561, 96
    %v563 = vpop.permute.xlu0 %562
    %v565 = vsel %vm374, %v561, 0
    %v568 = vsel %vm374, %v563, 0
    %570 = vmatpush.bf16.xpose.msra.mxu0 0
    %571 = vmatpush.bf16.xpose.msra.mxu0 0
    %572 = vmatpush.bf16.xpose.msra.mxu0 0
    %573 = vmatpush.bf16.xpose.msra.mxu0 0
    %574 = vmatpush.bf16.xpose.msra.mxu0 0
    %575 = vmatpush.bf16.xpose.msra.mxu0 0
    %576 = vmatpush.bf16.xpose.msra.mxu0 0
    %577 = vmatpush.bf16.xpose.msra.mxu0 %v568
    %578 = vmatmul.bf16.gmra.mxu0 %v565
    %v579 = vpop.f32.mrf.mxu0
    %v580 = vadd.f32 0.0, %v579
    %v581 = vpop.f32.mrf.mxu0
    %v582 = vadd.f32 0.0, %v581
    %583 = vdwg.mxu0
    %v586 = vunpack.c.l.b16 %v351
    %v587 = vunpack.c.l.b16 %v352
    %v588 = vpack.c.b16 %v587, %v586
    %589 = vrot.lane.b32.xlu0 %v588, 96
    %v590 = vpop.permute.xlu0 %589
    %v592 = vsel %vm374, %v588, 0
    %v595 = vsel %vm374, %v590, 0
    %597 = vmatpush.bf16.xpose.msra.mxu0 0
    %598 = vmatpush.bf16.xpose.msra.mxu0 0
    %599 = vmatpush.bf16.xpose.msra.mxu0 0
    %600 = vmatpush.bf16.xpose.msra.mxu0 0
    %601 = vmatpush.bf16.xpose.msra.mxu0 0
    %602 = vmatpush.bf16.xpose.msra.mxu0 0
    %603 = vmatpush.bf16.xpose.msra.mxu0 0
    %604 = vmatpush.bf16.xpose.msra.mxu0 %v595
    %605 = vmatmul.bf16.gmra.mxu0 %v592
    %v606 = vpop.f32.mrf.mxu0
    %v607 = vadd.f32 0.0, %v606
    %v608 = vpop.f32.mrf.mxu0
    %v609 = vadd.f32 0.0, %v608
    %610 = vdwg.mxu0
    %v613 = vunpack.c.l.b16 %v353
    %v614 = vunpack.c.l.b16 %v354
    %v615 = vpack.c.b16 %v614, %v613
    %616 = vrot.lane.b32.xlu0 %v615, 96
    %v617 = vpop.permute.xlu0 %616
    %v619 = vsel %vm374, %v615, 0
    %v622 = vsel %vm374, %v617, 0
    %624 = vmatpush.bf16.xpose.msra.mxu0 0
    %625 = vmatpush.bf16.xpose.msra.mxu0 0
    %626 = vmatpush.bf16.xpose.msra.mxu0 0
    %627 = vmatpush.bf16.xpose.msra.mxu0 0
    %628 = vmatpush.bf16.xpose.msra.mxu0 0
    %629 = vmatpush.bf16.xpose.msra.mxu0 0
    %630 = vmatpush.bf16.xpose.msra.mxu0 0
    %631 = vmatpush.bf16.xpose.msra.mxu0 %v622
    %632 = vmatmul.bf16.gmra.mxu0 %v619
    %v633 = vpop.f32.mrf.mxu0
    %v634 = vadd.f32 0.0, %v633
    %v635 = vpop.f32.mrf.mxu0
    %v636 = vadd.f32 0.0, %v635
    %637 = vdwg.mxu0
    %v640 = vunpack.c.l.b16 %v355
    %v641 = vunpack.c.l.b16 %v356
    %v642 = vpack.c.b16 %v641, %v640
    %643 = vrot.lane.b32.xlu0 %v642, 96
    %v644 = vpop.permute.xlu0 %643
    %v646 = vsel %vm374, %v642, 0
    %v649 = vsel %vm374, %v644, 0
    %651 = vmatpush.bf16.xpose.msra.mxu0 0
    %652 = vmatpush.bf16.xpose.msra.mxu0 0
    %653 = vmatpush.bf16.xpose.msra.mxu0 0
    %654 = vmatpush.bf16.xpose.msra.mxu0 0
    %655 = vmatpush.bf16.xpose.msra.mxu0 0
    %656 = vmatpush.bf16.xpose.msra.mxu0 0
    %657 = vmatpush.bf16.xpose.msra.mxu0 0
    %658 = vmatpush.bf16.xpose.msra.mxu0 %v649
    %659 = vmatmul.bf16.gmra.mxu0 %v646
    %v660 = vpop.f32.mrf.mxu0
    %v661 = vadd.f32 0.0, %v660
    %v662 = vpop.f32.mrf.mxu0
    %v663 = vadd.f32 0.0, %v662
    %664 = vdwg.mxu0
    %v667 = vunpack.c.l.b16 %v357
    %v668 = vunpack.c.l.b16 %v358
    %v669 = vpack.c.b16 %v668, %v667
    %670 = vrot.lane.b32.xlu0 %v669, 96
    %v671 = vpop.permute.xlu0 %670
    %v673 = vsel %vm374, %v669, 0
    %v676 = vsel %vm374, %v671, 0
    %678 = vmatpush.bf16.xpose.msra.mxu0 0
    %679 = vmatpush.bf16.xpose.msra.mxu0 0
    %680 = vmatpush.bf16.xpose.msra.mxu0 0
    %681 = vmatpush.bf16.xpose.msra.mxu0 0
    %682 = vmatpush.bf16.xpose.msra.mxu0 0
    %683 = vmatpush.bf16.xpose.msra.mxu0 0
    %684 = vmatpush.bf16.xpose.msra.mxu0 0
    %685 = vmatpush.bf16.xpose.msra.mxu0 %v676
    %686 = vmatmul.bf16.gmra.mxu0 %v673
    %v687 = vpop.f32.mrf.mxu0
    %v688 = vadd.f32 0.0, %v687
    %v689 = vpop.f32.mrf.mxu0
    %v690 = vadd.f32 0.0, %v689
    %691 = vdwg.mxu0
    %v694 = vunpack.c.l.b16 %v359
    %v695 = vunpack.c.l.b16 %v360
    %v696 = vpack.c.b16 %v695, %v694
    %697 = vrot.lane.b32.xlu0 %v696, 96
    %v698 = vpop.permute.xlu0 %697
    %v700 = vsel %vm374, %v696, 0
    %v703 = vsel %vm374, %v698, 0
    %705 = vmatpush.bf16.xpose.msra.mxu0 0
    %706 = vmatpush.bf16.xpose.msra.mxu0 0
    %707 = vmatpush.bf16.xpose.msra.mxu0 0
    %708 = vmatpush.bf16.xpose.msra.mxu0 0
    %709 = vmatpush.bf16.xpose.msra.mxu0 0
    %710 = vmatpush.bf16.xpose.msra.mxu0 0
    %711 = vmatpush.bf16.xpose.msra.mxu0 0
    %712 = vmatpush.bf16.xpose.msra.mxu0 %v703
    %713 = vmatmul.bf16.gmra.mxu0 %v700
    %v714 = vpop.f32.mrf.mxu0
    %v715 = vadd.f32 0.0, %v714
    %v716 = vpop.f32.mrf.mxu0
    %v717 = vadd.f32 0.0, %v716
    %718 = vdwg.mxu0
    %v721 = vunpack.c.l.b16 %v361
    %v722 = vunpack.c.l.b16 %v362
    %v723 = vpack.c.b16 %v722, %v721
    %724 = vrot.lane.b32.xlu0 %v723, 96
    %v725 = vpop.permute.xlu0 %724
    %v727 = vsel %vm374, %v723, 0
    %v730 = vsel %vm374, %v725, 0
    %732 = vmatpush.bf16.xpose.msra.mxu0 0
    %733 = vmatpush.bf16.xpose.msra.mxu0 0
    %734 = vmatpush.bf16.xpose.msra.mxu0 0
    %735 = vmatpush.bf16.xpose.msra.mxu0 0
    %736 = vmatpush.bf16.xpose.msra.mxu0 0
    %737 = vmatpush.bf16.xpose.msra.mxu0 0
    %738 = vmatpush.bf16.xpose.msra.mxu0 0
    %739 = vmatpush.bf16.xpose.msra.mxu0 %v730
    %740 = vmatmul.bf16.gmra.mxu0 %v727
    %v741 = vpop.f32.mrf.mxu0
    %v742 = vadd.f32 0.0, %v741
    %v743 = vpop.f32.mrf.mxu0
    %v744 = vadd.f32 0.0, %v743
    %745 = vdwg.mxu0
    %v748 = vunpack.c.l.b16 %v363
    %v749 = vunpack.c.l.b16 %v364
    %v750 = vpack.c.b16 %v749, %v748
    %751 = vrot.lane.b32.xlu0 %v750, 96
    %v752 = vpop.permute.xlu0 %751
    %v754 = vsel %vm374, %v750, 0
    %v757 = vsel %vm374, %v752, 0
    %759 = vmatpush.bf16.xpose.msra.mxu0 0
    %760 = vmatpush.bf16.xpose.msra.mxu0 0
    %761 = vmatpush.bf16.xpose.msra.mxu0 0
    %762 = vmatpush.bf16.xpose.msra.mxu0 0
    %763 = vmatpush.bf16.xpose.msra.mxu0 0
    %764 = vmatpush.bf16.xpose.msra.mxu0 0
    %765 = vmatpush.bf16.xpose.msra.mxu0 0
    %766 = vmatpush.bf16.xpose.msra.mxu0 %v757
    %767 = vmatmul.bf16.gmra.mxu0 %v754
    %v768 = vpop.f32.mrf.mxu0
    %v769 = vadd.f32 0.0, %v768
    %v770 = vpop.f32.mrf.mxu0
    %v771 = vadd.f32 0.0, %v770
    %772 = vdwg.mxu0
    %v775 = vunpack.c.l.b16 %v365
    %v776 = vunpack.c.l.b16 %v366
    %v777 = vpack.c.b16 %v776, %v775
    %778 = vrot.lane.b32.xlu0 %v777, 96
    %v779 = vpop.permute.xlu0 %778
    %v781 = vsel %vm374, %v777, 0
    %v784 = vsel %vm374, %v779, 0
    %786 = vmatpush.bf16.xpose.msra.mxu0 0
    %787 = vmatpush.bf16.xpose.msra.mxu0 0
    %788 = vmatpush.bf16.xpose.msra.mxu0 0
    %789 = vmatpush.bf16.xpose.msra.mxu0 0
    %790 = vmatpush.bf16.xpose.msra.mxu0 0
    %791 = vmatpush.bf16.xpose.msra.mxu0 0
    %792 = vmatpush.bf16.xpose.msra.mxu0 0
    %793 = vmatpush.bf16.xpose.msra.mxu0 %v784
    %794 = vmatmul.bf16.gmra.mxu0 %v781
    %v795 = vpop.f32.mrf.mxu0
    %v796 = vadd.f32 0.0, %v795
    %v797 = vpop.f32.mrf.mxu0
    %v798 = vadd.f32 0.0, %v797
    %799 = vdwg.mxu0
    %v800 = vmul.f32 %v391, 0.35355338
    %v801 = vmul.f32 %v393, 0.35355338
    %v802 = vmul.f32 %v418, 0.35355338
    %v803 = vmul.f32 %v420, 0.35355338
    %v804 = vmul.f32 %v445, 0.35355338
    %v805 = vmul.f32 %v447, 0.35355338
    %v806 = vmul.f32 %v472, 0.35355338
    %v807 = vmul.f32 %v474, 0.35355338
    %v808 = vmul.f32 %v499, 0.35355338
    %v809 = vmul.f32 %v501, 0.35355338
    %v810 = vmul.f32 %v526, 0.35355338
    %v811 = vmul.f32 %v528, 0.35355338
    %v812 = vmul.f32 %v553, 0.35355338
    %v813 = vmul.f32 %v555, 0.35355338
    %v814 = vmul.f32 %v580, 0.35355338
    %v815 = vmul.f32 %v582, 0.35355338
    %v816 = vmul.f32 %v607, 0.35355338
    %v817 = vmul.f32 %v609, 0.35355338
    %v818 = vmul.f32 %v634, 0.35355338
    %v819 = vmul.f32 %v636, 0.35355338
    %v820 = vmul.f32 %v661, 0.35355338
    %v821 = vmul.f32 %v663, 0.35355338
    %v822 = vmul.f32 %v688, 0.35355338
    %v823 = vmul.f32 %v690, 0.35355338
    %v824 = vmul.f32 %v715, 0.35355338
    %v825 = vmul.f32 %v717, 0.35355338
    %v826 = vmul.f32 %v742, 0.35355338
    %v827 = vmul.f32 %v744, 0.35355338
    %v828 = vmul.f32 %v769, 0.35355338
    %v829 = vmul.f32 %v771, 0.35355338
    %v830 = vmul.f32 %v796, 0.35355338
    %v831 = vmul.f32 %v798, 0.35355338
    %vm832 = vcmask 130048
    %v833 = vsel %vm832, %v800, -inf
    %834 = vmax.xlane.f32.xlu0 %v833
    %v835 = vpop.xlane.xlu0 %834
    %v836 = vsel %vm832, %v801, -inf
    %837 = vmax.xlane.f32.xlu0 %v836
    %v838 = vpop.xlane.xlu0 %837
    %v839 = vsel %vm832, %v802, -inf
    %840 = vmax.xlane.f32.xlu0 %v839
    %v841 = vpop.xlane.xlu0 %840
    %v842 = vsel %vm832, %v803, -inf
    %843 = vmax.xlane.f32.xlu0 %v842
    %v844 = vpop.xlane.xlu0 %843
    %v845 = vsel %vm832, %v804, -inf
    %846 = vmax.xlane.f32.xlu0 %v845
    %v847 = vpop.xlane.xlu0 %846
    %v848 = vsel %vm832, %v805, -inf
    %849 = vmax.xlane.f32.xlu0 %v848
    %v850 = vpop.xlane.xlu0 %849
    %v851 = vsel %vm832, %v806, -inf
    %852 = vmax.xlane.f32.xlu0 %v851
    %v853 = vpop.xlane.xlu0 %852
    %v854 = vsel %vm832, %v807, -inf
    %855 = vmax.xlane.f32.xlu0 %v854
    %v856 = vpop.xlane.xlu0 %855
    %v857 = vsel %vm832, %v808, -inf
    %858 = vmax.xlane.f32.xlu0 %v857
    %v859 = vpop.xlane.xlu0 %858
    %v860 = vsel %vm832, %v809, -inf
    %861 = vmax.xlane.f32.xlu0 %v860
    %v862 = vpop.xlane.xlu0 %861
    %v863 = vsel %vm832, %v810, -inf
    %864 = vmax.xlane.f32.xlu0 %v863
    %v865 = vpop.xlane.xlu0 %864
    %v866 = vsel %vm832, %v811, -inf
    %867 = vmax.xlane.f32.xlu0 %v866
    %v868 = vpop.xlane.xlu0 %867
    %v869 = vsel %vm832, %v812, -inf
    %870 = vmax.xlane.f32.xlu0 %v869
    %v871 = vpop.xlane.xlu0 %870
    %v872 = vsel %vm832, %v813, -inf
    %873 = vmax.xlane.f32.xlu0 %v872
    %v874 = vpop.xlane.xlu0 %873
    %v875 = vsel %vm832, %v814, -inf
    %876 = vmax.xlane.f32.xlu0 %v875
    %v877 = vpop.xlane.xlu0 %876
    %v878 = vsel %vm832, %v815, -inf
    %879 = vmax.xlane.f32.xlu0 %v878
    %v880 = vpop.xlane.xlu0 %879
    %v881 = vsel %vm832, %v816, -inf
    %882 = vmax.xlane.f32.xlu0 %v881
    %v883 = vpop.xlane.xlu0 %882
    %v884 = vsel %vm832, %v817, -inf
    %885 = vmax.xlane.f32.xlu0 %v884
    %v886 = vpop.xlane.xlu0 %885
    %v887 = vsel %vm832, %v818, -inf
    %888 = vmax.xlane.f32.xlu0 %v887
    %v889 = vpop.xlane.xlu0 %888
    %v890 = vsel %vm832, %v819, -inf
    %891 = vmax.xlane.f32.xlu0 %v890
    %v892 = vpop.xlane.xlu0 %891
    %v893 = vsel %vm832, %v820, -inf
    %894 = vmax.xlane.f32.xlu0 %v893
    %v895 = vpop.xlane.xlu0 %894
    %v896 = vsel %vm832, %v821, -inf
    %897 = vmax.xlane.f32.xlu0 %v896
    %v898 = vpop.xlane.xlu0 %897
    %v899 = vsel %vm832, %v822, -inf
    %900 = vmax.xlane.f32.xlu0 %v899
    %v901 = vpop.xlane.xlu0 %900
    %v902 = vsel %vm832, %v823, -inf
    %903 = vmax.xlane.f32.xlu0 %v902
    %v904 = vpop.xlane.xlu0 %903
    %v905 = vsel %vm832, %v824, -inf
    %906 = vmax.xlane.f32.xlu0 %v905
    %v907 = vpop.xlane.xlu0 %906
    %v908 = vsel %vm832, %v825, -inf
    %909 = vmax.xlane.f32.xlu0 %v908
    %v910 = vpop.xlane.xlu0 %909
    %v911 = vsel %vm832, %v826, -inf
    %912 = vmax.xlane.f32.xlu0 %v911
    %v913 = vpop.xlane.xlu0 %912
    %v914 = vsel %vm832, %v827, -inf
    %915 = vmax.xlane.f32.xlu0 %v914
    %v916 = vpop.xlane.xlu0 %915
    %v917 = vsel %vm832, %v828, -inf
    %918 = vmax.xlane.f32.xlu0 %v917
    %v919 = vpop.xlane.xlu0 %918
    %v920 = vsel %vm832, %v829, -inf
    %921 = vmax.xlane.f32.xlu0 %v920
    %v922 = vpop.xlane.xlu0 %921
    %v923 = vsel %vm832, %v830, -inf
    %924 = vmax.xlane.f32.xlu0 %v923
    %v925 = vpop.xlane.xlu0 %924
    %v926 = vsel %vm832, %v831, -inf
    %927 = vmax.xlane.f32.xlu0 %v926
    %v928 = vpop.xlane.xlu0 %927
    %v929 = vsub.f32 %v800, %v835
    %v930 = vsub.f32 %v801, %v838
    %v931 = vsub.f32 %v802, %v841
    %v932 = vsub.f32 %v803, %v844
    %v933 = vsub.f32 %v804, %v847
    %v934 = vsub.f32 %v805, %v850
    %v935 = vsub.f32 %v806, %v853
    %v936 = vsub.f32 %v807, %v856
    %v937 = vsub.f32 %v808, %v859
    %v938 = vsub.f32 %v809, %v862
    %v939 = vsub.f32 %v810, %v865
    %v940 = vsub.f32 %v811, %v868
    %v941 = vsub.f32 %v812, %v871
    %v942 = vsub.f32 %v813, %v874
    %v943 = vsub.f32 %v814, %v877
    %v944 = vsub.f32 %v815, %v880
    %v945 = vsub.f32 %v816, %v883
    %v946 = vsub.f32 %v817, %v886
    %v947 = vsub.f32 %v818, %v889
    %v948 = vsub.f32 %v819, %v892
    %v949 = vsub.f32 %v820, %v895
    %v950 = vsub.f32 %v821, %v898
    %v951 = vsub.f32 %v822, %v901
    %v952 = vsub.f32 %v823, %v904
    %v953 = vsub.f32 %v824, %v907
    %v954 = vsub.f32 %v825, %v910
    %v955 = vsub.f32 %v826, %v913
    %v956 = vsub.f32 %v827, %v916
    %v957 = vsub.f32 %v828, %v919
    %v958 = vsub.f32 %v829, %v922
    %v959 = vsub.f32 %v830, %v925
    %v960 = vsub.f32 %v831, %v928
    %v961 = vmul.f32 %v929, 1.442695
    %v962 = vpow.pop %v961
    %v963 = vmul.f32 %v930, 1.442695
    %v964 = vpow.pop %v963
    %v965 = vmul.f32 %v931, 1.442695
    %v966 = vpow.pop %v965
    %v967 = vmul.f32 %v932, 1.442695
    %v968 = vpow.pop %v967
    %v969 = vmul.f32 %v933, 1.442695
    %v970 = vpow.pop %v969
    %v971 = vmul.f32 %v934, 1.442695
    %v972 = vpow.pop %v971
    %v973 = vmul.f32 %v935, 1.442695
    %v974 = vpow.pop %v973
    %v975 = vmul.f32 %v936, 1.442695
    %v976 = vpow.pop %v975
    %v977 = vmul.f32 %v937, 1.442695
    %v978 = vpow.pop %v977
    %v979 = vmul.f32 %v938, 1.442695
    %v980 = vpow.pop %v979
    %v981 = vmul.f32 %v939, 1.442695
    %v982 = vpow.pop %v981
    %v983 = vmul.f32 %v940, 1.442695
    %v984 = vpow.pop %v983
    %v985 = vmul.f32 %v941, 1.442695
    %v986 = vpow.pop %v985
    %v987 = vmul.f32 %v942, 1.442695
    %v988 = vpow.pop %v987
    %v989 = vmul.f32 %v943, 1.442695
    %v990 = vpow.pop %v989
    %v991 = vmul.f32 %v944, 1.442695
    %v992 = vpow.pop %v991
    %v993 = vmul.f32 %v945, 1.442695
    %v994 = vpow.pop %v993
    %v995 = vmul.f32 %v946, 1.442695
    %v996 = vpow.pop %v995
    %v997 = vmul.f32 %v947, 1.442695
    %v998 = vpow.pop %v997
    %v999 = vmul.f32 %v948, 1.442695
    %v1000 = vpow.pop %v999
    %v1001 = vmul.f32 %v949, 1.442695
    %v1002 = vpow.pop %v1001
    %v1003 = vmul.f32 %v950, 1.442695
    %v1004 = vpow.pop %v1003
    %v1005 = vmul.f32 %v951, 1.442695
    %v1006 = vpow.pop %v1005
    %v1007 = vmul.f32 %v952, 1.442695
    %v1008 = vpow.pop %v1007
    %v1009 = vmul.f32 %v953, 1.442695
    %v1010 = vpow.pop %v1009
    %v1011 = vmul.f32 %v954, 1.442695
    %v1012 = vpow.pop %v1011
    %v1013 = vmul.f32 %v955, 1.442695
    %v1014 = vpow.pop %v1013
    %v1015 = vmul.f32 %v956, 1.442695
    %v1016 = vpow.pop %v1015
    %v1017 = vmul.f32 %v957, 1.442695
    %v1018 = vpow.pop %v1017
    %v1019 = vmul.f32 %v958, 1.442695
    %v1020 = vpow.pop %v1019
    %v1021 = vmul.f32 %v959, 1.442695
    %v1022 = vpow.pop %v1021
    %v1023 = vmul.f32 %v960, 1.442695
    %v1024 = vpow.pop %v1023
    %v1025 = vsel %vm832, %v962, 0.0
    %1026 = vadd.xlane.f32.xlu0 %v1025
    %v1027 = vpop.xlane.xlu0 %1026
    %v1028 = vsel %vm832, %v964, 0.0
    %1029 = vadd.xlane.f32.xlu0 %v1028
    %v1030 = vpop.xlane.xlu0 %1029
    %v1031 = vsel %vm832, %v966, 0.0
    %1032 = vadd.xlane.f32.xlu0 %v1031
    %v1033 = vpop.xlane.xlu0 %1032
    %v1034 = vsel %vm832, %v968, 0.0
    %1035 = vadd.xlane.f32.xlu0 %v1034
    %v1036 = vpop.xlane.xlu0 %1035
    %v1037 = vsel %vm832, %v970, 0.0
    %1038 = vadd.xlane.f32.xlu0 %v1037
    %v1039 = vpop.xlane.xlu0 %1038
    %v1040 = vsel %vm832, %v972, 0.0
    %1041 = vadd.xlane.f32.xlu0 %v1040
    %v1042 = vpop.xlane.xlu0 %1041
    %v1043 = vsel %vm832, %v974, 0.0
    %1044 = vadd.xlane.f32.xlu0 %v1043
    %v1045 = vpop.xlane.xlu0 %1044
    %v1046 = vsel %vm832, %v976, 0.0
    %1047 = vadd.xlane.f32.xlu0 %v1046
    %v1048 = vpop.xlane.xlu0 %1047
    %v1049 = vsel %vm832, %v978, 0.0
    %1050 = vadd.xlane.f32.xlu0 %v1049
    %v1051 = vpop.xlane.xlu0 %1050
    %v1052 = vsel %vm832, %v980, 0.0
    %1053 = vadd.xlane.f32.xlu0 %v1052
    %v1054 = vpop.xlane.xlu0 %1053
    %v1055 = vsel %vm832, %v982, 0.0
    %1056 = vadd.xlane.f32.xlu0 %v1055
    %v1057 = vpop.xlane.xlu0 %1056
    %v1058 = vsel %vm832, %v984, 0.0
    %1059 = vadd.xlane.f32.xlu0 %v1058
    %v1060 = vpop.xlane.xlu0 %1059
    %v1061 = vsel %vm832, %v986, 0.0
    %1062 = vadd.xlane.f32.xlu0 %v1061
    %v1063 = vpop.xlane.xlu0 %1062
    %v1064 = vsel %vm832, %v988, 0.0
    %1065 = vadd.xlane.f32.xlu0 %v1064
    %v1066 = vpop.xlane.xlu0 %1065
    %v1067 = vsel %vm832, %v990, 0.0
    %1068 = vadd.xlane.f32.xlu0 %v1067
    %v1069 = vpop.xlane.xlu0 %1068
    %v1070 = vsel %vm832, %v992, 0.0
    %1071 = vadd.xlane.f32.xlu0 %v1070
    %v1072 = vpop.xlane.xlu0 %1071
    %v1073 = vsel %vm832, %v994, 0.0
    %1074 = vadd.xlane.f32.xlu0 %v1073
    %v1075 = vpop.xlane.xlu0 %1074
    %v1076 = vsel %vm832, %v996, 0.0
    %1077 = vadd.xlane.f32.xlu0 %v1076
    %v1078 = vpop.xlane.xlu0 %1077
    %v1079 = vsel %vm832, %v998, 0.0
    %1080 = vadd.xlane.f32.xlu0 %v1079
    %v1081 = vpop.xlane.xlu0 %1080
    %v1082 = vsel %vm832, %v1000, 0.0
    %1083 = vadd.xlane.f32.xlu0 %v1082
    %v1084 = vpop.xlane.xlu0 %1083
    %v1085 = vsel %vm832, %v1002, 0.0
    %1086 = vadd.xlane.f32.xlu0 %v1085
    %v1087 = vpop.xlane.xlu0 %1086
    %v1088 = vsel %vm832, %v1004, 0.0
    %1089 = vadd.xlane.f32.xlu0 %v1088
    %v1090 = vpop.xlane.xlu0 %1089
    %v1091 = vsel %vm832, %v1006, 0.0
    %1092 = vadd.xlane.f32.xlu0 %v1091
    %v1093 = vpop.xlane.xlu0 %1092
    %v1094 = vsel %vm832, %v1008, 0.0
    %1095 = vadd.xlane.f32.xlu0 %v1094
    %v1096 = vpop.xlane.xlu0 %1095
    %v1097 = vsel %vm832, %v1010, 0.0
    %1098 = vadd.xlane.f32.xlu0 %v1097
    %v1099 = vpop.xlane.xlu0 %1098
    %v1100 = vsel %vm832, %v1012, 0.0
    %1101 = vadd.xlane.f32.xlu0 %v1100
    %v1102 = vpop.xlane.xlu0 %1101
    %v1103 = vsel %vm832, %v1014, 0.0
    %1104 = vadd.xlane.f32.xlu0 %v1103
    %v1105 = vpop.xlane.xlu0 %1104
    %v1106 = vsel %vm832, %v1016, 0.0
    %1107 = vadd.xlane.f32.xlu0 %v1106
    %v1108 = vpop.xlane.xlu0 %1107
    %v1109 = vsel %vm832, %v1018, 0.0
    %1110 = vadd.xlane.f32.xlu0 %v1109
    %v1111 = vpop.xlane.xlu0 %1110
    %v1112 = vsel %vm832, %v1020, 0.0
    %1113 = vadd.xlane.f32.xlu0 %v1112
    %v1114 = vpop.xlane.xlu0 %1113
    %v1115 = vsel %vm832, %v1022, 0.0
    %1116 = vadd.xlane.f32.xlu0 %v1115
    %v1117 = vpop.xlane.xlu0 %1116
    %v1118 = vsel %vm832, %v1024, 0.0
    %1119 = vadd.xlane.f32.xlu0 %v1118
    %v1120 = vpop.xlane.xlu0 %1119
    %v1121 = vrcp.pop %v1027
    %v1122 = vmul.f32 %v1027, %v1121
    %v1123 = vsub.f32 1.0, %v1122
    %v1124 = vmul.f32 %v1121, %v1123
    %v1125 = vadd.f32 %v1121, %v1124
    %vm1126 = vweird.f32 %v1027
    %vm1127 = vweird.f32 %v1121
    %vm1128 = vmor %vm1126, %vm1127
    %v1129 = vsel %vm1128, %v1121, %v1125
    %v1130 = vand.u32 2147483647, %v1027
    %vm1131 = vcmp.eq.f32.partialorder %v1130, 8.507059e+37
    %v1132 = vand.u32 %v1027, 2147483648
    %v1133 = vor.u32 1.1754944e-38, %v1132
    %v1134 = vsel %vm1131, %v1133, %v1129
    %v1135 = vmul.f32 %v962, %v1134
    %v1136 = vrcp.pop %v1030
    %v1137 = vmul.f32 %v1030, %v1136
    %v1138 = vsub.f32 1.0, %v1137
    %v1139 = vmul.f32 %v1136, %v1138
    %v1140 = vadd.f32 %v1136, %v1139
    %vm1141 = vweird.f32 %v1030
    %vm1142 = vweird.f32 %v1136
    %vm1143 = vmor %vm1141, %vm1142
    %v1144 = vsel %vm1143, %v1136, %v1140
    %v1145 = vand.u32 2147483647, %v1030
    %vm1146 = vcmp.eq.f32.partialorder %v1145, 8.507059e+37
    %v1147 = vand.u32 %v1030, 2147483648
    %v1148 = vor.u32 1.1754944e-38, %v1147
    %v1149 = vsel %vm1146, %v1148, %v1144
    %v1150 = vmul.f32 %v964, %v1149
    %v1151 = vrcp.pop %v1033
    %v1152 = vmul.f32 %v1033, %v1151
    %v1153 = vsub.f32 1.0, %v1152
    %v1154 = vmul.f32 %v1151, %v1153
    %v1155 = vadd.f32 %v1151, %v1154
    %vm1156 = vweird.f32 %v1033
    %vm1157 = vweird.f32 %v1151
    %vm1158 = vmor %vm1156, %vm1157
    %v1159 = vsel %vm1158, %v1151, %v1155
    %v1160 = vand.u32 2147483647, %v1033
    %vm1161 = vcmp.eq.f32.partialorder %v1160, 8.507059e+37
    %v1162 = vand.u32 %v1033, 2147483648
    %v1163 = vor.u32 1.1754944e-38, %v1162
    %v1164 = vsel %vm1161, %v1163, %v1159
    %v1165 = vmul.f32 %v966, %v1164
    %v1166 = vrcp.pop %v1036
    %v1167 = vmul.f32 %v1036, %v1166
    %v1168 = vsub.f32 1.0, %v1167
    %v1169 = vmul.f32 %v1166, %v1168
    %v1170 = vadd.f32 %v1166, %v1169
    %vm1171 = vweird.f32 %v1036
    %vm1172 = vweird.f32 %v1166
    %vm1173 = vmor %vm1171, %vm1172
    %v1174 = vsel %vm1173, %v1166, %v1170
    %v1175 = vand.u32 2147483647, %v1036
    %vm1176 = vcmp.eq.f32.partialorder %v1175, 8.507059e+37
    %v1177 = vand.u32 %v1036, 2147483648
    %v1178 = vor.u32 1.1754944e-38, %v1177
    %v1179 = vsel %vm1176, %v1178, %v1174
    %v1180 = vmul.f32 %v968, %v1179
    %v1181 = vrcp.pop %v1039
    %v1182 = vmul.f32 %v1039, %v1181
    %v1183 = vsub.f32 1.0, %v1182
    %v1184 = vmul.f32 %v1181, %v1183
    %v1185 = vadd.f32 %v1181, %v1184
    %vm1186 = vweird.f32 %v1039
    %vm1187 = vweird.f32 %v1181
    %vm1188 = vmor %vm1186, %vm1187
    %v1189 = vsel %vm1188, %v1181, %v1185
    %v1190 = vand.u32 2147483647, %v1039
    %vm1191 = vcmp.eq.f32.partialorder %v1190, 8.507059e+37
    %v1192 = vand.u32 %v1039, 2147483648
    %v1193 = vor.u32 1.1754944e-38, %v1192
    %v1194 = vsel %vm1191, %v1193, %v1189
    %v1195 = vmul.f32 %v970, %v1194
    %v1196 = vrcp.pop %v1042
    %v1197 = vmul.f32 %v1042, %v1196
    %v1198 = vsub.f32 1.0, %v1197
    %v1199 = vmul.f32 %v1196, %v1198
    %v1200 = vadd.f32 %v1196, %v1199
    %vm1201 = vweird.f32 %v1042
    %vm1202 = vweird.f32 %v1196
    %vm1203 = vmor %vm1201, %vm1202
    %v1204 = vsel %vm1203, %v1196, %v1200
    %v1205 = vand.u32 2147483647, %v1042
    %vm1206 = vcmp.eq.f32.partialorder %v1205, 8.507059e+37
    %v1207 = vand.u32 %v1042, 2147483648
    %v1208 = vor.u32 1.1754944e-38, %v1207
    %v1209 = vsel %vm1206, %v1208, %v1204
    %v1210 = vmul.f32 %v972, %v1209
    %v1211 = vrcp.pop %v1045
    %v1212 = vmul.f32 %v1045, %v1211
    %v1213 = vsub.f32 1.0, %v1212
    %v1214 = vmul.f32 %v1211, %v1213
    %v1215 = vadd.f32 %v1211, %v1214
    %vm1216 = vweird.f32 %v1045
    %vm1217 = vweird.f32 %v1211
    %vm1218 = vmor %vm1216, %vm1217
    %v1219 = vsel %vm1218, %v1211, %v1215
    %v1220 = vand.u32 2147483647, %v1045
    %vm1221 = vcmp.eq.f32.partialorder %v1220, 8.507059e+37
    %v1222 = vand.u32 %v1045, 2147483648
    %v1223 = vor.u32 1.1754944e-38, %v1222
    %v1224 = vsel %vm1221, %v1223, %v1219
    %v1225 = vmul.f32 %v974, %v1224
    %v1226 = vrcp.pop %v1048
    %v1227 = vmul.f32 %v1048, %v1226
    %v1228 = vsub.f32 1.0, %v1227
    %v1229 = vmul.f32 %v1226, %v1228
    %v1230 = vadd.f32 %v1226, %v1229
    %vm1231 = vweird.f32 %v1048
    %vm1232 = vweird.f32 %v1226
    %vm1233 = vmor %vm1231, %vm1232
    %v1234 = vsel %vm1233, %v1226, %v1230
    %v1235 = vand.u32 2147483647, %v1048
    %vm1236 = vcmp.eq.f32.partialorder %v1235, 8.507059e+37
    %v1237 = vand.u32 %v1048, 2147483648
    %v1238 = vor.u32 1.1754944e-38, %v1237
    %v1239 = vsel %vm1236, %v1238, %v1234
    %v1240 = vmul.f32 %v976, %v1239
    %v1241 = vrcp.pop %v1051
    %v1242 = vmul.f32 %v1051, %v1241
    %v1243 = vsub.f32 1.0, %v1242
    %v1244 = vmul.f32 %v1241, %v1243
    %v1245 = vadd.f32 %v1241, %v1244
    %vm1246 = vweird.f32 %v1051
    %vm1247 = vweird.f32 %v1241
    %vm1248 = vmor %vm1246, %vm1247
    %v1249 = vsel %vm1248, %v1241, %v1245
    %v1250 = vand.u32 2147483647, %v1051
    %vm1251 = vcmp.eq.f32.partialorder %v1250, 8.507059e+37
    %v1252 = vand.u32 %v1051, 2147483648
    %v1253 = vor.u32 1.1754944e-38, %v1252
    %v1254 = vsel %vm1251, %v1253, %v1249
    %v1255 = vmul.f32 %v978, %v1254
    %v1256 = vrcp.pop %v1054
    %v1257 = vmul.f32 %v1054, %v1256
    %v1258 = vsub.f32 1.0, %v1257
    %v1259 = vmul.f32 %v1256, %v1258
    %v1260 = vadd.f32 %v1256, %v1259
    %vm1261 = vweird.f32 %v1054
    %vm1262 = vweird.f32 %v1256
    %vm1263 = vmor %vm1261, %vm1262
    %v1264 = vsel %vm1263, %v1256, %v1260
    %v1265 = vand.u32 2147483647, %v1054
    %vm1266 = vcmp.eq.f32.partialorder %v1265, 8.507059e+37
    %v1267 = vand.u32 %v1054, 2147483648
    %v1268 = vor.u32 1.1754944e-38, %v1267
    %v1269 = vsel %vm1266, %v1268, %v1264
    %v1270 = vmul.f32 %v980, %v1269
    %v1271 = vrcp.pop %v1057
    %v1272 = vmul.f32 %v1057, %v1271
    %v1273 = vsub.f32 1.0, %v1272
    %v1274 = vmul.f32 %v1271, %v1273
    %v1275 = vadd.f32 %v1271, %v1274
    %vm1276 = vweird.f32 %v1057
    %vm1277 = vweird.f32 %v1271
    %vm1278 = vmor %vm1276, %vm1277
    %v1279 = vsel %vm1278, %v1271, %v1275
    %v1280 = vand.u32 2147483647, %v1057
    %vm1281 = vcmp.eq.f32.partialorder %v1280, 8.507059e+37
    %v1282 = vand.u32 %v1057, 2147483648
    %v1283 = vor.u32 1.1754944e-38, %v1282
    %v1284 = vsel %vm1281, %v1283, %v1279
    %v1285 = vmul.f32 %v982, %v1284
    %v1286 = vrcp.pop %v1060
    %v1287 = vmul.f32 %v1060, %v1286
    %v1288 = vsub.f32 1.0, %v1287
    %v1289 = vmul.f32 %v1286, %v1288
    %v1290 = vadd.f32 %v1286, %v1289
    %vm1291 = vweird.f32 %v1060
    %vm1292 = vweird.f32 %v1286
    %vm1293 = vmor %vm1291, %vm1292
    %v1294 = vsel %vm1293, %v1286, %v1290
    %v1295 = vand.u32 2147483647, %v1060
    %vm1296 = vcmp.eq.f32.partialorder %v1295, 8.507059e+37
    %v1297 = vand.u32 %v1060, 2147483648
    %v1298 = vor.u32 1.1754944e-38, %v1297
    %v1299 = vsel %vm1296, %v1298, %v1294
    %v1300 = vmul.f32 %v984, %v1299
    %v1301 = vrcp.pop %v1063
    %v1302 = vmul.f32 %v1063, %v1301
    %v1303 = vsub.f32 1.0, %v1302
    %v1304 = vmul.f32 %v1301, %v1303
    %v1305 = vadd.f32 %v1301, %v1304
    %vm1306 = vweird.f32 %v1063
    %vm1307 = vweird.f32 %v1301
    %vm1308 = vmor %vm1306, %vm1307
    %v1309 = vsel %vm1308, %v1301, %v1305
    %v1310 = vand.u32 2147483647, %v1063
    %vm1311 = vcmp.eq.f32.partialorder %v1310, 8.507059e+37
    %v1312 = vand.u32 %v1063, 2147483648
    %v1313 = vor.u32 1.1754944e-38, %v1312
    %v1314 = vsel %vm1311, %v1313, %v1309
    %v1315 = vmul.f32 %v986, %v1314
    %v1316 = vrcp.pop %v1066
    %v1317 = vmul.f32 %v1066, %v1316
    %v1318 = vsub.f32 1.0, %v1317
    %v1319 = vmul.f32 %v1316, %v1318
    %v1320 = vadd.f32 %v1316, %v1319
    %vm1321 = vweird.f32 %v1066
    %vm1322 = vweird.f32 %v1316
    %vm1323 = vmor %vm1321, %vm1322
    %v1324 = vsel %vm1323, %v1316, %v1320
    %v1325 = vand.u32 2147483647, %v1066
    %vm1326 = vcmp.eq.f32.partialorder %v1325, 8.507059e+37
    %v1327 = vand.u32 %v1066, 2147483648
    %v1328 = vor.u32 1.1754944e-38, %v1327
    %v1329 = vsel %vm1326, %v1328, %v1324
    %v1330 = vmul.f32 %v988, %v1329
    %v1331 = vrcp.pop %v1069
    %v1332 = vmul.f32 %v1069, %v1331
    %v1333 = vsub.f32 1.0, %v1332
    %v1334 = vmul.f32 %v1331, %v1333
    %v1335 = vadd.f32 %v1331, %v1334
    %vm1336 = vweird.f32 %v1069
    %vm1337 = vweird.f32 %v1331
    %vm1338 = vmor %vm1336, %vm1337
    %v1339 = vsel %vm1338, %v1331, %v1335
    %v1340 = vand.u32 2147483647, %v1069
    %vm1341 = vcmp.eq.f32.partialorder %v1340, 8.507059e+37
    %v1342 = vand.u32 %v1069, 2147483648
    %v1343 = vor.u32 1.1754944e-38, %v1342
    %v1344 = vsel %vm1341, %v1343, %v1339
    %v1345 = vmul.f32 %v990, %v1344
    %v1346 = vrcp.pop %v1072
    %v1347 = vmul.f32 %v1072, %v1346
    %v1348 = vsub.f32 1.0, %v1347
    %v1349 = vmul.f32 %v1346, %v1348
    %v1350 = vadd.f32 %v1346, %v1349
    %vm1351 = vweird.f32 %v1072
    %vm1352 = vweird.f32 %v1346
    %vm1353 = vmor %vm1351, %vm1352
    %v1354 = vsel %vm1353, %v1346, %v1350
    %v1355 = vand.u32 2147483647, %v1072
    %vm1356 = vcmp.eq.f32.partialorder %v1355, 8.507059e+37
    %v1357 = vand.u32 %v1072, 2147483648
    %v1358 = vor.u32 1.1754944e-38, %v1357
    %v1359 = vsel %vm1356, %v1358, %v1354
    %v1360 = vmul.f32 %v992, %v1359
    %v1361 = vrcp.pop %v1075
    %v1362 = vmul.f32 %v1075, %v1361
    %v1363 = vsub.f32 1.0, %v1362
    %v1364 = vmul.f32 %v1361, %v1363
    %v1365 = vadd.f32 %v1361, %v1364
    %vm1366 = vweird.f32 %v1075
    %vm1367 = vweird.f32 %v1361
    %vm1368 = vmor %vm1366, %vm1367
    %v1369 = vsel %vm1368, %v1361, %v1365
    %v1370 = vand.u32 2147483647, %v1075
    %vm1371 = vcmp.eq.f32.partialorder %v1370, 8.507059e+37
    %v1372 = vand.u32 %v1075, 2147483648
    %v1373 = vor.u32 1.1754944e-38, %v1372
    %v1374 = vsel %vm1371, %v1373, %v1369
    %v1375 = vmul.f32 %v994, %v1374
    %v1376 = vrcp.pop %v1078
    %v1377 = vmul.f32 %v1078, %v1376
    %v1378 = vsub.f32 1.0, %v1377
    %v1379 = vmul.f32 %v1376, %v1378
    %v1380 = vadd.f32 %v1376, %v1379
    %vm1381 = vweird.f32 %v1078
    %vm1382 = vweird.f32 %v1376
    %vm1383 = vmor %vm1381, %vm1382
    %v1384 = vsel %vm1383, %v1376, %v1380
    %v1385 = vand.u32 2147483647, %v1078
    %vm1386 = vcmp.eq.f32.partialorder %v1385, 8.507059e+37
    %v1387 = vand.u32 %v1078, 2147483648
    %v1388 = vor.u32 1.1754944e-38, %v1387
    %v1389 = vsel %vm1386, %v1388, %v1384
    %v1390 = vmul.f32 %v996, %v1389
    %v1391 = vrcp.pop %v1081
    %v1392 = vmul.f32 %v1081, %v1391
    %v1393 = vsub.f32 1.0, %v1392
    %v1394 = vmul.f32 %v1391, %v1393
    %v1395 = vadd.f32 %v1391, %v1394
    %vm1396 = vweird.f32 %v1081
    %vm1397 = vweird.f32 %v1391
    %vm1398 = vmor %vm1396, %vm1397
    %v1399 = vsel %vm1398, %v1391, %v1395
    %v1400 = vand.u32 2147483647, %v1081
    %vm1401 = vcmp.eq.f32.partialorder %v1400, 8.507059e+37
    %v1402 = vand.u32 %v1081, 2147483648
    %v1403 = vor.u32 1.1754944e-38, %v1402
    %v1404 = vsel %vm1401, %v1403, %v1399
    %v1405 = vmul.f32 %v998, %v1404
    %v1406 = vrcp.pop %v1084
    %v1407 = vmul.f32 %v1084, %v1406
    %v1408 = vsub.f32 1.0, %v1407
    %v1409 = vmul.f32 %v1406, %v1408
    %v1410 = vadd.f32 %v1406, %v1409
    %vm1411 = vweird.f32 %v1084
    %vm1412 = vweird.f32 %v1406
    %vm1413 = vmor %vm1411, %vm1412
    %v1414 = vsel %vm1413, %v1406, %v1410
    %v1415 = vand.u32 2147483647, %v1084
    %vm1416 = vcmp.eq.f32.partialorder %v1415, 8.507059e+37
    %v1417 = vand.u32 %v1084, 2147483648
    %v1418 = vor.u32 1.1754944e-38, %v1417
    %v1419 = vsel %vm1416, %v1418, %v1414
    %v1420 = vmul.f32 %v1000, %v1419
    %v1421 = vrcp.pop %v1087
    %v1422 = vmul.f32 %v1087, %v1421
    %v1423 = vsub.f32 1.0, %v1422
    %v1424 = vmul.f32 %v1421, %v1423
    %v1425 = vadd.f32 %v1421, %v1424
    %vm1426 = vweird.f32 %v1087
    %vm1427 = vweird.f32 %v1421
    %vm1428 = vmor %vm1426, %vm1427
    %v1429 = vsel %vm1428, %v1421, %v1425
    %v1430 = vand.u32 2147483647, %v1087
    %vm1431 = vcmp.eq.f32.partialorder %v1430, 8.507059e+37
    %v1432 = vand.u32 %v1087, 2147483648
    %v1433 = vor.u32 1.1754944e-38, %v1432
    %v1434 = vsel %vm1431, %v1433, %v1429
    %v1435 = vmul.f32 %v1002, %v1434
    %v1436 = vrcp.pop %v1090
    %v1437 = vmul.f32 %v1090, %v1436
    %v1438 = vsub.f32 1.0, %v1437
    %v1439 = vmul.f32 %v1436, %v1438
    %v1440 = vadd.f32 %v1436, %v1439
    %vm1441 = vweird.f32 %v1090
    %vm1442 = vweird.f32 %v1436
    %vm1443 = vmor %vm1441, %vm1442
    %v1444 = vsel %vm1443, %v1436, %v1440
    %v1445 = vand.u32 2147483647, %v1090
    %vm1446 = vcmp.eq.f32.partialorder %v1445, 8.507059e+37
    %v1447 = vand.u32 %v1090, 2147483648
    %v1448 = vor.u32 1.1754944e-38, %v1447
    %v1449 = vsel %vm1446, %v1448, %v1444
    %v1450 = vmul.f32 %v1004, %v1449
    %v1451 = vrcp.pop %v1093
    %v1452 = vmul.f32 %v1093, %v1451
    %v1453 = vsub.f32 1.0, %v1452
    %v1454 = vmul.f32 %v1451, %v1453
    %v1455 = vadd.f32 %v1451, %v1454
    %vm1456 = vweird.f32 %v1093
    %vm1457 = vweird.f32 %v1451
    %vm1458 = vmor %vm1456, %vm1457
    %v1459 = vsel %vm1458, %v1451, %v1455
    %v1460 = vand.u32 2147483647, %v1093
    %vm1461 = vcmp.eq.f32.partialorder %v1460, 8.507059e+37
    %v1462 = vand.u32 %v1093, 2147483648
    %v1463 = vor.u32 1.1754944e-38, %v1462
    %v1464 = vsel %vm1461, %v1463, %v1459
    %v1465 = vmul.f32 %v1006, %v1464
    %v1466 = vrcp.pop %v1096
    %v1467 = vmul.f32 %v1096, %v1466
    %v1468 = vsub.f32 1.0, %v1467
    %v1469 = vmul.f32 %v1466, %v1468
    %v1470 = vadd.f32 %v1466, %v1469
    %vm1471 = vweird.f32 %v1096
    %vm1472 = vweird.f32 %v1466
    %vm1473 = vmor %vm1471, %vm1472
    %v1474 = vsel %vm1473, %v1466, %v1470
    %v1475 = vand.u32 2147483647, %v1096
    %vm1476 = vcmp.eq.f32.partialorder %v1475, 8.507059e+37
    %v1477 = vand.u32 %v1096, 2147483648
    %v1478 = vor.u32 1.1754944e-38, %v1477
    %v1479 = vsel %vm1476, %v1478, %v1474
    %v1480 = vmul.f32 %v1008, %v1479
    %v1481 = vrcp.pop %v1099
    %v1482 = vmul.f32 %v1099, %v1481
    %v1483 = vsub.f32 1.0, %v1482
    %v1484 = vmul.f32 %v1481, %v1483
    %v1485 = vadd.f32 %v1481, %v1484
    %vm1486 = vweird.f32 %v1099
    %vm1487 = vweird.f32 %v1481
    %vm1488 = vmor %vm1486, %vm1487
    %v1489 = vsel %vm1488, %v1481, %v1485
    %v1490 = vand.u32 2147483647, %v1099
    %vm1491 = vcmp.eq.f32.partialorder %v1490, 8.507059e+37
    %v1492 = vand.u32 %v1099, 2147483648
    %v1493 = vor.u32 1.1754944e-38, %v1492
    %v1494 = vsel %vm1491, %v1493, %v1489
    %v1495 = vmul.f32 %v1010, %v1494
    %v1496 = vrcp.pop %v1102
    %v1497 = vmul.f32 %v1102, %v1496
    %v1498 = vsub.f32 1.0, %v1497
    %v1499 = vmul.f32 %v1496, %v1498
    %v1500 = vadd.f32 %v1496, %v1499
    %vm1501 = vweird.f32 %v1102
    %vm1502 = vweird.f32 %v1496
    %vm1503 = vmor %vm1501, %vm1502
    %v1504 = vsel %vm1503, %v1496, %v1500
    %v1505 = vand.u32 2147483647, %v1102
    %vm1506 = vcmp.eq.f32.partialorder %v1505, 8.507059e+37
    %v1507 = vand.u32 %v1102, 2147483648
    %v1508 = vor.u32 1.1754944e-38, %v1507
    %v1509 = vsel %vm1506, %v1508, %v1504
    %v1510 = vmul.f32 %v1012, %v1509
    %v1511 = vrcp.pop %v1105
    %v1512 = vmul.f32 %v1105, %v1511
    %v1513 = vsub.f32 1.0, %v1512
    %v1514 = vmul.f32 %v1511, %v1513
    %v1515 = vadd.f32 %v1511, %v1514
    %vm1516 = vweird.f32 %v1105
    %vm1517 = vweird.f32 %v1511
    %vm1518 = vmor %vm1516, %vm1517
    %v1519 = vsel %vm1518, %v1511, %v1515
    %v1520 = vand.u32 2147483647, %v1105
    %vm1521 = vcmp.eq.f32.partialorder %v1520, 8.507059e+37
    %v1522 = vand.u32 %v1105, 2147483648
    %v1523 = vor.u32 1.1754944e-38, %v1522
    %v1524 = vsel %vm1521, %v1523, %v1519
    %v1525 = vmul.f32 %v1014, %v1524
    %v1526 = vrcp.pop %v1108
    %v1527 = vmul.f32 %v1108, %v1526
    %v1528 = vsub.f32 1.0, %v1527
    %v1529 = vmul.f32 %v1526, %v1528
    %v1530 = vadd.f32 %v1526, %v1529
    %vm1531 = vweird.f32 %v1108
    %vm1532 = vweird.f32 %v1526
    %vm1533 = vmor %vm1531, %vm1532
    %v1534 = vsel %vm1533, %v1526, %v1530
    %v1535 = vand.u32 2147483647, %v1108
    %vm1536 = vcmp.eq.f32.partialorder %v1535, 8.507059e+37
    %v1537 = vand.u32 %v1108, 2147483648
    %v1538 = vor.u32 1.1754944e-38, %v1537
    %v1539 = vsel %vm1536, %v1538, %v1534
    %v1540 = vmul.f32 %v1016, %v1539
    %v1541 = vrcp.pop %v1111
    %v1542 = vmul.f32 %v1111, %v1541
    %v1543 = vsub.f32 1.0, %v1542
    %v1544 = vmul.f32 %v1541, %v1543
    %v1545 = vadd.f32 %v1541, %v1544
    %vm1546 = vweird.f32 %v1111
    %vm1547 = vweird.f32 %v1541
    %vm1548 = vmor %vm1546, %vm1547
    %v1549 = vsel %vm1548, %v1541, %v1545
    %v1550 = vand.u32 2147483647, %v1111
    %vm1551 = vcmp.eq.f32.partialorder %v1550, 8.507059e+37
    %v1552 = vand.u32 %v1111, 2147483648
    %v1553 = vor.u32 1.1754944e-38, %v1552
    %v1554 = vsel %vm1551, %v1553, %v1549
    %v1555 = vmul.f32 %v1018, %v1554
    %v1556 = vrcp.pop %v1114
    %v1557 = vmul.f32 %v1114, %v1556
    %v1558 = vsub.f32 1.0, %v1557
    %v1559 = vmul.f32 %v1556, %v1558
    %v1560 = vadd.f32 %v1556, %v1559
    %vm1561 = vweird.f32 %v1114
    %vm1562 = vweird.f32 %v1556
    %vm1563 = vmor %vm1561, %vm1562
    %v1564 = vsel %vm1563, %v1556, %v1560
    %v1565 = vand.u32 2147483647, %v1114
    %vm1566 = vcmp.eq.f32.partialorder %v1565, 8.507059e+37
    %v1567 = vand.u32 %v1114, 2147483648
    %v1568 = vor.u32 1.1754944e-38, %v1567
    %v1569 = vsel %vm1566, %v1568, %v1564
    %v1570 = vmul.f32 %v1020, %v1569
    %v1571 = vrcp.pop %v1117
    %v1572 = vmul.f32 %v1117, %v1571
    %v1573 = vsub.f32 1.0, %v1572
    %v1574 = vmul.f32 %v1571, %v1573
    %v1575 = vadd.f32 %v1571, %v1574
    %vm1576 = vweird.f32 %v1117
    %vm1577 = vweird.f32 %v1571
    %vm1578 = vmor %vm1576, %vm1577
    %v1579 = vsel %vm1578, %v1571, %v1575
    %v1580 = vand.u32 2147483647, %v1117
    %vm1581 = vcmp.eq.f32.partialorder %v1580, 8.507059e+37
    %v1582 = vand.u32 %v1117, 2147483648
    %v1583 = vor.u32 1.1754944e-38, %v1582
    %v1584 = vsel %vm1581, %v1583, %v1579
    %v1585 = vmul.f32 %v1022, %v1584
    %v1586 = vrcp.pop %v1120
    %v1587 = vmul.f32 %v1120, %v1586
    %v1588 = vsub.f32 1.0, %v1587
    %v1589 = vmul.f32 %v1586, %v1588
    %v1590 = vadd.f32 %v1586, %v1589
    %vm1591 = vweird.f32 %v1120
    %vm1592 = vweird.f32 %v1586
    %vm1593 = vmor %vm1591, %vm1592
    %v1594 = vsel %vm1593, %v1586, %v1590
    %v1595 = vand.u32 2147483647, %v1120
    %vm1596 = vcmp.eq.f32.partialorder %v1595, 8.507059e+37
    %v1597 = vand.u32 %v1120, 2147483648
    %v1598 = vor.u32 1.1754944e-38, %v1597
    %v1599 = vsel %vm1596, %v1598, %v1594
    %v1600 = vmul.f32 %v1024, %v1599
    %v1601 = vpack.c.bf16 %v1135, %v1135
    %v1602 = vpack.c.bf16 %v1150, %v1150
    %v1603 = vpack.c.bf16 %v1165, %v1165
    %v1604 = vpack.c.bf16 %v1180, %v1180
    %v1605 = vpack.c.bf16 %v1195, %v1195
    %v1606 = vpack.c.bf16 %v1210, %v1210
    %v1607 = vpack.c.bf16 %v1225, %v1225
    %v1608 = vpack.c.bf16 %v1240, %v1240
    %v1609 = vpack.c.bf16 %v1255, %v1255
    %v1610 = vpack.c.bf16 %v1270, %v1270
    %v1611 = vpack.c.bf16 %v1285, %v1285
    %v1612 = vpack.c.bf16 %v1300, %v1300
    %v1613 = vpack.c.bf16 %v1315, %v1315
    %v1614 = vpack.c.bf16 %v1330, %v1330
    %v1615 = vpack.c.bf16 %v1345, %v1345
    %v1616 = vpack.c.bf16 %v1360, %v1360
    %v1617 = vpack.c.bf16 %v1375, %v1375
    %v1618 = vpack.c.bf16 %v1390, %v1390
    %v1619 = vpack.c.bf16 %v1405, %v1405
    %v1620 = vpack.c.bf16 %v1420, %v1420
    %v1621 = vpack.c.bf16 %v1435, %v1435
    %v1622 = vpack.c.bf16 %v1450, %v1450
    %v1623 = vpack.c.bf16 %v1465, %v1465
    %v1624 = vpack.c.bf16 %v1480, %v1480
    %v1625 = vpack.c.bf16 %v1495, %v1495
    %v1626 = vpack.c.bf16 %v1510, %v1510
    %v1627 = vpack.c.bf16 %v1525, %v1525
    %v1628 = vpack.c.bf16 %v1540, %v1540
    %v1629 = vpack.c.bf16 %v1555, %v1555
    %v1630 = vpack.c.bf16 %v1570, %v1570
    %v1631 = vpack.c.bf16 %v1585, %v1585
    %v1632 = vpack.c.bf16 %v1600, %v1600
    %v1635 = vunpack.c.l.b16 %v1601
    %v1636 = vunpack.c.l.b16 %v1602
    %v1637 = vpack.c.b16 %v1636, %v1635
    %1638 = vrot.lane.b32.xlu0 %v371, 64
    %v1639 = vpop.permute.xlu0 %1638
    %v1642 = vsel %vm832, %v1637, 0
    %1644 = vmatpush.bf16.msra.mxu0 0
    %1645 = vmatpush.bf16.msra.mxu0 0
    %1646 = vmatpush.bf16.msra.mxu0 0
    %1647 = vmatpush.bf16.msra.mxu0 0
    %1648 = vmatpush.bf16.msra.mxu0 0
    %1649 = vmatpush.bf16.msra.mxu0 0
    %1650 = vmatpush.bf16.msra.mxu0 0
    %1651 = vmatpush.bf16.msra.mxu0 %v1639
    %1652 = vmatmul.bf16.gmra.mxu0 %v1642
    %v1653 = vpop.f32.mrf.mxu0
    %v1654 = vadd.f32 0.0, %v1653
    %v1655 = vpop.f32.mrf.mxu0
    %v1656 = vadd.f32 0.0, %v1655
    %1657 = vdwg.mxu0
    %v1660 = vunpack.c.l.b16 %v1603
    %v1661 = vunpack.c.l.b16 %v1604
    %v1662 = vpack.c.b16 %v1661, %v1660
    %1663 = vrot.lane.b32.xlu0 %v399, 64
    %v1664 = vpop.permute.xlu0 %1663
    %v1667 = vsel %vm832, %v1662, 0
    %1669 = vmatpush.bf16.msra.mxu0 0
    %1670 = vmatpush.bf16.msra.mxu0 0
    %1671 = vmatpush.bf16.msra.mxu0 0
    %1672 = vmatpush.bf16.msra.mxu0 0
    %1673 = vmatpush.bf16.msra.mxu0 0
    %1674 = vmatpush.bf16.msra.mxu0 0
    %1675 = vmatpush.bf16.msra.mxu0 0
    %1676 = vmatpush.bf16.msra.mxu0 %v1664
    %1677 = vmatmul.bf16.gmra.mxu0 %v1667
    %v1678 = vpop.f32.mrf.mxu0
    %v1679 = vadd.f32 0.0, %v1678
    %v1680 = vpop.f32.mrf.mxu0
    %v1681 = vadd.f32 0.0, %v1680
    %1682 = vdwg.mxu0
    %v1685 = vunpack.c.l.b16 %v1605
    %v1686 = vunpack.c.l.b16 %v1606
    %v1687 = vpack.c.b16 %v1686, %v1685
    %1688 = vrot.lane.b32.xlu0 %v426, 64
    %v1689 = vpop.permute.xlu0 %1688
    %v1692 = vsel %vm832, %v1687, 0
    %1694 = vmatpush.bf16.msra.mxu0 0
    %1695 = vmatpush.bf16.msra.mxu0 0
    %1696 = vmatpush.bf16.msra.mxu0 0
    %1697 = vmatpush.bf16.msra.mxu0 0
    %1698 = vmatpush.bf16.msra.mxu0 0
    %1699 = vmatpush.bf16.msra.mxu0 0
    %1700 = vmatpush.bf16.msra.mxu0 0
    %1701 = vmatpush.bf16.msra.mxu0 %v1689
    %1702 = vmatmul.bf16.gmra.mxu0 %v1692
    %v1703 = vpop.f32.mrf.mxu0
    %v1704 = vadd.f32 0.0, %v1703
    %v1705 = vpop.f32.mrf.mxu0
    %v1706 = vadd.f32 0.0, %v1705
    %1707 = vdwg.mxu0
    %v1710 = vunpack.c.l.b16 %v1607
    %v1711 = vunpack.c.l.b16 %v1608
    %v1712 = vpack.c.b16 %v1711, %v1710
    %1713 = vrot.lane.b32.xlu0 %v453, 64
    %v1714 = vpop.permute.xlu0 %1713
    %v1717 = vsel %vm832, %v1712, 0
    %1719 = vmatpush.bf16.msra.mxu0 0
    %1720 = vmatpush.bf16.msra.mxu0 0
    %1721 = vmatpush.bf16.msra.mxu0 0
    %1722 = vmatpush.bf16.msra.mxu0 0
    %1723 = vmatpush.bf16.msra.mxu0 0
    %1724 = vmatpush.bf16.msra.mxu0 0
    %1725 = vmatpush.bf16.msra.mxu0 0
    %1726 = vmatpush.bf16.msra.mxu0 %v1714
    %1727 = vmatmul.bf16.gmra.mxu0 %v1717
    %v1728 = vpop.f32.mrf.mxu0
    %v1729 = vadd.f32 0.0, %v1728
    %v1730 = vpop.f32.mrf.mxu0
    %v1731 = vadd.f32 0.0, %v1730
    %1732 = vdwg.mxu0
    %v1735 = vunpack.c.l.b16 %v1609
    %v1736 = vunpack.c.l.b16 %v1610
    %v1737 = vpack.c.b16 %v1736, %v1735
    %1738 = vrot.lane.b32.xlu0 %v480, 64
    %v1739 = vpop.permute.xlu0 %1738
    %v1742 = vsel %vm832, %v1737, 0
    %1744 = vmatpush.bf16.msra.mxu0 0
    %1745 = vmatpush.bf16.msra.mxu0 0
    %1746 = vmatpush.bf16.msra.mxu0 0
    %1747 = vmatpush.bf16.msra.mxu0 0
    %1748 = vmatpush.bf16.msra.mxu0 0
    %1749 = vmatpush.bf16.msra.mxu0 0
    %1750 = vmatpush.bf16.msra.mxu0 0
    %1751 = vmatpush.bf16.msra.mxu0 %v1739
    %1752 = vmatmul.bf16.gmra.mxu0 %v1742
    %v1753 = vpop.f32.mrf.mxu0
    %v1754 = vadd.f32 0.0, %v1753
    %v1755 = vpop.f32.mrf.mxu0
    %v1756 = vadd.f32 0.0, %v1755
    %1757 = vdwg.mxu0
    %v1760 = vunpack.c.l.b16 %v1611
    %v1761 = vunpack.c.l.b16 %v1612
    %v1762 = vpack.c.b16 %v1761, %v1760
    %1763 = vrot.lane.b32.xlu0 %v507, 64
    %v1764 = vpop.permute.xlu0 %1763
    %v1767 = vsel %vm832, %v1762, 0
    %1769 = vmatpush.bf16.msra.mxu0 0
    %1770 = vmatpush.bf16.msra.mxu0 0
    %1771 = vmatpush.bf16.msra.mxu0 0
    %1772 = vmatpush.bf16.msra.mxu0 0
    %1773 = vmatpush.bf16.msra.mxu0 0
    %1774 = vmatpush.bf16.msra.mxu0 0
    %1775 = vmatpush.bf16.msra.mxu0 0
    %1776 = vmatpush.bf16.msra.mxu0 %v1764
    %1777 = vmatmul.bf16.gmra.mxu0 %v1767
    %v1778 = vpop.f32.mrf.mxu0
    %v1779 = vadd.f32 0.0, %v1778
    %v1780 = vpop.f32.mrf.mxu0
    %v1781 = vadd.f32 0.0, %v1780
    %1782 = vdwg.mxu0
    %v1785 = vunpack.c.l.b16 %v1613
    %v1786 = vunpack.c.l.b16 %v1614
    %v1787 = vpack.c.b16 %v1786, %v1785
    %1788 = vrot.lane.b32.xlu0 %v534, 64
    %v1789 = vpop.permute.xlu0 %1788
    %v1792 = vsel %vm832, %v1787, 0
    %1794 = vmatpush.bf16.msra.mxu0 0
    %1795 = vmatpush.bf16.msra.mxu0 0
    %1796 = vmatpush.bf16.msra.mxu0 0
    %1797 = vmatpush.bf16.msra.mxu0 0
    %1798 = vmatpush.bf16.msra.mxu0 0
    %1799 = vmatpush.bf16.msra.mxu0 0
    %1800 = vmatpush.bf16.msra.mxu0 0
    %1801 = vmatpush.bf16.msra.mxu0 %v1789
    %1802 = vmatmul.bf16.gmra.mxu0 %v1792
    %v1803 = vpop.f32.mrf.mxu0
    %v1804 = vadd.f32 0.0, %v1803
    %v1805 = vpop.f32.mrf.mxu0
    %v1806 = vadd.f32 0.0, %v1805
    %1807 = vdwg.mxu0
    %v1810 = vunpack.c.l.b16 %v1615
    %v1811 = vunpack.c.l.b16 %v1616
    %v1812 = vpack.c.b16 %v1811, %v1810
    %1813 = vrot.lane.b32.xlu0 %v561, 64
    %v1814 = vpop.permute.xlu0 %1813
    %v1817 = vsel %vm832, %v1812, 0
    %1819 = vmatpush.bf16.msra.mxu0 0
    %1820 = vmatpush.bf16.msra.mxu0 0
    %1821 = vmatpush.bf16.msra.mxu0 0
    %1822 = vmatpush.bf16.msra.mxu0 0
    %1823 = vmatpush.bf16.msra.mxu0 0
    %1824 = vmatpush.bf16.msra.mxu0 0
    %1825 = vmatpush.bf16.msra.mxu0 0
    %1826 = vmatpush.bf16.msra.mxu0 %v1814
    %1827 = vmatmul.bf16.gmra.mxu0 %v1817
    %v1828 = vpop.f32.mrf.mxu0
    %v1829 = vadd.f32 0.0, %v1828
    %v1830 = vpop.f32.mrf.mxu0
    %v1831 = vadd.f32 0.0, %v1830
    %1832 = vdwg.mxu0
    %v1835 = vunpack.c.l.b16 %v1617
    %v1836 = vunpack.c.l.b16 %v1618
    %v1837 = vpack.c.b16 %v1836, %v1835
    %1838 = vrot.lane.b32.xlu0 %v588, 64
    %v1839 = vpop.permute.xlu0 %1838
    %v1842 = vsel %vm832, %v1837, 0
    %1844 = vmatpush.bf16.msra.mxu0 0
    %1845 = vmatpush.bf16.msra.mxu0 0
    %1846 = vmatpush.bf16.msra.mxu0 0
    %1847 = vmatpush.bf16.msra.mxu0 0
    %1848 = vmatpush.bf16.msra.mxu0 0
    %1849 = vmatpush.bf16.msra.mxu0 0
    %1850 = vmatpush.bf16.msra.mxu0 0
    %1851 = vmatpush.bf16.msra.mxu0 %v1839
    %1852 = vmatmul.bf16.gmra.mxu0 %v1842
    %v1853 = vpop.f32.mrf.mxu0
    %v1854 = vadd.f32 0.0, %v1853
    %v1855 = vpop.f32.mrf.mxu0
    %v1856 = vadd.f32 0.0, %v1855
    %1857 = vdwg.mxu0
    %v1860 = vunpack.c.l.b16 %v1619
    %v1861 = vunpack.c.l.b16 %v1620
    %v1862 = vpack.c.b16 %v1861, %v1860
    %1863 = vrot.lane.b32.xlu0 %v615, 64
    %v1864 = vpop.permute.xlu0 %1863
    %v1867 = vsel %vm832, %v1862, 0
    %1869 = vmatpush.bf16.msra.mxu0 0
    %1870 = vmatpush.bf16.msra.mxu0 0
    %1871 = vmatpush.bf16.msra.mxu0 0
    %1872 = vmatpush.bf16.msra.mxu0 0
    %1873 = vmatpush.bf16.msra.mxu0 0
    %1874 = vmatpush.bf16.msra.mxu0 0
    %1875 = vmatpush.bf16.msra.mxu0 0
    %1876 = vmatpush.bf16.msra.mxu0 %v1864
    %1877 = vmatmul.bf16.gmra.mxu0 %v1867
    %v1878 = vpop.f32.mrf.mxu0
    %v1879 = vadd.f32 0.0, %v1878
    %v1880 = vpop.f32.mrf.mxu0
    %v1881 = vadd.f32 0.0, %v1880
    %1882 = vdwg.mxu0
    %v1885 = vunpack.c.l.b16 %v1621
    %v1886 = vunpack.c.l.b16 %v1622
    %v1887 = vpack.c.b16 %v1886, %v1885
    %1888 = vrot.lane.b32.xlu0 %v642, 64
    %v1889 = vpop.permute.xlu0 %1888
    %v1892 = vsel %vm832, %v1887, 0
    %1894 = vmatpush.bf16.msra.mxu0 0
    %1895 = vmatpush.bf16.msra.mxu0 0
    %1896 = vmatpush.bf16.msra.mxu0 0
    %1897 = vmatpush.bf16.msra.mxu0 0
    %1898 = vmatpush.bf16.msra.mxu0 0
    %1899 = vmatpush.bf16.msra.mxu0 0
    %1900 = vmatpush.bf16.msra.mxu0 0
    %1901 = vmatpush.bf16.msra.mxu0 %v1889
    %1902 = vmatmul.bf16.gmra.mxu0 %v1892
    %v1903 = vpop.f32.mrf.mxu0
    %v1904 = vadd.f32 0.0, %v1903
    %v1905 = vpop.f32.mrf.mxu0
    %v1906 = vadd.f32 0.0, %v1905
    %1907 = vdwg.mxu0
    %v1910 = vunpack.c.l.b16 %v1623
    %v1911 = vunpack.c.l.b16 %v1624
    %v1912 = vpack.c.b16 %v1911, %v1910
    %1913 = vrot.lane.b32.xlu0 %v669, 64
    %v1914 = vpop.permute.xlu0 %1913
    %v1917 = vsel %vm832, %v1912, 0
    %1919 = vmatpush.bf16.msra.mxu0 0
    %1920 = vmatpush.bf16.msra.mxu0 0
    %1921 = vmatpush.bf16.msra.mxu0 0
    %1922 = vmatpush.bf16.msra.mxu0 0
    %1923 = vmatpush.bf16.msra.mxu0 0
    %1924 = vmatpush.bf16.msra.mxu0 0
    %1925 = vmatpush.bf16.msra.mxu0 0
    %1926 = vmatpush.bf16.msra.mxu0 %v1914
    %1927 = vmatmul.bf16.gmra.mxu0 %v1917
    %v1928 = vpop.f32.mrf.mxu0
    %v1929 = vadd.f32 0.0, %v1928
    %v1930 = vpop.f32.mrf.mxu0
    %v1931 = vadd.f32 0.0, %v1930
    %1932 = vdwg.mxu0
    %v1935 = vunpack.c.l.b16 %v1625
    %v1936 = vunpack.c.l.b16 %v1626
    %v1937 = vpack.c.b16 %v1936, %v1935
    %1938 = vrot.lane.b32.xlu0 %v696, 64
    %v1939 = vpop.permute.xlu0 %1938
    %v1942 = vsel %vm832, %v1937, 0
    %1944 = vmatpush.bf16.msra.mxu0 0
    %1945 = vmatpush.bf16.msra.mxu0 0
    %1946 = vmatpush.bf16.msra.mxu0 0
    %1947 = vmatpush.bf16.msra.mxu0 0
    %1948 = vmatpush.bf16.msra.mxu0 0
    %1949 = vmatpush.bf16.msra.mxu0 0
    %1950 = vmatpush.bf16.msra.mxu0 0
    %1951 = vmatpush.bf16.msra.mxu0 %v1939
    %1952 = vmatmul.bf16.gmra.mxu0 %v1942
    %v1953 = vpop.f32.mrf.mxu0
    %v1954 = vadd.f32 0.0, %v1953
    %v1955 = vpop.f32.mrf.mxu0
    %v1956 = vadd.f32 0.0, %v1955
    %1957 = vdwg.mxu0
    %v1960 = vunpack.c.l.b16 %v1627
    %v1961 = vunpack.c.l.b16 %v1628
    %v1962 = vpack.c.b16 %v1961, %v1960
    %1963 = vrot.lane.b32.xlu0 %v723, 64
    %v1964 = vpop.permute.xlu0 %1963
    %v1967 = vsel %vm832, %v1962, 0
    %1969 = vmatpush.bf16.msra.mxu0 0
    %1970 = vmatpush.bf16.msra.mxu0 0
    %1971 = vmatpush.bf16.msra.mxu0 0
    %1972 = vmatpush.bf16.msra.mxu0 0
    %1973 = vmatpush.bf16.msra.mxu0 0
    %1974 = vmatpush.bf16.msra.mxu0 0
    %1975 = vmatpush.bf16.msra.mxu0 0
    %1976 = vmatpush.bf16.msra.mxu0 %v1964
    %1977 = vmatmul.bf16.gmra.mxu0 %v1967
    %v1978 = vpop.f32.mrf.mxu0
    %v1979 = vadd.f32 0.0, %v1978
    %v1980 = vpop.f32.mrf.mxu0
    %v1981 = vadd.f32 0.0, %v1980
    %1982 = vdwg.mxu0
    %v1985 = vunpack.c.l.b16 %v1629
    %v1986 = vunpack.c.l.b16 %v1630
    %v1987 = vpack.c.b16 %v1986, %v1985
    %1988 = vrot.lane.b32.xlu0 %v750, 64
    %v1989 = vpop.permute.xlu0 %1988
    %v1992 = vsel %vm832, %v1987, 0
    %1994 = vmatpush.bf16.msra.mxu0 0
    %1995 = vmatpush.bf16.msra.mxu0 0
    %1996 = vmatpush.bf16.msra.mxu0 0
    %1997 = vmatpush.bf16.msra.mxu0 0
    %1998 = vmatpush.bf16.msra.mxu0 0
    %1999 = vmatpush.bf16.msra.mxu0 0
    %2000 = vmatpush.bf16.msra.mxu0 0
    %2001 = vmatpush.bf16.msra.mxu0 %v1989
    %2002 = vmatmul.bf16.gmra.mxu0 %v1992
    %v2003 = vpop.f32.mrf.mxu0
    %v2004 = vadd.f32 0.0, %v2003
    %v2005 = vpop.f32.mrf.mxu0
    %v2006 = vadd.f32 0.0, %v2005
    %2007 = vdwg.mxu0
    %v2010 = vunpack.c.l.b16 %v1631
    %v2011 = vunpack.c.l.b16 %v1632
    %v2012 = vpack.c.b16 %v2011, %v2010
    %2013 = vrot.lane.b32.xlu0 %v777, 64
    %v2014 = vpop.permute.xlu0 %2013
    %v2017 = vsel %vm832, %v2012, 0
    %2019 = vmatpush.bf16.msra.mxu0 0
    %2020 = vmatpush.bf16.msra.mxu0 0
    %2021 = vmatpush.bf16.msra.mxu0 0
    %2022 = vmatpush.bf16.msra.mxu0 0
    %2023 = vmatpush.bf16.msra.mxu0 0
    %2024 = vmatpush.bf16.msra.mxu0 0
    %2025 = vmatpush.bf16.msra.mxu0 0
    %2026 = vmatpush.bf16.msra.mxu0 %v2014
    %2027 = vmatmul.bf16.gmra.mxu0 %v2017
    %v2028 = vpop.f32.mrf.mxu0
    %v2029 = vadd.f32 0.0, %v2028
    %v2030 = vpop.f32.mrf.mxu0
    %v2031 = vadd.f32 0.0, %v2030
    %2032 = vdwg.mxu0
    %2033 = vrot.lane.b32.xlu0 %v371, 120
    %v2034 = vpop.permute.xlu0 %2033
    %2035 = vrot.lane.b32.xlu0 %v371, 88
    %v2036 = vpop.permute.xlu0 %2035
    %v2038 = vsel %vm374, %v2034, 0
    %v2041 = vsel %vm374, %v2036, 0
    %2043 = vmatpush.bf16.xpose.msra.mxu0 0
    %2044 = vmatpush.bf16.xpose.msra.mxu0 0
    %2045 = vmatpush.bf16.xpose.msra.mxu0 0
    %2046 = vmatpush.bf16.xpose.msra.mxu0 0
    %2047 = vmatpush.bf16.xpose.msra.mxu0 0
    %2048 = vmatpush.bf16.xpose.msra.mxu0 0
    %2049 = vmatpush.bf16.xpose.msra.mxu0 0
    %2050 = vmatpush.bf16.xpose.msra.mxu0 %v2041
    %2051 = vmatmul.bf16.gmra.mxu0 %v2038
    %v2052 = vpop.f32.mrf.mxu0
    %v2053 = vadd.f32 0.0, %v2052
    %v2054 = vpop.f32.mrf.mxu0
    %v2055 = vadd.f32 0.0, %v2054
    %2056 = vdwg.mxu0
    %2057 = vrot.lane.b32.xlu0 %v399, 120
    %v2058 = vpop.permute.xlu0 %2057
    %2059 = vrot.lane.b32.xlu0 %v399, 88
    %v2060 = vpop.permute.xlu0 %2059
    %v2062 = vsel %vm374, %v2058, 0
    %v2065 = vsel %vm374, %v2060, 0
    %2067 = vmatpush.bf16.xpose.msra.mxu0 0
    %2068 = vmatpush.bf16.xpose.msra.mxu0 0
    %2069 = vmatpush.bf16.xpose.msra.mxu0 0
    %2070 = vmatpush.bf16.xpose.msra.mxu0 0
    %2071 = vmatpush.bf16.xpose.msra.mxu0 0
    %2072 = vmatpush.bf16.xpose.msra.mxu0 0
    %2073 = vmatpush.bf16.xpose.msra.mxu0 0
    %2074 = vmatpush.bf16.xpose.msra.mxu0 %v2065
    %2075 = vmatmul.bf16.gmra.mxu0 %v2062
    %v2076 = vpop.f32.mrf.mxu0
    %v2077 = vadd.f32 0.0, %v2076
    %v2078 = vpop.f32.mrf.mxu0
    %v2079 = vadd.f32 0.0, %v2078
    %2080 = vdwg.mxu0
    %2081 = vrot.lane.b32.xlu0 %v426, 120
    %v2082 = vpop.permute.xlu0 %2081
    %2083 = vrot.lane.b32.xlu0 %v426, 88
    %v2084 = vpop.permute.xlu0 %2083
    %v2086 = vsel %vm374, %v2082, 0
    %v2089 = vsel %vm374, %v2084, 0
    %2091 = vmatpush.bf16.xpose.msra.mxu0 0
    %2092 = vmatpush.bf16.xpose.msra.mxu0 0
    %2093 = vmatpush.bf16.xpose.msra.mxu0 0
    %2094 = vmatpush.bf16.xpose.msra.mxu0 0
    %2095 = vmatpush.bf16.xpose.msra.mxu0 0
    %2096 = vmatpush.bf16.xpose.msra.mxu0 0
    %2097 = vmatpush.bf16.xpose.msra.mxu0 0
    %2098 = vmatpush.bf16.xpose.msra.mxu0 %v2089
    %2099 = vmatmul.bf16.gmra.mxu0 %v2086
    %v2100 = vpop.f32.mrf.mxu0
    %v2101 = vadd.f32 0.0, %v2100
    %v2102 = vpop.f32.mrf.mxu0
    %v2103 = vadd.f32 0.0, %v2102
    %2104 = vdwg.mxu0
    %2105 = vrot.lane.b32.xlu0 %v453, 120
    %v2106 = vpop.permute.xlu0 %2105
    %2107 = vrot.lane.b32.xlu0 %v453, 88
    %v2108 = vpop.permute.xlu0 %2107
    %v2110 = vsel %vm374, %v2106, 0
    %v2113 = vsel %vm374, %v2108, 0
    %2115 = vmatpush.bf16.xpose.msra.mxu0 0
    %2116 = vmatpush.bf16.xpose.msra.mxu0 0
    %2117 = vmatpush.bf16.xpose.msra.mxu0 0
    %2118 = vmatpush.bf16.xpose.msra.mxu0 0
    %2119 = vmatpush.bf16.xpose.msra.mxu0 0
    %2120 = vmatpush.bf16.xpose.msra.mxu0 0
    %2121 = vmatpush.bf16.xpose.msra.mxu0 0
    %2122 = vmatpush.bf16.xpose.msra.mxu0 %v2113
    %2123 = vmatmul.bf16.gmra.mxu0 %v2110
    %v2124 = vpop.f32.mrf.mxu0
    %v2125 = vadd.f32 0.0, %v2124
    %v2126 = vpop.f32.mrf.mxu0
    %v2127 = vadd.f32 0.0, %v2126
    %2128 = vdwg.mxu0
    %2129 = vrot.lane.b32.xlu0 %v480, 120
    %v2130 = vpop.permute.xlu0 %2129
    %2131 = vrot.lane.b32.xlu0 %v480, 88
    %v2132 = vpop.permute.xlu0 %2131
    %v2134 = vsel %vm374, %v2130, 0
    %v2137 = vsel %vm374, %v2132, 0
    %2139 = vmatpush.bf16.xpose.msra.mxu0 0
    %2140 = vmatpush.bf16.xpose.msra.mxu0 0
    %2141 = vmatpush.bf16.xpose.msra.mxu0 0
    %2142 = vmatpush.bf16.xpose.msra.mxu0 0
    %2143 = vmatpush.bf16.xpose.msra.mxu0 0
    %2144 = vmatpush.bf16.xpose.msra.mxu0 0
    %2145 = vmatpush.bf16.xpose.msra.mxu0 0
    %2146 = vmatpush.bf16.xpose.msra.mxu0 %v2137
    %2147 = vmatmul.bf16.gmra.mxu0 %v2134
    %v2148 = vpop.f32.mrf.mxu0
    %v2149 = vadd.f32 0.0, %v2148
    %v2150 = vpop.f32.mrf.mxu0
    %v2151 = vadd.f32 0.0, %v2150
    %2152 = vdwg.mxu0
    %2153 = vrot.lane.b32.xlu0 %v507, 120
    %v2154 = vpop.permute.xlu0 %2153
    %2155 = vrot.lane.b32.xlu0 %v507, 88
    %v2156 = vpop.permute.xlu0 %2155
    %v2158 = vsel %vm374, %v2154, 0
    %v2161 = vsel %vm374, %v2156, 0
    %2163 = vmatpush.bf16.xpose.msra.mxu0 0
    %2164 = vmatpush.bf16.xpose.msra.mxu0 0
    %2165 = vmatpush.bf16.xpose.msra.mxu0 0
    %2166 = vmatpush.bf16.xpose.msra.mxu0 0
    %2167 = vmatpush.bf16.xpose.msra.mxu0 0
    %2168 = vmatpush.bf16.xpose.msra.mxu0 0
    %2169 = vmatpush.bf16.xpose.msra.mxu0 0
    %2170 = vmatpush.bf16.xpose.msra.mxu0 %v2161
    %2171 = vmatmul.bf16.gmra.mxu0 %v2158
    %v2172 = vpop.f32.mrf.mxu0
    %v2173 = vadd.f32 0.0, %v2172
    %v2174 = vpop.f32.mrf.mxu0
    %v2175 = vadd.f32 0.0, %v2174
    %2176 = vdwg.mxu0
    %2177 = vrot.lane.b32.xlu0 %v534, 120
    %v2178 = vpop.permute.xlu0 %2177
    %2179 = vrot.lane.b32.xlu0 %v534, 88
    %v2180 = vpop.permute.xlu0 %2179
    %v2182 = vsel %vm374, %v2178, 0
    %v2185 = vsel %vm374, %v2180, 0
    %2187 = vmatpush.bf16.xpose.msra.mxu0 0
    %2188 = vmatpush.bf16.xpose.msra.mxu0 0
    %2189 = vmatpush.bf16.xpose.msra.mxu0 0
    %2190 = vmatpush.bf16.xpose.msra.mxu0 0
    %2191 = vmatpush.bf16.xpose.msra.mxu0 0
    %2192 = vmatpush.bf16.xpose.msra.mxu0 0
    %2193 = vmatpush.bf16.xpose.msra.mxu0 0
    %2194 = vmatpush.bf16.xpose.msra.mxu0 %v2185
    %2195 = vmatmul.bf16.gmra.mxu0 %v2182
    %v2196 = vpop.f32.mrf.mxu0
    %v2197 = vadd.f32 0.0, %v2196
    %v2198 = vpop.f32.mrf.mxu0
    %v2199 = vadd.f32 0.0, %v2198
    %2200 = vdwg.mxu0
    %2201 = vrot.lane.b32.xlu0 %v561, 120
    %v2202 = vpop.permute.xlu0 %2201
    %2203 = vrot.lane.b32.xlu0 %v561, 88
    %v2204 = vpop.permute.xlu0 %2203
    %v2206 = vsel %vm374, %v2202, 0
    %v2209 = vsel %vm374, %v2204, 0
    %2211 = vmatpush.bf16.xpose.msra.mxu0 0
    %2212 = vmatpush.bf16.xpose.msra.mxu0 0
    %2213 = vmatpush.bf16.xpose.msra.mxu0 0
    %2214 = vmatpush.bf16.xpose.msra.mxu0 0
    %2215 = vmatpush.bf16.xpose.msra.mxu0 0
    %2216 = vmatpush.bf16.xpose.msra.mxu0 0
    %2217 = vmatpush.bf16.xpose.msra.mxu0 0
    %2218 = vmatpush.bf16.xpose.msra.mxu0 %v2209
    %2219 = vmatmul.bf16.gmra.mxu0 %v2206
    %v2220 = vpop.f32.mrf.mxu0
    %v2221 = vadd.f32 0.0, %v2220
    %v2222 = vpop.f32.mrf.mxu0
    %v2223 = vadd.f32 0.0, %v2222
    %2224 = vdwg.mxu0
    %2225 = vrot.lane.b32.xlu0 %v588, 120
    %v2226 = vpop.permute.xlu0 %2225
    %2227 = vrot.lane.b32.xlu0 %v588, 88
    %v2228 = vpop.permute.xlu0 %2227
    %v2230 = vsel %vm374, %v2226, 0
    %v2233 = vsel %vm374, %v2228, 0
    %2235 = vmatpush.bf16.xpose.msra.mxu0 0
    %2236 = vmatpush.bf16.xpose.msra.mxu0 0
    %2237 = vmatpush.bf16.xpose.msra.mxu0 0
    %2238 = vmatpush.bf16.xpose.msra.mxu0 0
    %2239 = vmatpush.bf16.xpose.msra.mxu0 0
    %2240 = vmatpush.bf16.xpose.msra.mxu0 0
    %2241 = vmatpush.bf16.xpose.msra.mxu0 0
    %2242 = vmatpush.bf16.xpose.msra.mxu0 %v2233
    %2243 = vmatmul.bf16.gmra.mxu0 %v2230
    %v2244 = vpop.f32.mrf.mxu0
    %v2245 = vadd.f32 0.0, %v2244
    %v2246 = vpop.f32.mrf.mxu0
    %v2247 = vadd.f32 0.0, %v2246
    %2248 = vdwg.mxu0
    %2249 = vrot.lane.b32.xlu0 %v615, 120
    %v2250 = vpop.permute.xlu0 %2249
    %2251 = vrot.lane.b32.xlu0 %v615, 88
    %v2252 = vpop.permute.xlu0 %2251
    %v2254 = vsel %vm374, %v2250, 0
    %v2257 = vsel %vm374, %v2252, 0
    %2259 = vmatpush.bf16.xpose.msra.mxu0 0
    %2260 = vmatpush.bf16.xpose.msra.mxu0 0
    %2261 = vmatpush.bf16.xpose.msra.mxu0 0
    %2262 = vmatpush.bf16.xpose.msra.mxu0 0
    %2263 = vmatpush.bf16.xpose.msra.mxu0 0
    %2264 = vmatpush.bf16.xpose.msra.mxu0 0
    %2265 = vmatpush.bf16.xpose.msra.mxu0 0
    %2266 = vmatpush.bf16.xpose.msra.mxu0 %v2257
    %2267 = vmatmul.bf16.gmra.mxu0 %v2254
    %v2268 = vpop.f32.mrf.mxu0
    %v2269 = vadd.f32 0.0, %v2268
    %v2270 = vpop.f32.mrf.mxu0
    %v2271 = vadd.f32 0.0, %v2270
    %2272 = vdwg.mxu0
    %2273 = vrot.lane.b32.xlu0 %v642, 120
    %v2274 = vpop.permute.xlu0 %2273
    %2275 = vrot.lane.b32.xlu0 %v642, 88
    %v2276 = vpop.permute.xlu0 %2275
    %v2278 = vsel %vm374, %v2274, 0
    %v2281 = vsel %vm374, %v2276, 0
    %2283 = vmatpush.bf16.xpose.msra.mxu0 0
    %2284 = vmatpush.bf16.xpose.msra.mxu0 0
    %2285 = vmatpush.bf16.xpose.msra.mxu0 0
    %2286 = vmatpush.bf16.xpose.msra.mxu0 0
    %2287 = vmatpush.bf16.xpose.msra.mxu0 0
    %2288 = vmatpush.bf16.xpose.msra.mxu0 0
    %2289 = vmatpush.bf16.xpose.msra.mxu0 0
    %2290 = vmatpush.bf16.xpose.msra.mxu0 %v2281
    %2291 = vmatmul.bf16.gmra.mxu0 %v2278
    %v2292 = vpop.f32.mrf.mxu0
    %v2293 = vadd.f32 0.0, %v2292
    %v2294 = vpop.f32.mrf.mxu0
    %v2295 = vadd.f32 0.0, %v2294
    %2296 = vdwg.mxu0
    %2297 = vrot.lane.b32.xlu0 %v669, 120
    %v2298 = vpop.permute.xlu0 %2297
    %2299 = vrot.lane.b32.xlu0 %v669, 88
    %v2300 = vpop.permute.xlu0 %2299
    %v2302 = vsel %vm374, %v2298, 0
    %v2305 = vsel %vm374, %v2300, 0
    %2307 = vmatpush.bf16.xpose.msra.mxu0 0
    %2308 = vmatpush.bf16.xpose.msra.mxu0 0
    %2309 = vmatpush.bf16.xpose.msra.mxu0 0
    %2310 = vmatpush.bf16.xpose.msra.mxu0 0
    %2311 = vmatpush.bf16.xpose.msra.mxu0 0
    %2312 = vmatpush.bf16.xpose.msra.mxu0 0
    %2313 = vmatpush.bf16.xpose.msra.mxu0 0
    %2314 = vmatpush.bf16.xpose.msra.mxu0 %v2305
    %2315 = vmatmul.bf16.gmra.mxu0 %v2302
    %v2316 = vpop.f32.mrf.mxu0
    %v2317 = vadd.f32 0.0, %v2316
    %v2318 = vpop.f32.mrf.mxu0
    %v2319 = vadd.f32 0.0, %v2318
    %2320 = vdwg.mxu0
    %2321 = vrot.lane.b32.xlu0 %v696, 120
    %v2322 = vpop.permute.xlu0 %2321
    %2323 = vrot.lane.b32.xlu0 %v696, 88
    %v2324 = vpop.permute.xlu0 %2323
    %v2326 = vsel %vm374, %v2322, 0
    %v2329 = vsel %vm374, %v2324, 0
    %2331 = vmatpush.bf16.xpose.msra.mxu0 0
    %2332 = vmatpush.bf16.xpose.msra.mxu0 0
    %2333 = vmatpush.bf16.xpose.msra.mxu0 0
    %2334 = vmatpush.bf16.xpose.msra.mxu0 0
    %2335 = vmatpush.bf16.xpose.msra.mxu0 0
    %2336 = vmatpush.bf16.xpose.msra.mxu0 0
    %2337 = vmatpush.bf16.xpose.msra.mxu0 0
    %2338 = vmatpush.bf16.xpose.msra.mxu0 %v2329
    %2339 = vmatmul.bf16.gmra.mxu0 %v2326
    %v2340 = vpop.f32.mrf.mxu0
    %v2341 = vadd.f32 0.0, %v2340
    %v2342 = vpop.f32.mrf.mxu0
    %v2343 = vadd.f32 0.0, %v2342
    %2344 = vdwg.mxu0
    %2345 = vrot.lane.b32.xlu0 %v723, 120
    %v2346 = vpop.permute.xlu0 %2345
    %2347 = vrot.lane.b32.xlu0 %v723, 88
    %v2348 = vpop.permute.xlu0 %2347
    %v2350 = vsel %vm374, %v2346, 0
    %v2353 = vsel %vm374, %v2348, 0
    %2355 = vmatpush.bf16.xpose.msra.mxu0 0
    %2356 = vmatpush.bf16.xpose.msra.mxu0 0
    %2357 = vmatpush.bf16.xpose.msra.mxu0 0
    %2358 = vmatpush.bf16.xpose.msra.mxu0 0
    %2359 = vmatpush.bf16.xpose.msra.mxu0 0
    %2360 = vmatpush.bf16.xpose.msra.mxu0 0
    %2361 = vmatpush.bf16.xpose.msra.mxu0 0
    %2362 = vmatpush.bf16.xpose.msra.mxu0 %v2353
    %2363 = vmatmul.bf16.gmra.mxu0 %v2350
    %v2364 = vpop.f32.mrf.mxu0
    %v2365 = vadd.f32 0.0, %v2364
    %v2366 = vpop.f32.mrf.mxu0
    %v2367 = vadd.f32 0.0, %v2366
    %2368 = vdwg.mxu0
    %2369 = vrot.lane.b32.xlu0 %v750, 120
    %v2370 = vpop.permute.xlu0 %2369
    %2371 = vrot.lane.b32.xlu0 %v750, 88
    %v2372 = vpop.permute.xlu0 %2371
    %v2374 = vsel %vm374, %v2370, 0
    %v2377 = vsel %vm374, %v2372, 0
    %2379 = vmatpush.bf16.xpose.msra.mxu0 0
    %2380 = vmatpush.bf16.xpose.msra.mxu0 0
    %2381 = vmatpush.bf16.xpose.msra.mxu0 0
    %2382 = vmatpush.bf16.xpose.msra.mxu0 0
    %2383 = vmatpush.bf16.xpose.msra.mxu0 0
    %2384 = vmatpush.bf16.xpose.msra.mxu0 0
    %2385 = vmatpush.bf16.xpose.msra.mxu0 0
    %2386 = vmatpush.bf16.xpose.msra.mxu0 %v2377
    %2387 = vmatmul.bf16.gmra.mxu0 %v2374
    %v2388 = vpop.f32.mrf.mxu0
    %v2389 = vadd.f32 0.0, %v2388
    %v2390 = vpop.f32.mrf.mxu0
    %v2391 = vadd.f32 0.0, %v2390
    %2392 = vdwg.mxu0
    %2393 = vrot.lane.b32.xlu0 %v777, 120
    %v2394 = vpop.permute.xlu0 %2393
    %2395 = vrot.lane.b32.xlu0 %v777, 88
    %v2396 = vpop.permute.xlu0 %2395
    %v2398 = vsel %vm374, %v2394, 0
    %v2401 = vsel %vm374, %v2396, 0
    %2403 = vmatpush.bf16.xpose.msra.mxu0 0
    %2404 = vmatpush.bf16.xpose.msra.mxu0 0
    %2405 = vmatpush.bf16.xpose.msra.mxu0 0
    %2406 = vmatpush.bf16.xpose.msra.mxu0 0
    %2407 = vmatpush.bf16.xpose.msra.mxu0 0
    %2408 = vmatpush.bf16.xpose.msra.mxu0 0
    %2409 = vmatpush.bf16.xpose.msra.mxu0 0
    %2410 = vmatpush.bf16.xpose.msra.mxu0 %v2401
    %2411 = vmatmul.bf16.gmra.mxu0 %v2398
    %v2412 = vpop.f32.mrf.mxu0
    %v2413 = vadd.f32 0.0, %v2412
    %v2414 = vpop.f32.mrf.mxu0
    %v2415 = vadd.f32 0.0, %v2414
    %2416 = vdwg.mxu0
    %v2417 = vmul.f32 %v2053, 0.35355338
    %v2418 = vmul.f32 %v2055, 0.35355338
    %v2419 = vmul.f32 %v2077, 0.35355338
    %v2420 = vmul.f32 %v2079, 0.35355338
    %v2421 = vmul.f32 %v2101, 0.35355338
    %v2422 = vmul.f32 %v2103, 0.35355338
    %v2423 = vmul.f32 %v2125, 0.35355338
    %v2424 = vmul.f32 %v2127, 0.35355338
    %v2425 = vmul.f32 %v2149, 0.35355338
    %v2426 = vmul.f32 %v2151, 0.35355338
    %v2427 = vmul.f32 %v2173, 0.35355338
    %v2428 = vmul.f32 %v2175, 0.35355338
    %v2429 = vmul.f32 %v2197, 0.35355338
    %v2430 = vmul.f32 %v2199, 0.35355338
    %v2431 = vmul.f32 %v2221, 0.35355338
    %v2432 = vmul.f32 %v2223, 0.35355338
    %v2433 = vmul.f32 %v2245, 0.35355338
    %v2434 = vmul.f32 %v2247, 0.35355338
    %v2435 = vmul.f32 %v2269, 0.35355338
    %v2436 = vmul.f32 %v2271, 0.35355338
    %v2437 = vmul.f32 %v2293, 0.35355338
    %v2438 = vmul.f32 %v2295, 0.35355338
    %v2439 = vmul.f32 %v2317, 0.35355338
    %v2440 = vmul.f32 %v2319, 0.35355338
    %v2441 = vmul.f32 %v2341, 0.35355338
    %v2442 = vmul.f32 %v2343, 0.35355338
    %v2443 = vmul.f32 %v2365, 0.35355338
    %v2444 = vmul.f32 %v2367, 0.35355338
    %v2445 = vmul.f32 %v2389, 0.35355338
    %v2446 = vmul.f32 %v2391, 0.35355338
    %v2447 = vmul.f32 %v2413, 0.35355338
    %v2448 = vmul.f32 %v2415, 0.35355338
    %v2449 = vsel %vm832, %v2417, -inf
    %2450 = vmax.xlane.f32.xlu0 %v2449
    %v2451 = vpop.xlane.xlu0 %2450
    %v2452 = vsel %vm832, %v2418, -inf
    %2453 = vmax.xlane.f32.xlu0 %v2452
    %v2454 = vpop.xlane.xlu0 %2453
    %v2455 = vsel %vm832, %v2419, -inf
    %2456 = vmax.xlane.f32.xlu0 %v2455
    %v2457 = vpop.xlane.xlu0 %2456
    %v2458 = vsel %vm832, %v2420, -inf
    %2459 = vmax.xlane.f32.xlu0 %v2458
    %v2460 = vpop.xlane.xlu0 %2459
    %v2461 = vsel %vm832, %v2421, -inf
    %2462 = vmax.xlane.f32.xlu0 %v2461
    %v2463 = vpop.xlane.xlu0 %2462
    %v2464 = vsel %vm832, %v2422, -inf
    %2465 = vmax.xlane.f32.xlu0 %v2464
    %v2466 = vpop.xlane.xlu0 %2465
    %v2467 = vsel %vm832, %v2423, -inf
    %2468 = vmax.xlane.f32.xlu0 %v2467
    %v2469 = vpop.xlane.xlu0 %2468
    %v2470 = vsel %vm832, %v2424, -inf
    %2471 = vmax.xlane.f32.xlu0 %v2470
    %v2472 = vpop.xlane.xlu0 %2471
    %v2473 = vsel %vm832, %v2425, -inf
    %2474 = vmax.xlane.f32.xlu0 %v2473
    %v2475 = vpop.xlane.xlu0 %2474
    %v2476 = vsel %vm832, %v2426, -inf
    %2477 = vmax.xlane.f32.xlu0 %v2476
    %v2478 = vpop.xlane.xlu0 %2477
    %v2479 = vsel %vm832, %v2427, -inf
    %2480 = vmax.xlane.f32.xlu0 %v2479
    %v2481 = vpop.xlane.xlu0 %2480
    %v2482 = vsel %vm832, %v2428, -inf
    %2483 = vmax.xlane.f32.xlu0 %v2482
    %v2484 = vpop.xlane.xlu0 %2483
    %v2485 = vsel %vm832, %v2429, -inf
    %2486 = vmax.xlane.f32.xlu0 %v2485
    %v2487 = vpop.xlane.xlu0 %2486
    %v2488 = vsel %vm832, %v2430, -inf
    %2489 = vmax.xlane.f32.xlu0 %v2488
    %v2490 = vpop.xlane.xlu0 %2489
    %v2491 = vsel %vm832, %v2431, -inf
    %2492 = vmax.xlane.f32.xlu0 %v2491
    %v2493 = vpop.xlane.xlu0 %2492
    %v2494 = vsel %vm832, %v2432, -inf
    %2495 = vmax.xlane.f32.xlu0 %v2494
    %v2496 = vpop.xlane.xlu0 %2495
    %v2497 = vsel %vm832, %v2433, -inf
    %2498 = vmax.xlane.f32.xlu0 %v2497
    %v2499 = vpop.xlane.xlu0 %2498
    %v2500 = vsel %vm832, %v2434, -inf
    %2501 = vmax.xlane.f32.xlu0 %v2500
    %v2502 = vpop.xlane.xlu0 %2501
    %v2503 = vsel %vm832, %v2435, -inf
    %2504 = vmax.xlane.f32.xlu0 %v2503
    %v2505 = vpop.xlane.xlu0 %2504
    %v2506 = vsel %vm832, %v2436, -inf
    %2507 = vmax.xlane.f32.xlu0 %v2506
    %v2508 = vpop.xlane.xlu0 %2507
    %v2509 = vsel %vm832, %v2437, -inf
    %2510 = vmax.xlane.f32.xlu0 %v2509
    %v2511 = vpop.xlane.xlu0 %2510
    %v2512 = vsel %vm832, %v2438, -inf
    %2513 = vmax.xlane.f32.xlu0 %v2512
    %v2514 = vpop.xlane.xlu0 %2513
    %v2515 = vsel %vm832, %v2439, -inf
    %2516 = vmax.xlane.f32.xlu0 %v2515
    %v2517 = vpop.xlane.xlu0 %2516
    %v2518 = vsel %vm832, %v2440, -inf
    %2519 = vmax.xlane.f32.xlu0 %v2518
    %v2520 = vpop.xlane.xlu0 %2519
    %v2521 = vsel %vm832, %v2441, -inf
    %2522 = vmax.xlane.f32.xlu0 %v2521
    %v2523 = vpop.xlane.xlu0 %2522
    %v2524 = vsel %vm832, %v2442, -inf
    %2525 = vmax.xlane.f32.xlu0 %v2524
    %v2526 = vpop.xlane.xlu0 %2525
    %v2527 = vsel %vm832, %v2443, -inf
    %2528 = vmax.xlane.f32.xlu0 %v2527
    %v2529 = vpop.xlane.xlu0 %2528
    %v2530 = vsel %vm832, %v2444, -inf
    %2531 = vmax.xlane.f32.xlu0 %v2530
    %v2532 = vpop.xlane.xlu0 %2531
    %v2533 = vsel %vm832, %v2445, -inf
    %2534 = vmax.xlane.f32.xlu0 %v2533
    %v2535 = vpop.xlane.xlu0 %2534
    %v2536 = vsel %vm832, %v2446, -inf
    %2537 = vmax.xlane.f32.xlu0 %v2536
    %v2538 = vpop.xlane.xlu0 %2537
    %v2539 = vsel %vm832, %v2447, -inf
    %2540 = vmax.xlane.f32.xlu0 %v2539
    %v2541 = vpop.xlane.xlu0 %2540
    %v2542 = vsel %vm832, %v2448, -inf
    %2543 = vmax.xlane.f32.xlu0 %v2542
    %v2544 = vpop.xlane.xlu0 %2543
    %v2545 = vsub.f32 %v2417, %v2451
    %v2546 = vsub.f32 %v2418, %v2454
    %v2547 = vsub.f32 %v2419, %v2457
    %v2548 = vsub.f32 %v2420, %v2460
    %v2549 = vsub.f32 %v2421, %v2463
    %v2550 = vsub.f32 %v2422, %v2466
    %v2551 = vsub.f32 %v2423, %v2469
    %v2552 = vsub.f32 %v2424, %v2472
    %v2553 = vsub.f32 %v2425, %v2475
    %v2554 = vsub.f32 %v2426, %v2478
    %v2555 = vsub.f32 %v2427, %v2481
    %v2556 = vsub.f32 %v2428, %v2484
    %v2557 = vsub.f32 %v2429, %v2487
    %v2558 = vsub.f32 %v2430, %v2490
    %v2559 = vsub.f32 %v2431, %v2493
    %v2560 = vsub.f32 %v2432, %v2496
    %v2561 = vsub.f32 %v2433, %v2499
    %v2562 = vsub.f32 %v2434, %v2502
    %v2563 = vsub.f32 %v2435, %v2505
    %v2564 = vsub.f32 %v2436, %v2508
    %v2565 = vsub.f32 %v2437, %v2511
    %v2566 = vsub.f32 %v2438, %v2514
    %v2567 = vsub.f32 %v2439, %v2517
    %v2568 = vsub.f32 %v2440, %v2520
    %v2569 = vsub.f32 %v2441, %v2523
    %v2570 = vsub.f32 %v2442, %v2526
    %v2571 = vsub.f32 %v2443, %v2529
    %v2572 = vsub.f32 %v2444, %v2532
    %v2573 = vsub.f32 %v2445, %v2535
    %v2574 = vsub.f32 %v2446, %v2538
    %v2575 = vsub.f32 %v2447, %v2541
    %v2576 = vsub.f32 %v2448, %v2544
    %v2577 = vmul.f32 %v2545, 1.442695
    %v2578 = vpow.pop %v2577
    %v2579 = vmul.f32 %v2546, 1.442695
    %v2580 = vpow.pop %v2579
    %v2581 = vmul.f32 %v2547, 1.442695
    %v2582 = vpow.pop %v2581
    %v2583 = vmul.f32 %v2548, 1.442695
    %v2584 = vpow.pop %v2583
    %v2585 = vmul.f32 %v2549, 1.442695
    %v2586 = vpow.pop %v2585
    %v2587 = vmul.f32 %v2550, 1.442695
    %v2588 = vpow.pop %v2587
    %v2589 = vmul.f32 %v2551, 1.442695
    %v2590 = vpow.pop %v2589
    %v2591 = vmul.f32 %v2552, 1.442695
    %v2592 = vpow.pop %v2591
    %v2593 = vmul.f32 %v2553, 1.442695
    %v2594 = vpow.pop %v2593
    %v2595 = vmul.f32 %v2554, 1.442695
    %v2596 = vpow.pop %v2595
    %v2597 = vmul.f32 %v2555, 1.442695
    %v2598 = vpow.pop %v2597
    %v2599 = vmul.f32 %v2556, 1.442695
    %v2600 = vpow.pop %v2599
    %v2601 = vmul.f32 %v2557, 1.442695
    %v2602 = vpow.pop %v2601
    %v2603 = vmul.f32 %v2558, 1.442695
    %v2604 = vpow.pop %v2603
    %v2605 = vmul.f32 %v2559, 1.442695
    %v2606 = vpow.pop %v2605
    %v2607 = vmul.f32 %v2560, 1.442695
    %v2608 = vpow.pop %v2607
    %v2609 = vmul.f32 %v2561, 1.442695
    %v2610 = vpow.pop %v2609
    %v2611 = vmul.f32 %v2562, 1.442695
    %v2612 = vpow.pop %v2611
    %v2613 = vmul.f32 %v2563, 1.442695
    %v2614 = vpow.pop %v2613
    %v2615 = vmul.f32 %v2564, 1.442695
    %v2616 = vpow.pop %v2615
    %v2617 = vmul.f32 %v2565, 1.442695
    %v2618 = vpow.pop %v2617
    %v2619 = vmul.f32 %v2566, 1.442695
    %v2620 = vpow.pop %v2619
    %v2621 = vmul.f32 %v2567, 1.442695
    %v2622 = vpow.pop %v2621
    %v2623 = vmul.f32 %v2568, 1.442695
    %v2624 = vpow.pop %v2623
    %v2625 = vmul.f32 %v2569, 1.442695
    %v2626 = vpow.pop %v2625
    %v2627 = vmul.f32 %v2570, 1.442695
    %v2628 = vpow.pop %v2627
    %v2629 = vmul.f32 %v2571, 1.442695
    %v2630 = vpow.pop %v2629
    %v2631 = vmul.f32 %v2572, 1.442695
    %v2632 = vpow.pop %v2631
    %v2633 = vmul.f32 %v2573, 1.442695
    %v2634 = vpow.pop %v2633
    %v2635 = vmul.f32 %v2574, 1.442695
    %v2636 = vpow.pop %v2635
    %v2637 = vmul.f32 %v2575, 1.442695
    %v2638 = vpow.pop %v2637
    %v2639 = vmul.f32 %v2576, 1.442695
    %v2640 = vpow.pop %v2639
    %v2641 = vsel %vm832, %v2578, 0.0
    %2642 = vadd.xlane.f32.xlu0 %v2641
    %v2643 = vpop.xlane.xlu0 %2642
    %v2644 = vsel %vm832, %v2580, 0.0
    %2645 = vadd.xlane.f32.xlu0 %v2644
    %v2646 = vpop.xlane.xlu0 %2645
    %v2647 = vsel %vm832, %v2582, 0.0
    %2648 = vadd.xlane.f32.xlu0 %v2647
    %v2649 = vpop.xlane.xlu0 %2648
    %v2650 = vsel %vm832, %v2584, 0.0
    %2651 = vadd.xlane.f32.xlu0 %v2650
    %v2652 = vpop.xlane.xlu0 %2651
    %v2653 = vsel %vm832, %v2586, 0.0
    %2654 = vadd.xlane.f32.xlu0 %v2653
    %v2655 = vpop.xlane.xlu0 %2654
    %v2656 = vsel %vm832, %v2588, 0.0
    %2657 = vadd.xlane.f32.xlu0 %v2656
    %v2658 = vpop.xlane.xlu0 %2657
    %v2659 = vsel %vm832, %v2590, 0.0
    %2660 = vadd.xlane.f32.xlu0 %v2659
    %v2661 = vpop.xlane.xlu0 %2660
    %v2662 = vsel %vm832, %v2592, 0.0
    %2663 = vadd.xlane.f32.xlu0 %v2662
    %v2664 = vpop.xlane.xlu0 %2663
    %v2665 = vsel %vm832, %v2594, 0.0
    %2666 = vadd.xlane.f32.xlu0 %v2665
    %v2667 = vpop.xlane.xlu0 %2666
    %v2668 = vsel %vm832, %v2596, 0.0
    %2669 = vadd.xlane.f32.xlu0 %v2668
    %v2670 = vpop.xlane.xlu0 %2669
    %v2671 = vsel %vm832, %v2598, 0.0
    %2672 = vadd.xlane.f32.xlu0 %v2671
    %v2673 = vpop.xlane.xlu0 %2672
    %v2674 = vsel %vm832, %v2600, 0.0
    %2675 = vadd.xlane.f32.xlu0 %v2674
    %v2676 = vpop.xlane.xlu0 %2675
    %v2677 = vsel %vm832, %v2602, 0.0
    %2678 = vadd.xlane.f32.xlu0 %v2677
    %v2679 = vpop.xlane.xlu0 %2678
    %v2680 = vsel %vm832, %v2604, 0.0
    %2681 = vadd.xlane.f32.xlu0 %v2680
    %v2682 = vpop.xlane.xlu0 %2681
    %v2683 = vsel %vm832, %v2606, 0.0
    %2684 = vadd.xlane.f32.xlu0 %v2683
    %v2685 = vpop.xlane.xlu0 %2684
    %v2686 = vsel %vm832, %v2608, 0.0
    %2687 = vadd.xlane.f32.xlu0 %v2686
    %v2688 = vpop.xlane.xlu0 %2687
    %v2689 = vsel %vm832, %v2610, 0.0
    %2690 = vadd.xlane.f32.xlu0 %v2689
    %v2691 = vpop.xlane.xlu0 %2690
    %v2692 = vsel %vm832, %v2612, 0.0
    %2693 = vadd.xlane.f32.xlu0 %v2692
    %v2694 = vpop.xlane.xlu0 %2693
    %v2695 = vsel %vm832, %v2614, 0.0
    %2696 = vadd.xlane.f32.xlu0 %v2695
    %v2697 = vpop.xlane.xlu0 %2696
    %v2698 = vsel %vm832, %v2616, 0.0
    %2699 = vadd.xlane.f32.xlu0 %v2698
    %v2700 = vpop.xlane.xlu0 %2699
    %v2701 = vsel %vm832, %v2618, 0.0
    %2702 = vadd.xlane.f32.xlu0 %v2701
    %v2703 = vpop.xlane.xlu0 %2702
    %v2704 = vsel %vm832, %v2620, 0.0
    %2705 = vadd.xlane.f32.xlu0 %v2704
    %v2706 = vpop.xlane.xlu0 %2705
    %v2707 = vsel %vm832, %v2622, 0.0
    %2708 = vadd.xlane.f32.xlu0 %v2707
    %v2709 = vpop.xlane.xlu0 %2708
    %v2710 = vsel %vm832, %v2624, 0.0
    %2711 = vadd.xlane.f32.xlu0 %v2710
    %v2712 = vpop.xlane.xlu0 %2711
    %v2713 = vsel %vm832, %v2626, 0.0
    %2714 = vadd.xlane.f32.xlu0 %v2713
    %v2715 = vpop.xlane.xlu0 %2714
    %v2716 = vsel %vm832, %v2628, 0.0
    %2717 = vadd.xlane.f32.xlu0 %v2716
    %v2718 = vpop.xlane.xlu0 %2717
    %v2719 = vsel %vm832, %v2630, 0.0
    %2720 = vadd.xlane.f32.xlu0 %v2719
    %v2721 = vpop.xlane.xlu0 %2720
    %v2722 = vsel %vm832, %v2632, 0.0
    %2723 = vadd.xlane.f32.xlu0 %v2722
    %v2724 = vpop.xlane.xlu0 %2723
    %v2725 = vsel %vm832, %v2634, 0.0
    %2726 = vadd.xlane.f32.xlu0 %v2725
    %v2727 = vpop.xlane.xlu0 %2726
    %v2728 = vsel %vm832, %v2636, 0.0
    %2729 = vadd.xlane.f32.xlu0 %v2728
    %v2730 = vpop.xlane.xlu0 %2729
    %v2731 = vsel %vm832, %v2638, 0.0
    %2732 = vadd.xlane.f32.xlu0 %v2731
    %v2733 = vpop.xlane.xlu0 %2732
    %v2734 = vsel %vm832, %v2640, 0.0
    %2735 = vadd.xlane.f32.xlu0 %v2734
    %v2736 = vpop.xlane.xlu0 %2735
    %v2737 = vrcp.pop %v2643
    %v2738 = vmul.f32 %v2643, %v2737
    %v2739 = vsub.f32 1.0, %v2738
    %v2740 = vmul.f32 %v2737, %v2739
    %v2741 = vadd.f32 %v2737, %v2740
    %vm2742 = vweird.f32 %v2643
    %vm2743 = vweird.f32 %v2737
    %vm2744 = vmor %vm2742, %vm2743
    %v2745 = vsel %vm2744, %v2737, %v2741
    %v2746 = vand.u32 2147483647, %v2643
    %vm2747 = vcmp.eq.f32.partialorder %v2746, 8.507059e+37
    %v2748 = vand.u32 %v2643, 2147483648
    %v2749 = vor.u32 1.1754944e-38, %v2748
    %v2750 = vsel %vm2747, %v2749, %v2745
    %v2751 = vmul.f32 %v2578, %v2750
    %v2752 = vrcp.pop %v2646
    %v2753 = vmul.f32 %v2646, %v2752
    %v2754 = vsub.f32 1.0, %v2753
    %v2755 = vmul.f32 %v2752, %v2754
    %v2756 = vadd.f32 %v2752, %v2755
    %vm2757 = vweird.f32 %v2646
    %vm2758 = vweird.f32 %v2752
    %vm2759 = vmor %vm2757, %vm2758
    %v2760 = vsel %vm2759, %v2752, %v2756
    %v2761 = vand.u32 2147483647, %v2646
    %vm2762 = vcmp.eq.f32.partialorder %v2761, 8.507059e+37
    %v2763 = vand.u32 %v2646, 2147483648
    %v2764 = vor.u32 1.1754944e-38, %v2763
    %v2765 = vsel %vm2762, %v2764, %v2760
    %v2766 = vmul.f32 %v2580, %v2765
    %v2767 = vrcp.pop %v2649
    %v2768 = vmul.f32 %v2649, %v2767
    %v2769 = vsub.f32 1.0, %v2768
    %v2770 = vmul.f32 %v2767, %v2769
    %v2771 = vadd.f32 %v2767, %v2770
    %vm2772 = vweird.f32 %v2649
    %vm2773 = vweird.f32 %v2767
    %vm2774 = vmor %vm2772, %vm2773
    %v2775 = vsel %vm2774, %v2767, %v2771
    %v2776 = vand.u32 2147483647, %v2649
    %vm2777 = vcmp.eq.f32.partialorder %v2776, 8.507059e+37
    %v2778 = vand.u32 %v2649, 2147483648
    %v2779 = vor.u32 1.1754944e-38, %v2778
    %v2780 = vsel %vm2777, %v2779, %v2775
    %v2781 = vmul.f32 %v2582, %v2780
    %v2782 = vrcp.pop %v2652
    %v2783 = vmul.f32 %v2652, %v2782
    %v2784 = vsub.f32 1.0, %v2783
    %v2785 = vmul.f32 %v2782, %v2784
    %v2786 = vadd.f32 %v2782, %v2785
    %vm2787 = vweird.f32 %v2652
    %vm2788 = vweird.f32 %v2782
    %vm2789 = vmor %vm2787, %vm2788
    %v2790 = vsel %vm2789, %v2782, %v2786
    %v2791 = vand.u32 2147483647, %v2652
    %vm2792 = vcmp.eq.f32.partialorder %v2791, 8.507059e+37
    %v2793 = vand.u32 %v2652, 2147483648
    %v2794 = vor.u32 1.1754944e-38, %v2793
    %v2795 = vsel %vm2792, %v2794, %v2790
    %v2796 = vmul.f32 %v2584, %v2795
    %v2797 = vrcp.pop %v2655
    %v2798 = vmul.f32 %v2655, %v2797
    %v2799 = vsub.f32 1.0, %v2798
    %v2800 = vmul.f32 %v2797, %v2799
    %v2801 = vadd.f32 %v2797, %v2800
    %vm2802 = vweird.f32 %v2655
    %vm2803 = vweird.f32 %v2797
    %vm2804 = vmor %vm2802, %vm2803
    %v2805 = vsel %vm2804, %v2797, %v2801
    %v2806 = vand.u32 2147483647, %v2655
    %vm2807 = vcmp.eq.f32.partialorder %v2806, 8.507059e+37
    %v2808 = vand.u32 %v2655, 2147483648
    %v2809 = vor.u32 1.1754944e-38, %v2808
    %v2810 = vsel %vm2807, %v2809, %v2805
    %v2811 = vmul.f32 %v2586, %v2810
    %v2812 = vrcp.pop %v2658
    %v2813 = vmul.f32 %v2658, %v2812
    %v2814 = vsub.f32 1.0, %v2813
    %v2815 = vmul.f32 %v2812, %v2814
    %v2816 = vadd.f32 %v2812, %v2815
    %vm2817 = vweird.f32 %v2658
    %vm2818 = vweird.f32 %v2812
    %vm2819 = vmor %vm2817, %vm2818
    %v2820 = vsel %vm2819, %v2812, %v2816
    %v2821 = vand.u32 2147483647, %v2658
    %vm2822 = vcmp.eq.f32.partialorder %v2821, 8.507059e+37
    %v2823 = vand.u32 %v2658, 2147483648
    %v2824 = vor.u32 1.1754944e-38, %v2823
    %v2825 = vsel %vm2822, %v2824, %v2820
    %v2826 = vmul.f32 %v2588, %v2825
    %v2827 = vrcp.pop %v2661
    %v2828 = vmul.f32 %v2661, %v2827
    %v2829 = vsub.f32 1.0, %v2828
    %v2830 = vmul.f32 %v2827, %v2829
    %v2831 = vadd.f32 %v2827, %v2830
    %vm2832 = vweird.f32 %v2661
    %vm2833 = vweird.f32 %v2827
    %vm2834 = vmor %vm2832, %vm2833
    %v2835 = vsel %vm2834, %v2827, %v2831
    %v2836 = vand.u32 2147483647, %v2661
    %vm2837 = vcmp.eq.f32.partialorder %v2836, 8.507059e+37
    %v2838 = vand.u32 %v2661, 2147483648
    %v2839 = vor.u32 1.1754944e-38, %v2838
    %v2840 = vsel %vm2837, %v2839, %v2835
    %v2841 = vmul.f32 %v2590, %v2840
    %v2842 = vrcp.pop %v2664
    %v2843 = vmul.f32 %v2664, %v2842
    %v2844 = vsub.f32 1.0, %v2843
    %v2845 = vmul.f32 %v2842, %v2844
    %v2846 = vadd.f32 %v2842, %v2845
    %vm2847 = vweird.f32 %v2664
    %vm2848 = vweird.f32 %v2842
    %vm2849 = vmor %vm2847, %vm2848
    %v2850 = vsel %vm2849, %v2842, %v2846
    %v2851 = vand.u32 2147483647, %v2664
    %vm2852 = vcmp.eq.f32.partialorder %v2851, 8.507059e+37
    %v2853 = vand.u32 %v2664, 2147483648
    %v2854 = vor.u32 1.1754944e-38, %v2853
    %v2855 = vsel %vm2852, %v2854, %v2850
    %v2856 = vmul.f32 %v2592, %v2855
    %v2857 = vrcp.pop %v2667
    %v2858 = vmul.f32 %v2667, %v2857
    %v2859 = vsub.f32 1.0, %v2858
    %v2860 = vmul.f32 %v2857, %v2859
    %v2861 = vadd.f32 %v2857, %v2860
    %vm2862 = vweird.f32 %v2667
    %vm2863 = vweird.f32 %v2857
    %vm2864 = vmor %vm2862, %vm2863
    %v2865 = vsel %vm2864, %v2857, %v2861
    %v2866 = vand.u32 2147483647, %v2667
    %vm2867 = vcmp.eq.f32.partialorder %v2866, 8.507059e+37
    %v2868 = vand.u32 %v2667, 2147483648
    %v2869 = vor.u32 1.1754944e-38, %v2868
    %v2870 = vsel %vm2867, %v2869, %v2865
    %v2871 = vmul.f32 %v2594, %v2870
    %v2872 = vrcp.pop %v2670
    %v2873 = vmul.f32 %v2670, %v2872
    %v2874 = vsub.f32 1.0, %v2873
    %v2875 = vmul.f32 %v2872, %v2874
    %v2876 = vadd.f32 %v2872, %v2875
    %vm2877 = vweird.f32 %v2670
    %vm2878 = vweird.f32 %v2872
    %vm2879 = vmor %vm2877, %vm2878
    %v2880 = vsel %vm2879, %v2872, %v2876
    %v2881 = vand.u32 2147483647, %v2670
    %vm2882 = vcmp.eq.f32.partialorder %v2881, 8.507059e+37
    %v2883 = vand.u32 %v2670, 2147483648
    %v2884 = vor.u32 1.1754944e-38, %v2883
    %v2885 = vsel %vm2882, %v2884, %v2880
    %v2886 = vmul.f32 %v2596, %v2885
    %v2887 = vrcp.pop %v2673
    %v2888 = vmul.f32 %v2673, %v2887
    %v2889 = vsub.f32 1.0, %v2888
    %v2890 = vmul.f32 %v2887, %v2889
    %v2891 = vadd.f32 %v2887, %v2890
    %vm2892 = vweird.f32 %v2673
    %vm2893 = vweird.f32 %v2887
    %vm2894 = vmor %vm2892, %vm2893
    %v2895 = vsel %vm2894, %v2887, %v2891
    %v2896 = vand.u32 2147483647, %v2673
    %vm2897 = vcmp.eq.f32.partialorder %v2896, 8.507059e+37
    %v2898 = vand.u32 %v2673, 2147483648
    %v2899 = vor.u32 1.1754944e-38, %v2898
    %v2900 = vsel %vm2897, %v2899, %v2895
    %v2901 = vmul.f32 %v2598, %v2900
    %v2902 = vrcp.pop %v2676
    %v2903 = vmul.f32 %v2676, %v2902
    %v2904 = vsub.f32 1.0, %v2903
    %v2905 = vmul.f32 %v2902, %v2904
    %v2906 = vadd.f32 %v2902, %v2905
    %vm2907 = vweird.f32 %v2676
    %vm2908 = vweird.f32 %v2902
    %vm2909 = vmor %vm2907, %vm2908
    %v2910 = vsel %vm2909, %v2902, %v2906
    %v2911 = vand.u32 2147483647, %v2676
    %vm2912 = vcmp.eq.f32.partialorder %v2911, 8.507059e+37
    %v2913 = vand.u32 %v2676, 2147483648
    %v2914 = vor.u32 1.1754944e-38, %v2913
    %v2915 = vsel %vm2912, %v2914, %v2910
    %v2916 = vmul.f32 %v2600, %v2915
    %v2917 = vrcp.pop %v2679
    %v2918 = vmul.f32 %v2679, %v2917
    %v2919 = vsub.f32 1.0, %v2918
    %v2920 = vmul.f32 %v2917, %v2919
    %v2921 = vadd.f32 %v2917, %v2920
    %vm2922 = vweird.f32 %v2679
    %vm2923 = vweird.f32 %v2917
    %vm2924 = vmor %vm2922, %vm2923
    %v2925 = vsel %vm2924, %v2917, %v2921
    %v2926 = vand.u32 2147483647, %v2679
    %vm2927 = vcmp.eq.f32.partialorder %v2926, 8.507059e+37
    %v2928 = vand.u32 %v2679, 2147483648
    %v2929 = vor.u32 1.1754944e-38, %v2928
    %v2930 = vsel %vm2927, %v2929, %v2925
    %v2931 = vmul.f32 %v2602, %v2930
    %v2932 = vrcp.pop %v2682
    %v2933 = vmul.f32 %v2682, %v2932
    %v2934 = vsub.f32 1.0, %v2933
    %v2935 = vmul.f32 %v2932, %v2934
    %v2936 = vadd.f32 %v2932, %v2935
    %vm2937 = vweird.f32 %v2682
    %vm2938 = vweird.f32 %v2932
    %vm2939 = vmor %vm2937, %vm2938
    %v2940 = vsel %vm2939, %v2932, %v2936
    %v2941 = vand.u32 2147483647, %v2682
    %vm2942 = vcmp.eq.f32.partialorder %v2941, 8.507059e+37
    %v2943 = vand.u32 %v2682, 2147483648
    %v2944 = vor.u32 1.1754944e-38, %v2943
    %v2945 = vsel %vm2942, %v2944, %v2940
    %v2946 = vmul.f32 %v2604, %v2945
    %v2947 = vrcp.pop %v2685
    %v2948 = vmul.f32 %v2685, %v2947
    %v2949 = vsub.f32 1.0, %v2948
    %v2950 = vmul.f32 %v2947, %v2949
    %v2951 = vadd.f32 %v2947, %v2950
    %vm2952 = vweird.f32 %v2685
    %vm2953 = vweird.f32 %v2947
    %vm2954 = vmor %vm2952, %vm2953
    %v2955 = vsel %vm2954, %v2947, %v2951
    %v2956 = vand.u32 2147483647, %v2685
    %vm2957 = vcmp.eq.f32.partialorder %v2956, 8.507059e+37
    %v2958 = vand.u32 %v2685, 2147483648
    %v2959 = vor.u32 1.1754944e-38, %v2958
    %v2960 = vsel %vm2957, %v2959, %v2955
    %v2961 = vmul.f32 %v2606, %v2960
    %v2962 = vrcp.pop %v2688
    %v2963 = vmul.f32 %v2688, %v2962
    %v2964 = vsub.f32 1.0, %v2963
    %v2965 = vmul.f32 %v2962, %v2964
    %v2966 = vadd.f32 %v2962, %v2965
    %vm2967 = vweird.f32 %v2688
    %vm2968 = vweird.f32 %v2962
    %vm2969 = vmor %vm2967, %vm2968
    %v2970 = vsel %vm2969, %v2962, %v2966
    %v2971 = vand.u32 2147483647, %v2688
    %vm2972 = vcmp.eq.f32.partialorder %v2971, 8.507059e+37
    %v2973 = vand.u32 %v2688, 2147483648
    %v2974 = vor.u32 1.1754944e-38, %v2973
    %v2975 = vsel %vm2972, %v2974, %v2970
    %v2976 = vmul.f32 %v2608, %v2975
    %v2977 = vrcp.pop %v2691
    %v2978 = vmul.f32 %v2691, %v2977
    %v2979 = vsub.f32 1.0, %v2978
    %v2980 = vmul.f32 %v2977, %v2979
    %v2981 = vadd.f32 %v2977, %v2980
    %vm2982 = vweird.f32 %v2691
    %vm2983 = vweird.f32 %v2977
    %vm2984 = vmor %vm2982, %vm2983
    %v2985 = vsel %vm2984, %v2977, %v2981
    %v2986 = vand.u32 2147483647, %v2691
    %vm2987 = vcmp.eq.f32.partialorder %v2986, 8.507059e+37
    %v2988 = vand.u32 %v2691, 2147483648
    %v2989 = vor.u32 1.1754944e-38, %v2988
    %v2990 = vsel %vm2987, %v2989, %v2985
    %v2991 = vmul.f32 %v2610, %v2990
    %v2992 = vrcp.pop %v2694
    %v2993 = vmul.f32 %v2694, %v2992
    %v2994 = vsub.f32 1.0, %v2993
    %v2995 = vmul.f32 %v2992, %v2994
    %v2996 = vadd.f32 %v2992, %v2995
    %vm2997 = vweird.f32 %v2694
    %vm2998 = vweird.f32 %v2992
    %vm2999 = vmor %vm2997, %vm2998
    %v3000 = vsel %vm2999, %v2992, %v2996
    %v3001 = vand.u32 2147483647, %v2694
    %vm3002 = vcmp.eq.f32.partialorder %v3001, 8.507059e+37
    %v3003 = vand.u32 %v2694, 2147483648
    %v3004 = vor.u32 1.1754944e-38, %v3003
    %v3005 = vsel %vm3002, %v3004, %v3000
    %v3006 = vmul.f32 %v2612, %v3005
    %v3007 = vrcp.pop %v2697
    %v3008 = vmul.f32 %v2697, %v3007
    %v3009 = vsub.f32 1.0, %v3008
    %v3010 = vmul.f32 %v3007, %v3009
    %v3011 = vadd.f32 %v3007, %v3010
    %vm3012 = vweird.f32 %v2697
    %vm3013 = vweird.f32 %v3007
    %vm3014 = vmor %vm3012, %vm3013
    %v3015 = vsel %vm3014, %v3007, %v3011
    %v3016 = vand.u32 2147483647, %v2697
    %vm3017 = vcmp.eq.f32.partialorder %v3016, 8.507059e+37
    %v3018 = vand.u32 %v2697, 2147483648
    %v3019 = vor.u32 1.1754944e-38, %v3018
    %v3020 = vsel %vm3017, %v3019, %v3015
    %v3021 = vmul.f32 %v2614, %v3020
    %v3022 = vrcp.pop %v2700
    %v3023 = vmul.f32 %v2700, %v3022
    %v3024 = vsub.f32 1.0, %v3023
    %v3025 = vmul.f32 %v3022, %v3024
    %v3026 = vadd.f32 %v3022, %v3025
    %vm3027 = vweird.f32 %v2700
    %vm3028 = vweird.f32 %v3022
    %vm3029 = vmor %vm3027, %vm3028
    %v3030 = vsel %vm3029, %v3022, %v3026
    %v3031 = vand.u32 2147483647, %v2700
    %vm3032 = vcmp.eq.f32.partialorder %v3031, 8.507059e+37
    %v3033 = vand.u32 %v2700, 2147483648
    %v3034 = vor.u32 1.1754944e-38, %v3033
    %v3035 = vsel %vm3032, %v3034, %v3030
    %v3036 = vmul.f32 %v2616, %v3035
    %v3037 = vrcp.pop %v2703
    %v3038 = vmul.f32 %v2703, %v3037
    %v3039 = vsub.f32 1.0, %v3038
    %v3040 = vmul.f32 %v3037, %v3039
    %v3041 = vadd.f32 %v3037, %v3040
    %vm3042 = vweird.f32 %v2703
    %vm3043 = vweird.f32 %v3037
    %vm3044 = vmor %vm3042, %vm3043
    %v3045 = vsel %vm3044, %v3037, %v3041
    %v3046 = vand.u32 2147483647, %v2703
    %vm3047 = vcmp.eq.f32.partialorder %v3046, 8.507059e+37
    %v3048 = vand.u32 %v2703, 2147483648
    %v3049 = vor.u32 1.1754944e-38, %v3048
    %v3050 = vsel %vm3047, %v3049, %v3045
    %v3051 = vmul.f32 %v2618, %v3050
    %v3052 = vrcp.pop %v2706
    %v3053 = vmul.f32 %v2706, %v3052
    %v3054 = vsub.f32 1.0, %v3053
    %v3055 = vmul.f32 %v3052, %v3054
    %v3056 = vadd.f32 %v3052, %v3055
    %vm3057 = vweird.f32 %v2706
    %vm3058 = vweird.f32 %v3052
    %vm3059 = vmor %vm3057, %vm3058
    %v3060 = vsel %vm3059, %v3052, %v3056
    %v3061 = vand.u32 2147483647, %v2706
    %vm3062 = vcmp.eq.f32.partialorder %v3061, 8.507059e+37
    %v3063 = vand.u32 %v2706, 2147483648
    %v3064 = vor.u32 1.1754944e-38, %v3063
    %v3065 = vsel %vm3062, %v3064, %v3060
    %v3066 = vmul.f32 %v2620, %v3065
    %v3067 = vrcp.pop %v2709
    %v3068 = vmul.f32 %v2709, %v3067
    %v3069 = vsub.f32 1.0, %v3068
    %v3070 = vmul.f32 %v3067, %v3069
    %v3071 = vadd.f32 %v3067, %v3070
    %vm3072 = vweird.f32 %v2709
    %vm3073 = vweird.f32 %v3067
    %vm3074 = vmor %vm3072, %vm3073
    %v3075 = vsel %vm3074, %v3067, %v3071
    %v3076 = vand.u32 2147483647, %v2709
    %vm3077 = vcmp.eq.f32.partialorder %v3076, 8.507059e+37
    %v3078 = vand.u32 %v2709, 2147483648
    %v3079 = vor.u32 1.1754944e-38, %v3078
    %v3080 = vsel %vm3077, %v3079, %v3075
    %v3081 = vmul.f32 %v2622, %v3080
    %v3082 = vrcp.pop %v2712
    %v3083 = vmul.f32 %v2712, %v3082
    %v3084 = vsub.f32 1.0, %v3083
    %v3085 = vmul.f32 %v3082, %v3084
    %v3086 = vadd.f32 %v3082, %v3085
    %vm3087 = vweird.f32 %v2712
    %vm3088 = vweird.f32 %v3082
    %vm3089 = vmor %vm3087, %vm3088
    %v3090 = vsel %vm3089, %v3082, %v3086
    %v3091 = vand.u32 2147483647, %v2712
    %vm3092 = vcmp.eq.f32.partialorder %v3091, 8.507059e+37
    %v3093 = vand.u32 %v2712, 2147483648
    %v3094 = vor.u32 1.1754944e-38, %v3093
    %v3095 = vsel %vm3092, %v3094, %v3090
    %v3096 = vmul.f32 %v2624, %v3095
    %v3097 = vrcp.pop %v2715
    %v3098 = vmul.f32 %v2715, %v3097
    %v3099 = vsub.f32 1.0, %v3098
    %v3100 = vmul.f32 %v3097, %v3099
    %v3101 = vadd.f32 %v3097, %v3100
    %vm3102 = vweird.f32 %v2715
    %vm3103 = vweird.f32 %v3097
    %vm3104 = vmor %vm3102, %vm3103
    %v3105 = vsel %vm3104, %v3097, %v3101
    %v3106 = vand.u32 2147483647, %v2715
    %vm3107 = vcmp.eq.f32.partialorder %v3106, 8.507059e+37
    %v3108 = vand.u32 %v2715, 2147483648
    %v3109 = vor.u32 1.1754944e-38, %v3108
    %v3110 = vsel %vm3107, %v3109, %v3105
    %v3111 = vmul.f32 %v2626, %v3110
    %v3112 = vrcp.pop %v2718
    %v3113 = vmul.f32 %v2718, %v3112
    %v3114 = vsub.f32 1.0, %v3113
    %v3115 = vmul.f32 %v3112, %v3114
    %v3116 = vadd.f32 %v3112, %v3115
    %vm3117 = vweird.f32 %v2718
    %vm3118 = vweird.f32 %v3112
    %vm3119 = vmor %vm3117, %vm3118
    %v3120 = vsel %vm3119, %v3112, %v3116
    %v3121 = vand.u32 2147483647, %v2718
    %vm3122 = vcmp.eq.f32.partialorder %v3121, 8.507059e+37
    %v3123 = vand.u32 %v2718, 2147483648
    %v3124 = vor.u32 1.1754944e-38, %v3123
    %v3125 = vsel %vm3122, %v3124, %v3120
    %v3126 = vmul.f32 %v2628, %v3125
    %v3127 = vrcp.pop %v2721
    %v3128 = vmul.f32 %v2721, %v3127
    %v3129 = vsub.f32 1.0, %v3128
    %v3130 = vmul.f32 %v3127, %v3129
    %v3131 = vadd.f32 %v3127, %v3130
    %vm3132 = vweird.f32 %v2721
    %vm3133 = vweird.f32 %v3127
    %vm3134 = vmor %vm3132, %vm3133
    %v3135 = vsel %vm3134, %v3127, %v3131
    %v3136 = vand.u32 2147483647, %v2721
    %vm3137 = vcmp.eq.f32.partialorder %v3136, 8.507059e+37
    %v3138 = vand.u32 %v2721, 2147483648
    %v3139 = vor.u32 1.1754944e-38, %v3138
    %v3140 = vsel %vm3137, %v3139, %v3135
    %v3141 = vmul.f32 %v2630, %v3140
    %v3142 = vrcp.pop %v2724
    %v3143 = vmul.f32 %v2724, %v3142
    %v3144 = vsub.f32 1.0, %v3143
    %v3145 = vmul.f32 %v3142, %v3144
    %v3146 = vadd.f32 %v3142, %v3145
    %vm3147 = vweird.f32 %v2724
    %vm3148 = vweird.f32 %v3142
    %vm3149 = vmor %vm3147, %vm3148
    %v3150 = vsel %vm3149, %v3142, %v3146
    %v3151 = vand.u32 2147483647, %v2724
    %vm3152 = vcmp.eq.f32.partialorder %v3151, 8.507059e+37
    %v3153 = vand.u32 %v2724, 2147483648
    %v3154 = vor.u32 1.1754944e-38, %v3153
    %v3155 = vsel %vm3152, %v3154, %v3150
    %v3156 = vmul.f32 %v2632, %v3155
    %v3157 = vrcp.pop %v2727
    %v3158 = vmul.f32 %v2727, %v3157
    %v3159 = vsub.f32 1.0, %v3158
    %v3160 = vmul.f32 %v3157, %v3159
    %v3161 = vadd.f32 %v3157, %v3160
    %vm3162 = vweird.f32 %v2727
    %vm3163 = vweird.f32 %v3157
    %vm3164 = vmor %vm3162, %vm3163
    %v3165 = vsel %vm3164, %v3157, %v3161
    %v3166 = vand.u32 2147483647, %v2727
    %vm3167 = vcmp.eq.f32.partialorder %v3166, 8.507059e+37
    %v3168 = vand.u32 %v2727, 2147483648
    %v3169 = vor.u32 1.1754944e-38, %v3168
    %v3170 = vsel %vm3167, %v3169, %v3165
    %v3171 = vmul.f32 %v2634, %v3170
    %v3172 = vrcp.pop %v2730
    %v3173 = vmul.f32 %v2730, %v3172
    %v3174 = vsub.f32 1.0, %v3173
    %v3175 = vmul.f32 %v3172, %v3174
    %v3176 = vadd.f32 %v3172, %v3175
    %vm3177 = vweird.f32 %v2730
    %vm3178 = vweird.f32 %v3172
    %vm3179 = vmor %vm3177, %vm3178
    %v3180 = vsel %vm3179, %v3172, %v3176
    %v3181 = vand.u32 2147483647, %v2730
    %vm3182 = vcmp.eq.f32.partialorder %v3181, 8.507059e+37
    %v3183 = vand.u32 %v2730, 2147483648
    %v3184 = vor.u32 1.1754944e-38, %v3183
    %v3185 = vsel %vm3182, %v3184, %v3180
    %v3186 = vmul.f32 %v2636, %v3185
    %v3187 = vrcp.pop %v2733
    %v3188 = vmul.f32 %v2733, %v3187
    %v3189 = vsub.f32 1.0, %v3188
    %v3190 = vmul.f32 %v3187, %v3189
    %v3191 = vadd.f32 %v3187, %v3190
    %vm3192 = vweird.f32 %v2733
    %vm3193 = vweird.f32 %v3187
    %vm3194 = vmor %vm3192, %vm3193
    %v3195 = vsel %vm3194, %v3187, %v3191
    %v3196 = vand.u32 2147483647, %v2733
    %vm3197 = vcmp.eq.f32.partialorder %v3196, 8.507059e+37
    %v3198 = vand.u32 %v2733, 2147483648
    %v3199 = vor.u32 1.1754944e-38, %v3198
    %v3200 = vsel %vm3197, %v3199, %v3195
    %v3201 = vmul.f32 %v2638, %v3200
    %v3202 = vrcp.pop %v2736
    %v3203 = vmul.f32 %v2736, %v3202
    %v3204 = vsub.f32 1.0, %v3203
    %v3205 = vmul.f32 %v3202, %v3204
    %v3206 = vadd.f32 %v3202, %v3205
    %vm3207 = vweird.f32 %v2736
    %vm3208 = vweird.f32 %v3202
    %vm3209 = vmor %vm3207, %vm3208
    %v3210 = vsel %vm3209, %v3202, %v3206
    %v3211 = vand.u32 2147483647, %v2736
    %vm3212 = vcmp.eq.f32.partialorder %v3211, 8.507059e+37
    %v3213 = vand.u32 %v2736, 2147483648
    %v3214 = vor.u32 1.1754944e-38, %v3213
    %v3215 = vsel %vm3212, %v3214, %v3210
    %v3216 = vmul.f32 %v2640, %v3215
    %v3217 = vpack.c.bf16 %v2751, %v2751
    %v3218 = vpack.c.bf16 %v2766, %v2766
    %v3219 = vpack.c.bf16 %v2781, %v2781
    %v3220 = vpack.c.bf16 %v2796, %v2796
    %v3221 = vpack.c.bf16 %v2811, %v2811
    %v3222 = vpack.c.bf16 %v2826, %v2826
    %v3223 = vpack.c.bf16 %v2841, %v2841
    %v3224 = vpack.c.bf16 %v2856, %v2856
    %v3225 = vpack.c.bf16 %v2871, %v2871
    %v3226 = vpack.c.bf16 %v2886, %v2886
    %v3227 = vpack.c.bf16 %v2901, %v2901
    %v3228 = vpack.c.bf16 %v2916, %v2916
    %v3229 = vpack.c.bf16 %v2931, %v2931
    %v3230 = vpack.c.bf16 %v2946, %v2946
    %v3231 = vpack.c.bf16 %v2961, %v2961
    %v3232 = vpack.c.bf16 %v2976, %v2976
    %v3233 = vpack.c.bf16 %v2991, %v2991
    %v3234 = vpack.c.bf16 %v3006, %v3006
    %v3235 = vpack.c.bf16 %v3021, %v3021
    %v3236 = vpack.c.bf16 %v3036, %v3036
    %v3237 = vpack.c.bf16 %v3051, %v3051
    %v3238 = vpack.c.bf16 %v3066, %v3066
    %v3239 = vpack.c.bf16 %v3081, %v3081
    %v3240 = vpack.c.bf16 %v3096, %v3096
    %v3241 = vpack.c.bf16 %v3111, %v3111
    %v3242 = vpack.c.bf16 %v3126, %v3126
    %v3243 = vpack.c.bf16 %v3141, %v3141
    %v3244 = vpack.c.bf16 %v3156, %v3156
    %v3245 = vpack.c.bf16 %v3171, %v3171
    %v3246 = vpack.c.bf16 %v3186, %v3186
    %v3247 = vpack.c.bf16 %v3201, %v3201
    %v3248 = vpack.c.bf16 %v3216, %v3216
    %v3251 = vunpack.c.l.b16 %v3217
    %v3252 = vunpack.c.l.b16 %v3218
    %v3253 = vpack.c.b16 %v3252, %v3251
    %3254 = vrot.lane.b32.xlu0 %v371, 56
    %v3255 = vpop.permute.xlu0 %3254
    %v3258 = vsel %vm832, %v3253, 0
    %3260 = vmatpush.bf16.msra.mxu0 0
    %3261 = vmatpush.bf16.msra.mxu0 0
    %3262 = vmatpush.bf16.msra.mxu0 0
    %3263 = vmatpush.bf16.msra.mxu0 0
    %3264 = vmatpush.bf16.msra.mxu0 0
    %3265 = vmatpush.bf16.msra.mxu0 0
    %3266 = vmatpush.bf16.msra.mxu0 0
    %3267 = vmatpush.bf16.msra.mxu0 %v3255
    %3268 = vmatmul.bf16.gmra.mxu0 %v3258
    %v3269 = vpop.f32.mrf.mxu0
    %v3270 = vadd.f32 0.0, %v3269
    %v3271 = vpop.f32.mrf.mxu0
    %v3272 = vadd.f32 0.0, %v3271
    %3273 = vdwg.mxu0
    %v3276 = vunpack.c.l.b16 %v3219
    %v3277 = vunpack.c.l.b16 %v3220
    %v3278 = vpack.c.b16 %v3277, %v3276
    %3279 = vrot.lane.b32.xlu0 %v399, 56
    %v3280 = vpop.permute.xlu0 %3279
    %v3283 = vsel %vm832, %v3278, 0
    %3285 = vmatpush.bf16.msra.mxu0 0
    %3286 = vmatpush.bf16.msra.mxu0 0
    %3287 = vmatpush.bf16.msra.mxu0 0
    %3288 = vmatpush.bf16.msra.mxu0 0
    %3289 = vmatpush.bf16.msra.mxu0 0
    %3290 = vmatpush.bf16.msra.mxu0 0
    %3291 = vmatpush.bf16.msra.mxu0 0
    %3292 = vmatpush.bf16.msra.mxu0 %v3280
    %3293 = vmatmul.bf16.gmra.mxu0 %v3283
    %v3294 = vpop.f32.mrf.mxu0
    %v3295 = vadd.f32 0.0, %v3294
    %v3296 = vpop.f32.mrf.mxu0
    %v3297 = vadd.f32 0.0, %v3296
    %3298 = vdwg.mxu0
    %v3301 = vunpack.c.l.b16 %v3221
    %v3302 = vunpack.c.l.b16 %v3222
    %v3303 = vpack.c.b16 %v3302, %v3301
    %3304 = vrot.lane.b32.xlu0 %v426, 56
    %v3305 = vpop.permute.xlu0 %3304
    %v3308 = vsel %vm832, %v3303, 0
    %3310 = vmatpush.bf16.msra.mxu0 0
    %3311 = vmatpush.bf16.msra.mxu0 0
    %3312 = vmatpush.bf16.msra.mxu0 0
    %3313 = vmatpush.bf16.msra.mxu0 0
    %3314 = vmatpush.bf16.msra.mxu0 0
    %3315 = vmatpush.bf16.msra.mxu0 0
    %3316 = vmatpush.bf16.msra.mxu0 0
    %3317 = vmatpush.bf16.msra.mxu0 %v3305
    %3318 = vmatmul.bf16.gmra.mxu0 %v3308
    %v3319 = vpop.f32.mrf.mxu0
    %v3320 = vadd.f32 0.0, %v3319
    %v3321 = vpop.f32.mrf.mxu0
    %v3322 = vadd.f32 0.0, %v3321
    %3323 = vdwg.mxu0
    %v3326 = vunpack.c.l.b16 %v3223
    %v3327 = vunpack.c.l.b16 %v3224
    %v3328 = vpack.c.b16 %v3327, %v3326
    %3329 = vrot.lane.b32.xlu0 %v453, 56
    %v3330 = vpop.permute.xlu0 %3329
    %v3333 = vsel %vm832, %v3328, 0
    %3335 = vmatpush.bf16.msra.mxu0 0
    %3336 = vmatpush.bf16.msra.mxu0 0
    %3337 = vmatpush.bf16.msra.mxu0 0
    %3338 = vmatpush.bf16.msra.mxu0 0
    %3339 = vmatpush.bf16.msra.mxu0 0
    %3340 = vmatpush.bf16.msra.mxu0 0
    %3341 = vmatpush.bf16.msra.mxu0 0
    %3342 = vmatpush.bf16.msra.mxu0 %v3330
    %3343 = vmatmul.bf16.gmra.mxu0 %v3333
    %v3344 = vpop.f32.mrf.mxu0
    %v3345 = vadd.f32 0.0, %v3344
    %v3346 = vpop.f32.mrf.mxu0
    %v3347 = vadd.f32 0.0, %v3346
    %3348 = vdwg.mxu0
    %v3351 = vunpack.c.l.b16 %v3225
    %v3352 = vunpack.c.l.b16 %v3226
    %v3353 = vpack.c.b16 %v3352, %v3351
    %3354 = vrot.lane.b32.xlu0 %v480, 56
    %v3355 = vpop.permute.xlu0 %3354
    %v3358 = vsel %vm832, %v3353, 0
    %3360 = vmatpush.bf16.msra.mxu0 0
    %3361 = vmatpush.bf16.msra.mxu0 0
    %3362 = vmatpush.bf16.msra.mxu0 0
    %3363 = vmatpush.bf16.msra.mxu0 0
    %3364 = vmatpush.bf16.msra.mxu0 0
    %3365 = vmatpush.bf16.msra.mxu0 0
    %3366 = vmatpush.bf16.msra.mxu0 0
    %3367 = vmatpush.bf16.msra.mxu0 %v3355
    %3368 = vmatmul.bf16.gmra.mxu0 %v3358
    %v3369 = vpop.f32.mrf.mxu0
    %v3370 = vadd.f32 0.0, %v3369
    %v3371 = vpop.f32.mrf.mxu0
    %v3372 = vadd.f32 0.0, %v3371
    %3373 = vdwg.mxu0
    %v3376 = vunpack.c.l.b16 %v3227
    %v3377 = vunpack.c.l.b16 %v3228
    %v3378 = vpack.c.b16 %v3377, %v3376
    %3379 = vrot.lane.b32.xlu0 %v507, 56
    %v3380 = vpop.permute.xlu0 %3379
    %v3383 = vsel %vm832, %v3378, 0
    %3385 = vmatpush.bf16.msra.mxu0 0
    %3386 = vmatpush.bf16.msra.mxu0 0
    %3387 = vmatpush.bf16.msra.mxu0 0
    %3388 = vmatpush.bf16.msra.mxu0 0
    %3389 = vmatpush.bf16.msra.mxu0 0
    %3390 = vmatpush.bf16.msra.mxu0 0
    %3391 = vmatpush.bf16.msra.mxu0 0
    %3392 = vmatpush.bf16.msra.mxu0 %v3380
    %3393 = vmatmul.bf16.gmra.mxu0 %v3383
    %v3394 = vpop.f32.mrf.mxu0
    %v3395 = vadd.f32 0.0, %v3394
    %v3396 = vpop.f32.mrf.mxu0
    %v3397 = vadd.f32 0.0, %v3396
    %3398 = vdwg.mxu0
    %v3401 = vunpack.c.l.b16 %v3229
    %v3402 = vunpack.c.l.b16 %v3230
    %v3403 = vpack.c.b16 %v3402, %v3401
    %3404 = vrot.lane.b32.xlu0 %v534, 56
    %v3405 = vpop.permute.xlu0 %3404
    %v3408 = vsel %vm832, %v3403, 0
    %3410 = vmatpush.bf16.msra.mxu0 0
    %3411 = vmatpush.bf16.msra.mxu0 0
    %3412 = vmatpush.bf16.msra.mxu0 0
    %3413 = vmatpush.bf16.msra.mxu0 0
    %3414 = vmatpush.bf16.msra.mxu0 0
    %3415 = vmatpush.bf16.msra.mxu0 0
    %3416 = vmatpush.bf16.msra.mxu0 0
    %3417 = vmatpush.bf16.msra.mxu0 %v3405
    %3418 = vmatmul.bf16.gmra.mxu0 %v3408
    %v3419 = vpop.f32.mrf.mxu0
    %v3420 = vadd.f32 0.0, %v3419
    %v3421 = vpop.f32.mrf.mxu0
    %v3422 = vadd.f32 0.0, %v3421
    %3423 = vdwg.mxu0
    %v3426 = vunpack.c.l.b16 %v3231
    %v3427 = vunpack.c.l.b16 %v3232
    %v3428 = vpack.c.b16 %v3427, %v3426
    %3429 = vrot.lane.b32.xlu0 %v561, 56
    %v3430 = vpop.permute.xlu0 %3429
    %v3433 = vsel %vm832, %v3428, 0
    %3435 = vmatpush.bf16.msra.mxu0 0
    %3436 = vmatpush.bf16.msra.mxu0 0
    %3437 = vmatpush.bf16.msra.mxu0 0
    %3438 = vmatpush.bf16.msra.mxu0 0
    %3439 = vmatpush.bf16.msra.mxu0 0
    %3440 = vmatpush.bf16.msra.mxu0 0
    %3441 = vmatpush.bf16.msra.mxu0 0
    %3442 = vmatpush.bf16.msra.mxu0 %v3430
    %3443 = vmatmul.bf16.gmra.mxu0 %v3433
    %v3444 = vpop.f32.mrf.mxu0
    %v3445 = vadd.f32 0.0, %v3444
    %v3446 = vpop.f32.mrf.mxu0
    %v3447 = vadd.f32 0.0, %v3446
    %3448 = vdwg.mxu0
    %v3451 = vunpack.c.l.b16 %v3233
    %v3452 = vunpack.c.l.b16 %v3234
    %v3453 = vpack.c.b16 %v3452, %v3451
    %3454 = vrot.lane.b32.xlu0 %v588, 56
    %v3455 = vpop.permute.xlu0 %3454
    %v3458 = vsel %vm832, %v3453, 0
    %3460 = vmatpush.bf16.msra.mxu0 0
    %3461 = vmatpush.bf16.msra.mxu0 0
    %3462 = vmatpush.bf16.msra.mxu0 0
    %3463 = vmatpush.bf16.msra.mxu0 0
    %3464 = vmatpush.bf16.msra.mxu0 0
    %3465 = vmatpush.bf16.msra.mxu0 0
    %3466 = vmatpush.bf16.msra.mxu0 0
    %3467 = vmatpush.bf16.msra.mxu0 %v3455
    %3468 = vmatmul.bf16.gmra.mxu0 %v3458
    %v3469 = vpop.f32.mrf.mxu0
    %v3470 = vadd.f32 0.0, %v3469
    %v3471 = vpop.f32.mrf.mxu0
    %v3472 = vadd.f32 0.0, %v3471
    %3473 = vdwg.mxu0
    %v3476 = vunpack.c.l.b16 %v3235
    %v3477 = vunpack.c.l.b16 %v3236
    %v3478 = vpack.c.b16 %v3477, %v3476
    %3479 = vrot.lane.b32.xlu0 %v615, 56
    %v3480 = vpop.permute.xlu0 %3479
    %v3483 = vsel %vm832, %v3478, 0
    %3485 = vmatpush.bf16.msra.mxu0 0
    %3486 = vmatpush.bf16.msra.mxu0 0
    %3487 = vmatpush.bf16.msra.mxu0 0
    %3488 = vmatpush.bf16.msra.mxu0 0
    %3489 = vmatpush.bf16.msra.mxu0 0
    %3490 = vmatpush.bf16.msra.mxu0 0
    %3491 = vmatpush.bf16.msra.mxu0 0
    %3492 = vmatpush.bf16.msra.mxu0 %v3480
    %3493 = vmatmul.bf16.gmra.mxu0 %v3483
    %v3494 = vpop.f32.mrf.mxu0
    %v3495 = vadd.f32 0.0, %v3494
    %v3496 = vpop.f32.mrf.mxu0
    %v3497 = vadd.f32 0.0, %v3496
    %3498 = vdwg.mxu0
    %v3501 = vunpack.c.l.b16 %v3237
    %v3502 = vunpack.c.l.b16 %v3238
    %v3503 = vpack.c.b16 %v3502, %v3501
    %3504 = vrot.lane.b32.xlu0 %v642, 56
    %v3505 = vpop.permute.xlu0 %3504
    %v3508 = vsel %vm832, %v3503, 0
    %3510 = vmatpush.bf16.msra.mxu0 0
    %3511 = vmatpush.bf16.msra.mxu0 0
    %3512 = vmatpush.bf16.msra.mxu0 0
    %3513 = vmatpush.bf16.msra.mxu0 0
    %3514 = vmatpush.bf16.msra.mxu0 0
    %3515 = vmatpush.bf16.msra.mxu0 0
    %3516 = vmatpush.bf16.msra.mxu0 0
    %3517 = vmatpush.bf16.msra.mxu0 %v3505
    %3518 = vmatmul.bf16.gmra.mxu0 %v3508
    %v3519 = vpop.f32.mrf.mxu0
    %v3520 = vadd.f32 0.0, %v3519
    %v3521 = vpop.f32.mrf.mxu0
    %v3522 = vadd.f32 0.0, %v3521
    %3523 = vdwg.mxu0
    %v3526 = vunpack.c.l.b16 %v3239
    %v3527 = vunpack.c.l.b16 %v3240
    %v3528 = vpack.c.b16 %v3527, %v3526
    %3529 = vrot.lane.b32.xlu0 %v669, 56
    %v3530 = vpop.permute.xlu0 %3529
    %v3533 = vsel %vm832, %v3528, 0
    %3535 = vmatpush.bf16.msra.mxu0 0
    %3536 = vmatpush.bf16.msra.mxu0 0
    %3537 = vmatpush.bf16.msra.mxu0 0
    %3538 = vmatpush.bf16.msra.mxu0 0
    %3539 = vmatpush.bf16.msra.mxu0 0
    %3540 = vmatpush.bf16.msra.mxu0 0
    %3541 = vmatpush.bf16.msra.mxu0 0
    %3542 = vmatpush.bf16.msra.mxu0 %v3530
    %3543 = vmatmul.bf16.gmra.mxu0 %v3533
    %v3544 = vpop.f32.mrf.mxu0
    %v3545 = vadd.f32 0.0, %v3544
    %v3546 = vpop.f32.mrf.mxu0
    %v3547 = vadd.f32 0.0, %v3546
    %3548 = vdwg.mxu0
    %v3551 = vunpack.c.l.b16 %v3241
    %v3552 = vunpack.c.l.b16 %v3242
    %v3553 = vpack.c.b16 %v3552, %v3551
    %3554 = vrot.lane.b32.xlu0 %v696, 56
    %v3555 = vpop.permute.xlu0 %3554
    %v3558 = vsel %vm832, %v3553, 0
    %3560 = vmatpush.bf16.msra.mxu0 0
    %3561 = vmatpush.bf16.msra.mxu0 0
    %3562 = vmatpush.bf16.msra.mxu0 0
    %3563 = vmatpush.bf16.msra.mxu0 0
    %3564 = vmatpush.bf16.msra.mxu0 0
    %3565 = vmatpush.bf16.msra.mxu0 0
    %3566 = vmatpush.bf16.msra.mxu0 0
    %3567 = vmatpush.bf16.msra.mxu0 %v3555
    %3568 = vmatmul.bf16.gmra.mxu0 %v3558
    %v3569 = vpop.f32.mrf.mxu0
    %v3570 = vadd.f32 0.0, %v3569
    %v3571 = vpop.f32.mrf.mxu0
    %v3572 = vadd.f32 0.0, %v3571
    %3573 = vdwg.mxu0
    %v3576 = vunpack.c.l.b16 %v3243
    %v3577 = vunpack.c.l.b16 %v3244
    %v3578 = vpack.c.b16 %v3577, %v3576
    %3579 = vrot.lane.b32.xlu0 %v723, 56
    %v3580 = vpop.permute.xlu0 %3579
    %v3583 = vsel %vm832, %v3578, 0
    %3585 = vmatpush.bf16.msra.mxu0 0
    %3586 = vmatpush.bf16.msra.mxu0 0
    %3587 = vmatpush.bf16.msra.mxu0 0
    %3588 = vmatpush.bf16.msra.mxu0 0
    %3589 = vmatpush.bf16.msra.mxu0 0
    %3590 = vmatpush.bf16.msra.mxu0 0
    %3591 = vmatpush.bf16.msra.mxu0 0
    %3592 = vmatpush.bf16.msra.mxu0 %v3580
    %3593 = vmatmul.bf16.gmra.mxu0 %v3583
    %v3594 = vpop.f32.mrf.mxu0
    %v3595 = vadd.f32 0.0, %v3594
    %v3596 = vpop.f32.mrf.mxu0
    %v3597 = vadd.f32 0.0, %v3596
    %3598 = vdwg.mxu0
    %v3601 = vunpack.c.l.b16 %v3245
    %v3602 = vunpack.c.l.b16 %v3246
    %v3603 = vpack.c.b16 %v3602, %v3601
    %3604 = vrot.lane.b32.xlu0 %v750, 56
    %v3605 = vpop.permute.xlu0 %3604
    %v3608 = vsel %vm832, %v3603, 0
    %3610 = vmatpush.bf16.msra.mxu0 0
    %3611 = vmatpush.bf16.msra.mxu0 0
    %3612 = vmatpush.bf16.msra.mxu0 0
    %3613 = vmatpush.bf16.msra.mxu0 0
    %3614 = vmatpush.bf16.msra.mxu0 0
    %3615 = vmatpush.bf16.msra.mxu0 0
    %3616 = vmatpush.bf16.msra.mxu0 0
    %3617 = vmatpush.bf16.msra.mxu0 %v3605
    %3618 = vmatmul.bf16.gmra.mxu0 %v3608
    %v3619 = vpop.f32.mrf.mxu0
    %v3620 = vadd.f32 0.0, %v3619
    %v3621 = vpop.f32.mrf.mxu0
    %v3622 = vadd.f32 0.0, %v3621
    %3623 = vdwg.mxu0
    %v3626 = vunpack.c.l.b16 %v3247
    %v3627 = vunpack.c.l.b16 %v3248
    %v3628 = vpack.c.b16 %v3627, %v3626
    %3629 = vrot.lane.b32.xlu0 %v777, 56
    %v3630 = vpop.permute.xlu0 %3629
    %v3633 = vsel %vm832, %v3628, 0
    %3635 = vmatpush.bf16.msra.mxu0 0
    %3636 = vmatpush.bf16.msra.mxu0 0
    %3637 = vmatpush.bf16.msra.mxu0 0
    %3638 = vmatpush.bf16.msra.mxu0 0
    %3639 = vmatpush.bf16.msra.mxu0 0
    %3640 = vmatpush.bf16.msra.mxu0 0
    %3641 = vmatpush.bf16.msra.mxu0 0
    %3642 = vmatpush.bf16.msra.mxu0 %v3630
    %3643 = vmatmul.bf16.gmra.mxu0 %v3633
    %v3644 = vpop.f32.mrf.mxu0
    %v3645 = vadd.f32 0.0, %v3644
    %v3646 = vpop.f32.mrf.mxu0
    %v3647 = vadd.f32 0.0, %v3646
    %3648 = vdwg.mxu0
    %3649 = vrot.lane.b32.xlu0 %v371, 112
    %v3650 = vpop.permute.xlu0 %3649
    %3651 = vrot.lane.b32.xlu0 %v371, 80
    %v3652 = vpop.permute.xlu0 %3651
    %v3654 = vsel %vm374, %v3650, 0
    %v3657 = vsel %vm374, %v3652, 0
    %3659 = vmatpush.bf16.xpose.msra.mxu0 0
    %3660 = vmatpush.bf16.xpose.msra.mxu0 0
    %3661 = vmatpush.bf16.xpose.msra.mxu0 0
    %3662 = vmatpush.bf16.xpose.msra.mxu0 0
    %3663 = vmatpush.bf16.xpose.msra.mxu0 0
    %3664 = vmatpush.bf16.xpose.msra.mxu0 0
    %3665 = vmatpush.bf16.xpose.msra.mxu0 0
    %3666 = vmatpush.bf16.xpose.msra.mxu0 %v3657
    %3667 = vmatmul.bf16.gmra.mxu0 %v3654
    %v3668 = vpop.f32.mrf.mxu0
    %v3669 = vadd.f32 0.0, %v3668
    %v3670 = vpop.f32.mrf.mxu0
    %v3671 = vadd.f32 0.0, %v3670
    %3672 = vdwg.mxu0
    %3673 = vrot.lane.b32.xlu0 %v399, 112
    %v3674 = vpop.permute.xlu0 %3673
    %3675 = vrot.lane.b32.xlu0 %v399, 80
    %v3676 = vpop.permute.xlu0 %3675
    %v3678 = vsel %vm374, %v3674, 0
    %v3681 = vsel %vm374, %v3676, 0
    %3683 = vmatpush.bf16.xpose.msra.mxu0 0
    %3684 = vmatpush.bf16.xpose.msra.mxu0 0
    %3685 = vmatpush.bf16.xpose.msra.mxu0 0
    %3686 = vmatpush.bf16.xpose.msra.mxu0 0
    %3687 = vmatpush.bf16.xpose.msra.mxu0 0
    %3688 = vmatpush.bf16.xpose.msra.mxu0 0
    %3689 = vmatpush.bf16.xpose.msra.mxu0 0
    %3690 = vmatpush.bf16.xpose.msra.mxu0 %v3681
    %3691 = vmatmul.bf16.gmra.mxu0 %v3678
    %v3692 = vpop.f32.mrf.mxu0
    %v3693 = vadd.f32 0.0, %v3692
    %v3694 = vpop.f32.mrf.mxu0
    %v3695 = vadd.f32 0.0, %v3694
    %3696 = vdwg.mxu0
    %3697 = vrot.lane.b32.xlu0 %v426, 112
    %v3698 = vpop.permute.xlu0 %3697
    %3699 = vrot.lane.b32.xlu0 %v426, 80
    %v3700 = vpop.permute.xlu0 %3699
    %v3702 = vsel %vm374, %v3698, 0
    %v3705 = vsel %vm374, %v3700, 0
    %3707 = vmatpush.bf16.xpose.msra.mxu0 0
    %3708 = vmatpush.bf16.xpose.msra.mxu0 0
    %3709 = vmatpush.bf16.xpose.msra.mxu0 0
    %3710 = vmatpush.bf16.xpose.msra.mxu0 0
    %3711 = vmatpush.bf16.xpose.msra.mxu0 0
    %3712 = vmatpush.bf16.xpose.msra.mxu0 0
    %3713 = vmatpush.bf16.xpose.msra.mxu0 0
    %3714 = vmatpush.bf16.xpose.msra.mxu0 %v3705
    %3715 = vmatmul.bf16.gmra.mxu0 %v3702
    %v3716 = vpop.f32.mrf.mxu0
    %v3717 = vadd.f32 0.0, %v3716
    %v3718 = vpop.f32.mrf.mxu0
    %v3719 = vadd.f32 0.0, %v3718
    %3720 = vdwg.mxu0
    %3721 = vrot.lane.b32.xlu0 %v453, 112
    %v3722 = vpop.permute.xlu0 %3721
    %3723 = vrot.lane.b32.xlu0 %v453, 80
    %v3724 = vpop.permute.xlu0 %3723
    %v3726 = vsel %vm374, %v3722, 0
    %v3729 = vsel %vm374, %v3724, 0
    %3731 = vmatpush.bf16.xpose.msra.mxu0 0
    %3732 = vmatpush.bf16.xpose.msra.mxu0 0
    %3733 = vmatpush.bf16.xpose.msra.mxu0 0
    %3734 = vmatpush.bf16.xpose.msra.mxu0 0
    %3735 = vmatpush.bf16.xpose.msra.mxu0 0
    %3736 = vmatpush.bf16.xpose.msra.mxu0 0
    %3737 = vmatpush.bf16.xpose.msra.mxu0 0
    %3738 = vmatpush.bf16.xpose.msra.mxu0 %v3729
    %3739 = vmatmul.bf16.gmra.mxu0 %v3726
    %v3740 = vpop.f32.mrf.mxu0
    %v3741 = vadd.f32 0.0, %v3740
    %v3742 = vpop.f32.mrf.mxu0
    %v3743 = vadd.f32 0.0, %v3742
    %3744 = vdwg.mxu0
    %3745 = vrot.lane.b32.xlu0 %v480, 112
    %v3746 = vpop.permute.xlu0 %3745
    %3747 = vrot.lane.b32.xlu0 %v480, 80
    %v3748 = vpop.permute.xlu0 %3747
    %v3750 = vsel %vm374, %v3746, 0
    %v3753 = vsel %vm374, %v3748, 0
    %3755 = vmatpush.bf16.xpose.msra.mxu0 0
    %3756 = vmatpush.bf16.xpose.msra.mxu0 0
    %3757 = vmatpush.bf16.xpose.msra.mxu0 0
    %3758 = vmatpush.bf16.xpose.msra.mxu0 0
    %3759 = vmatpush.bf16.xpose.msra.mxu0 0
    %3760 = vmatpush.bf16.xpose.msra.mxu0 0
    %3761 = vmatpush.bf16.xpose.msra.mxu0 0
    %3762 = vmatpush.bf16.xpose.msra.mxu0 %v3753
    %3763 = vmatmul.bf16.gmra.mxu0 %v3750
    %v3764 = vpop.f32.mrf.mxu0
    %v3765 = vadd.f32 0.0, %v3764
    %v3766 = vpop.f32.mrf.mxu0
    %v3767 = vadd.f32 0.0, %v3766
    %3768 = vdwg.mxu0
    %3769 = vrot.lane.b32.xlu0 %v507, 112
    %v3770 = vpop.permute.xlu0 %3769
    %3771 = vrot.lane.b32.xlu0 %v507, 80
    %v3772 = vpop.permute.xlu0 %3771
    %v3774 = vsel %vm374, %v3770, 0
    %v3777 = vsel %vm374, %v3772, 0
    %3779 = vmatpush.bf16.xpose.msra.mxu0 0
    %3780 = vmatpush.bf16.xpose.msra.mxu0 0
    %3781 = vmatpush.bf16.xpose.msra.mxu0 0
    %3782 = vmatpush.bf16.xpose.msra.mxu0 0
    %3783 = vmatpush.bf16.xpose.msra.mxu0 0
    %3784 = vmatpush.bf16.xpose.msra.mxu0 0
    %3785 = vmatpush.bf16.xpose.msra.mxu0 0
    %3786 = vmatpush.bf16.xpose.msra.mxu0 %v3777
    %3787 = vmatmul.bf16.gmra.mxu0 %v3774
    %v3788 = vpop.f32.mrf.mxu0
    %v3789 = vadd.f32 0.0, %v3788
    %v3790 = vpop.f32.mrf.mxu0
    %v3791 = vadd.f32 0.0, %v3790
    %3792 = vdwg.mxu0
    %3793 = vrot.lane.b32.xlu0 %v534, 112
    %v3794 = vpop.permute.xlu0 %3793
    %3795 = vrot.lane.b32.xlu0 %v534, 80
    %v3796 = vpop.permute.xlu0 %3795
    %v3798 = vsel %vm374, %v3794, 0
    %v3801 = vsel %vm374, %v3796, 0
    %3803 = vmatpush.bf16.xpose.msra.mxu0 0
    %3804 = vmatpush.bf16.xpose.msra.mxu0 0
    %3805 = vmatpush.bf16.xpose.msra.mxu0 0
    %3806 = vmatpush.bf16.xpose.msra.mxu0 0
    %3807 = vmatpush.bf16.xpose.msra.mxu0 0
    %3808 = vmatpush.bf16.xpose.msra.mxu0 0
    %3809 = vmatpush.bf16.xpose.msra.mxu0 0
    %3810 = vmatpush.bf16.xpose.msra.mxu0 %v3801
    %3811 = vmatmul.bf16.gmra.mxu0 %v3798
    %v3812 = vpop.f32.mrf.mxu0
    %v3813 = vadd.f32 0.0, %v3812
    %v3814 = vpop.f32.mrf.mxu0
    %v3815 = vadd.f32 0.0, %v3814
    %3816 = vdwg.mxu0
    %3817 = vrot.lane.b32.xlu0 %v561, 112
    %v3818 = vpop.permute.xlu0 %3817
    %3819 = vrot.lane.b32.xlu0 %v561, 80
    %v3820 = vpop.permute.xlu0 %3819
    %v3822 = vsel %vm374, %v3818, 0
    %v3825 = vsel %vm374, %v3820, 0
    %3827 = vmatpush.bf16.xpose.msra.mxu0 0
    %3828 = vmatpush.bf16.xpose.msra.mxu0 0
    %3829 = vmatpush.bf16.xpose.msra.mxu0 0
    %3830 = vmatpush.bf16.xpose.msra.mxu0 0
    %3831 = vmatpush.bf16.xpose.msra.mxu0 0
    %3832 = vmatpush.bf16.xpose.msra.mxu0 0
    %3833 = vmatpush.bf16.xpose.msra.mxu0 0
    %3834 = vmatpush.bf16.xpose.msra.mxu0 %v3825
    %3835 = vmatmul.bf16.gmra.mxu0 %v3822
    %v3836 = vpop.f32.mrf.mxu0
    %v3837 = vadd.f32 0.0, %v3836
    %v3838 = vpop.f32.mrf.mxu0
    %v3839 = vadd.f32 0.0, %v3838
    %3840 = vdwg.mxu0
    %3841 = vrot.lane.b32.xlu0 %v588, 112
    %v3842 = vpop.permute.xlu0 %3841
    %3843 = vrot.lane.b32.xlu0 %v588, 80
    %v3844 = vpop.permute.xlu0 %3843
    %v3846 = vsel %vm374, %v3842, 0
    %v3849 = vsel %vm374, %v3844, 0
    %3851 = vmatpush.bf16.xpose.msra.mxu0 0
    %3852 = vmatpush.bf16.xpose.msra.mxu0 0
    %3853 = vmatpush.bf16.xpose.msra.mxu0 0
    %3854 = vmatpush.bf16.xpose.msra.mxu0 0
    %3855 = vmatpush.bf16.xpose.msra.mxu0 0
    %3856 = vmatpush.bf16.xpose.msra.mxu0 0
    %3857 = vmatpush.bf16.xpose.msra.mxu0 0
    %3858 = vmatpush.bf16.xpose.msra.mxu0 %v3849
    %3859 = vmatmul.bf16.gmra.mxu0 %v3846
    %v3860 = vpop.f32.mrf.mxu0
    %v3861 = vadd.f32 0.0, %v3860
    %v3862 = vpop.f32.mrf.mxu0
    %v3863 = vadd.f32 0.0, %v3862
    %3864 = vdwg.mxu0
    %3865 = vrot.lane.b32.xlu0 %v615, 112
    %v3866 = vpop.permute.xlu0 %3865
    %3867 = vrot.lane.b32.xlu0 %v615, 80
    %v3868 = vpop.permute.xlu0 %3867
    %v3870 = vsel %vm374, %v3866, 0
    %v3873 = vsel %vm374, %v3868, 0
    %3875 = vmatpush.bf16.xpose.msra.mxu0 0
    %3876 = vmatpush.bf16.xpose.msra.mxu0 0
    %3877 = vmatpush.bf16.xpose.msra.mxu0 0
    %3878 = vmatpush.bf16.xpose.msra.mxu0 0
    %3879 = vmatpush.bf16.xpose.msra.mxu0 0
    %3880 = vmatpush.bf16.xpose.msra.mxu0 0
    %3881 = vmatpush.bf16.xpose.msra.mxu0 0
    %3882 = vmatpush.bf16.xpose.msra.mxu0 %v3873
    %3883 = vmatmul.bf16.gmra.mxu0 %v3870
    %v3884 = vpop.f32.mrf.mxu0
    %v3885 = vadd.f32 0.0, %v3884
    %v3886 = vpop.f32.mrf.mxu0
    %v3887 = vadd.f32 0.0, %v3886
    %3888 = vdwg.mxu0
    %3889 = vrot.lane.b32.xlu0 %v642, 112
    %v3890 = vpop.permute.xlu0 %3889
    %3891 = vrot.lane.b32.xlu0 %v642, 80
    %v3892 = vpop.permute.xlu0 %3891
    %v3894 = vsel %vm374, %v3890, 0
    %v3897 = vsel %vm374, %v3892, 0
    %3899 = vmatpush.bf16.xpose.msra.mxu0 0
    %3900 = vmatpush.bf16.xpose.msra.mxu0 0
    %3901 = vmatpush.bf16.xpose.msra.mxu0 0
    %3902 = vmatpush.bf16.xpose.msra.mxu0 0
    %3903 = vmatpush.bf16.xpose.msra.mxu0 0
    %3904 = vmatpush.bf16.xpose.msra.mxu0 0
    %3905 = vmatpush.bf16.xpose.msra.mxu0 0
    %3906 = vmatpush.bf16.xpose.msra.mxu0 %v3897
    %3907 = vmatmul.bf16.gmra.mxu0 %v3894
    %v3908 = vpop.f32.mrf.mxu0
    %v3909 = vadd.f32 0.0, %v3908
    %v3910 = vpop.f32.mrf.mxu0
    %v3911 = vadd.f32 0.0, %v3910
    %3912 = vdwg.mxu0
    %3913 = vrot.lane.b32.xlu0 %v669, 112
    %v3914 = vpop.permute.xlu0 %3913
    %3915 = vrot.lane.b32.xlu0 %v669, 80
    %v3916 = vpop.permute.xlu0 %3915
    %v3918 = vsel %vm374, %v3914, 0
    %v3921 = vsel %vm374, %v3916, 0
    %3923 = vmatpush.bf16.xpose.msra.mxu0 0
    %3924 = vmatpush.bf16.xpose.msra.mxu0 0
    %3925 = vmatpush.bf16.xpose.msra.mxu0 0
    %3926 = vmatpush.bf16.xpose.msra.mxu0 0
    %3927 = vmatpush.bf16.xpose.msra.mxu0 0
    %3928 = vmatpush.bf16.xpose.msra.mxu0 0
    %3929 = vmatpush.bf16.xpose.msra.mxu0 0
    %3930 = vmatpush.bf16.xpose.msra.mxu0 %v3921
    %3931 = vmatmul.bf16.gmra.mxu0 %v3918
    %v3932 = vpop.f32.mrf.mxu0
    %v3933 = vadd.f32 0.0, %v3932
    %v3934 = vpop.f32.mrf.mxu0
    %v3935 = vadd.f32 0.0, %v3934
    %3936 = vdwg.mxu0
    %3937 = vrot.lane.b32.xlu0 %v696, 112
    %v3938 = vpop.permute.xlu0 %3937
    %3939 = vrot.lane.b32.xlu0 %v696, 80
    %v3940 = vpop.permute.xlu0 %3939
    %v3942 = vsel %vm374, %v3938, 0
    %v3945 = vsel %vm374, %v3940, 0
    %3947 = vmatpush.bf16.xpose.msra.mxu0 0
    %3948 = vmatpush.bf16.xpose.msra.mxu0 0
    %3949 = vmatpush.bf16.xpose.msra.mxu0 0
    %3950 = vmatpush.bf16.xpose.msra.mxu0 0
    %3951 = vmatpush.bf16.xpose.msra.mxu0 0
    %3952 = vmatpush.bf16.xpose.msra.mxu0 0
    %3953 = vmatpush.bf16.xpose.msra.mxu0 0
    %3954 = vmatpush.bf16.xpose.msra.mxu0 %v3945
    %3955 = vmatmul.bf16.gmra.mxu0 %v3942
    %v3956 = vpop.f32.mrf.mxu0
    %v3957 = vadd.f32 0.0, %v3956
    %v3958 = vpop.f32.mrf.mxu0
    %v3959 = vadd.f32 0.0, %v3958
    %3960 = vdwg.mxu0
    %3961 = vrot.lane.b32.xlu0 %v723, 112
    %v3962 = vpop.permute.xlu0 %3961
    %3963 = vrot.lane.b32.xlu0 %v723, 80
    %v3964 = vpop.permute.xlu0 %3963
    %v3966 = vsel %vm374, %v3962, 0
    %v3969 = vsel %vm374, %v3964, 0
    %3971 = vmatpush.bf16.xpose.msra.mxu0 0
    %3972 = vmatpush.bf16.xpose.msra.mxu0 0
    %3973 = vmatpush.bf16.xpose.msra.mxu0 0
    %3974 = vmatpush.bf16.xpose.msra.mxu0 0
    %3975 = vmatpush.bf16.xpose.msra.mxu0 0
    %3976 = vmatpush.bf16.xpose.msra.mxu0 0
    %3977 = vmatpush.bf16.xpose.msra.mxu0 0
    %3978 = vmatpush.bf16.xpose.msra.mxu0 %v3969
    %3979 = vmatmul.bf16.gmra.mxu0 %v3966
    %v3980 = vpop.f32.mrf.mxu0
    %v3981 = vadd.f32 0.0, %v3980
    %v3982 = vpop.f32.mrf.mxu0
    %v3983 = vadd.f32 0.0, %v3982
    %3984 = vdwg.mxu0
    %3985 = vrot.lane.b32.xlu0 %v750, 112
    %v3986 = vpop.permute.xlu0 %3985
    %3987 = vrot.lane.b32.xlu0 %v750, 80
    %v3988 = vpop.permute.xlu0 %3987
    %v3990 = vsel %vm374, %v3986, 0
    %v3993 = vsel %vm374, %v3988, 0
    %3995 = vmatpush.bf16.xpose.msra.mxu0 0
    %3996 = vmatpush.bf16.xpose.msra.mxu0 0
    %3997 = vmatpush.bf16.xpose.msra.mxu0 0
    %3998 = vmatpush.bf16.xpose.msra.mxu0 0
    %3999 = vmatpush.bf16.xpose.msra.mxu0 0
    %4000 = vmatpush.bf16.xpose.msra.mxu0 0
    %4001 = vmatpush.bf16.xpose.msra.mxu0 0
    %4002 = vmatpush.bf16.xpose.msra.mxu0 %v3993
    %4003 = vmatmul.bf16.gmra.mxu0 %v3990
    %v4004 = vpop.f32.mrf.mxu0
    %v4005 = vadd.f32 0.0, %v4004
    %v4006 = vpop.f32.mrf.mxu0
    %v4007 = vadd.f32 0.0, %v4006
    %4008 = vdwg.mxu0
    %4009 = vrot.lane.b32.xlu0 %v777, 112
    %v4010 = vpop.permute.xlu0 %4009
    %4011 = vrot.lane.b32.xlu0 %v777, 80
    %v4012 = vpop.permute.xlu0 %4011
    %v4014 = vsel %vm374, %v4010, 0
    %v4017 = vsel %vm374, %v4012, 0
    %4019 = vmatpush.bf16.xpose.msra.mxu0 0
    %4020 = vmatpush.bf16.xpose.msra.mxu0 0
    %4021 = vmatpush.bf16.xpose.msra.mxu0 0
    %4022 = vmatpush.bf16.xpose.msra.mxu0 0
    %4023 = vmatpush.bf16.xpose.msra.mxu0 0
    %4024 = vmatpush.bf16.xpose.msra.mxu0 0
    %4025 = vmatpush.bf16.xpose.msra.mxu0 0
    %4026 = vmatpush.bf16.xpose.msra.mxu0 %v4017
    %4027 = vmatmul.bf16.gmra.mxu0 %v4014
    %v4028 = vpop.f32.mrf.mxu0
    %v4029 = vadd.f32 0.0, %v4028
    %v4030 = vpop.f32.mrf.mxu0
    %v4031 = vadd.f32 0.0, %v4030
    %4032 = vdwg.mxu0
    %v4033 = vmul.f32 %v3669, 0.35355338
    %v4034 = vmul.f32 %v3671, 0.35355338
    %v4035 = vmul.f32 %v3693, 0.35355338
    %v4036 = vmul.f32 %v3695, 0.35355338
    %v4037 = vmul.f32 %v3717, 0.35355338
    %v4038 = vmul.f32 %v3719, 0.35355338
    %v4039 = vmul.f32 %v3741, 0.35355338
    %v4040 = vmul.f32 %v3743, 0.35355338
    %v4041 = vmul.f32 %v3765, 0.35355338
    %v4042 = vmul.f32 %v3767, 0.35355338
    %v4043 = vmul.f32 %v3789, 0.35355338
    %v4044 = vmul.f32 %v3791, 0.35355338
    %v4045 = vmul.f32 %v3813, 0.35355338
    %v4046 = vmul.f32 %v3815, 0.35355338
    %v4047 = vmul.f32 %v3837, 0.35355338
    %v4048 = vmul.f32 %v3839, 0.35355338
    %v4049 = vmul.f32 %v3861, 0.35355338
    %v4050 = vmul.f32 %v3863, 0.35355338
    %v4051 = vmul.f32 %v3885, 0.35355338
    %v4052 = vmul.f32 %v3887, 0.35355338
    %v4053 = vmul.f32 %v3909, 0.35355338
    %v4054 = vmul.f32 %v3911, 0.35355338
    %v4055 = vmul.f32 %v3933, 0.35355338
    %v4056 = vmul.f32 %v3935, 0.35355338
    %v4057 = vmul.f32 %v3957, 0.35355338
    %v4058 = vmul.f32 %v3959, 0.35355338
    %v4059 = vmul.f32 %v3981, 0.35355338
    %v4060 = vmul.f32 %v3983, 0.35355338
    %v4061 = vmul.f32 %v4005, 0.35355338
    %v4062 = vmul.f32 %v4007, 0.35355338
    %v4063 = vmul.f32 %v4029, 0.35355338
    %v4064 = vmul.f32 %v4031, 0.35355338
    %v4065 = vsel %vm832, %v4033, -inf
    %4066 = vmax.xlane.f32.xlu0 %v4065
    %v4067 = vpop.xlane.xlu0 %4066
    %v4068 = vsel %vm832, %v4034, -inf
    %4069 = vmax.xlane.f32.xlu0 %v4068
    %v4070 = vpop.xlane.xlu0 %4069
    %v4071 = vsel %vm832, %v4035, -inf
    %4072 = vmax.xlane.f32.xlu0 %v4071
    %v4073 = vpop.xlane.xlu0 %4072
    %v4074 = vsel %vm832, %v4036, -inf
    %4075 = vmax.xlane.f32.xlu0 %v4074
    %v4076 = vpop.xlane.xlu0 %4075
    %v4077 = vsel %vm832, %v4037, -inf
    %4078 = vmax.xlane.f32.xlu0 %v4077
    %v4079 = vpop.xlane.xlu0 %4078
    %v4080 = vsel %vm832, %v4038, -inf
    %4081 = vmax.xlane.f32.xlu0 %v4080
    %v4082 = vpop.xlane.xlu0 %4081
    %v4083 = vsel %vm832, %v4039, -inf
    %4084 = vmax.xlane.f32.xlu0 %v4083
    %v4085 = vpop.xlane.xlu0 %4084
    %v4086 = vsel %vm832, %v4040, -inf
    %4087 = vmax.xlane.f32.xlu0 %v4086
    %v4088 = vpop.xlane.xlu0 %4087
    %v4089 = vsel %vm832, %v4041, -inf
    %4090 = vmax.xlane.f32.xlu0 %v4089
    %v4091 = vpop.xlane.xlu0 %4090
    %v4092 = vsel %vm832, %v4042, -inf
    %4093 = vmax.xlane.f32.xlu0 %v4092
    %v4094 = vpop.xlane.xlu0 %4093
    %v4095 = vsel %vm832, %v4043, -inf
    %4096 = vmax.xlane.f32.xlu0 %v4095
    %v4097 = vpop.xlane.xlu0 %4096
    %v4098 = vsel %vm832, %v4044, -inf
    %4099 = vmax.xlane.f32.xlu0 %v4098
    %v4100 = vpop.xlane.xlu0 %4099
    %v4101 = vsel %vm832, %v4045, -inf
    %4102 = vmax.xlane.f32.xlu0 %v4101
    %v4103 = vpop.xlane.xlu0 %4102
    %v4104 = vsel %vm832, %v4046, -inf
    %4105 = vmax.xlane.f32.xlu0 %v4104
    %v4106 = vpop.xlane.xlu0 %4105
    %v4107 = vsel %vm832, %v4047, -inf
    %4108 = vmax.xlane.f32.xlu0 %v4107
    %v4109 = vpop.xlane.xlu0 %4108
    %v4110 = vsel %vm832, %v4048, -inf
    %4111 = vmax.xlane.f32.xlu0 %v4110
    %v4112 = vpop.xlane.xlu0 %4111
    %v4113 = vsel %vm832, %v4049, -inf
    %4114 = vmax.xlane.f32.xlu0 %v4113
    %v4115 = vpop.xlane.xlu0 %4114
    %v4116 = vsel %vm832, %v4050, -inf
    %4117 = vmax.xlane.f32.xlu0 %v4116
    %v4118 = vpop.xlane.xlu0 %4117
    %v4119 = vsel %vm832, %v4051, -inf
    %4120 = vmax.xlane.f32.xlu0 %v4119
    %v4121 = vpop.xlane.xlu0 %4120
    %v4122 = vsel %vm832, %v4052, -inf
    %4123 = vmax.xlane.f32.xlu0 %v4122
    %v4124 = vpop.xlane.xlu0 %4123
    %v4125 = vsel %vm832, %v4053, -inf
    %4126 = vmax.xlane.f32.xlu0 %v4125
    %v4127 = vpop.xlane.xlu0 %4126
    %v4128 = vsel %vm832, %v4054, -inf
    %4129 = vmax.xlane.f32.xlu0 %v4128
    %v4130 = vpop.xlane.xlu0 %4129
    %v4131 = vsel %vm832, %v4055, -inf
    %4132 = vmax.xlane.f32.xlu0 %v4131
    %v4133 = vpop.xlane.xlu0 %4132
    %v4134 = vsel %vm832, %v4056, -inf
    %4135 = vmax.xlane.f32.xlu0 %v4134
    %v4136 = vpop.xlane.xlu0 %4135
    %v4137 = vsel %vm832, %v4057, -inf
    %4138 = vmax.xlane.f32.xlu0 %v4137
    %v4139 = vpop.xlane.xlu0 %4138
    %v4140 = vsel %vm832, %v4058, -inf
    %4141 = vmax.xlane.f32.xlu0 %v4140
    %v4142 = vpop.xlane.xlu0 %4141
    %v4143 = vsel %vm832, %v4059, -inf
    %4144 = vmax.xlane.f32.xlu0 %v4143
    %v4145 = vpop.xlane.xlu0 %4144
    %v4146 = vsel %vm832, %v4060, -inf
    %4147 = vmax.xlane.f32.xlu0 %v4146
    %v4148 = vpop.xlane.xlu0 %4147
    %v4149 = vsel %vm832, %v4061, -inf
    %4150 = vmax.xlane.f32.xlu0 %v4149
    %v4151 = vpop.xlane.xlu0 %4150
    %v4152 = vsel %vm832, %v4062, -inf
    %4153 = vmax.xlane.f32.xlu0 %v4152
    %v4154 = vpop.xlane.xlu0 %4153
    %v4155 = vsel %vm832, %v4063, -inf
    %4156 = vmax.xlane.f32.xlu0 %v4155
    %v4157 = vpop.xlane.xlu0 %4156
    %v4158 = vsel %vm832, %v4064, -inf
    %4159 = vmax.xlane.f32.xlu0 %v4158
    %v4160 = vpop.xlane.xlu0 %4159
    %v4161 = vsub.f32 %v4033, %v4067
    %v4162 = vsub.f32 %v4034, %v4070
    %v4163 = vsub.f32 %v4035, %v4073
    %v4164 = vsub.f32 %v4036, %v4076
    %v4165 = vsub.f32 %v4037, %v4079
    %v4166 = vsub.f32 %v4038, %v4082
    %v4167 = vsub.f32 %v4039, %v4085
    %v4168 = vsub.f32 %v4040, %v4088
    %v4169 = vsub.f32 %v4041, %v4091
    %v4170 = vsub.f32 %v4042, %v4094
    %v4171 = vsub.f32 %v4043, %v4097
    %v4172 = vsub.f32 %v4044, %v4100
    %v4173 = vsub.f32 %v4045, %v4103
    %v4174 = vsub.f32 %v4046, %v4106
    %v4175 = vsub.f32 %v4047, %v4109
    %v4176 = vsub.f32 %v4048, %v4112
    %v4177 = vsub.f32 %v4049, %v4115
    %v4178 = vsub.f32 %v4050, %v4118
    %v4179 = vsub.f32 %v4051, %v4121
    %v4180 = vsub.f32 %v4052, %v4124
    %v4181 = vsub.f32 %v4053, %v4127
    %v4182 = vsub.f32 %v4054, %v4130
    %v4183 = vsub.f32 %v4055, %v4133
    %v4184 = vsub.f32 %v4056, %v4136
    %v4185 = vsub.f32 %v4057, %v4139
    %v4186 = vsub.f32 %v4058, %v4142
    %v4187 = vsub.f32 %v4059, %v4145
    %v4188 = vsub.f32 %v4060, %v4148
    %v4189 = vsub.f32 %v4061, %v4151
    %v4190 = vsub.f32 %v4062, %v4154
    %v4191 = vsub.f32 %v4063, %v4157
    %v4192 = vsub.f32 %v4064, %v4160
    %v4193 = vmul.f32 %v4161, 1.442695
    %v4194 = vpow.pop %v4193
    %v4195 = vmul.f32 %v4162, 1.442695
    %v4196 = vpow.pop %v4195
    %v4197 = vmul.f32 %v4163, 1.442695
    %v4198 = vpow.pop %v4197
    %v4199 = vmul.f32 %v4164, 1.442695
    %v4200 = vpow.pop %v4199
    %v4201 = vmul.f32 %v4165, 1.442695
    %v4202 = vpow.pop %v4201
    %v4203 = vmul.f32 %v4166, 1.442695
    %v4204 = vpow.pop %v4203
    %v4205 = vmul.f32 %v4167, 1.442695
    %v4206 = vpow.pop %v4205
    %v4207 = vmul.f32 %v4168, 1.442695
    %v4208 = vpow.pop %v4207
    %v4209 = vmul.f32 %v4169, 1.442695
    %v4210 = vpow.pop %v4209
    %v4211 = vmul.f32 %v4170, 1.442695
    %v4212 = vpow.pop %v4211
    %v4213 = vmul.f32 %v4171, 1.442695
    %v4214 = vpow.pop %v4213
    %v4215 = vmul.f32 %v4172, 1.442695
    %v4216 = vpow.pop %v4215
    %v4217 = vmul.f32 %v4173, 1.442695
    %v4218 = vpow.pop %v4217
    %v4219 = vmul.f32 %v4174, 1.442695
    %v4220 = vpow.pop %v4219
    %v4221 = vmul.f32 %v4175, 1.442695
    %v4222 = vpow.pop %v4221
    %v4223 = vmul.f32 %v4176, 1.442695
    %v4224 = vpow.pop %v4223
    %v4225 = vmul.f32 %v4177, 1.442695
    %v4226 = vpow.pop %v4225
    %v4227 = vmul.f32 %v4178, 1.442695
    %v4228 = vpow.pop %v4227
    %v4229 = vmul.f32 %v4179, 1.442695
    %v4230 = vpow.pop %v4229
    %v4231 = vmul.f32 %v4180, 1.442695
    %v4232 = vpow.pop %v4231
    %v4233 = vmul.f32 %v4181, 1.442695
    %v4234 = vpow.pop %v4233
    %v4235 = vmul.f32 %v4182, 1.442695
    %v4236 = vpow.pop %v4235
    %v4237 = vmul.f32 %v4183, 1.442695
    %v4238 = vpow.pop %v4237
    %v4239 = vmul.f32 %v4184, 1.442695
    %v4240 = vpow.pop %v4239
    %v4241 = vmul.f32 %v4185, 1.442695
    %v4242 = vpow.pop %v4241
    %v4243 = vmul.f32 %v4186, 1.442695
    %v4244 = vpow.pop %v4243
    %v4245 = vmul.f32 %v4187, 1.442695
    %v4246 = vpow.pop %v4245
    %v4247 = vmul.f32 %v4188, 1.442695
    %v4248 = vpow.pop %v4247
    %v4249 = vmul.f32 %v4189, 1.442695
    %v4250 = vpow.pop %v4249
    %v4251 = vmul.f32 %v4190, 1.442695
    %v4252 = vpow.pop %v4251
    %v4253 = vmul.f32 %v4191, 1.442695
    %v4254 = vpow.pop %v4253
    %v4255 = vmul.f32 %v4192, 1.442695
    %v4256 = vpow.pop %v4255
    %v4257 = vsel %vm832, %v4194, 0.0
    %4258 = vadd.xlane.f32.xlu0 %v4257
    %v4259 = vpop.xlane.xlu0 %4258
    %v4260 = vsel %vm832, %v4196, 0.0
    %4261 = vadd.xlane.f32.xlu0 %v4260
    %v4262 = vpop.xlane.xlu0 %4261
    %v4263 = vsel %vm832, %v4198, 0.0
    %4264 = vadd.xlane.f32.xlu0 %v4263
    %v4265 = vpop.xlane.xlu0 %4264
    %v4266 = vsel %vm832, %v4200, 0.0
    %4267 = vadd.xlane.f32.xlu0 %v4266
    %v4268 = vpop.xlane.xlu0 %4267
    %v4269 = vsel %vm832, %v4202, 0.0
    %4270 = vadd.xlane.f32.xlu0 %v4269
    %v4271 = vpop.xlane.xlu0 %4270
    %v4272 = vsel %vm832, %v4204, 0.0
    %4273 = vadd.xlane.f32.xlu0 %v4272
    %v4274 = vpop.xlane.xlu0 %4273
    %v4275 = vsel %vm832, %v4206, 0.0
    %4276 = vadd.xlane.f32.xlu0 %v4275
    %v4277 = vpop.xlane.xlu0 %4276
    %v4278 = vsel %vm832, %v4208, 0.0
    %4279 = vadd.xlane.f32.xlu0 %v4278
    %v4280 = vpop.xlane.xlu0 %4279
    %v4281 = vsel %vm832, %v4210, 0.0
    %4282 = vadd.xlane.f32.xlu0 %v4281
    %v4283 = vpop.xlane.xlu0 %4282
    %v4284 = vsel %vm832, %v4212, 0.0
    %4285 = vadd.xlane.f32.xlu0 %v4284
    %v4286 = vpop.xlane.xlu0 %4285
    %v4287 = vsel %vm832, %v4214, 0.0
    %4288 = vadd.xlane.f32.xlu0 %v4287
    %v4289 = vpop.xlane.xlu0 %4288
    %v4290 = vsel %vm832, %v4216, 0.0
    %4291 = vadd.xlane.f32.xlu0 %v4290
    %v4292 = vpop.xlane.xlu0 %4291
    %v4293 = vsel %vm832, %v4218, 0.0
    %4294 = vadd.xlane.f32.xlu0 %v4293
    %v4295 = vpop.xlane.xlu0 %4294
    %v4296 = vsel %vm832, %v4220, 0.0
    %4297 = vadd.xlane.f32.xlu0 %v4296
    %v4298 = vpop.xlane.xlu0 %4297
    %v4299 = vsel %vm832, %v4222, 0.0
    %4300 = vadd.xlane.f32.xlu0 %v4299
    %v4301 = vpop.xlane.xlu0 %4300
    %v4302 = vsel %vm832, %v4224, 0.0
    %4303 = vadd.xlane.f32.xlu0 %v4302
    %v4304 = vpop.xlane.xlu0 %4303
    %v4305 = vsel %vm832, %v4226, 0.0
    %4306 = vadd.xlane.f32.xlu0 %v4305
    %v4307 = vpop.xlane.xlu0 %4306
    %v4308 = vsel %vm832, %v4228, 0.0
    %4309 = vadd.xlane.f32.xlu0 %v4308
    %v4310 = vpop.xlane.xlu0 %4309
    %v4311 = vsel %vm832, %v4230, 0.0
    %4312 = vadd.xlane.f32.xlu0 %v4311
    %v4313 = vpop.xlane.xlu0 %4312
    %v4314 = vsel %vm832, %v4232, 0.0
    %4315 = vadd.xlane.f32.xlu0 %v4314
    %v4316 = vpop.xlane.xlu0 %4315
    %v4317 = vsel %vm832, %v4234, 0.0
    %4318 = vadd.xlane.f32.xlu0 %v4317
    %v4319 = vpop.xlane.xlu0 %4318
    %v4320 = vsel %vm832, %v4236, 0.0
    %4321 = vadd.xlane.f32.xlu0 %v4320
    %v4322 = vpop.xlane.xlu0 %4321
    %v4323 = vsel %vm832, %v4238, 0.0
    %4324 = vadd.xlane.f32.xlu0 %v4323
    %v4325 = vpop.xlane.xlu0 %4324
    %v4326 = vsel %vm832, %v4240, 0.0
    %4327 = vadd.xlane.f32.xlu0 %v4326
    %v4328 = vpop.xlane.xlu0 %4327
    %v4329 = vsel %vm832, %v4242, 0.0
    %4330 = vadd.xlane.f32.xlu0 %v4329
    %v4331 = vpop.xlane.xlu0 %4330
    %v4332 = vsel %vm832, %v4244, 0.0
    %4333 = vadd.xlane.f32.xlu0 %v4332
    %v4334 = vpop.xlane.xlu0 %4333
    %v4335 = vsel %vm832, %v4246, 0.0
    %4336 = vadd.xlane.f32.xlu0 %v4335
    %v4337 = vpop.xlane.xlu0 %4336
    %v4338 = vsel %vm832, %v4248, 0.0
    %4339 = vadd.xlane.f32.xlu0 %v4338
    %v4340 = vpop.xlane.xlu0 %4339
    %v4341 = vsel %vm832, %v4250, 0.0
    %4342 = vadd.xlane.f32.xlu0 %v4341
    %v4343 = vpop.xlane.xlu0 %4342
    %v4344 = vsel %vm832, %v4252, 0.0
    %4345 = vadd.xlane.f32.xlu0 %v4344
    %v4346 = vpop.xlane.xlu0 %4345
    %v4347 = vsel %vm832, %v4254, 0.0
    %4348 = vadd.xlane.f32.xlu0 %v4347
    %v4349 = vpop.xlane.xlu0 %4348
    %v4350 = vsel %vm832, %v4256, 0.0
    %4351 = vadd.xlane.f32.xlu0 %v4350
    %v4352 = vpop.xlane.xlu0 %4351
    %v4353 = vrcp.pop %v4259
    %v4354 = vmul.f32 %v4259, %v4353
    %v4355 = vsub.f32 1.0, %v4354
    %v4356 = vmul.f32 %v4353, %v4355
    %v4357 = vadd.f32 %v4353, %v4356
    %vm4358 = vweird.f32 %v4259
    %vm4359 = vweird.f32 %v4353
    %vm4360 = vmor %vm4358, %vm4359
    %v4361 = vsel %vm4360, %v4353, %v4357
    %v4362 = vand.u32 2147483647, %v4259
    %vm4363 = vcmp.eq.f32.partialorder %v4362, 8.507059e+37
    %v4364 = vand.u32 %v4259, 2147483648
    %v4365 = vor.u32 1.1754944e-38, %v4364
    %v4366 = vsel %vm4363, %v4365, %v4361
    %v4367 = vmul.f32 %v4194, %v4366
    %v4368 = vrcp.pop %v4262
    %v4369 = vmul.f32 %v4262, %v4368
    %v4370 = vsub.f32 1.0, %v4369
    %v4371 = vmul.f32 %v4368, %v4370
    %v4372 = vadd.f32 %v4368, %v4371
    %vm4373 = vweird.f32 %v4262
    %vm4374 = vweird.f32 %v4368
    %vm4375 = vmor %vm4373, %vm4374
    %v4376 = vsel %vm4375, %v4368, %v4372
    %v4377 = vand.u32 2147483647, %v4262
    %vm4378 = vcmp.eq.f32.partialorder %v4377, 8.507059e+37
    %v4379 = vand.u32 %v4262, 2147483648
    %v4380 = vor.u32 1.1754944e-38, %v4379
    %v4381 = vsel %vm4378, %v4380, %v4376
    %v4382 = vmul.f32 %v4196, %v4381
    %v4383 = vrcp.pop %v4265
    %v4384 = vmul.f32 %v4265, %v4383
    %v4385 = vsub.f32 1.0, %v4384
    %v4386 = vmul.f32 %v4383, %v4385
    %v4387 = vadd.f32 %v4383, %v4386
    %vm4388 = vweird.f32 %v4265
    %vm4389 = vweird.f32 %v4383
    %vm4390 = vmor %vm4388, %vm4389
    %v4391 = vsel %vm4390, %v4383, %v4387
    %v4392 = vand.u32 2147483647, %v4265
    %vm4393 = vcmp.eq.f32.partialorder %v4392, 8.507059e+37
    %v4394 = vand.u32 %v4265, 2147483648
    %v4395 = vor.u32 1.1754944e-38, %v4394
    %v4396 = vsel %vm4393, %v4395, %v4391
    %v4397 = vmul.f32 %v4198, %v4396
    %v4398 = vrcp.pop %v4268
    %v4399 = vmul.f32 %v4268, %v4398
    %v4400 = vsub.f32 1.0, %v4399
    %v4401 = vmul.f32 %v4398, %v4400
    %v4402 = vadd.f32 %v4398, %v4401
    %vm4403 = vweird.f32 %v4268
    %vm4404 = vweird.f32 %v4398
    %vm4405 = vmor %vm4403, %vm4404
    %v4406 = vsel %vm4405, %v4398, %v4402
    %v4407 = vand.u32 2147483647, %v4268
    %vm4408 = vcmp.eq.f32.partialorder %v4407, 8.507059e+37
    %v4409 = vand.u32 %v4268, 2147483648
    %v4410 = vor.u32 1.1754944e-38, %v4409
    %v4411 = vsel %vm4408, %v4410, %v4406
    %v4412 = vmul.f32 %v4200, %v4411
    %v4413 = vrcp.pop %v4271
    %v4414 = vmul.f32 %v4271, %v4413
    %v4415 = vsub.f32 1.0, %v4414
    %v4416 = vmul.f32 %v4413, %v4415
    %v4417 = vadd.f32 %v4413, %v4416
    %vm4418 = vweird.f32 %v4271
    %vm4419 = vweird.f32 %v4413
    %vm4420 = vmor %vm4418, %vm4419
    %v4421 = vsel %vm4420, %v4413, %v4417
    %v4422 = vand.u32 2147483647, %v4271
    %vm4423 = vcmp.eq.f32.partialorder %v4422, 8.507059e+37
    %v4424 = vand.u32 %v4271, 2147483648
    %v4425 = vor.u32 1.1754944e-38, %v4424
    %v4426 = vsel %vm4423, %v4425, %v4421
    %v4427 = vmul.f32 %v4202, %v4426
    %v4428 = vrcp.pop %v4274
    %v4429 = vmul.f32 %v4274, %v4428
    %v4430 = vsub.f32 1.0, %v4429
    %v4431 = vmul.f32 %v4428, %v4430
    %v4432 = vadd.f32 %v4428, %v4431
    %vm4433 = vweird.f32 %v4274
    %vm4434 = vweird.f32 %v4428
    %vm4435 = vmor %vm4433, %vm4434
    %v4436 = vsel %vm4435, %v4428, %v4432
    %v4437 = vand.u32 2147483647, %v4274
    %vm4438 = vcmp.eq.f32.partialorder %v4437, 8.507059e+37
    %v4439 = vand.u32 %v4274, 2147483648
    %v4440 = vor.u32 1.1754944e-38, %v4439
    %v4441 = vsel %vm4438, %v4440, %v4436
    %v4442 = vmul.f32 %v4204, %v4441
    %v4443 = vrcp.pop %v4277
    %v4444 = vmul.f32 %v4277, %v4443
    %v4445 = vsub.f32 1.0, %v4444
    %v4446 = vmul.f32 %v4443, %v4445
    %v4447 = vadd.f32 %v4443, %v4446
    %vm4448 = vweird.f32 %v4277
    %vm4449 = vweird.f32 %v4443
    %vm4450 = vmor %vm4448, %vm4449
    %v4451 = vsel %vm4450, %v4443, %v4447
    %v4452 = vand.u32 2147483647, %v4277
    %vm4453 = vcmp.eq.f32.partialorder %v4452, 8.507059e+37
    %v4454 = vand.u32 %v4277, 2147483648
    %v4455 = vor.u32 1.1754944e-38, %v4454
    %v4456 = vsel %vm4453, %v4455, %v4451
    %v4457 = vmul.f32 %v4206, %v4456
    %v4458 = vrcp.pop %v4280
    %v4459 = vmul.f32 %v4280, %v4458
    %v4460 = vsub.f32 1.0, %v4459
    %v4461 = vmul.f32 %v4458, %v4460
    %v4462 = vadd.f32 %v4458, %v4461
    %vm4463 = vweird.f32 %v4280
    %vm4464 = vweird.f32 %v4458
    %vm4465 = vmor %vm4463, %vm4464
    %v4466 = vsel %vm4465, %v4458, %v4462
    %v4467 = vand.u32 2147483647, %v4280
    %vm4468 = vcmp.eq.f32.partialorder %v4467, 8.507059e+37
    %v4469 = vand.u32 %v4280, 2147483648
    %v4470 = vor.u32 1.1754944e-38, %v4469
    %v4471 = vsel %vm4468, %v4470, %v4466
    %v4472 = vmul.f32 %v4208, %v4471
    %v4473 = vrcp.pop %v4283
    %v4474 = vmul.f32 %v4283, %v4473
    %v4475 = vsub.f32 1.0, %v4474
    %v4476 = vmul.f32 %v4473, %v4475
    %v4477 = vadd.f32 %v4473, %v4476
    %vm4478 = vweird.f32 %v4283
    %vm4479 = vweird.f32 %v4473
    %vm4480 = vmor %vm4478, %vm4479
    %v4481 = vsel %vm4480, %v4473, %v4477
    %v4482 = vand.u32 2147483647, %v4283
    %vm4483 = vcmp.eq.f32.partialorder %v4482, 8.507059e+37
    %v4484 = vand.u32 %v4283, 2147483648
    %v4485 = vor.u32 1.1754944e-38, %v4484
    %v4486 = vsel %vm4483, %v4485, %v4481
    %v4487 = vmul.f32 %v4210, %v4486
    %v4488 = vrcp.pop %v4286
    %v4489 = vmul.f32 %v4286, %v4488
    %v4490 = vsub.f32 1.0, %v4489
    %v4491 = vmul.f32 %v4488, %v4490
    %v4492 = vadd.f32 %v4488, %v4491
    %vm4493 = vweird.f32 %v4286
    %vm4494 = vweird.f32 %v4488
    %vm4495 = vmor %vm4493, %vm4494
    %v4496 = vsel %vm4495, %v4488, %v4492
    %v4497 = vand.u32 2147483647, %v4286
    %vm4498 = vcmp.eq.f32.partialorder %v4497, 8.507059e+37
    %v4499 = vand.u32 %v4286, 2147483648
    %v4500 = vor.u32 1.1754944e-38, %v4499
    %v4501 = vsel %vm4498, %v4500, %v4496
    %v4502 = vmul.f32 %v4212, %v4501
    %v4503 = vrcp.pop %v4289
    %v4504 = vmul.f32 %v4289, %v4503
    %v4505 = vsub.f32 1.0, %v4504
    %v4506 = vmul.f32 %v4503, %v4505
    %v4507 = vadd.f32 %v4503, %v4506
    %vm4508 = vweird.f32 %v4289
    %vm4509 = vweird.f32 %v4503
    %vm4510 = vmor %vm4508, %vm4509
    %v4511 = vsel %vm4510, %v4503, %v4507
    %v4512 = vand.u32 2147483647, %v4289
    %vm4513 = vcmp.eq.f32.partialorder %v4512, 8.507059e+37
    %v4514 = vand.u32 %v4289, 2147483648
    %v4515 = vor.u32 1.1754944e-38, %v4514
    %v4516 = vsel %vm4513, %v4515, %v4511
    %v4517 = vmul.f32 %v4214, %v4516
    %v4518 = vrcp.pop %v4292
    %v4519 = vmul.f32 %v4292, %v4518
    %v4520 = vsub.f32 1.0, %v4519
    %v4521 = vmul.f32 %v4518, %v4520
    %v4522 = vadd.f32 %v4518, %v4521
    %vm4523 = vweird.f32 %v4292
    %vm4524 = vweird.f32 %v4518
    %vm4525 = vmor %vm4523, %vm4524
    %v4526 = vsel %vm4525, %v4518, %v4522
    %v4527 = vand.u32 2147483647, %v4292
    %vm4528 = vcmp.eq.f32.partialorder %v4527, 8.507059e+37
    %v4529 = vand.u32 %v4292, 2147483648
    %v4530 = vor.u32 1.1754944e-38, %v4529
    %v4531 = vsel %vm4528, %v4530, %v4526
    %v4532 = vmul.f32 %v4216, %v4531
    %v4533 = vrcp.pop %v4295
    %v4534 = vmul.f32 %v4295, %v4533
    %v4535 = vsub.f32 1.0, %v4534
    %v4536 = vmul.f32 %v4533, %v4535
    %v4537 = vadd.f32 %v4533, %v4536
    %vm4538 = vweird.f32 %v4295
    %vm4539 = vweird.f32 %v4533
    %vm4540 = vmor %vm4538, %vm4539
    %v4541 = vsel %vm4540, %v4533, %v4537
    %v4542 = vand.u32 2147483647, %v4295
    %vm4543 = vcmp.eq.f32.partialorder %v4542, 8.507059e+37
    %v4544 = vand.u32 %v4295, 2147483648
    %v4545 = vor.u32 1.1754944e-38, %v4544
    %v4546 = vsel %vm4543, %v4545, %v4541
    %v4547 = vmul.f32 %v4218, %v4546
    %v4548 = vrcp.pop %v4298
    %v4549 = vmul.f32 %v4298, %v4548
    %v4550 = vsub.f32 1.0, %v4549
    %v4551 = vmul.f32 %v4548, %v4550
    %v4552 = vadd.f32 %v4548, %v4551
    %vm4553 = vweird.f32 %v4298
    %vm4554 = vweird.f32 %v4548
    %vm4555 = vmor %vm4553, %vm4554
    %v4556 = vsel %vm4555, %v4548, %v4552
    %v4557 = vand.u32 2147483647, %v4298
    %vm4558 = vcmp.eq.f32.partialorder %v4557, 8.507059e+37
    %v4559 = vand.u32 %v4298, 2147483648
    %v4560 = vor.u32 1.1754944e-38, %v4559
    %v4561 = vsel %vm4558, %v4560, %v4556
    %v4562 = vmul.f32 %v4220, %v4561
    %v4563 = vrcp.pop %v4301
    %v4564 = vmul.f32 %v4301, %v4563
    %v4565 = vsub.f32 1.0, %v4564
    %v4566 = vmul.f32 %v4563, %v4565
    %v4567 = vadd.f32 %v4563, %v4566
    %vm4568 = vweird.f32 %v4301
    %vm4569 = vweird.f32 %v4563
    %vm4570 = vmor %vm4568, %vm4569
    %v4571 = vsel %vm4570, %v4563, %v4567
    %v4572 = vand.u32 2147483647, %v4301
    %vm4573 = vcmp.eq.f32.partialorder %v4572, 8.507059e+37
    %v4574 = vand.u32 %v4301, 2147483648
    %v4575 = vor.u32 1.1754944e-38, %v4574
    %v4576 = vsel %vm4573, %v4575, %v4571
    %v4577 = vmul.f32 %v4222, %v4576
    %v4578 = vrcp.pop %v4304
    %v4579 = vmul.f32 %v4304, %v4578
    %v4580 = vsub.f32 1.0, %v4579
    %v4581 = vmul.f32 %v4578, %v4580
    %v4582 = vadd.f32 %v4578, %v4581
    %vm4583 = vweird.f32 %v4304
    %vm4584 = vweird.f32 %v4578
    %vm4585 = vmor %vm4583, %vm4584
    %v4586 = vsel %vm4585, %v4578, %v4582
    %v4587 = vand.u32 2147483647, %v4304
    %vm4588 = vcmp.eq.f32.partialorder %v4587, 8.507059e+37
    %v4589 = vand.u32 %v4304, 2147483648
    %v4590 = vor.u32 1.1754944e-38, %v4589
    %v4591 = vsel %vm4588, %v4590, %v4586
    %v4592 = vmul.f32 %v4224, %v4591
    %v4593 = vrcp.pop %v4307
    %v4594 = vmul.f32 %v4307, %v4593
    %v4595 = vsub.f32 1.0, %v4594
    %v4596 = vmul.f32 %v4593, %v4595
    %v4597 = vadd.f32 %v4593, %v4596
    %vm4598 = vweird.f32 %v4307
    %vm4599 = vweird.f32 %v4593
    %vm4600 = vmor %vm4598, %vm4599
    %v4601 = vsel %vm4600, %v4593, %v4597
    %v4602 = vand.u32 2147483647, %v4307
    %vm4603 = vcmp.eq.f32.partialorder %v4602, 8.507059e+37
    %v4604 = vand.u32 %v4307, 2147483648
    %v4605 = vor.u32 1.1754944e-38, %v4604
    %v4606 = vsel %vm4603, %v4605, %v4601
    %v4607 = vmul.f32 %v4226, %v4606
    %v4608 = vrcp.pop %v4310
    %v4609 = vmul.f32 %v4310, %v4608
    %v4610 = vsub.f32 1.0, %v4609
    %v4611 = vmul.f32 %v4608, %v4610
    %v4612 = vadd.f32 %v4608, %v4611
    %vm4613 = vweird.f32 %v4310
    %vm4614 = vweird.f32 %v4608
    %vm4615 = vmor %vm4613, %vm4614
    %v4616 = vsel %vm4615, %v4608, %v4612
    %v4617 = vand.u32 2147483647, %v4310
    %vm4618 = vcmp.eq.f32.partialorder %v4617, 8.507059e+37
    %v4619 = vand.u32 %v4310, 2147483648
    %v4620 = vor.u32 1.1754944e-38, %v4619
    %v4621 = vsel %vm4618, %v4620, %v4616
    %v4622 = vmul.f32 %v4228, %v4621
    %v4623 = vrcp.pop %v4313
    %v4624 = vmul.f32 %v4313, %v4623
    %v4625 = vsub.f32 1.0, %v4624
    %v4626 = vmul.f32 %v4623, %v4625
    %v4627 = vadd.f32 %v4623, %v4626
    %vm4628 = vweird.f32 %v4313
    %vm4629 = vweird.f32 %v4623
    %vm4630 = vmor %vm4628, %vm4629
    %v4631 = vsel %vm4630, %v4623, %v4627
    %v4632 = vand.u32 2147483647, %v4313
    %vm4633 = vcmp.eq.f32.partialorder %v4632, 8.507059e+37
    %v4634 = vand.u32 %v4313, 2147483648
    %v4635 = vor.u32 1.1754944e-38, %v4634
    %v4636 = vsel %vm4633, %v4635, %v4631
    %v4637 = vmul.f32 %v4230, %v4636
    %v4638 = vrcp.pop %v4316
    %v4639 = vmul.f32 %v4316, %v4638
    %v4640 = vsub.f32 1.0, %v4639
    %v4641 = vmul.f32 %v4638, %v4640
    %v4642 = vadd.f32 %v4638, %v4641
    %vm4643 = vweird.f32 %v4316
    %vm4644 = vweird.f32 %v4638
    %vm4645 = vmor %vm4643, %vm4644
    %v4646 = vsel %vm4645, %v4638, %v4642
    %v4647 = vand.u32 2147483647, %v4316
    %vm4648 = vcmp.eq.f32.partialorder %v4647, 8.507059e+37
    %v4649 = vand.u32 %v4316, 2147483648
    %v4650 = vor.u32 1.1754944e-38, %v4649
    %v4651 = vsel %vm4648, %v4650, %v4646
    %v4652 = vmul.f32 %v4232, %v4651
    %v4653 = vrcp.pop %v4319
    %v4654 = vmul.f32 %v4319, %v4653
    %v4655 = vsub.f32 1.0, %v4654
    %v4656 = vmul.f32 %v4653, %v4655
    %v4657 = vadd.f32 %v4653, %v4656
    %vm4658 = vweird.f32 %v4319
    %vm4659 = vweird.f32 %v4653
    %vm4660 = vmor %vm4658, %vm4659
    %v4661 = vsel %vm4660, %v4653, %v4657
    %v4662 = vand.u32 2147483647, %v4319
    %vm4663 = vcmp.eq.f32.partialorder %v4662, 8.507059e+37
    %v4664 = vand.u32 %v4319, 2147483648
    %v4665 = vor.u32 1.1754944e-38, %v4664
    %v4666 = vsel %vm4663, %v4665, %v4661
    %v4667 = vmul.f32 %v4234, %v4666
    %v4668 = vrcp.pop %v4322
    %v4669 = vmul.f32 %v4322, %v4668
    %v4670 = vsub.f32 1.0, %v4669
    %v4671 = vmul.f32 %v4668, %v4670
    %v4672 = vadd.f32 %v4668, %v4671
    %vm4673 = vweird.f32 %v4322
    %vm4674 = vweird.f32 %v4668
    %vm4675 = vmor %vm4673, %vm4674
    %v4676 = vsel %vm4675, %v4668, %v4672
    %v4677 = vand.u32 2147483647, %v4322
    %vm4678 = vcmp.eq.f32.partialorder %v4677, 8.507059e+37
    %v4679 = vand.u32 %v4322, 2147483648
    %v4680 = vor.u32 1.1754944e-38, %v4679
    %v4681 = vsel %vm4678, %v4680, %v4676
    %v4682 = vmul.f32 %v4236, %v4681
    %v4683 = vrcp.pop %v4325
    %v4684 = vmul.f32 %v4325, %v4683
    %v4685 = vsub.f32 1.0, %v4684
    %v4686 = vmul.f32 %v4683, %v4685
    %v4687 = vadd.f32 %v4683, %v4686
    %vm4688 = vweird.f32 %v4325
    %vm4689 = vweird.f32 %v4683
    %vm4690 = vmor %vm4688, %vm4689
    %v4691 = vsel %vm4690, %v4683, %v4687
    %v4692 = vand.u32 2147483647, %v4325
    %vm4693 = vcmp.eq.f32.partialorder %v4692, 8.507059e+37
    %v4694 = vand.u32 %v4325, 2147483648
    %v4695 = vor.u32 1.1754944e-38, %v4694
    %v4696 = vsel %vm4693, %v4695, %v4691
    %v4697 = vmul.f32 %v4238, %v4696
    %v4698 = vrcp.pop %v4328
    %v4699 = vmul.f32 %v4328, %v4698
    %v4700 = vsub.f32 1.0, %v4699
    %v4701 = vmul.f32 %v4698, %v4700
    %v4702 = vadd.f32 %v4698, %v4701
    %vm4703 = vweird.f32 %v4328
    %vm4704 = vweird.f32 %v4698
    %vm4705 = vmor %vm4703, %vm4704
    %v4706 = vsel %vm4705, %v4698, %v4702
    %v4707 = vand.u32 2147483647, %v4328
    %vm4708 = vcmp.eq.f32.partialorder %v4707, 8.507059e+37
    %v4709 = vand.u32 %v4328, 2147483648
    %v4710 = vor.u32 1.1754944e-38, %v4709
    %v4711 = vsel %vm4708, %v4710, %v4706
    %v4712 = vmul.f32 %v4240, %v4711
    %v4713 = vrcp.pop %v4331
    %v4714 = vmul.f32 %v4331, %v4713
    %v4715 = vsub.f32 1.0, %v4714
    %v4716 = vmul.f32 %v4713, %v4715
    %v4717 = vadd.f32 %v4713, %v4716
    %vm4718 = vweird.f32 %v4331
    %vm4719 = vweird.f32 %v4713
    %vm4720 = vmor %vm4718, %vm4719
    %v4721 = vsel %vm4720, %v4713, %v4717
    %v4722 = vand.u32 2147483647, %v4331
    %vm4723 = vcmp.eq.f32.partialorder %v4722, 8.507059e+37
    %v4724 = vand.u32 %v4331, 2147483648
    %v4725 = vor.u32 1.1754944e-38, %v4724
    %v4726 = vsel %vm4723, %v4725, %v4721
    %v4727 = vmul.f32 %v4242, %v4726
    %v4728 = vrcp.pop %v4334
    %v4729 = vmul.f32 %v4334, %v4728
    %v4730 = vsub.f32 1.0, %v4729
    %v4731 = vmul.f32 %v4728, %v4730
    %v4732 = vadd.f32 %v4728, %v4731
    %vm4733 = vweird.f32 %v4334
    %vm4734 = vweird.f32 %v4728
    %vm4735 = vmor %vm4733, %vm4734
    %v4736 = vsel %vm4735, %v4728, %v4732
    %v4737 = vand.u32 2147483647, %v4334
    %vm4738 = vcmp.eq.f32.partialorder %v4737, 8.507059e+37
    %v4739 = vand.u32 %v4334, 2147483648
    %v4740 = vor.u32 1.1754944e-38, %v4739
    %v4741 = vsel %vm4738, %v4740, %v4736
    %v4742 = vmul.f32 %v4244, %v4741
    %v4743 = vrcp.pop %v4337
    %v4744 = vmul.f32 %v4337, %v4743
    %v4745 = vsub.f32 1.0, %v4744
    %v4746 = vmul.f32 %v4743, %v4745
    %v4747 = vadd.f32 %v4743, %v4746
    %vm4748 = vweird.f32 %v4337
    %vm4749 = vweird.f32 %v4743
    %vm4750 = vmor %vm4748, %vm4749
    %v4751 = vsel %vm4750, %v4743, %v4747
    %v4752 = vand.u32 2147483647, %v4337
    %vm4753 = vcmp.eq.f32.partialorder %v4752, 8.507059e+37
    %v4754 = vand.u32 %v4337, 2147483648
    %v4755 = vor.u32 1.1754944e-38, %v4754
    %v4756 = vsel %vm4753, %v4755, %v4751
    %v4757 = vmul.f32 %v4246, %v4756
    %v4758 = vrcp.pop %v4340
    %v4759 = vmul.f32 %v4340, %v4758
    %v4760 = vsub.f32 1.0, %v4759
    %v4761 = vmul.f32 %v4758, %v4760
    %v4762 = vadd.f32 %v4758, %v4761
    %vm4763 = vweird.f32 %v4340
    %vm4764 = vweird.f32 %v4758
    %vm4765 = vmor %vm4763, %vm4764
    %v4766 = vsel %vm4765, %v4758, %v4762
    %v4767 = vand.u32 2147483647, %v4340
    %vm4768 = vcmp.eq.f32.partialorder %v4767, 8.507059e+37
    %v4769 = vand.u32 %v4340, 2147483648
    %v4770 = vor.u32 1.1754944e-38, %v4769
    %v4771 = vsel %vm4768, %v4770, %v4766
    %v4772 = vmul.f32 %v4248, %v4771
    %v4773 = vrcp.pop %v4343
    %v4774 = vmul.f32 %v4343, %v4773
    %v4775 = vsub.f32 1.0, %v4774
    %v4776 = vmul.f32 %v4773, %v4775
    %v4777 = vadd.f32 %v4773, %v4776
    %vm4778 = vweird.f32 %v4343
    %vm4779 = vweird.f32 %v4773
    %vm4780 = vmor %vm4778, %vm4779
    %v4781 = vsel %vm4780, %v4773, %v4777
    %v4782 = vand.u32 2147483647, %v4343
    %vm4783 = vcmp.eq.f32.partialorder %v4782, 8.507059e+37
    %v4784 = vand.u32 %v4343, 2147483648
    %v4785 = vor.u32 1.1754944e-38, %v4784
    %v4786 = vsel %vm4783, %v4785, %v4781
    %v4787 = vmul.f32 %v4250, %v4786
    %v4788 = vrcp.pop %v4346
    %v4789 = vmul.f32 %v4346, %v4788
    %v4790 = vsub.f32 1.0, %v4789
    %v4791 = vmul.f32 %v4788, %v4790
    %v4792 = vadd.f32 %v4788, %v4791
    %vm4793 = vweird.f32 %v4346
    %vm4794 = vweird.f32 %v4788
    %vm4795 = vmor %vm4793, %vm4794
    %v4796 = vsel %vm4795, %v4788, %v4792
    %v4797 = vand.u32 2147483647, %v4346
    %vm4798 = vcmp.eq.f32.partialorder %v4797, 8.507059e+37
    %v4799 = vand.u32 %v4346, 2147483648
    %v4800 = vor.u32 1.1754944e-38, %v4799
    %v4801 = vsel %vm4798, %v4800, %v4796
    %v4802 = vmul.f32 %v4252, %v4801
    %v4803 = vrcp.pop %v4349
    %v4804 = vmul.f32 %v4349, %v4803
    %v4805 = vsub.f32 1.0, %v4804
    %v4806 = vmul.f32 %v4803, %v4805
    %v4807 = vadd.f32 %v4803, %v4806
    %vm4808 = vweird.f32 %v4349
    %vm4809 = vweird.f32 %v4803
    %vm4810 = vmor %vm4808, %vm4809
    %v4811 = vsel %vm4810, %v4803, %v4807
    %v4812 = vand.u32 2147483647, %v4349
    %vm4813 = vcmp.eq.f32.partialorder %v4812, 8.507059e+37
    %v4814 = vand.u32 %v4349, 2147483648
    %v4815 = vor.u32 1.1754944e-38, %v4814
    %v4816 = vsel %vm4813, %v4815, %v4811
    %v4817 = vmul.f32 %v4254, %v4816
    %v4818 = vrcp.pop %v4352
    %v4819 = vmul.f32 %v4352, %v4818
    %v4820 = vsub.f32 1.0, %v4819
    %v4821 = vmul.f32 %v4818, %v4820
    %v4822 = vadd.f32 %v4818, %v4821
    %vm4823 = vweird.f32 %v4352
    %vm4824 = vweird.f32 %v4818
    %vm4825 = vmor %vm4823, %vm4824
    %v4826 = vsel %vm4825, %v4818, %v4822
    %v4827 = vand.u32 2147483647, %v4352
    %vm4828 = vcmp.eq.f32.partialorder %v4827, 8.507059e+37
    %v4829 = vand.u32 %v4352, 2147483648
    %v4830 = vor.u32 1.1754944e-38, %v4829
    %v4831 = vsel %vm4828, %v4830, %v4826
    %v4832 = vmul.f32 %v4256, %v4831
    %v4833 = vpack.c.bf16 %v4367, %v4367
    %v4834 = vpack.c.bf16 %v4382, %v4382
    %v4835 = vpack.c.bf16 %v4397, %v4397
    %v4836 = vpack.c.bf16 %v4412, %v4412
    %v4837 = vpack.c.bf16 %v4427, %v4427
    %v4838 = vpack.c.bf16 %v4442, %v4442
    %v4839 = vpack.c.bf16 %v4457, %v4457
    %v4840 = vpack.c.bf16 %v4472, %v4472
    %v4841 = vpack.c.bf16 %v4487, %v4487
    %v4842 = vpack.c.bf16 %v4502, %v4502
    %v4843 = vpack.c.bf16 %v4517, %v4517
    %v4844 = vpack.c.bf16 %v4532, %v4532
    %v4845 = vpack.c.bf16 %v4547, %v4547
    %v4846 = vpack.c.bf16 %v4562, %v4562
    %v4847 = vpack.c.bf16 %v4577, %v4577
    %v4848 = vpack.c.bf16 %v4592, %v4592
    %v4849 = vpack.c.bf16 %v4607, %v4607
    %v4850 = vpack.c.bf16 %v4622, %v4622
    %v4851 = vpack.c.bf16 %v4637, %v4637
    %v4852 = vpack.c.bf16 %v4652, %v4652
    %v4853 = vpack.c.bf16 %v4667, %v4667
    %v4854 = vpack.c.bf16 %v4682, %v4682
    %v4855 = vpack.c.bf16 %v4697, %v4697
    %v4856 = vpack.c.bf16 %v4712, %v4712
    %v4857 = vpack.c.bf16 %v4727, %v4727
    %v4858 = vpack.c.bf16 %v4742, %v4742
    %v4859 = vpack.c.bf16 %v4757, %v4757
    %v4860 = vpack.c.bf16 %v4772, %v4772
    %v4861 = vpack.c.bf16 %v4787, %v4787
    %v4862 = vpack.c.bf16 %v4802, %v4802
    %v4863 = vpack.c.bf16 %v4817, %v4817
    %v4864 = vpack.c.bf16 %v4832, %v4832
    %v4867 = vunpack.c.l.b16 %v4833
    %v4868 = vunpack.c.l.b16 %v4834
    %v4869 = vpack.c.b16 %v4868, %v4867
    %4870 = vrot.lane.b32.xlu0 %v371, 48
    %v4871 = vpop.permute.xlu0 %4870
    %v4874 = vsel %vm832, %v4869, 0
    %4876 = vmatpush.bf16.msra.mxu0 0
    %4877 = vmatpush.bf16.msra.mxu0 0
    %4878 = vmatpush.bf16.msra.mxu0 0
    %4879 = vmatpush.bf16.msra.mxu0 0
    %4880 = vmatpush.bf16.msra.mxu0 0
    %4881 = vmatpush.bf16.msra.mxu0 0
    %4882 = vmatpush.bf16.msra.mxu0 0
    %4883 = vmatpush.bf16.msra.mxu0 %v4871
    %4884 = vmatmul.bf16.gmra.mxu0 %v4874
    %v4885 = vpop.f32.mrf.mxu0
    %v4886 = vadd.f32 0.0, %v4885
    %v4887 = vpop.f32.mrf.mxu0
    %v4888 = vadd.f32 0.0, %v4887
    %4889 = vdwg.mxu0
    %v4892 = vunpack.c.l.b16 %v4835
    %v4893 = vunpack.c.l.b16 %v4836
    %v4894 = vpack.c.b16 %v4893, %v4892
    %4895 = vrot.lane.b32.xlu0 %v399, 48
    %v4896 = vpop.permute.xlu0 %4895
    %v4899 = vsel %vm832, %v4894, 0
    %4901 = vmatpush.bf16.msra.mxu0 0
    %4902 = vmatpush.bf16.msra.mxu0 0
    %4903 = vmatpush.bf16.msra.mxu0 0
    %4904 = vmatpush.bf16.msra.mxu0 0
    %4905 = vmatpush.bf16.msra.mxu0 0
    %4906 = vmatpush.bf16.msra.mxu0 0
    %4907 = vmatpush.bf16.msra.mxu0 0
    %4908 = vmatpush.bf16.msra.mxu0 %v4896
    %4909 = vmatmul.bf16.gmra.mxu0 %v4899
    %v4910 = vpop.f32.mrf.mxu0
    %v4911 = vadd.f32 0.0, %v4910
    %v4912 = vpop.f32.mrf.mxu0
    %v4913 = vadd.f32 0.0, %v4912
    %4914 = vdwg.mxu0
    %v4917 = vunpack.c.l.b16 %v4837
    %v4918 = vunpack.c.l.b16 %v4838
    %v4919 = vpack.c.b16 %v4918, %v4917
    %4920 = vrot.lane.b32.xlu0 %v426, 48
    %v4921 = vpop.permute.xlu0 %4920
    %v4924 = vsel %vm832, %v4919, 0
    %4926 = vmatpush.bf16.msra.mxu0 0
    %4927 = vmatpush.bf16.msra.mxu0 0
    %4928 = vmatpush.bf16.msra.mxu0 0
    %4929 = vmatpush.bf16.msra.mxu0 0
    %4930 = vmatpush.bf16.msra.mxu0 0
    %4931 = vmatpush.bf16.msra.mxu0 0
    %4932 = vmatpush.bf16.msra.mxu0 0
    %4933 = vmatpush.bf16.msra.mxu0 %v4921
    %4934 = vmatmul.bf16.gmra.mxu0 %v4924
    %v4935 = vpop.f32.mrf.mxu0
    %v4936 = vadd.f32 0.0, %v4935
    %v4937 = vpop.f32.mrf.mxu0
    %v4938 = vadd.f32 0.0, %v4937
    %4939 = vdwg.mxu0
    %v4942 = vunpack.c.l.b16 %v4839
    %v4943 = vunpack.c.l.b16 %v4840
    %v4944 = vpack.c.b16 %v4943, %v4942
    %4945 = vrot.lane.b32.xlu0 %v453, 48
    %v4946 = vpop.permute.xlu0 %4945
    %v4949 = vsel %vm832, %v4944, 0
    %4951 = vmatpush.bf16.msra.mxu0 0
    %4952 = vmatpush.bf16.msra.mxu0 0
    %4953 = vmatpush.bf16.msra.mxu0 0
    %4954 = vmatpush.bf16.msra.mxu0 0
    %4955 = vmatpush.bf16.msra.mxu0 0
    %4956 = vmatpush.bf16.msra.mxu0 0
    %4957 = vmatpush.bf16.msra.mxu0 0
    %4958 = vmatpush.bf16.msra.mxu0 %v4946
    %4959 = vmatmul.bf16.gmra.mxu0 %v4949
    %v4960 = vpop.f32.mrf.mxu0
    %v4961 = vadd.f32 0.0, %v4960
    %v4962 = vpop.f32.mrf.mxu0
    %v4963 = vadd.f32 0.0, %v4962
    %4964 = vdwg.mxu0
    %v4967 = vunpack.c.l.b16 %v4841
    %v4968 = vunpack.c.l.b16 %v4842
    %v4969 = vpack.c.b16 %v4968, %v4967
    %4970 = vrot.lane.b32.xlu0 %v480, 48
    %v4971 = vpop.permute.xlu0 %4970
    %v4974 = vsel %vm832, %v4969, 0
    %4976 = vmatpush.bf16.msra.mxu0 0
    %4977 = vmatpush.bf16.msra.mxu0 0
    %4978 = vmatpush.bf16.msra.mxu0 0
    %4979 = vmatpush.bf16.msra.mxu0 0
    %4980 = vmatpush.bf16.msra.mxu0 0
    %4981 = vmatpush.bf16.msra.mxu0 0
    %4982 = vmatpush.bf16.msra.mxu0 0
    %4983 = vmatpush.bf16.msra.mxu0 %v4971
    %4984 = vmatmul.bf16.gmra.mxu0 %v4974
    %v4985 = vpop.f32.mrf.mxu0
    %v4986 = vadd.f32 0.0, %v4985
    %v4987 = vpop.f32.mrf.mxu0
    %v4988 = vadd.f32 0.0, %v4987
    %4989 = vdwg.mxu0
    %v4992 = vunpack.c.l.b16 %v4843
    %v4993 = vunpack.c.l.b16 %v4844
    %v4994 = vpack.c.b16 %v4993, %v4992
    %4995 = vrot.lane.b32.xlu0 %v507, 48
    %v4996 = vpop.permute.xlu0 %4995
    %v4999 = vsel %vm832, %v4994, 0
    %5001 = vmatpush.bf16.msra.mxu0 0
    %5002 = vmatpush.bf16.msra.mxu0 0
    %5003 = vmatpush.bf16.msra.mxu0 0
    %5004 = vmatpush.bf16.msra.mxu0 0
    %5005 = vmatpush.bf16.msra.mxu0 0
    %5006 = vmatpush.bf16.msra.mxu0 0
    %5007 = vmatpush.bf16.msra.mxu0 0
    %5008 = vmatpush.bf16.msra.mxu0 %v4996
    %5009 = vmatmul.bf16.gmra.mxu0 %v4999
    %v5010 = vpop.f32.mrf.mxu0
    %v5011 = vadd.f32 0.0, %v5010
    %v5012 = vpop.f32.mrf.mxu0
    %v5013 = vadd.f32 0.0, %v5012
    %5014 = vdwg.mxu0
    %v5017 = vunpack.c.l.b16 %v4845
    %v5018 = vunpack.c.l.b16 %v4846
    %v5019 = vpack.c.b16 %v5018, %v5017
    %5020 = vrot.lane.b32.xlu0 %v534, 48
    %v5021 = vpop.permute.xlu0 %5020
    %v5024 = vsel %vm832, %v5019, 0
    %5026 = vmatpush.bf16.msra.mxu0 0
    %5027 = vmatpush.bf16.msra.mxu0 0
    %5028 = vmatpush.bf16.msra.mxu0 0
    %5029 = vmatpush.bf16.msra.mxu0 0
    %5030 = vmatpush.bf16.msra.mxu0 0
    %5031 = vmatpush.bf16.msra.mxu0 0
    %5032 = vmatpush.bf16.msra.mxu0 0
    %5033 = vmatpush.bf16.msra.mxu0 %v5021
    %5034 = vmatmul.bf16.gmra.mxu0 %v5024
    %v5035 = vpop.f32.mrf.mxu0
    %v5036 = vadd.f32 0.0, %v5035
    %v5037 = vpop.f32.mrf.mxu0
    %v5038 = vadd.f32 0.0, %v5037
    %5039 = vdwg.mxu0
    %v5042 = vunpack.c.l.b16 %v4847
    %v5043 = vunpack.c.l.b16 %v4848
    %v5044 = vpack.c.b16 %v5043, %v5042
    %5045 = vrot.lane.b32.xlu0 %v561, 48
    %v5046 = vpop.permute.xlu0 %5045
    %v5049 = vsel %vm832, %v5044, 0
    %5051 = vmatpush.bf16.msra.mxu0 0
    %5052 = vmatpush.bf16.msra.mxu0 0
    %5053 = vmatpush.bf16.msra.mxu0 0
    %5054 = vmatpush.bf16.msra.mxu0 0
    %5055 = vmatpush.bf16.msra.mxu0 0
    %5056 = vmatpush.bf16.msra.mxu0 0
    %5057 = vmatpush.bf16.msra.mxu0 0
    %5058 = vmatpush.bf16.msra.mxu0 %v5046
    %5059 = vmatmul.bf16.gmra.mxu0 %v5049
    %v5060 = vpop.f32.mrf.mxu0
    %v5061 = vadd.f32 0.0, %v5060
    %v5062 = vpop.f32.mrf.mxu0
    %v5063 = vadd.f32 0.0, %v5062
    %5064 = vdwg.mxu0
    %v5067 = vunpack.c.l.b16 %v4849
    %v5068 = vunpack.c.l.b16 %v4850
    %v5069 = vpack.c.b16 %v5068, %v5067
    %5070 = vrot.lane.b32.xlu0 %v588, 48
    %v5071 = vpop.permute.xlu0 %5070
    %v5074 = vsel %vm832, %v5069, 0
    %5076 = vmatpush.bf16.msra.mxu0 0
    %5077 = vmatpush.bf16.msra.mxu0 0
    %5078 = vmatpush.bf16.msra.mxu0 0
    %5079 = vmatpush.bf16.msra.mxu0 0
    %5080 = vmatpush.bf16.msra.mxu0 0
    %5081 = vmatpush.bf16.msra.mxu0 0
    %5082 = vmatpush.bf16.msra.mxu0 0
    %5083 = vmatpush.bf16.msra.mxu0 %v5071
    %5084 = vmatmul.bf16.gmra.mxu0 %v5074
    %v5085 = vpop.f32.mrf.mxu0
    %v5086 = vadd.f32 0.0, %v5085
    %v5087 = vpop.f32.mrf.mxu0
    %v5088 = vadd.f32 0.0, %v5087
    %5089 = vdwg.mxu0
    %v5092 = vunpack.c.l.b16 %v4851
    %v5093 = vunpack.c.l.b16 %v4852
    %v5094 = vpack.c.b16 %v5093, %v5092
    %5095 = vrot.lane.b32.xlu0 %v615, 48
    %v5096 = vpop.permute.xlu0 %5095
    %v5099 = vsel %vm832, %v5094, 0
    %5101 = vmatpush.bf16.msra.mxu0 0
    %5102 = vmatpush.bf16.msra.mxu0 0
    %5103 = vmatpush.bf16.msra.mxu0 0
    %5104 = vmatpush.bf16.msra.mxu0 0
    %5105 = vmatpush.bf16.msra.mxu0 0
    %5106 = vmatpush.bf16.msra.mxu0 0
    %5107 = vmatpush.bf16.msra.mxu0 0
    %5108 = vmatpush.bf16.msra.mxu0 %v5096
    %5109 = vmatmul.bf16.gmra.mxu0 %v5099
    %v5110 = vpop.f32.mrf.mxu0
    %v5111 = vadd.f32 0.0, %v5110
    %v5112 = vpop.f32.mrf.mxu0
    %v5113 = vadd.f32 0.0, %v5112
    %5114 = vdwg.mxu0
    %v5117 = vunpack.c.l.b16 %v4853
    %v5118 = vunpack.c.l.b16 %v4854
    %v5119 = vpack.c.b16 %v5118, %v5117
    %5120 = vrot.lane.b32.xlu0 %v642, 48
    %v5121 = vpop.permute.xlu0 %5120
    %v5124 = vsel %vm832, %v5119, 0
    %5126 = vmatpush.bf16.msra.mxu0 0
    %5127 = vmatpush.bf16.msra.mxu0 0
    %5128 = vmatpush.bf16.msra.mxu0 0
    %5129 = vmatpush.bf16.msra.mxu0 0
    %5130 = vmatpush.bf16.msra.mxu0 0
    %5131 = vmatpush.bf16.msra.mxu0 0
    %5132 = vmatpush.bf16.msra.mxu0 0
    %5133 = vmatpush.bf16.msra.mxu0 %v5121
    %5134 = vmatmul.bf16.gmra.mxu0 %v5124
    %v5135 = vpop.f32.mrf.mxu0
    %v5136 = vadd.f32 0.0, %v5135
    %v5137 = vpop.f32.mrf.mxu0
    %v5138 = vadd.f32 0.0, %v5137
    %5139 = vdwg.mxu0
    %v5142 = vunpack.c.l.b16 %v4855
    %v5143 = vunpack.c.l.b16 %v4856
    %v5144 = vpack.c.b16 %v5143, %v5142
    %5145 = vrot.lane.b32.xlu0 %v669, 48
    %v5146 = vpop.permute.xlu0 %5145
    %v5149 = vsel %vm832, %v5144, 0
    %5151 = vmatpush.bf16.msra.mxu0 0
    %5152 = vmatpush.bf16.msra.mxu0 0
    %5153 = vmatpush.bf16.msra.mxu0 0
    %5154 = vmatpush.bf16.msra.mxu0 0
    %5155 = vmatpush.bf16.msra.mxu0 0
    %5156 = vmatpush.bf16.msra.mxu0 0
    %5157 = vmatpush.bf16.msra.mxu0 0
    %5158 = vmatpush.bf16.msra.mxu0 %v5146
    %5159 = vmatmul.bf16.gmra.mxu0 %v5149
    %v5160 = vpop.f32.mrf.mxu0
    %v5161 = vadd.f32 0.0, %v5160
    %v5162 = vpop.f32.mrf.mxu0
    %v5163 = vadd.f32 0.0, %v5162
    %5164 = vdwg.mxu0
    %v5167 = vunpack.c.l.b16 %v4857
    %v5168 = vunpack.c.l.b16 %v4858
    %v5169 = vpack.c.b16 %v5168, %v5167
    %5170 = vrot.lane.b32.xlu0 %v696, 48
    %v5171 = vpop.permute.xlu0 %5170
    %v5174 = vsel %vm832, %v5169, 0
    %5176 = vmatpush.bf16.msra.mxu0 0
    %5177 = vmatpush.bf16.msra.mxu0 0
    %5178 = vmatpush.bf16.msra.mxu0 0
    %5179 = vmatpush.bf16.msra.mxu0 0
    %5180 = vmatpush.bf16.msra.mxu0 0
    %5181 = vmatpush.bf16.msra.mxu0 0
    %5182 = vmatpush.bf16.msra.mxu0 0
    %5183 = vmatpush.bf16.msra.mxu0 %v5171
    %5184 = vmatmul.bf16.gmra.mxu0 %v5174
    %v5185 = vpop.f32.mrf.mxu0
    %v5186 = vadd.f32 0.0, %v5185
    %v5187 = vpop.f32.mrf.mxu0
    %v5188 = vadd.f32 0.0, %v5187
    %5189 = vdwg.mxu0
    %v5192 = vunpack.c.l.b16 %v4859
    %v5193 = vunpack.c.l.b16 %v4860
    %v5194 = vpack.c.b16 %v5193, %v5192
    %5195 = vrot.lane.b32.xlu0 %v723, 48
    %v5196 = vpop.permute.xlu0 %5195
    %v5199 = vsel %vm832, %v5194, 0
    %5201 = vmatpush.bf16.msra.mxu0 0
    %5202 = vmatpush.bf16.msra.mxu0 0
    %5203 = vmatpush.bf16.msra.mxu0 0
    %5204 = vmatpush.bf16.msra.mxu0 0
    %5205 = vmatpush.bf16.msra.mxu0 0
    %5206 = vmatpush.bf16.msra.mxu0 0
    %5207 = vmatpush.bf16.msra.mxu0 0
    %5208 = vmatpush.bf16.msra.mxu0 %v5196
    %5209 = vmatmul.bf16.gmra.mxu0 %v5199
    %v5210 = vpop.f32.mrf.mxu0
    %v5211 = vadd.f32 0.0, %v5210
    %v5212 = vpop.f32.mrf.mxu0
    %v5213 = vadd.f32 0.0, %v5212
    %5214 = vdwg.mxu0
    %v5217 = vunpack.c.l.b16 %v4861
    %v5218 = vunpack.c.l.b16 %v4862
    %v5219 = vpack.c.b16 %v5218, %v5217
    %5220 = vrot.lane.b32.xlu0 %v750, 48
    %v5221 = vpop.permute.xlu0 %5220
    %v5224 = vsel %vm832, %v5219, 0
    %5226 = vmatpush.bf16.msra.mxu0 0
    %5227 = vmatpush.bf16.msra.mxu0 0
    %5228 = vmatpush.bf16.msra.mxu0 0
    %5229 = vmatpush.bf16.msra.mxu0 0
    %5230 = vmatpush.bf16.msra.mxu0 0
    %5231 = vmatpush.bf16.msra.mxu0 0
    %5232 = vmatpush.bf16.msra.mxu0 0
    %5233 = vmatpush.bf16.msra.mxu0 %v5221
    %5234 = vmatmul.bf16.gmra.mxu0 %v5224
    %v5235 = vpop.f32.mrf.mxu0
    %v5236 = vadd.f32 0.0, %v5235
    %v5237 = vpop.f32.mrf.mxu0
    %v5238 = vadd.f32 0.0, %v5237
    %5239 = vdwg.mxu0
    %v5242 = vunpack.c.l.b16 %v4863
    %v5243 = vunpack.c.l.b16 %v4864
    %v5244 = vpack.c.b16 %v5243, %v5242
    %5245 = vrot.lane.b32.xlu0 %v777, 48
    %v5246 = vpop.permute.xlu0 %5245
    %v5249 = vsel %vm832, %v5244, 0
    %5251 = vmatpush.bf16.msra.mxu0 0
    %5252 = vmatpush.bf16.msra.mxu0 0
    %5253 = vmatpush.bf16.msra.mxu0 0
    %5254 = vmatpush.bf16.msra.mxu0 0
    %5255 = vmatpush.bf16.msra.mxu0 0
    %5256 = vmatpush.bf16.msra.mxu0 0
    %5257 = vmatpush.bf16.msra.mxu0 0
    %5258 = vmatpush.bf16.msra.mxu0 %v5246
    %5259 = vmatmul.bf16.gmra.mxu0 %v5249
    %v5260 = vpop.f32.mrf.mxu0
    %v5261 = vadd.f32 0.0, %v5260
    %v5262 = vpop.f32.mrf.mxu0
    %v5263 = vadd.f32 0.0, %v5262
    %5264 = vdwg.mxu0
    %5265 = vrot.lane.b32.xlu0 %v371, 104
    %v5266 = vpop.permute.xlu0 %5265
    %5267 = vrot.lane.b32.xlu0 %v371, 72
    %v5268 = vpop.permute.xlu0 %5267
    %v5270 = vsel %vm374, %v5266, 0
    %v5273 = vsel %vm374, %v5268, 0
    %5275 = vmatpush.bf16.xpose.msra.mxu0 0
    %5276 = vmatpush.bf16.xpose.msra.mxu0 0
    %5277 = vmatpush.bf16.xpose.msra.mxu0 0
    %5278 = vmatpush.bf16.xpose.msra.mxu0 0
    %5279 = vmatpush.bf16.xpose.msra.mxu0 0
    %5280 = vmatpush.bf16.xpose.msra.mxu0 0
    %5281 = vmatpush.bf16.xpose.msra.mxu0 0
    %5282 = vmatpush.bf16.xpose.msra.mxu0 %v5273
    %5283 = vmatmul.bf16.gmra.mxu0 %v5270
    %v5284 = vpop.f32.mrf.mxu0
    %v5285 = vadd.f32 0.0, %v5284
    %v5286 = vpop.f32.mrf.mxu0
    %v5287 = vadd.f32 0.0, %v5286
    %5288 = vdwg.mxu0
    %5289 = vrot.lane.b32.xlu0 %v399, 104
    %v5290 = vpop.permute.xlu0 %5289
    %5291 = vrot.lane.b32.xlu0 %v399, 72
    %v5292 = vpop.permute.xlu0 %5291
    %v5294 = vsel %vm374, %v5290, 0
    %v5297 = vsel %vm374, %v5292, 0
    %5299 = vmatpush.bf16.xpose.msra.mxu0 0
    %5300 = vmatpush.bf16.xpose.msra.mxu0 0
    %5301 = vmatpush.bf16.xpose.msra.mxu0 0
    %5302 = vmatpush.bf16.xpose.msra.mxu0 0
    %5303 = vmatpush.bf16.xpose.msra.mxu0 0
    %5304 = vmatpush.bf16.xpose.msra.mxu0 0
    %5305 = vmatpush.bf16.xpose.msra.mxu0 0
    %5306 = vmatpush.bf16.xpose.msra.mxu0 %v5297
    %5307 = vmatmul.bf16.gmra.mxu0 %v5294
    %v5308 = vpop.f32.mrf.mxu0
    %v5309 = vadd.f32 0.0, %v5308
    %v5310 = vpop.f32.mrf.mxu0
    %v5311 = vadd.f32 0.0, %v5310
    %5312 = vdwg.mxu0
    %5313 = vrot.lane.b32.xlu0 %v426, 104
    %v5314 = vpop.permute.xlu0 %5313
    %5315 = vrot.lane.b32.xlu0 %v426, 72
    %v5316 = vpop.permute.xlu0 %5315
    %v5318 = vsel %vm374, %v5314, 0
    %v5321 = vsel %vm374, %v5316, 0
    %5323 = vmatpush.bf16.xpose.msra.mxu0 0
    %5324 = vmatpush.bf16.xpose.msra.mxu0 0
    %5325 = vmatpush.bf16.xpose.msra.mxu0 0
    %5326 = vmatpush.bf16.xpose.msra.mxu0 0
    %5327 = vmatpush.bf16.xpose.msra.mxu0 0
    %5328 = vmatpush.bf16.xpose.msra.mxu0 0
    %5329 = vmatpush.bf16.xpose.msra.mxu0 0
    %5330 = vmatpush.bf16.xpose.msra.mxu0 %v5321
    %5331 = vmatmul.bf16.gmra.mxu0 %v5318
    %v5332 = vpop.f32.mrf.mxu0
    %v5333 = vadd.f32 0.0, %v5332
    %v5334 = vpop.f32.mrf.mxu0
    %v5335 = vadd.f32 0.0, %v5334
    %5336 = vdwg.mxu0
    %5337 = vrot.lane.b32.xlu0 %v453, 104
    %v5338 = vpop.permute.xlu0 %5337
    %5339 = vrot.lane.b32.xlu0 %v453, 72
    %v5340 = vpop.permute.xlu0 %5339
    %v5342 = vsel %vm374, %v5338, 0
    %v5345 = vsel %vm374, %v5340, 0
    %5347 = vmatpush.bf16.xpose.msra.mxu0 0
    %5348 = vmatpush.bf16.xpose.msra.mxu0 0
    %5349 = vmatpush.bf16.xpose.msra.mxu0 0
    %5350 = vmatpush.bf16.xpose.msra.mxu0 0
    %5351 = vmatpush.bf16.xpose.msra.mxu0 0
    %5352 = vmatpush.bf16.xpose.msra.mxu0 0
    %5353 = vmatpush.bf16.xpose.msra.mxu0 0
    %5354 = vmatpush.bf16.xpose.msra.mxu0 %v5345
    %5355 = vmatmul.bf16.gmra.mxu0 %v5342
    %v5356 = vpop.f32.mrf.mxu0
    %v5357 = vadd.f32 0.0, %v5356
    %v5358 = vpop.f32.mrf.mxu0
    %v5359 = vadd.f32 0.0, %v5358
    %5360 = vdwg.mxu0
    %5361 = vrot.lane.b32.xlu0 %v480, 104
    %v5362 = vpop.permute.xlu0 %5361
    %5363 = vrot.lane.b32.xlu0 %v480, 72
    %v5364 = vpop.permute.xlu0 %5363
    %v5366 = vsel %vm374, %v5362, 0
    %v5369 = vsel %vm374, %v5364, 0
    %5371 = vmatpush.bf16.xpose.msra.mxu0 0
    %5372 = vmatpush.bf16.xpose.msra.mxu0 0
    %5373 = vmatpush.bf16.xpose.msra.mxu0 0
    %5374 = vmatpush.bf16.xpose.msra.mxu0 0
    %5375 = vmatpush.bf16.xpose.msra.mxu0 0
    %5376 = vmatpush.bf16.xpose.msra.mxu0 0
    %5377 = vmatpush.bf16.xpose.msra.mxu0 0
    %5378 = vmatpush.bf16.xpose.msra.mxu0 %v5369
    %5379 = vmatmul.bf16.gmra.mxu0 %v5366
    %v5380 = vpop.f32.mrf.mxu0
    %v5381 = vadd.f32 0.0, %v5380
    %v5382 = vpop.f32.mrf.mxu0
    %v5383 = vadd.f32 0.0, %v5382
    %5384 = vdwg.mxu0
    %5385 = vrot.lane.b32.xlu0 %v507, 104
    %v5386 = vpop.permute.xlu0 %5385
    %5387 = vrot.lane.b32.xlu0 %v507, 72
    %v5388 = vpop.permute.xlu0 %5387
    %v5390 = vsel %vm374, %v5386, 0
    %v5393 = vsel %vm374, %v5388, 0
    %5395 = vmatpush.bf16.xpose.msra.mxu0 0
    %5396 = vmatpush.bf16.xpose.msra.mxu0 0
    %5397 = vmatpush.bf16.xpose.msra.mxu0 0
    %5398 = vmatpush.bf16.xpose.msra.mxu0 0
    %5399 = vmatpush.bf16.xpose.msra.mxu0 0
    %5400 = vmatpush.bf16.xpose.msra.mxu0 0
    %5401 = vmatpush.bf16.xpose.msra.mxu0 0
    %5402 = vmatpush.bf16.xpose.msra.mxu0 %v5393
    %5403 = vmatmul.bf16.gmra.mxu0 %v5390
    %v5404 = vpop.f32.mrf.mxu0
    %v5405 = vadd.f32 0.0, %v5404
    %v5406 = vpop.f32.mrf.mxu0
    %v5407 = vadd.f32 0.0, %v5406
    %5408 = vdwg.mxu0
    %5409 = vrot.lane.b32.xlu0 %v534, 104
    %v5410 = vpop.permute.xlu0 %5409
    %5411 = vrot.lane.b32.xlu0 %v534, 72
    %v5412 = vpop.permute.xlu0 %5411
    %v5414 = vsel %vm374, %v5410, 0
    %v5417 = vsel %vm374, %v5412, 0
    %5419 = vmatpush.bf16.xpose.msra.mxu0 0
    %5420 = vmatpush.bf16.xpose.msra.mxu0 0
    %5421 = vmatpush.bf16.xpose.msra.mxu0 0
    %5422 = vmatpush.bf16.xpose.msra.mxu0 0
    %5423 = vmatpush.bf16.xpose.msra.mxu0 0
    %5424 = vmatpush.bf16.xpose.msra.mxu0 0
    %5425 = vmatpush.bf16.xpose.msra.mxu0 0
    %5426 = vmatpush.bf16.xpose.msra.mxu0 %v5417
    %5427 = vmatmul.bf16.gmra.mxu0 %v5414
    %v5428 = vpop.f32.mrf.mxu0
    %v5429 = vadd.f32 0.0, %v5428
    %v5430 = vpop.f32.mrf.mxu0
    %v5431 = vadd.f32 0.0, %v5430
    %5432 = vdwg.mxu0
    %5433 = vrot.lane.b32.xlu0 %v561, 104
    %v5434 = vpop.permute.xlu0 %5433
    %5435 = vrot.lane.b32.xlu0 %v561, 72
    %v5436 = vpop.permute.xlu0 %5435
    %v5438 = vsel %vm374, %v5434, 0
    %v5441 = vsel %vm374, %v5436, 0
    %5443 = vmatpush.bf16.xpose.msra.mxu0 0
    %5444 = vmatpush.bf16.xpose.msra.mxu0 0
    %5445 = vmatpush.bf16.xpose.msra.mxu0 0
    %5446 = vmatpush.bf16.xpose.msra.mxu0 0
    %5447 = vmatpush.bf16.xpose.msra.mxu0 0
    %5448 = vmatpush.bf16.xpose.msra.mxu0 0
    %5449 = vmatpush.bf16.xpose.msra.mxu0 0
    %5450 = vmatpush.bf16.xpose.msra.mxu0 %v5441
    %5451 = vmatmul.bf16.gmra.mxu0 %v5438
    %v5452 = vpop.f32.mrf.mxu0
    %v5453 = vadd.f32 0.0, %v5452
    %v5454 = vpop.f32.mrf.mxu0
    %v5455 = vadd.f32 0.0, %v5454
    %5456 = vdwg.mxu0
    %5457 = vrot.lane.b32.xlu0 %v588, 104
    %v5458 = vpop.permute.xlu0 %5457
    %5459 = vrot.lane.b32.xlu0 %v588, 72
    %v5460 = vpop.permute.xlu0 %5459
    %v5462 = vsel %vm374, %v5458, 0
    %v5465 = vsel %vm374, %v5460, 0
    %5467 = vmatpush.bf16.xpose.msra.mxu0 0
    %5468 = vmatpush.bf16.xpose.msra.mxu0 0
    %5469 = vmatpush.bf16.xpose.msra.mxu0 0
    %5470 = vmatpush.bf16.xpose.msra.mxu0 0
    %5471 = vmatpush.bf16.xpose.msra.mxu0 0
    %5472 = vmatpush.bf16.xpose.msra.mxu0 0
    %5473 = vmatpush.bf16.xpose.msra.mxu0 0
    %5474 = vmatpush.bf16.xpose.msra.mxu0 %v5465
    %5475 = vmatmul.bf16.gmra.mxu0 %v5462
    %v5476 = vpop.f32.mrf.mxu0
    %v5477 = vadd.f32 0.0, %v5476
    %v5478 = vpop.f32.mrf.mxu0
    %v5479 = vadd.f32 0.0, %v5478
    %5480 = vdwg.mxu0
    %5481 = vrot.lane.b32.xlu0 %v615, 104
    %v5482 = vpop.permute.xlu0 %5481
    %5483 = vrot.lane.b32.xlu0 %v615, 72
    %v5484 = vpop.permute.xlu0 %5483
    %v5486 = vsel %vm374, %v5482, 0
    %v5489 = vsel %vm374, %v5484, 0
    %5491 = vmatpush.bf16.xpose.msra.mxu0 0
    %5492 = vmatpush.bf16.xpose.msra.mxu0 0
    %5493 = vmatpush.bf16.xpose.msra.mxu0 0
    %5494 = vmatpush.bf16.xpose.msra.mxu0 0
    %5495 = vmatpush.bf16.xpose.msra.mxu0 0
    %5496 = vmatpush.bf16.xpose.msra.mxu0 0
    %5497 = vmatpush.bf16.xpose.msra.mxu0 0
    %5498 = vmatpush.bf16.xpose.msra.mxu0 %v5489
    %5499 = vmatmul.bf16.gmra.mxu0 %v5486
    %v5500 = vpop.f32.mrf.mxu0
    %v5501 = vadd.f32 0.0, %v5500
    %v5502 = vpop.f32.mrf.mxu0
    %v5503 = vadd.f32 0.0, %v5502
    %5504 = vdwg.mxu0
    %5505 = vrot.lane.b32.xlu0 %v642, 104
    %v5506 = vpop.permute.xlu0 %5505
    %5507 = vrot.lane.b32.xlu0 %v642, 72
    %v5508 = vpop.permute.xlu0 %5507
    %v5510 = vsel %vm374, %v5506, 0
    %v5513 = vsel %vm374, %v5508, 0
    %5515 = vmatpush.bf16.xpose.msra.mxu0 0
    %5516 = vmatpush.bf16.xpose.msra.mxu0 0
    %5517 = vmatpush.bf16.xpose.msra.mxu0 0
    %5518 = vmatpush.bf16.xpose.msra.mxu0 0
    %5519 = vmatpush.bf16.xpose.msra.mxu0 0
    %5520 = vmatpush.bf16.xpose.msra.mxu0 0
    %5521 = vmatpush.bf16.xpose.msra.mxu0 0
    %5522 = vmatpush.bf16.xpose.msra.mxu0 %v5513
    %5523 = vmatmul.bf16.gmra.mxu0 %v5510
    %v5524 = vpop.f32.mrf.mxu0
    %v5525 = vadd.f32 0.0, %v5524
    %v5526 = vpop.f32.mrf.mxu0
    %v5527 = vadd.f32 0.0, %v5526
    %5528 = vdwg.mxu0
    %5529 = vrot.lane.b32.xlu0 %v669, 104
    %v5530 = vpop.permute.xlu0 %5529
    %5531 = vrot.lane.b32.xlu0 %v669, 72
    %v5532 = vpop.permute.xlu0 %5531
    %v5534 = vsel %vm374, %v5530, 0
    %v5537 = vsel %vm374, %v5532, 0
    %5539 = vmatpush.bf16.xpose.msra.mxu0 0
    %5540 = vmatpush.bf16.xpose.msra.mxu0 0
    %5541 = vmatpush.bf16.xpose.msra.mxu0 0
    %5542 = vmatpush.bf16.xpose.msra.mxu0 0
    %5543 = vmatpush.bf16.xpose.msra.mxu0 0
    %5544 = vmatpush.bf16.xpose.msra.mxu0 0
    %5545 = vmatpush.bf16.xpose.msra.mxu0 0
    %5546 = vmatpush.bf16.xpose.msra.mxu0 %v5537
    %5547 = vmatmul.bf16.gmra.mxu0 %v5534
    %v5548 = vpop.f32.mrf.mxu0
    %v5549 = vadd.f32 0.0, %v5548
    %v5550 = vpop.f32.mrf.mxu0
    %v5551 = vadd.f32 0.0, %v5550
    %5552 = vdwg.mxu0
    %5553 = vrot.lane.b32.xlu0 %v696, 104
    %v5554 = vpop.permute.xlu0 %5553
    %5555 = vrot.lane.b32.xlu0 %v696, 72
    %v5556 = vpop.permute.xlu0 %5555
    %v5558 = vsel %vm374, %v5554, 0
    %v5561 = vsel %vm374, %v5556, 0
    %5563 = vmatpush.bf16.xpose.msra.mxu0 0
    %5564 = vmatpush.bf16.xpose.msra.mxu0 0
    %5565 = vmatpush.bf16.xpose.msra.mxu0 0
    %5566 = vmatpush.bf16.xpose.msra.mxu0 0
    %5567 = vmatpush.bf16.xpose.msra.mxu0 0
    %5568 = vmatpush.bf16.xpose.msra.mxu0 0
    %5569 = vmatpush.bf16.xpose.msra.mxu0 0
    %5570 = vmatpush.bf16.xpose.msra.mxu0 %v5561
    %5571 = vmatmul.bf16.gmra.mxu0 %v5558
    %v5572 = vpop.f32.mrf.mxu0
    %v5573 = vadd.f32 0.0, %v5572
    %v5574 = vpop.f32.mrf.mxu0
    %v5575 = vadd.f32 0.0, %v5574
    %5576 = vdwg.mxu0
    %5577 = vrot.lane.b32.xlu0 %v723, 104
    %v5578 = vpop.permute.xlu0 %5577
    %5579 = vrot.lane.b32.xlu0 %v723, 72
    %v5580 = vpop.permute.xlu0 %5579
    %v5582 = vsel %vm374, %v5578, 0
    %v5585 = vsel %vm374, %v5580, 0
    %5587 = vmatpush.bf16.xpose.msra.mxu0 0
    %5588 = vmatpush.bf16.xpose.msra.mxu0 0
    %5589 = vmatpush.bf16.xpose.msra.mxu0 0
    %5590 = vmatpush.bf16.xpose.msra.mxu0 0
    %5591 = vmatpush.bf16.xpose.msra.mxu0 0
    %5592 = vmatpush.bf16.xpose.msra.mxu0 0
    %5593 = vmatpush.bf16.xpose.msra.mxu0 0
    %5594 = vmatpush.bf16.xpose.msra.mxu0 %v5585
    %5595 = vmatmul.bf16.gmra.mxu0 %v5582
    %v5596 = vpop.f32.mrf.mxu0
    %v5597 = vadd.f32 0.0, %v5596
    %v5598 = vpop.f32.mrf.mxu0
    %v5599 = vadd.f32 0.0, %v5598
    %5600 = vdwg.mxu0
    %5601 = vrot.lane.b32.xlu0 %v750, 104
    %v5602 = vpop.permute.xlu0 %5601
    %5603 = vrot.lane.b32.xlu0 %v750, 72
    %v5604 = vpop.permute.xlu0 %5603
    %v5606 = vsel %vm374, %v5602, 0
    %v5609 = vsel %vm374, %v5604, 0
    %5611 = vmatpush.bf16.xpose.msra.mxu0 0
    %5612 = vmatpush.bf16.xpose.msra.mxu0 0
    %5613 = vmatpush.bf16.xpose.msra.mxu0 0
    %5614 = vmatpush.bf16.xpose.msra.mxu0 0
    %5615 = vmatpush.bf16.xpose.msra.mxu0 0
    %5616 = vmatpush.bf16.xpose.msra.mxu0 0
    %5617 = vmatpush.bf16.xpose.msra.mxu0 0
    %5618 = vmatpush.bf16.xpose.msra.mxu0 %v5609
    %5619 = vmatmul.bf16.gmra.mxu0 %v5606
    %v5620 = vpop.f32.mrf.mxu0
    %v5621 = vadd.f32 0.0, %v5620
    %v5622 = vpop.f32.mrf.mxu0
    %v5623 = vadd.f32 0.0, %v5622
    %5624 = vdwg.mxu0
    %5625 = vrot.lane.b32.xlu0 %v777, 104
    %v5626 = vpop.permute.xlu0 %5625
    %5627 = vrot.lane.b32.xlu0 %v777, 72
    %v5628 = vpop.permute.xlu0 %5627
    %v5630 = vsel %vm374, %v5626, 0
    %v5633 = vsel %vm374, %v5628, 0
    %5635 = vmatpush.bf16.xpose.msra.mxu0 0
    %5636 = vmatpush.bf16.xpose.msra.mxu0 0
    %5637 = vmatpush.bf16.xpose.msra.mxu0 0
    %5638 = vmatpush.bf16.xpose.msra.mxu0 0
    %5639 = vmatpush.bf16.xpose.msra.mxu0 0
    %5640 = vmatpush.bf16.xpose.msra.mxu0 0
    %5641 = vmatpush.bf16.xpose.msra.mxu0 0
    %5642 = vmatpush.bf16.xpose.msra.mxu0 %v5633
    %5643 = vmatmul.bf16.gmra.mxu0 %v5630
    %v5644 = vpop.f32.mrf.mxu0
    %v5645 = vadd.f32 0.0, %v5644
    %v5646 = vpop.f32.mrf.mxu0
    %v5647 = vadd.f32 0.0, %v5646
    %5648 = vdwg.mxu0
    %v5649 = vmul.f32 %v5285, 0.35355338
    %v5650 = vmul.f32 %v5287, 0.35355338
    %v5651 = vmul.f32 %v5309, 0.35355338
    %v5652 = vmul.f32 %v5311, 0.35355338
    %v5653 = vmul.f32 %v5333, 0.35355338
    %v5654 = vmul.f32 %v5335, 0.35355338
    %v5655 = vmul.f32 %v5357, 0.35355338
    %v5656 = vmul.f32 %v5359, 0.35355338
    %v5657 = vmul.f32 %v5381, 0.35355338
    %v5658 = vmul.f32 %v5383, 0.35355338
    %v5659 = vmul.f32 %v5405, 0.35355338
    %v5660 = vmul.f32 %v5407, 0.35355338
    %v5661 = vmul.f32 %v5429, 0.35355338
    %v5662 = vmul.f32 %v5431, 0.35355338
    %v5663 = vmul.f32 %v5453, 0.35355338
    %v5664 = vmul.f32 %v5455, 0.35355338
    %v5665 = vmul.f32 %v5477, 0.35355338
    %v5666 = vmul.f32 %v5479, 0.35355338
    %v5667 = vmul.f32 %v5501, 0.35355338
    %v5668 = vmul.f32 %v5503, 0.35355338
    %v5669 = vmul.f32 %v5525, 0.35355338
    %v5670 = vmul.f32 %v5527, 0.35355338
    %v5671 = vmul.f32 %v5549, 0.35355338
    %v5672 = vmul.f32 %v5551, 0.35355338
    %v5673 = vmul.f32 %v5573, 0.35355338
    %v5674 = vmul.f32 %v5575, 0.35355338
    %v5675 = vmul.f32 %v5597, 0.35355338
    %v5676 = vmul.f32 %v5599, 0.35355338
    %v5677 = vmul.f32 %v5621, 0.35355338
    %v5678 = vmul.f32 %v5623, 0.35355338
    %v5679 = vmul.f32 %v5645, 0.35355338
    %v5680 = vmul.f32 %v5647, 0.35355338
    %v5681 = vsel %vm832, %v5649, -inf
    %5682 = vmax.xlane.f32.xlu0 %v5681
    %v5683 = vpop.xlane.xlu0 %5682
    %v5684 = vsel %vm832, %v5650, -inf
    %5685 = vmax.xlane.f32.xlu0 %v5684
    %v5686 = vpop.xlane.xlu0 %5685
    %v5687 = vsel %vm832, %v5651, -inf
    %5688 = vmax.xlane.f32.xlu0 %v5687
    %v5689 = vpop.xlane.xlu0 %5688
    %v5690 = vsel %vm832, %v5652, -inf
    %5691 = vmax.xlane.f32.xlu0 %v5690
    %v5692 = vpop.xlane.xlu0 %5691
    %v5693 = vsel %vm832, %v5653, -inf
    %5694 = vmax.xlane.f32.xlu0 %v5693
    %v5695 = vpop.xlane.xlu0 %5694
    %v5696 = vsel %vm832, %v5654, -inf
    %5697 = vmax.xlane.f32.xlu0 %v5696
    %v5698 = vpop.xlane.xlu0 %5697
    %v5699 = vsel %vm832, %v5655, -inf
    %5700 = vmax.xlane.f32.xlu0 %v5699
    %v5701 = vpop.xlane.xlu0 %5700
    %v5702 = vsel %vm832, %v5656, -inf
    %5703 = vmax.xlane.f32.xlu0 %v5702
    %v5704 = vpop.xlane.xlu0 %5703
    %v5705 = vsel %vm832, %v5657, -inf
    %5706 = vmax.xlane.f32.xlu0 %v5705
    %v5707 = vpop.xlane.xlu0 %5706
    %v5708 = vsel %vm832, %v5658, -inf
    %5709 = vmax.xlane.f32.xlu0 %v5708
    %v5710 = vpop.xlane.xlu0 %5709
    %v5711 = vsel %vm832, %v5659, -inf
    %5712 = vmax.xlane.f32.xlu0 %v5711
    %v5713 = vpop.xlane.xlu0 %5712
    %v5714 = vsel %vm832, %v5660, -inf
    %5715 = vmax.xlane.f32.xlu0 %v5714
    %v5716 = vpop.xlane.xlu0 %5715
    %v5717 = vsel %vm832, %v5661, -inf
    %5718 = vmax.xlane.f32.xlu0 %v5717
    %v5719 = vpop.xlane.xlu0 %5718
    %v5720 = vsel %vm832, %v5662, -inf
    %5721 = vmax.xlane.f32.xlu0 %v5720
    %v5722 = vpop.xlane.xlu0 %5721
    %v5723 = vsel %vm832, %v5663, -inf
    %5724 = vmax.xlane.f32.xlu0 %v5723
    %v5725 = vpop.xlane.xlu0 %5724
    %v5726 = vsel %vm832, %v5664, -inf
    %5727 = vmax.xlane.f32.xlu0 %v5726
    %v5728 = vpop.xlane.xlu0 %5727
    %v5729 = vsel %vm832, %v5665, -inf
    %5730 = vmax.xlane.f32.xlu0 %v5729
    %v5731 = vpop.xlane.xlu0 %5730
    %v5732 = vsel %vm832, %v5666, -inf
    %5733 = vmax.xlane.f32.xlu0 %v5732
    %v5734 = vpop.xlane.xlu0 %5733
    %v5735 = vsel %vm832, %v5667, -inf
    %5736 = vmax.xlane.f32.xlu0 %v5735
    %v5737 = vpop.xlane.xlu0 %5736
    %v5738 = vsel %vm832, %v5668, -inf
    %5739 = vmax.xlane.f32.xlu0 %v5738
    %v5740 = vpop.xlane.xlu0 %5739
    %v5741 = vsel %vm832, %v5669, -inf
    %5742 = vmax.xlane.f32.xlu0 %v5741
    %v5743 = vpop.xlane.xlu0 %5742
    %v5744 = vsel %vm832, %v5670, -inf
    %5745 = vmax.xlane.f32.xlu0 %v5744
    %v5746 = vpop.xlane.xlu0 %5745
    %v5747 = vsel %vm832, %v5671, -inf
    %5748 = vmax.xlane.f32.xlu0 %v5747
    %v5749 = vpop.xlane.xlu0 %5748
    %v5750 = vsel %vm832, %v5672, -inf
    %5751 = vmax.xlane.f32.xlu0 %v5750
    %v5752 = vpop.xlane.xlu0 %5751
    %v5753 = vsel %vm832, %v5673, -inf
    %5754 = vmax.xlane.f32.xlu0 %v5753
    %v5755 = vpop.xlane.xlu0 %5754
    %v5756 = vsel %vm832, %v5674, -inf
    %5757 = vmax.xlane.f32.xlu0 %v5756
    %v5758 = vpop.xlane.xlu0 %5757
    %v5759 = vsel %vm832, %v5675, -inf
    %5760 = vmax.xlane.f32.xlu0 %v5759
    %v5761 = vpop.xlane.xlu0 %5760
    %v5762 = vsel %vm832, %v5676, -inf
    %5763 = vmax.xlane.f32.xlu0 %v5762
    %v5764 = vpop.xlane.xlu0 %5763
    %v5765 = vsel %vm832, %v5677, -inf
    %5766 = vmax.xlane.f32.xlu0 %v5765
    %v5767 = vpop.xlane.xlu0 %5766
    %v5768 = vsel %vm832, %v5678, -inf
    %5769 = vmax.xlane.f32.xlu0 %v5768
    %v5770 = vpop.xlane.xlu0 %5769
    %v5771 = vsel %vm832, %v5679, -inf
    %5772 = vmax.xlane.f32.xlu0 %v5771
    %v5773 = vpop.xlane.xlu0 %5772
    %v5774 = vsel %vm832, %v5680, -inf
    %5775 = vmax.xlane.f32.xlu0 %v5774
    %v5776 = vpop.xlane.xlu0 %5775
    %v5777 = vsub.f32 %v5649, %v5683
    %v5778 = vsub.f32 %v5650, %v5686
    %v5779 = vsub.f32 %v5651, %v5689
    %v5780 = vsub.f32 %v5652, %v5692
    %v5781 = vsub.f32 %v5653, %v5695
    %v5782 = vsub.f32 %v5654, %v5698
    %v5783 = vsub.f32 %v5655, %v5701
    %v5784 = vsub.f32 %v5656, %v5704
    %v5785 = vsub.f32 %v5657, %v5707
    %v5786 = vsub.f32 %v5658, %v5710
    %v5787 = vsub.f32 %v5659, %v5713
    %v5788 = vsub.f32 %v5660, %v5716
    %v5789 = vsub.f32 %v5661, %v5719
    %v5790 = vsub.f32 %v5662, %v5722
    %v5791 = vsub.f32 %v5663, %v5725
    %v5792 = vsub.f32 %v5664, %v5728
    %v5793 = vsub.f32 %v5665, %v5731
    %v5794 = vsub.f32 %v5666, %v5734
    %v5795 = vsub.f32 %v5667, %v5737
    %v5796 = vsub.f32 %v5668, %v5740
    %v5797 = vsub.f32 %v5669, %v5743
    %v5798 = vsub.f32 %v5670, %v5746
    %v5799 = vsub.f32 %v5671, %v5749
    %v5800 = vsub.f32 %v5672, %v5752
    %v5801 = vsub.f32 %v5673, %v5755
    %v5802 = vsub.f32 %v5674, %v5758
    %v5803 = vsub.f32 %v5675, %v5761
    %v5804 = vsub.f32 %v5676, %v5764
    %v5805 = vsub.f32 %v5677, %v5767
    %v5806 = vsub.f32 %v5678, %v5770
    %v5807 = vsub.f32 %v5679, %v5773
    %v5808 = vsub.f32 %v5680, %v5776
    %v5809 = vmul.f32 %v5777, 1.442695
    %v5810 = vpow.pop %v5809
    %v5811 = vmul.f32 %v5778, 1.442695
    %v5812 = vpow.pop %v5811
    %v5813 = vmul.f32 %v5779, 1.442695
    %v5814 = vpow.pop %v5813
    %v5815 = vmul.f32 %v5780, 1.442695
    %v5816 = vpow.pop %v5815
    %v5817 = vmul.f32 %v5781, 1.442695
    %v5818 = vpow.pop %v5817
    %v5819 = vmul.f32 %v5782, 1.442695
    %v5820 = vpow.pop %v5819
    %v5821 = vmul.f32 %v5783, 1.442695
    %v5822 = vpow.pop %v5821
    %v5823 = vmul.f32 %v5784, 1.442695
    %v5824 = vpow.pop %v5823
    %v5825 = vmul.f32 %v5785, 1.442695
    %v5826 = vpow.pop %v5825
    %v5827 = vmul.f32 %v5786, 1.442695
    %v5828 = vpow.pop %v5827
    %v5829 = vmul.f32 %v5787, 1.442695
    %v5830 = vpow.pop %v5829
    %v5831 = vmul.f32 %v5788, 1.442695
    %v5832 = vpow.pop %v5831
    %v5833 = vmul.f32 %v5789, 1.442695
    %v5834 = vpow.pop %v5833
    %v5835 = vmul.f32 %v5790, 1.442695
    %v5836 = vpow.pop %v5835
    %v5837 = vmul.f32 %v5791, 1.442695
    %v5838 = vpow.pop %v5837
    %v5839 = vmul.f32 %v5792, 1.442695
    %v5840 = vpow.pop %v5839
    %v5841 = vmul.f32 %v5793, 1.442695
    %v5842 = vpow.pop %v5841
    %v5843 = vmul.f32 %v5794, 1.442695
    %v5844 = vpow.pop %v5843
    %v5845 = vmul.f32 %v5795, 1.442695
    %v5846 = vpow.pop %v5845
    %v5847 = vmul.f32 %v5796, 1.442695
    %v5848 = vpow.pop %v5847
    %v5849 = vmul.f32 %v5797, 1.442695
    %v5850 = vpow.pop %v5849
    %v5851 = vmul.f32 %v5798, 1.442695
    %v5852 = vpow.pop %v5851
    %v5853 = vmul.f32 %v5799, 1.442695
    %v5854 = vpow.pop %v5853
    %v5855 = vmul.f32 %v5800, 1.442695
    %v5856 = vpow.pop %v5855
    %v5857 = vmul.f32 %v5801, 1.442695
    %v5858 = vpow.pop %v5857
    %v5859 = vmul.f32 %v5802, 1.442695
    %v5860 = vpow.pop %v5859
    %v5861 = vmul.f32 %v5803, 1.442695
    %v5862 = vpow.pop %v5861
    %v5863 = vmul.f32 %v5804, 1.442695
    %v5864 = vpow.pop %v5863
    %v5865 = vmul.f32 %v5805, 1.442695
    %v5866 = vpow.pop %v5865
    %v5867 = vmul.f32 %v5806, 1.442695
    %v5868 = vpow.pop %v5867
    %v5869 = vmul.f32 %v5807, 1.442695
    %v5870 = vpow.pop %v5869
    %v5871 = vmul.f32 %v5808, 1.442695
    %v5872 = vpow.pop %v5871
    %v5873 = vsel %vm832, %v5810, 0.0
    %5874 = vadd.xlane.f32.xlu0 %v5873
    %v5875 = vpop.xlane.xlu0 %5874
    %v5876 = vsel %vm832, %v5812, 0.0
    %5877 = vadd.xlane.f32.xlu0 %v5876
    %v5878 = vpop.xlane.xlu0 %5877
    %v5879 = vsel %vm832, %v5814, 0.0
    %5880 = vadd.xlane.f32.xlu0 %v5879
    %v5881 = vpop.xlane.xlu0 %5880
    %v5882 = vsel %vm832, %v5816, 0.0
    %5883 = vadd.xlane.f32.xlu0 %v5882
    %v5884 = vpop.xlane.xlu0 %5883
    %v5885 = vsel %vm832, %v5818, 0.0
    %5886 = vadd.xlane.f32.xlu0 %v5885
    %v5887 = vpop.xlane.xlu0 %5886
    %v5888 = vsel %vm832, %v5820, 0.0
    %5889 = vadd.xlane.f32.xlu0 %v5888
    %v5890 = vpop.xlane.xlu0 %5889
    %v5891 = vsel %vm832, %v5822, 0.0
    %5892 = vadd.xlane.f32.xlu0 %v5891
    %v5893 = vpop.xlane.xlu0 %5892
    %v5894 = vsel %vm832, %v5824, 0.0
    %5895 = vadd.xlane.f32.xlu0 %v5894
    %v5896 = vpop.xlane.xlu0 %5895
    %v5897 = vsel %vm832, %v5826, 0.0
    %5898 = vadd.xlane.f32.xlu0 %v5897
    %v5899 = vpop.xlane.xlu0 %5898
    %v5900 = vsel %vm832, %v5828, 0.0
    %5901 = vadd.xlane.f32.xlu0 %v5900
    %v5902 = vpop.xlane.xlu0 %5901
    %v5903 = vsel %vm832, %v5830, 0.0
    %5904 = vadd.xlane.f32.xlu0 %v5903
    %v5905 = vpop.xlane.xlu0 %5904
    %v5906 = vsel %vm832, %v5832, 0.0
    %5907 = vadd.xlane.f32.xlu0 %v5906
    %v5908 = vpop.xlane.xlu0 %5907
    %v5909 = vsel %vm832, %v5834, 0.0
    %5910 = vadd.xlane.f32.xlu0 %v5909
    %v5911 = vpop.xlane.xlu0 %5910
    %v5912 = vsel %vm832, %v5836, 0.0
    %5913 = vadd.xlane.f32.xlu0 %v5912
    %v5914 = vpop.xlane.xlu0 %5913
    %v5915 = vsel %vm832, %v5838, 0.0
    %5916 = vadd.xlane.f32.xlu0 %v5915
    %v5917 = vpop.xlane.xlu0 %5916
    %v5918 = vsel %vm832, %v5840, 0.0
    %5919 = vadd.xlane.f32.xlu0 %v5918
    %v5920 = vpop.xlane.xlu0 %5919
    %v5921 = vsel %vm832, %v5842, 0.0
    %5922 = vadd.xlane.f32.xlu0 %v5921
    %v5923 = vpop.xlane.xlu0 %5922
    %v5924 = vsel %vm832, %v5844, 0.0
    %5925 = vadd.xlane.f32.xlu0 %v5924
    %v5926 = vpop.xlane.xlu0 %5925
    %v5927 = vsel %vm832, %v5846, 0.0
    %5928 = vadd.xlane.f32.xlu0 %v5927
    %v5929 = vpop.xlane.xlu0 %5928
    %v5930 = vsel %vm832, %v5848, 0.0
    %5931 = vadd.xlane.f32.xlu0 %v5930
    %v5932 = vpop.xlane.xlu0 %5931
    %v5933 = vsel %vm832, %v5850, 0.0
    %5934 = vadd.xlane.f32.xlu0 %v5933
    %v5935 = vpop.xlane.xlu0 %5934
    %v5936 = vsel %vm832, %v5852, 0.0
    %5937 = vadd.xlane.f32.xlu0 %v5936
    %v5938 = vpop.xlane.xlu0 %5937
    %v5939 = vsel %vm832, %v5854, 0.0
    %5940 = vadd.xlane.f32.xlu0 %v5939
    %v5941 = vpop.xlane.xlu0 %5940
    %v5942 = vsel %vm832, %v5856, 0.0
    %5943 = vadd.xlane.f32.xlu0 %v5942
    %v5944 = vpop.xlane.xlu0 %5943
    %v5945 = vsel %vm832, %v5858, 0.0
    %5946 = vadd.xlane.f32.xlu0 %v5945
    %v5947 = vpop.xlane.xlu0 %5946
    %v5948 = vsel %vm832, %v5860, 0.0
    %5949 = vadd.xlane.f32.xlu0 %v5948
    %v5950 = vpop.xlane.xlu0 %5949
    %v5951 = vsel %vm832, %v5862, 0.0
    %5952 = vadd.xlane.f32.xlu0 %v5951
    %v5953 = vpop.xlane.xlu0 %5952
    %v5954 = vsel %vm832, %v5864, 0.0
    %5955 = vadd.xlane.f32.xlu0 %v5954
    %v5956 = vpop.xlane.xlu0 %5955
    %v5957 = vsel %vm832, %v5866, 0.0
    %5958 = vadd.xlane.f32.xlu0 %v5957
    %v5959 = vpop.xlane.xlu0 %5958
    %v5960 = vsel %vm832, %v5868, 0.0
    %5961 = vadd.xlane.f32.xlu0 %v5960
    %v5962 = vpop.xlane.xlu0 %5961
    %v5963 = vsel %vm832, %v5870, 0.0
    %5964 = vadd.xlane.f32.xlu0 %v5963
    %v5965 = vpop.xlane.xlu0 %5964
    %v5966 = vsel %vm832, %v5872, 0.0
    %5967 = vadd.xlane.f32.xlu0 %v5966
    %v5968 = vpop.xlane.xlu0 %5967
    %v5969 = vrcp.pop %v5875
    %v5970 = vmul.f32 %v5875, %v5969
    %v5971 = vsub.f32 1.0, %v5970
    %v5972 = vmul.f32 %v5969, %v5971
    %v5973 = vadd.f32 %v5969, %v5972
    %vm5974 = vweird.f32 %v5875
    %vm5975 = vweird.f32 %v5969
    %vm5976 = vmor %vm5974, %vm5975
    %v5977 = vsel %vm5976, %v5969, %v5973
    %v5978 = vand.u32 2147483647, %v5875
    %vm5979 = vcmp.eq.f32.partialorder %v5978, 8.507059e+37
    %v5980 = vand.u32 %v5875, 2147483648
    %v5981 = vor.u32 1.1754944e-38, %v5980
    %v5982 = vsel %vm5979, %v5981, %v5977
    %v5983 = vmul.f32 %v5810, %v5982
    %v5984 = vrcp.pop %v5878
    %v5985 = vmul.f32 %v5878, %v5984
    %v5986 = vsub.f32 1.0, %v5985
    %v5987 = vmul.f32 %v5984, %v5986
    %v5988 = vadd.f32 %v5984, %v5987
    %vm5989 = vweird.f32 %v5878
    %vm5990 = vweird.f32 %v5984
    %vm5991 = vmor %vm5989, %vm5990
    %v5992 = vsel %vm5991, %v5984, %v5988
    %v5993 = vand.u32 2147483647, %v5878
    %vm5994 = vcmp.eq.f32.partialorder %v5993, 8.507059e+37
    %v5995 = vand.u32 %v5878, 2147483648
    %v5996 = vor.u32 1.1754944e-38, %v5995
    %v5997 = vsel %vm5994, %v5996, %v5992
    %v5998 = vmul.f32 %v5812, %v5997
    %v5999 = vrcp.pop %v5881
    %v6000 = vmul.f32 %v5881, %v5999
    %v6001 = vsub.f32 1.0, %v6000
    %v6002 = vmul.f32 %v5999, %v6001
    %v6003 = vadd.f32 %v5999, %v6002
    %vm6004 = vweird.f32 %v5881
    %vm6005 = vweird.f32 %v5999
    %vm6006 = vmor %vm6004, %vm6005
    %v6007 = vsel %vm6006, %v5999, %v6003
    %v6008 = vand.u32 2147483647, %v5881
    %vm6009 = vcmp.eq.f32.partialorder %v6008, 8.507059e+37
    %v6010 = vand.u32 %v5881, 2147483648
    %v6011 = vor.u32 1.1754944e-38, %v6010
    %v6012 = vsel %vm6009, %v6011, %v6007
    %v6013 = vmul.f32 %v5814, %v6012
    %v6014 = vrcp.pop %v5884
    %v6015 = vmul.f32 %v5884, %v6014
    %v6016 = vsub.f32 1.0, %v6015
    %v6017 = vmul.f32 %v6014, %v6016
    %v6018 = vadd.f32 %v6014, %v6017
    %vm6019 = vweird.f32 %v5884
    %vm6020 = vweird.f32 %v6014
    %vm6021 = vmor %vm6019, %vm6020
    %v6022 = vsel %vm6021, %v6014, %v6018
    %v6023 = vand.u32 2147483647, %v5884
    %vm6024 = vcmp.eq.f32.partialorder %v6023, 8.507059e+37
    %v6025 = vand.u32 %v5884, 2147483648
    %v6026 = vor.u32 1.1754944e-38, %v6025
    %v6027 = vsel %vm6024, %v6026, %v6022
    %v6028 = vmul.f32 %v5816, %v6027
    %v6029 = vrcp.pop %v5887
    %v6030 = vmul.f32 %v5887, %v6029
    %v6031 = vsub.f32 1.0, %v6030
    %v6032 = vmul.f32 %v6029, %v6031
    %v6033 = vadd.f32 %v6029, %v6032
    %vm6034 = vweird.f32 %v5887
    %vm6035 = vweird.f32 %v6029
    %vm6036 = vmor %vm6034, %vm6035
    %v6037 = vsel %vm6036, %v6029, %v6033
    %v6038 = vand.u32 2147483647, %v5887
    %vm6039 = vcmp.eq.f32.partialorder %v6038, 8.507059e+37
    %v6040 = vand.u32 %v5887, 2147483648
    %v6041 = vor.u32 1.1754944e-38, %v6040
    %v6042 = vsel %vm6039, %v6041, %v6037
    %v6043 = vmul.f32 %v5818, %v6042
    %v6044 = vrcp.pop %v5890
    %v6045 = vmul.f32 %v5890, %v6044
    %v6046 = vsub.f32 1.0, %v6045
    %v6047 = vmul.f32 %v6044, %v6046
    %v6048 = vadd.f32 %v6044, %v6047
    %vm6049 = vweird.f32 %v5890
    %vm6050 = vweird.f32 %v6044
    %vm6051 = vmor %vm6049, %vm6050
    %v6052 = vsel %vm6051, %v6044, %v6048
    %v6053 = vand.u32 2147483647, %v5890
    %vm6054 = vcmp.eq.f32.partialorder %v6053, 8.507059e+37
    %v6055 = vand.u32 %v5890, 2147483648
    %v6056 = vor.u32 1.1754944e-38, %v6055
    %v6057 = vsel %vm6054, %v6056, %v6052
    %v6058 = vmul.f32 %v5820, %v6057
    %v6059 = vrcp.pop %v5893
    %v6060 = vmul.f32 %v5893, %v6059
    %v6061 = vsub.f32 1.0, %v6060
    %v6062 = vmul.f32 %v6059, %v6061
    %v6063 = vadd.f32 %v6059, %v6062
    %vm6064 = vweird.f32 %v5893
    %vm6065 = vweird.f32 %v6059
    %vm6066 = vmor %vm6064, %vm6065
    %v6067 = vsel %vm6066, %v6059, %v6063
    %v6068 = vand.u32 2147483647, %v5893
    %vm6069 = vcmp.eq.f32.partialorder %v6068, 8.507059e+37
    %v6070 = vand.u32 %v5893, 2147483648
    %v6071 = vor.u32 1.1754944e-38, %v6070
    %v6072 = vsel %vm6069, %v6071, %v6067
    %v6073 = vmul.f32 %v5822, %v6072
    %v6074 = vrcp.pop %v5896
    %v6075 = vmul.f32 %v5896, %v6074
    %v6076 = vsub.f32 1.0, %v6075
    %v6077 = vmul.f32 %v6074, %v6076
    %v6078 = vadd.f32 %v6074, %v6077
    %vm6079 = vweird.f32 %v5896
    %vm6080 = vweird.f32 %v6074
    %vm6081 = vmor %vm6079, %vm6080
    %v6082 = vsel %vm6081, %v6074, %v6078
    %v6083 = vand.u32 2147483647, %v5896
    %vm6084 = vcmp.eq.f32.partialorder %v6083, 8.507059e+37
    %v6085 = vand.u32 %v5896, 2147483648
    %v6086 = vor.u32 1.1754944e-38, %v6085
    %v6087 = vsel %vm6084, %v6086, %v6082
    %v6088 = vmul.f32 %v5824, %v6087
    %v6089 = vrcp.pop %v5899
    %v6090 = vmul.f32 %v5899, %v6089
    %v6091 = vsub.f32 1.0, %v6090
    %v6092 = vmul.f32 %v6089, %v6091
    %v6093 = vadd.f32 %v6089, %v6092
    %vm6094 = vweird.f32 %v5899
    %vm6095 = vweird.f32 %v6089
    %vm6096 = vmor %vm6094, %vm6095
    %v6097 = vsel %vm6096, %v6089, %v6093
    %v6098 = vand.u32 2147483647, %v5899
    %vm6099 = vcmp.eq.f32.partialorder %v6098, 8.507059e+37
    %v6100 = vand.u32 %v5899, 2147483648
    %v6101 = vor.u32 1.1754944e-38, %v6100
    %v6102 = vsel %vm6099, %v6101, %v6097
    %v6103 = vmul.f32 %v5826, %v6102
    %v6104 = vrcp.pop %v5902
    %v6105 = vmul.f32 %v5902, %v6104
    %v6106 = vsub.f32 1.0, %v6105
    %v6107 = vmul.f32 %v6104, %v6106
    %v6108 = vadd.f32 %v6104, %v6107
    %vm6109 = vweird.f32 %v5902
    %vm6110 = vweird.f32 %v6104
    %vm6111 = vmor %vm6109, %vm6110
    %v6112 = vsel %vm6111, %v6104, %v6108
    %v6113 = vand.u32 2147483647, %v5902
    %vm6114 = vcmp.eq.f32.partialorder %v6113, 8.507059e+37
    %v6115 = vand.u32 %v5902, 2147483648
    %v6116 = vor.u32 1.1754944e-38, %v6115
    %v6117 = vsel %vm6114, %v6116, %v6112
    %v6118 = vmul.f32 %v5828, %v6117
    %v6119 = vrcp.pop %v5905
    %v6120 = vmul.f32 %v5905, %v6119
    %v6121 = vsub.f32 1.0, %v6120
    %v6122 = vmul.f32 %v6119, %v6121
    %v6123 = vadd.f32 %v6119, %v6122
    %vm6124 = vweird.f32 %v5905
    %vm6125 = vweird.f32 %v6119
    %vm6126 = vmor %vm6124, %vm6125
    %v6127 = vsel %vm6126, %v6119, %v6123
    %v6128 = vand.u32 2147483647, %v5905
    %vm6129 = vcmp.eq.f32.partialorder %v6128, 8.507059e+37
    %v6130 = vand.u32 %v5905, 2147483648
    %v6131 = vor.u32 1.1754944e-38, %v6130
    %v6132 = vsel %vm6129, %v6131, %v6127
    %v6133 = vmul.f32 %v5830, %v6132
    %v6134 = vrcp.pop %v5908
    %v6135 = vmul.f32 %v5908, %v6134
    %v6136 = vsub.f32 1.0, %v6135
    %v6137 = vmul.f32 %v6134, %v6136
    %v6138 = vadd.f32 %v6134, %v6137
    %vm6139 = vweird.f32 %v5908
    %vm6140 = vweird.f32 %v6134
    %vm6141 = vmor %vm6139, %vm6140
    %v6142 = vsel %vm6141, %v6134, %v6138
    %v6143 = vand.u32 2147483647, %v5908
    %vm6144 = vcmp.eq.f32.partialorder %v6143, 8.507059e+37
    %v6145 = vand.u32 %v5908, 2147483648
    %v6146 = vor.u32 1.1754944e-38, %v6145
    %v6147 = vsel %vm6144, %v6146, %v6142
    %v6148 = vmul.f32 %v5832, %v6147
    %v6149 = vrcp.pop %v5911
    %v6150 = vmul.f32 %v5911, %v6149
    %v6151 = vsub.f32 1.0, %v6150
    %v6152 = vmul.f32 %v6149, %v6151
    %v6153 = vadd.f32 %v6149, %v6152
    %vm6154 = vweird.f32 %v5911
    %vm6155 = vweird.f32 %v6149
    %vm6156 = vmor %vm6154, %vm6155
    %v6157 = vsel %vm6156, %v6149, %v6153
    %v6158 = vand.u32 2147483647, %v5911
    %vm6159 = vcmp.eq.f32.partialorder %v6158, 8.507059e+37
    %v6160 = vand.u32 %v5911, 2147483648
    %v6161 = vor.u32 1.1754944e-38, %v6160
    %v6162 = vsel %vm6159, %v6161, %v6157
    %v6163 = vmul.f32 %v5834, %v6162
    %v6164 = vrcp.pop %v5914
    %v6165 = vmul.f32 %v5914, %v6164
    %v6166 = vsub.f32 1.0, %v6165
    %v6167 = vmul.f32 %v6164, %v6166
    %v6168 = vadd.f32 %v6164, %v6167
    %vm6169 = vweird.f32 %v5914
    %vm6170 = vweird.f32 %v6164
    %vm6171 = vmor %vm6169, %vm6170
    %v6172 = vsel %vm6171, %v6164, %v6168
    %v6173 = vand.u32 2147483647, %v5914
    %vm6174 = vcmp.eq.f32.partialorder %v6173, 8.507059e+37
    %v6175 = vand.u32 %v5914, 2147483648
    %v6176 = vor.u32 1.1754944e-38, %v6175
    %v6177 = vsel %vm6174, %v6176, %v6172
    %v6178 = vmul.f32 %v5836, %v6177
    %v6179 = vrcp.pop %v5917
    %v6180 = vmul.f32 %v5917, %v6179
    %v6181 = vsub.f32 1.0, %v6180
    %v6182 = vmul.f32 %v6179, %v6181
    %v6183 = vadd.f32 %v6179, %v6182
    %vm6184 = vweird.f32 %v5917
    %vm6185 = vweird.f32 %v6179
    %vm6186 = vmor %vm6184, %vm6185
    %v6187 = vsel %vm6186, %v6179, %v6183
    %v6188 = vand.u32 2147483647, %v5917
    %vm6189 = vcmp.eq.f32.partialorder %v6188, 8.507059e+37
    %v6190 = vand.u32 %v5917, 2147483648
    %v6191 = vor.u32 1.1754944e-38, %v6190
    %v6192 = vsel %vm6189, %v6191, %v6187
    %v6193 = vmul.f32 %v5838, %v6192
    %v6194 = vrcp.pop %v5920
    %v6195 = vmul.f32 %v5920, %v6194
    %v6196 = vsub.f32 1.0, %v6195
    %v6197 = vmul.f32 %v6194, %v6196
    %v6198 = vadd.f32 %v6194, %v6197
    %vm6199 = vweird.f32 %v5920
    %vm6200 = vweird.f32 %v6194
    %vm6201 = vmor %vm6199, %vm6200
    %v6202 = vsel %vm6201, %v6194, %v6198
    %v6203 = vand.u32 2147483647, %v5920
    %vm6204 = vcmp.eq.f32.partialorder %v6203, 8.507059e+37
    %v6205 = vand.u32 %v5920, 2147483648
    %v6206 = vor.u32 1.1754944e-38, %v6205
    %v6207 = vsel %vm6204, %v6206, %v6202
    %v6208 = vmul.f32 %v5840, %v6207
    %v6209 = vrcp.pop %v5923
    %v6210 = vmul.f32 %v5923, %v6209
    %v6211 = vsub.f32 1.0, %v6210
    %v6212 = vmul.f32 %v6209, %v6211
    %v6213 = vadd.f32 %v6209, %v6212
    %vm6214 = vweird.f32 %v5923
    %vm6215 = vweird.f32 %v6209
    %vm6216 = vmor %vm6214, %vm6215
    %v6217 = vsel %vm6216, %v6209, %v6213
    %v6218 = vand.u32 2147483647, %v5923
    %vm6219 = vcmp.eq.f32.partialorder %v6218, 8.507059e+37
    %v6220 = vand.u32 %v5923, 2147483648
    %v6221 = vor.u32 1.1754944e-38, %v6220
    %v6222 = vsel %vm6219, %v6221, %v6217
    %v6223 = vmul.f32 %v5842, %v6222
    %v6224 = vrcp.pop %v5926
    %v6225 = vmul.f32 %v5926, %v6224
    %v6226 = vsub.f32 1.0, %v6225
    %v6227 = vmul.f32 %v6224, %v6226
    %v6228 = vadd.f32 %v6224, %v6227
    %vm6229 = vweird.f32 %v5926
    %vm6230 = vweird.f32 %v6224
    %vm6231 = vmor %vm6229, %vm6230
    %v6232 = vsel %vm6231, %v6224, %v6228
    %v6233 = vand.u32 2147483647, %v5926
    %vm6234 = vcmp.eq.f32.partialorder %v6233, 8.507059e+37
    %v6235 = vand.u32 %v5926, 2147483648
    %v6236 = vor.u32 1.1754944e-38, %v6235
    %v6237 = vsel %vm6234, %v6236, %v6232
    %v6238 = vmul.f32 %v5844, %v6237
    %v6239 = vrcp.pop %v5929
    %v6240 = vmul.f32 %v5929, %v6239
    %v6241 = vsub.f32 1.0, %v6240
    %v6242 = vmul.f32 %v6239, %v6241
    %v6243 = vadd.f32 %v6239, %v6242
    %vm6244 = vweird.f32 %v5929
    %vm6245 = vweird.f32 %v6239
    %vm6246 = vmor %vm6244, %vm6245
    %v6247 = vsel %vm6246, %v6239, %v6243
    %v6248 = vand.u32 2147483647, %v5929
    %vm6249 = vcmp.eq.f32.partialorder %v6248, 8.507059e+37
    %v6250 = vand.u32 %v5929, 2147483648
    %v6251 = vor.u32 1.1754944e-38, %v6250
    %v6252 = vsel %vm6249, %v6251, %v6247
    %v6253 = vmul.f32 %v5846, %v6252
    %v6254 = vrcp.pop %v5932
    %v6255 = vmul.f32 %v5932, %v6254
    %v6256 = vsub.f32 1.0, %v6255
    %v6257 = vmul.f32 %v6254, %v6256
    %v6258 = vadd.f32 %v6254, %v6257
    %vm6259 = vweird.f32 %v5932
    %vm6260 = vweird.f32 %v6254
    %vm6261 = vmor %vm6259, %vm6260
    %v6262 = vsel %vm6261, %v6254, %v6258
    %v6263 = vand.u32 2147483647, %v5932
    %vm6264 = vcmp.eq.f32.partialorder %v6263, 8.507059e+37
    %v6265 = vand.u32 %v5932, 2147483648
    %v6266 = vor.u32 1.1754944e-38, %v6265
    %v6267 = vsel %vm6264, %v6266, %v6262
    %v6268 = vmul.f32 %v5848, %v6267
    %v6269 = vrcp.pop %v5935
    %v6270 = vmul.f32 %v5935, %v6269
    %v6271 = vsub.f32 1.0, %v6270
    %v6272 = vmul.f32 %v6269, %v6271
    %v6273 = vadd.f32 %v6269, %v6272
    %vm6274 = vweird.f32 %v5935
    %vm6275 = vweird.f32 %v6269
    %vm6276 = vmor %vm6274, %vm6275
    %v6277 = vsel %vm6276, %v6269, %v6273
    %v6278 = vand.u32 2147483647, %v5935
    %vm6279 = vcmp.eq.f32.partialorder %v6278, 8.507059e+37
    %v6280 = vand.u32 %v5935, 2147483648
    %v6281 = vor.u32 1.1754944e-38, %v6280
    %v6282 = vsel %vm6279, %v6281, %v6277
    %v6283 = vmul.f32 %v5850, %v6282
    %v6284 = vrcp.pop %v5938
    %v6285 = vmul.f32 %v5938, %v6284
    %v6286 = vsub.f32 1.0, %v6285
    %v6287 = vmul.f32 %v6284, %v6286
    %v6288 = vadd.f32 %v6284, %v6287
    %vm6289 = vweird.f32 %v5938
    %vm6290 = vweird.f32 %v6284
    %vm6291 = vmor %vm6289, %vm6290
    %v6292 = vsel %vm6291, %v6284, %v6288
    %v6293 = vand.u32 2147483647, %v5938
    %vm6294 = vcmp.eq.f32.partialorder %v6293, 8.507059e+37
    %v6295 = vand.u32 %v5938, 2147483648
    %v6296 = vor.u32 1.1754944e-38, %v6295
    %v6297 = vsel %vm6294, %v6296, %v6292
    %v6298 = vmul.f32 %v5852, %v6297
    %v6299 = vrcp.pop %v5941
    %v6300 = vmul.f32 %v5941, %v6299
    %v6301 = vsub.f32 1.0, %v6300
    %v6302 = vmul.f32 %v6299, %v6301
    %v6303 = vadd.f32 %v6299, %v6302
    %vm6304 = vweird.f32 %v5941
    %vm6305 = vweird.f32 %v6299
    %vm6306 = vmor %vm6304, %vm6305
    %v6307 = vsel %vm6306, %v6299, %v6303
    %v6308 = vand.u32 2147483647, %v5941
    %vm6309 = vcmp.eq.f32.partialorder %v6308, 8.507059e+37
    %v6310 = vand.u32 %v5941, 2147483648
    %v6311 = vor.u32 1.1754944e-38, %v6310
    %v6312 = vsel %vm6309, %v6311, %v6307
    %v6313 = vmul.f32 %v5854, %v6312
    %v6314 = vrcp.pop %v5944
    %v6315 = vmul.f32 %v5944, %v6314
    %v6316 = vsub.f32 1.0, %v6315
    %v6317 = vmul.f32 %v6314, %v6316
    %v6318 = vadd.f32 %v6314, %v6317
    %vm6319 = vweird.f32 %v5944
    %vm6320 = vweird.f32 %v6314
    %vm6321 = vmor %vm6319, %vm6320
    %v6322 = vsel %vm6321, %v6314, %v6318
    %v6323 = vand.u32 2147483647, %v5944
    %vm6324 = vcmp.eq.f32.partialorder %v6323, 8.507059e+37
    %v6325 = vand.u32 %v5944, 2147483648
    %v6326 = vor.u32 1.1754944e-38, %v6325
    %v6327 = vsel %vm6324, %v6326, %v6322
    %v6328 = vmul.f32 %v5856, %v6327
    %v6329 = vrcp.pop %v5947
    %v6330 = vmul.f32 %v5947, %v6329
    %v6331 = vsub.f32 1.0, %v6330
    %v6332 = vmul.f32 %v6329, %v6331
    %v6333 = vadd.f32 %v6329, %v6332
    %vm6334 = vweird.f32 %v5947
    %vm6335 = vweird.f32 %v6329
    %vm6336 = vmor %vm6334, %vm6335
    %v6337 = vsel %vm6336, %v6329, %v6333
    %v6338 = vand.u32 2147483647, %v5947
    %vm6339 = vcmp.eq.f32.partialorder %v6338, 8.507059e+37
    %v6340 = vand.u32 %v5947, 2147483648
    %v6341 = vor.u32 1.1754944e-38, %v6340
    %v6342 = vsel %vm6339, %v6341, %v6337
    %v6343 = vmul.f32 %v5858, %v6342
    %v6344 = vrcp.pop %v5950
    %v6345 = vmul.f32 %v5950, %v6344
    %v6346 = vsub.f32 1.0, %v6345
    %v6347 = vmul.f32 %v6344, %v6346
    %v6348 = vadd.f32 %v6344, %v6347
    %vm6349 = vweird.f32 %v5950
    %vm6350 = vweird.f32 %v6344
    %vm6351 = vmor %vm6349, %vm6350
    %v6352 = vsel %vm6351, %v6344, %v6348
    %v6353 = vand.u32 2147483647, %v5950
    %vm6354 = vcmp.eq.f32.partialorder %v6353, 8.507059e+37
    %v6355 = vand.u32 %v5950, 2147483648
    %v6356 = vor.u32 1.1754944e-38, %v6355
    %v6357 = vsel %vm6354, %v6356, %v6352
    %v6358 = vmul.f32 %v5860, %v6357
    %v6359 = vrcp.pop %v5953
    %v6360 = vmul.f32 %v5953, %v6359
    %v6361 = vsub.f32 1.0, %v6360
    %v6362 = vmul.f32 %v6359, %v6361
    %v6363 = vadd.f32 %v6359, %v6362
    %vm6364 = vweird.f32 %v5953
    %vm6365 = vweird.f32 %v6359
    %vm6366 = vmor %vm6364, %vm6365
    %v6367 = vsel %vm6366, %v6359, %v6363
    %v6368 = vand.u32 2147483647, %v5953
    %vm6369 = vcmp.eq.f32.partialorder %v6368, 8.507059e+37
    %v6370 = vand.u32 %v5953, 2147483648
    %v6371 = vor.u32 1.1754944e-38, %v6370
    %v6372 = vsel %vm6369, %v6371, %v6367
    %v6373 = vmul.f32 %v5862, %v6372
    %v6374 = vrcp.pop %v5956
    %v6375 = vmul.f32 %v5956, %v6374
    %v6376 = vsub.f32 1.0, %v6375
    %v6377 = vmul.f32 %v6374, %v6376
    %v6378 = vadd.f32 %v6374, %v6377
    %vm6379 = vweird.f32 %v5956
    %vm6380 = vweird.f32 %v6374
    %vm6381 = vmor %vm6379, %vm6380
    %v6382 = vsel %vm6381, %v6374, %v6378
    %v6383 = vand.u32 2147483647, %v5956
    %vm6384 = vcmp.eq.f32.partialorder %v6383, 8.507059e+37
    %v6385 = vand.u32 %v5956, 2147483648
    %v6386 = vor.u32 1.1754944e-38, %v6385
    %v6387 = vsel %vm6384, %v6386, %v6382
    %v6388 = vmul.f32 %v5864, %v6387
    %v6389 = vrcp.pop %v5959
    %v6390 = vmul.f32 %v5959, %v6389
    %v6391 = vsub.f32 1.0, %v6390
    %v6392 = vmul.f32 %v6389, %v6391
    %v6393 = vadd.f32 %v6389, %v6392
    %vm6394 = vweird.f32 %v5959
    %vm6395 = vweird.f32 %v6389
    %vm6396 = vmor %vm6394, %vm6395
    %v6397 = vsel %vm6396, %v6389, %v6393
    %v6398 = vand.u32 2147483647, %v5959
    %vm6399 = vcmp.eq.f32.partialorder %v6398, 8.507059e+37
    %v6400 = vand.u32 %v5959, 2147483648
    %v6401 = vor.u32 1.1754944e-38, %v6400
    %v6402 = vsel %vm6399, %v6401, %v6397
    %v6403 = vmul.f32 %v5866, %v6402
    %v6404 = vrcp.pop %v5962
    %v6405 = vmul.f32 %v5962, %v6404
    %v6406 = vsub.f32 1.0, %v6405
    %v6407 = vmul.f32 %v6404, %v6406
    %v6408 = vadd.f32 %v6404, %v6407
    %vm6409 = vweird.f32 %v5962
    %vm6410 = vweird.f32 %v6404
    %vm6411 = vmor %vm6409, %vm6410
    %v6412 = vsel %vm6411, %v6404, %v6408
    %v6413 = vand.u32 2147483647, %v5962
    %vm6414 = vcmp.eq.f32.partialorder %v6413, 8.507059e+37
    %v6415 = vand.u32 %v5962, 2147483648
    %v6416 = vor.u32 1.1754944e-38, %v6415
    %v6417 = vsel %vm6414, %v6416, %v6412
    %v6418 = vmul.f32 %v5868, %v6417
    %v6419 = vrcp.pop %v5965
    %v6420 = vmul.f32 %v5965, %v6419
    %v6421 = vsub.f32 1.0, %v6420
    %v6422 = vmul.f32 %v6419, %v6421
    %v6423 = vadd.f32 %v6419, %v6422
    %vm6424 = vweird.f32 %v5965
    %vm6425 = vweird.f32 %v6419
    %vm6426 = vmor %vm6424, %vm6425
    %v6427 = vsel %vm6426, %v6419, %v6423
    %v6428 = vand.u32 2147483647, %v5965
    %vm6429 = vcmp.eq.f32.partialorder %v6428, 8.507059e+37
    %v6430 = vand.u32 %v5965, 2147483648
    %v6431 = vor.u32 1.1754944e-38, %v6430
    %v6432 = vsel %vm6429, %v6431, %v6427
    %v6433 = vmul.f32 %v5870, %v6432
    %v6434 = vrcp.pop %v5968
    %v6435 = vmul.f32 %v5968, %v6434
    %v6436 = vsub.f32 1.0, %v6435
    %v6437 = vmul.f32 %v6434, %v6436
    %v6438 = vadd.f32 %v6434, %v6437
    %vm6439 = vweird.f32 %v5968
    %vm6440 = vweird.f32 %v6434
    %vm6441 = vmor %vm6439, %vm6440
    %v6442 = vsel %vm6441, %v6434, %v6438
    %v6443 = vand.u32 2147483647, %v5968
    %vm6444 = vcmp.eq.f32.partialorder %v6443, 8.507059e+37
    %v6445 = vand.u32 %v5968, 2147483648
    %v6446 = vor.u32 1.1754944e-38, %v6445
    %v6447 = vsel %vm6444, %v6446, %v6442
    %v6448 = vmul.f32 %v5872, %v6447
    %v6449 = vpack.c.bf16 %v5983, %v5983
    %v6450 = vpack.c.bf16 %v5998, %v5998
    %v6451 = vpack.c.bf16 %v6013, %v6013
    %v6452 = vpack.c.bf16 %v6028, %v6028
    %v6453 = vpack.c.bf16 %v6043, %v6043
    %v6454 = vpack.c.bf16 %v6058, %v6058
    %v6455 = vpack.c.bf16 %v6073, %v6073
    %v6456 = vpack.c.bf16 %v6088, %v6088
    %v6457 = vpack.c.bf16 %v6103, %v6103
    %v6458 = vpack.c.bf16 %v6118, %v6118
    %v6459 = vpack.c.bf16 %v6133, %v6133
    %v6460 = vpack.c.bf16 %v6148, %v6148
    %v6461 = vpack.c.bf16 %v6163, %v6163
    %v6462 = vpack.c.bf16 %v6178, %v6178
    %v6463 = vpack.c.bf16 %v6193, %v6193
    %v6464 = vpack.c.bf16 %v6208, %v6208
    %v6465 = vpack.c.bf16 %v6223, %v6223
    %v6466 = vpack.c.bf16 %v6238, %v6238
    %v6467 = vpack.c.bf16 %v6253, %v6253
    %v6468 = vpack.c.bf16 %v6268, %v6268
    %v6469 = vpack.c.bf16 %v6283, %v6283
    %v6470 = vpack.c.bf16 %v6298, %v6298
    %v6471 = vpack.c.bf16 %v6313, %v6313
    %v6472 = vpack.c.bf16 %v6328, %v6328
    %v6473 = vpack.c.bf16 %v6343, %v6343
    %v6474 = vpack.c.bf16 %v6358, %v6358
    %v6475 = vpack.c.bf16 %v6373, %v6373
    %v6476 = vpack.c.bf16 %v6388, %v6388
    %v6477 = vpack.c.bf16 %v6403, %v6403
    %v6478 = vpack.c.bf16 %v6418, %v6418
    %v6479 = vpack.c.bf16 %v6433, %v6433
    %v6480 = vpack.c.bf16 %v6448, %v6448
    %v6483 = vunpack.c.l.b16 %v6449
    %v6484 = vunpack.c.l.b16 %v6450
    %v6485 = vpack.c.b16 %v6484, %v6483
    %6486 = vrot.lane.b32.xlu0 %v371, 40
    %v6487 = vpop.permute.xlu0 %6486
    %v6490 = vsel %vm832, %v6485, 0
    %6492 = vmatpush.bf16.msra.mxu0 0
    %6493 = vmatpush.bf16.msra.mxu0 0
    %6494 = vmatpush.bf16.msra.mxu0 0
    %6495 = vmatpush.bf16.msra.mxu0 0
    %6496 = vmatpush.bf16.msra.mxu0 0
    %6497 = vmatpush.bf16.msra.mxu0 0
    %6498 = vmatpush.bf16.msra.mxu0 0
    %6499 = vmatpush.bf16.msra.mxu0 %v6487
    %6500 = vmatmul.bf16.gmra.mxu0 %v6490
    %v6501 = vpop.f32.mrf.mxu0
    %v6502 = vadd.f32 0.0, %v6501
    %v6503 = vpop.f32.mrf.mxu0
    %v6504 = vadd.f32 0.0, %v6503
    %6505 = vdwg.mxu0
    %v6508 = vunpack.c.l.b16 %v6451
    %v6509 = vunpack.c.l.b16 %v6452
    %v6510 = vpack.c.b16 %v6509, %v6508
    %6511 = vrot.lane.b32.xlu0 %v399, 40
    %v6512 = vpop.permute.xlu0 %6511
    %v6515 = vsel %vm832, %v6510, 0
    %6517 = vmatpush.bf16.msra.mxu0 0
    %6518 = vmatpush.bf16.msra.mxu0 0
    %6519 = vmatpush.bf16.msra.mxu0 0
    %6520 = vmatpush.bf16.msra.mxu0 0
    %6521 = vmatpush.bf16.msra.mxu0 0
    %6522 = vmatpush.bf16.msra.mxu0 0
    %6523 = vmatpush.bf16.msra.mxu0 0
    %6524 = vmatpush.bf16.msra.mxu0 %v6512
    %6525 = vmatmul.bf16.gmra.mxu0 %v6515
    %v6526 = vpop.f32.mrf.mxu0
    %v6527 = vadd.f32 0.0, %v6526
    %v6528 = vpop.f32.mrf.mxu0
    %v6529 = vadd.f32 0.0, %v6528
    %6530 = vdwg.mxu0
    %v6533 = vunpack.c.l.b16 %v6453
    %v6534 = vunpack.c.l.b16 %v6454
    %v6535 = vpack.c.b16 %v6534, %v6533
    %6536 = vrot.lane.b32.xlu0 %v426, 40
    %v6537 = vpop.permute.xlu0 %6536
    %v6540 = vsel %vm832, %v6535, 0
    %6542 = vmatpush.bf16.msra.mxu0 0
    %6543 = vmatpush.bf16.msra.mxu0 0
    %6544 = vmatpush.bf16.msra.mxu0 0
    %6545 = vmatpush.bf16.msra.mxu0 0
    %6546 = vmatpush.bf16.msra.mxu0 0
    %6547 = vmatpush.bf16.msra.mxu0 0
    %6548 = vmatpush.bf16.msra.mxu0 0
    %6549 = vmatpush.bf16.msra.mxu0 %v6537
    %6550 = vmatmul.bf16.gmra.mxu0 %v6540
    %v6551 = vpop.f32.mrf.mxu0
    %v6552 = vadd.f32 0.0, %v6551
    %v6553 = vpop.f32.mrf.mxu0
    %v6554 = vadd.f32 0.0, %v6553
    %6555 = vdwg.mxu0
    %v6558 = vunpack.c.l.b16 %v6455
    %v6559 = vunpack.c.l.b16 %v6456
    %v6560 = vpack.c.b16 %v6559, %v6558
    %6561 = vrot.lane.b32.xlu0 %v453, 40
    %v6562 = vpop.permute.xlu0 %6561
    %v6565 = vsel %vm832, %v6560, 0
    %6567 = vmatpush.bf16.msra.mxu0 0
    %6568 = vmatpush.bf16.msra.mxu0 0
    %6569 = vmatpush.bf16.msra.mxu0 0
    %6570 = vmatpush.bf16.msra.mxu0 0
    %6571 = vmatpush.bf16.msra.mxu0 0
    %6572 = vmatpush.bf16.msra.mxu0 0
    %6573 = vmatpush.bf16.msra.mxu0 0
    %6574 = vmatpush.bf16.msra.mxu0 %v6562
    %6575 = vmatmul.bf16.gmra.mxu0 %v6565
    %v6576 = vpop.f32.mrf.mxu0
    %v6577 = vadd.f32 0.0, %v6576
    %v6578 = vpop.f32.mrf.mxu0
    %v6579 = vadd.f32 0.0, %v6578
    %6580 = vdwg.mxu0
    %v6583 = vunpack.c.l.b16 %v6457
    %v6584 = vunpack.c.l.b16 %v6458
    %v6585 = vpack.c.b16 %v6584, %v6583
    %6586 = vrot.lane.b32.xlu0 %v480, 40
    %v6587 = vpop.permute.xlu0 %6586
    %v6590 = vsel %vm832, %v6585, 0
    %6592 = vmatpush.bf16.msra.mxu0 0
    %6593 = vmatpush.bf16.msra.mxu0 0
    %6594 = vmatpush.bf16.msra.mxu0 0
    %6595 = vmatpush.bf16.msra.mxu0 0
    %6596 = vmatpush.bf16.msra.mxu0 0
    %6597 = vmatpush.bf16.msra.mxu0 0
    %6598 = vmatpush.bf16.msra.mxu0 0
    %6599 = vmatpush.bf16.msra.mxu0 %v6587
    %6600 = vmatmul.bf16.gmra.mxu0 %v6590
    %v6601 = vpop.f32.mrf.mxu0
    %v6602 = vadd.f32 0.0, %v6601
    %v6603 = vpop.f32.mrf.mxu0
    %v6604 = vadd.f32 0.0, %v6603
    %6605 = vdwg.mxu0
    %v6608 = vunpack.c.l.b16 %v6459
    %v6609 = vunpack.c.l.b16 %v6460
    %v6610 = vpack.c.b16 %v6609, %v6608
    %6611 = vrot.lane.b32.xlu0 %v507, 40
    %v6612 = vpop.permute.xlu0 %6611
    %v6615 = vsel %vm832, %v6610, 0
    %6617 = vmatpush.bf16.msra.mxu0 0
    %6618 = vmatpush.bf16.msra.mxu0 0
    %6619 = vmatpush.bf16.msra.mxu0 0
    %6620 = vmatpush.bf16.msra.mxu0 0
    %6621 = vmatpush.bf16.msra.mxu0 0
    %6622 = vmatpush.bf16.msra.mxu0 0
    %6623 = vmatpush.bf16.msra.mxu0 0
    %6624 = vmatpush.bf16.msra.mxu0 %v6612
    %6625 = vmatmul.bf16.gmra.mxu0 %v6615
    %v6626 = vpop.f32.mrf.mxu0
    %v6627 = vadd.f32 0.0, %v6626
    %v6628 = vpop.f32.mrf.mxu0
    %v6629 = vadd.f32 0.0, %v6628
    %6630 = vdwg.mxu0
    %v6633 = vunpack.c.l.b16 %v6461
    %v6634 = vunpack.c.l.b16 %v6462
    %v6635 = vpack.c.b16 %v6634, %v6633
    %6636 = vrot.lane.b32.xlu0 %v534, 40
    %v6637 = vpop.permute.xlu0 %6636
    %v6640 = vsel %vm832, %v6635, 0
    %6642 = vmatpush.bf16.msra.mxu0 0
    %6643 = vmatpush.bf16.msra.mxu0 0
    %6644 = vmatpush.bf16.msra.mxu0 0
    %6645 = vmatpush.bf16.msra.mxu0 0
    %6646 = vmatpush.bf16.msra.mxu0 0
    %6647 = vmatpush.bf16.msra.mxu0 0
    %6648 = vmatpush.bf16.msra.mxu0 0
    %6649 = vmatpush.bf16.msra.mxu0 %v6637
    %6650 = vmatmul.bf16.gmra.mxu0 %v6640
    %v6651 = vpop.f32.mrf.mxu0
    %v6652 = vadd.f32 0.0, %v6651
    %v6653 = vpop.f32.mrf.mxu0
    %v6654 = vadd.f32 0.0, %v6653
    %6655 = vdwg.mxu0
    %v6658 = vunpack.c.l.b16 %v6463
    %v6659 = vunpack.c.l.b16 %v6464
    %v6660 = vpack.c.b16 %v6659, %v6658
    %6661 = vrot.lane.b32.xlu0 %v561, 40
    %v6662 = vpop.permute.xlu0 %6661
    %v6665 = vsel %vm832, %v6660, 0
    %6667 = vmatpush.bf16.msra.mxu0 0
    %6668 = vmatpush.bf16.msra.mxu0 0
    %6669 = vmatpush.bf16.msra.mxu0 0
    %6670 = vmatpush.bf16.msra.mxu0 0
    %6671 = vmatpush.bf16.msra.mxu0 0
    %6672 = vmatpush.bf16.msra.mxu0 0
    %6673 = vmatpush.bf16.msra.mxu0 0
    %6674 = vmatpush.bf16.msra.mxu0 %v6662
    %6675 = vmatmul.bf16.gmra.mxu0 %v6665
    %v6676 = vpop.f32.mrf.mxu0
    %v6677 = vadd.f32 0.0, %v6676
    %v6678 = vpop.f32.mrf.mxu0
    %v6679 = vadd.f32 0.0, %v6678
    %6680 = vdwg.mxu0
    %v6683 = vunpack.c.l.b16 %v6465
    %v6684 = vunpack.c.l.b16 %v6466
    %v6685 = vpack.c.b16 %v6684, %v6683
    %6686 = vrot.lane.b32.xlu0 %v588, 40
    %v6687 = vpop.permute.xlu0 %6686
    %v6690 = vsel %vm832, %v6685, 0
    %6692 = vmatpush.bf16.msra.mxu0 0
    %6693 = vmatpush.bf16.msra.mxu0 0
    %6694 = vmatpush.bf16.msra.mxu0 0
    %6695 = vmatpush.bf16.msra.mxu0 0
    %6696 = vmatpush.bf16.msra.mxu0 0
    %6697 = vmatpush.bf16.msra.mxu0 0
    %6698 = vmatpush.bf16.msra.mxu0 0
    %6699 = vmatpush.bf16.msra.mxu0 %v6687
    %6700 = vmatmul.bf16.gmra.mxu0 %v6690
    %v6701 = vpop.f32.mrf.mxu0
    %v6702 = vadd.f32 0.0, %v6701
    %v6703 = vpop.f32.mrf.mxu0
    %v6704 = vadd.f32 0.0, %v6703
    %6705 = vdwg.mxu0
    %v6708 = vunpack.c.l.b16 %v6467
    %v6709 = vunpack.c.l.b16 %v6468
    %v6710 = vpack.c.b16 %v6709, %v6708
    %6711 = vrot.lane.b32.xlu0 %v615, 40
    %v6712 = vpop.permute.xlu0 %6711
    %v6715 = vsel %vm832, %v6710, 0
    %6717 = vmatpush.bf16.msra.mxu0 0
    %6718 = vmatpush.bf16.msra.mxu0 0
    %6719 = vmatpush.bf16.msra.mxu0 0
    %6720 = vmatpush.bf16.msra.mxu0 0
    %6721 = vmatpush.bf16.msra.mxu0 0
    %6722 = vmatpush.bf16.msra.mxu0 0
    %6723 = vmatpush.bf16.msra.mxu0 0
    %6724 = vmatpush.bf16.msra.mxu0 %v6712
    %6725 = vmatmul.bf16.gmra.mxu0 %v6715
    %v6726 = vpop.f32.mrf.mxu0
    %v6727 = vadd.f32 0.0, %v6726
    %v6728 = vpop.f32.mrf.mxu0
    %v6729 = vadd.f32 0.0, %v6728
    %6730 = vdwg.mxu0
    %v6733 = vunpack.c.l.b16 %v6469
    %v6734 = vunpack.c.l.b16 %v6470
    %v6735 = vpack.c.b16 %v6734, %v6733
    %6736 = vrot.lane.b32.xlu0 %v642, 40
    %v6737 = vpop.permute.xlu0 %6736
    %v6740 = vsel %vm832, %v6735, 0
    %6742 = vmatpush.bf16.msra.mxu0 0
    %6743 = vmatpush.bf16.msra.mxu0 0
    %6744 = vmatpush.bf16.msra.mxu0 0
    %6745 = vmatpush.bf16.msra.mxu0 0
    %6746 = vmatpush.bf16.msra.mxu0 0
    %6747 = vmatpush.bf16.msra.mxu0 0
    %6748 = vmatpush.bf16.msra.mxu0 0
    %6749 = vmatpush.bf16.msra.mxu0 %v6737
    %6750 = vmatmul.bf16.gmra.mxu0 %v6740
    %v6751 = vpop.f32.mrf.mxu0
    %v6752 = vadd.f32 0.0, %v6751
    %v6753 = vpop.f32.mrf.mxu0
    %v6754 = vadd.f32 0.0, %v6753
    %6755 = vdwg.mxu0
    %v6758 = vunpack.c.l.b16 %v6471
    %v6759 = vunpack.c.l.b16 %v6472
    %v6760 = vpack.c.b16 %v6759, %v6758
    %6761 = vrot.lane.b32.xlu0 %v669, 40
    %v6762 = vpop.permute.xlu0 %6761
    %v6765 = vsel %vm832, %v6760, 0
    %6767 = vmatpush.bf16.msra.mxu0 0
    %6768 = vmatpush.bf16.msra.mxu0 0
    %6769 = vmatpush.bf16.msra.mxu0 0
    %6770 = vmatpush.bf16.msra.mxu0 0
    %6771 = vmatpush.bf16.msra.mxu0 0
    %6772 = vmatpush.bf16.msra.mxu0 0
    %6773 = vmatpush.bf16.msra.mxu0 0
    %6774 = vmatpush.bf16.msra.mxu0 %v6762
    %6775 = vmatmul.bf16.gmra.mxu0 %v6765
    %v6776 = vpop.f32.mrf.mxu0
    %v6777 = vadd.f32 0.0, %v6776
    %v6778 = vpop.f32.mrf.mxu0
    %v6779 = vadd.f32 0.0, %v6778
    %6780 = vdwg.mxu0
    %v6783 = vunpack.c.l.b16 %v6473
    %v6784 = vunpack.c.l.b16 %v6474
    %v6785 = vpack.c.b16 %v6784, %v6783
    %6786 = vrot.lane.b32.xlu0 %v696, 40
    %v6787 = vpop.permute.xlu0 %6786
    %v6790 = vsel %vm832, %v6785, 0
    %6792 = vmatpush.bf16.msra.mxu0 0
    %6793 = vmatpush.bf16.msra.mxu0 0
    %6794 = vmatpush.bf16.msra.mxu0 0
    %6795 = vmatpush.bf16.msra.mxu0 0
    %6796 = vmatpush.bf16.msra.mxu0 0
    %6797 = vmatpush.bf16.msra.mxu0 0
    %6798 = vmatpush.bf16.msra.mxu0 0
    %6799 = vmatpush.bf16.msra.mxu0 %v6787
    %6800 = vmatmul.bf16.gmra.mxu0 %v6790
    %v6801 = vpop.f32.mrf.mxu0
    %v6802 = vadd.f32 0.0, %v6801
    %v6803 = vpop.f32.mrf.mxu0
    %v6804 = vadd.f32 0.0, %v6803
    %6805 = vdwg.mxu0
    %v6808 = vunpack.c.l.b16 %v6475
    %v6809 = vunpack.c.l.b16 %v6476
    %v6810 = vpack.c.b16 %v6809, %v6808
    %6811 = vrot.lane.b32.xlu0 %v723, 40
    %v6812 = vpop.permute.xlu0 %6811
    %v6815 = vsel %vm832, %v6810, 0
    %6817 = vmatpush.bf16.msra.mxu0 0
    %6818 = vmatpush.bf16.msra.mxu0 0
    %6819 = vmatpush.bf16.msra.mxu0 0
    %6820 = vmatpush.bf16.msra.mxu0 0
    %6821 = vmatpush.bf16.msra.mxu0 0
    %6822 = vmatpush.bf16.msra.mxu0 0
    %6823 = vmatpush.bf16.msra.mxu0 0
    %6824 = vmatpush.bf16.msra.mxu0 %v6812
    %6825 = vmatmul.bf16.gmra.mxu0 %v6815
    %v6826 = vpop.f32.mrf.mxu0
    %v6827 = vadd.f32 0.0, %v6826
    %v6828 = vpop.f32.mrf.mxu0
    %v6829 = vadd.f32 0.0, %v6828
    %6830 = vdwg.mxu0
    %v6833 = vunpack.c.l.b16 %v6477
    %v6834 = vunpack.c.l.b16 %v6478
    %v6835 = vpack.c.b16 %v6834, %v6833
    %6836 = vrot.lane.b32.xlu0 %v750, 40
    %v6837 = vpop.permute.xlu0 %6836
    %v6840 = vsel %vm832, %v6835, 0
    %6842 = vmatpush.bf16.msra.mxu0 0
    %6843 = vmatpush.bf16.msra.mxu0 0
    %6844 = vmatpush.bf16.msra.mxu0 0
    %6845 = vmatpush.bf16.msra.mxu0 0
    %6846 = vmatpush.bf16.msra.mxu0 0
    %6847 = vmatpush.bf16.msra.mxu0 0
    %6848 = vmatpush.bf16.msra.mxu0 0
    %6849 = vmatpush.bf16.msra.mxu0 %v6837
    %6850 = vmatmul.bf16.gmra.mxu0 %v6840
    %v6851 = vpop.f32.mrf.mxu0
    %v6852 = vadd.f32 0.0, %v6851
    %v6853 = vpop.f32.mrf.mxu0
    %v6854 = vadd.f32 0.0, %v6853
    %6855 = vdwg.mxu0
    %v6858 = vunpack.c.l.b16 %v6479
    %v6859 = vunpack.c.l.b16 %v6480
    %v6860 = vpack.c.b16 %v6859, %v6858
    %6861 = vrot.lane.b32.xlu0 %v777, 40
    %v6862 = vpop.permute.xlu0 %6861
    %v6865 = vsel %vm832, %v6860, 0
    %6867 = vmatpush.bf16.msra.mxu0 0
    %6868 = vmatpush.bf16.msra.mxu0 0
    %6869 = vmatpush.bf16.msra.mxu0 0
    %6870 = vmatpush.bf16.msra.mxu0 0
    %6871 = vmatpush.bf16.msra.mxu0 0
    %6872 = vmatpush.bf16.msra.mxu0 0
    %6873 = vmatpush.bf16.msra.mxu0 0
    %6874 = vmatpush.bf16.msra.mxu0 %v6862
    %6875 = vmatmul.bf16.gmra.mxu0 %v6865
    %v6876 = vpop.f32.mrf.mxu0
    %v6877 = vadd.f32 0.0, %v6876
    %v6878 = vpop.f32.mrf.mxu0
    %v6879 = vadd.f32 0.0, %v6878
    %6880 = vdwg.mxu0
    %6913 = vrot.lane.b32.xlu0 %v3270, 8
    %v6914 = vpop.permute.xlu0 %6913
    %6915 = vrot.lane.b32.xlu0 %v3272, 8
    %v6916 = vpop.permute.xlu0 %6915
    %6917 = vrot.lane.b32.xlu0 %v3295, 8
    %v6918 = vpop.permute.xlu0 %6917
    %6919 = vrot.lane.b32.xlu0 %v3297, 8
    %v6920 = vpop.permute.xlu0 %6919
    %6921 = vrot.lane.b32.xlu0 %v3320, 8
    %v6922 = vpop.permute.xlu0 %6921
    %6923 = vrot.lane.b32.xlu0 %v3322, 8
    %v6924 = vpop.permute.xlu0 %6923
    %6925 = vrot.lane.b32.xlu0 %v3345, 8
    %v6926 = vpop.permute.xlu0 %6925
    %6927 = vrot.lane.b32.xlu0 %v3347, 8
    %v6928 = vpop.permute.xlu0 %6927
    %6929 = vrot.lane.b32.xlu0 %v3370, 8
    %v6930 = vpop.permute.xlu0 %6929
    %6931 = vrot.lane.b32.xlu0 %v3372, 8
    %v6932 = vpop.permute.xlu0 %6931
    %6933 = vrot.lane.b32.xlu0 %v3395, 8
    %v6934 = vpop.permute.xlu0 %6933
    %6935 = vrot.lane.b32.xlu0 %v3397, 8
    %v6936 = vpop.permute.xlu0 %6935
    %6937 = vrot.lane.b32.xlu0 %v3420, 8
    %v6938 = vpop.permute.xlu0 %6937
    %6939 = vrot.lane.b32.xlu0 %v3422, 8
    %v6940 = vpop.permute.xlu0 %6939
    %6941 = vrot.lane.b32.xlu0 %v3445, 8
    %v6942 = vpop.permute.xlu0 %6941
    %6943 = vrot.lane.b32.xlu0 %v3447, 8
    %v6944 = vpop.permute.xlu0 %6943
    %6945 = vrot.lane.b32.xlu0 %v3470, 8
    %v6946 = vpop.permute.xlu0 %6945
    %6947 = vrot.lane.b32.xlu0 %v3472, 8
    %v6948 = vpop.permute.xlu0 %6947
    %6949 = vrot.lane.b32.xlu0 %v3495, 8
    %v6950 = vpop.permute.xlu0 %6949
    %6951 = vrot.lane.b32.xlu0 %v3497, 8
    %v6952 = vpop.permute.xlu0 %6951
    %6953 = vrot.lane.b32.xlu0 %v3520, 8
    %v6954 = vpop.permute.xlu0 %6953
    %6955 = vrot.lane.b32.xlu0 %v3522, 8
    %v6956 = vpop.permute.xlu0 %6955
    %6957 = vrot.lane.b32.xlu0 %v3545, 8
    %v6958 = vpop.permute.xlu0 %6957
    %6959 = vrot.lane.b32.xlu0 %v3547, 8
    %v6960 = vpop.permute.xlu0 %6959
    %6961 = vrot.lane.b32.xlu0 %v3570, 8
    %v6962 = vpop.permute.xlu0 %6961
    %6963 = vrot.lane.b32.xlu0 %v3572, 8
    %v6964 = vpop.permute.xlu0 %6963
    %6965 = vrot.lane.b32.xlu0 %v3595, 8
    %v6966 = vpop.permute.xlu0 %6965
    %6967 = vrot.lane.b32.xlu0 %v3597, 8
    %v6968 = vpop.permute.xlu0 %6967
    %6969 = vrot.lane.b32.xlu0 %v3620, 8
    %v6970 = vpop.permute.xlu0 %6969
    %6971 = vrot.lane.b32.xlu0 %v3622, 8
    %v6972 = vpop.permute.xlu0 %6971
    %6973 = vrot.lane.b32.xlu0 %v3645, 8
    %v6974 = vpop.permute.xlu0 %6973
    %6975 = vrot.lane.b32.xlu0 %v3647, 8
    %v6976 = vpop.permute.xlu0 %6975
    %7041 = vrot.lane.b32.xlu0 %v4886, 16
    %v7042 = vpop.permute.xlu0 %7041
    %7043 = vrot.lane.b32.xlu0 %v4888, 16
    %v7044 = vpop.permute.xlu0 %7043
    %7045 = vrot.lane.b32.xlu0 %v4911, 16
    %v7046 = vpop.permute.xlu0 %7045
    %7047 = vrot.lane.b32.xlu0 %v4913, 16
    %v7048 = vpop.permute.xlu0 %7047
    %7049 = vrot.lane.b32.xlu0 %v4936, 16
    %v7050 = vpop.permute.xlu0 %7049
    %7051 = vrot.lane.b32.xlu0 %v4938, 16
    %v7052 = vpop.permute.xlu0 %7051
    %7053 = vrot.lane.b32.xlu0 %v4961, 16
    %v7054 = vpop.permute.xlu0 %7053
    %7055 = vrot.lane.b32.xlu0 %v4963, 16
    %v7056 = vpop.permute.xlu0 %7055
    %7057 = vrot.lane.b32.xlu0 %v4986, 16
    %v7058 = vpop.permute.xlu0 %7057
    %7059 = vrot.lane.b32.xlu0 %v4988, 16
    %v7060 = vpop.permute.xlu0 %7059
    %7061 = vrot.lane.b32.xlu0 %v5011, 16
    %v7062 = vpop.permute.xlu0 %7061
    %7063 = vrot.lane.b32.xlu0 %v5013, 16
    %v7064 = vpop.permute.xlu0 %7063
    %7065 = vrot.lane.b32.xlu0 %v5036, 16
    %v7066 = vpop.permute.xlu0 %7065
    %7067 = vrot.lane.b32.xlu0 %v5038, 16
    %v7068 = vpop.permute.xlu0 %7067
    %7069 = vrot.lane.b32.xlu0 %v5061, 16
    %v7070 = vpop.permute.xlu0 %7069
    %7071 = vrot.lane.b32.xlu0 %v5063, 16
    %v7072 = vpop.permute.xlu0 %7071
    %7073 = vrot.lane.b32.xlu0 %v5086, 16
    %v7074 = vpop.permute.xlu0 %7073
    %7075 = vrot.lane.b32.xlu0 %v5088, 16
    %v7076 = vpop.permute.xlu0 %7075
    %7077 = vrot.lane.b32.xlu0 %v5111, 16
    %v7078 = vpop.permute.xlu0 %7077
    %7079 = vrot.lane.b32.xlu0 %v5113, 16
    %v7080 = vpop.permute.xlu0 %7079
    %7081 = vrot.lane.b32.xlu0 %v5136, 16
    %v7082 = vpop.permute.xlu0 %7081
    %7083 = vrot.lane.b32.xlu0 %v5138, 16
    %v7084 = vpop.permute.xlu0 %7083
    %7085 = vrot.lane.b32.xlu0 %v5161, 16
    %v7086 = vpop.permute.xlu0 %7085
    %7087 = vrot.lane.b32.xlu0 %v5163, 16
    %v7088 = vpop.permute.xlu0 %7087
    %7089 = vrot.lane.b32.xlu0 %v5186, 16
    %v7090 = vpop.permute.xlu0 %7089
    %7091 = vrot.lane.b32.xlu0 %v5188, 16
    %v7092 = vpop.permute.xlu0 %7091
    %7093 = vrot.lane.b32.xlu0 %v5211, 16
    %v7094 = vpop.permute.xlu0 %7093
    %7095 = vrot.lane.b32.xlu0 %v5213, 16
    %v7096 = vpop.permute.xlu0 %7095
    %7097 = vrot.lane.b32.xlu0 %v5236, 16
    %v7098 = vpop.permute.xlu0 %7097
    %7099 = vrot.lane.b32.xlu0 %v5238, 16
    %v7100 = vpop.permute.xlu0 %7099
    %7101 = vrot.lane.b32.xlu0 %v5261, 16
    %v7102 = vpop.permute.xlu0 %7101
    %7103 = vrot.lane.b32.xlu0 %v5263, 16
    %v7104 = vpop.permute.xlu0 %7103
    %7169 = vrot.lane.b32.xlu0 %v6502, 24
    %v7170 = vpop.permute.xlu0 %7169
    %7171 = vrot.lane.b32.xlu0 %v6504, 24
    %v7172 = vpop.permute.xlu0 %7171
    %7173 = vrot.lane.b32.xlu0 %v6527, 24
    %v7174 = vpop.permute.xlu0 %7173
    %7175 = vrot.lane.b32.xlu0 %v6529, 24
    %v7176 = vpop.permute.xlu0 %7175
    %7177 = vrot.lane.b32.xlu0 %v6552, 24
    %v7178 = vpop.permute.xlu0 %7177
    %7179 = vrot.lane.b32.xlu0 %v6554, 24
    %v7180 = vpop.permute.xlu0 %7179
    %7181 = vrot.lane.b32.xlu0 %v6577, 24
    %v7182 = vpop.permute.xlu0 %7181
    %7183 = vrot.lane.b32.xlu0 %v6579, 24
    %v7184 = vpop.permute.xlu0 %7183
    %7185 = vrot.lane.b32.xlu0 %v6602, 24
    %v7186 = vpop.permute.xlu0 %7185
    %7187 = vrot.lane.b32.xlu0 %v6604, 24
    %v7188 = vpop.permute.xlu0 %7187
    %7189 = vrot.lane.b32.xlu0 %v6627, 24
    %v7190 = vpop.permute.xlu0 %7189
    %7191 = vrot.lane.b32.xlu0 %v6629, 24
    %v7192 = vpop.permute.xlu0 %7191
    %7193 = vrot.lane.b32.xlu0 %v6652, 24
    %v7194 = vpop.permute.xlu0 %7193
    %7195 = vrot.lane.b32.xlu0 %v6654, 24
    %v7196 = vpop.permute.xlu0 %7195
    %7197 = vrot.lane.b32.xlu0 %v6677, 24
    %v7198 = vpop.permute.xlu0 %7197
    %7199 = vrot.lane.b32.xlu0 %v6679, 24
    %v7200 = vpop.permute.xlu0 %7199
    %7201 = vrot.lane.b32.xlu0 %v6702, 24
    %v7202 = vpop.permute.xlu0 %7201
    %7203 = vrot.lane.b32.xlu0 %v6704, 24
    %v7204 = vpop.permute.xlu0 %7203
    %7205 = vrot.lane.b32.xlu0 %v6727, 24
    %v7206 = vpop.permute.xlu0 %7205
    %7207 = vrot.lane.b32.xlu0 %v6729, 24
    %v7208 = vpop.permute.xlu0 %7207
    %7209 = vrot.lane.b32.xlu0 %v6752, 24
    %v7210 = vpop.permute.xlu0 %7209
    %7211 = vrot.lane.b32.xlu0 %v6754, 24
    %v7212 = vpop.permute.xlu0 %7211
    %7213 = vrot.lane.b32.xlu0 %v6777, 24
    %v7214 = vpop.permute.xlu0 %7213
    %7215 = vrot.lane.b32.xlu0 %v6779, 24
    %v7216 = vpop.permute.xlu0 %7215
    %7217 = vrot.lane.b32.xlu0 %v6802, 24
    %v7218 = vpop.permute.xlu0 %7217
    %7219 = vrot.lane.b32.xlu0 %v6804, 24
    %v7220 = vpop.permute.xlu0 %7219
    %7221 = vrot.lane.b32.xlu0 %v6827, 24
    %v7222 = vpop.permute.xlu0 %7221
    %7223 = vrot.lane.b32.xlu0 %v6829, 24
    %v7224 = vpop.permute.xlu0 %7223
    %7225 = vrot.lane.b32.xlu0 %v6852, 24
    %v7226 = vpop.permute.xlu0 %7225
    %7227 = vrot.lane.b32.xlu0 %v6854, 24
    %v7228 = vpop.permute.xlu0 %7227
    %7229 = vrot.lane.b32.xlu0 %v6877, 24
    %v7230 = vpop.permute.xlu0 %7229
    %7231 = vrot.lane.b32.xlu0 %v6879, 24
    %v7232 = vpop.permute.xlu0 %7231
    %v7265 = vsel %vm374, %v1654, %v6914
    %v7266 = vsel %vm374, %v1656, %v6916
    %v7267 = vsel %vm374, %v1679, %v6918
    %v7268 = vsel %vm374, %v1681, %v6920
    %v7269 = vsel %vm374, %v1704, %v6922
    %v7270 = vsel %vm374, %v1706, %v6924
    %v7271 = vsel %vm374, %v1729, %v6926
    %v7272 = vsel %vm374, %v1731, %v6928
    %v7273 = vsel %vm374, %v1754, %v6930
    %v7274 = vsel %vm374, %v1756, %v6932
    %v7275 = vsel %vm374, %v1779, %v6934
    %v7276 = vsel %vm374, %v1781, %v6936
    %v7277 = vsel %vm374, %v1804, %v6938
    %v7278 = vsel %vm374, %v1806, %v6940
    %v7279 = vsel %vm374, %v1829, %v6942
    %v7280 = vsel %vm374, %v1831, %v6944
    %v7281 = vsel %vm374, %v1854, %v6946
    %v7282 = vsel %vm374, %v1856, %v6948
    %v7283 = vsel %vm374, %v1879, %v6950
    %v7284 = vsel %vm374, %v1881, %v6952
    %v7285 = vsel %vm374, %v1904, %v6954
    %v7286 = vsel %vm374, %v1906, %v6956
    %v7287 = vsel %vm374, %v1929, %v6958
    %v7288 = vsel %vm374, %v1931, %v6960
    %v7289 = vsel %vm374, %v1954, %v6962
    %v7290 = vsel %vm374, %v1956, %v6964
    %v7291 = vsel %vm374, %v1979, %v6966
    %v7292 = vsel %vm374, %v1981, %v6968
    %v7293 = vsel %vm374, %v2004, %v6970
    %v7294 = vsel %vm374, %v2006, %v6972
    %v7295 = vsel %vm374, %v2029, %v6974
    %v7296 = vsel %vm374, %v2031, %v6976
    %v7297 = vsel %vm832, %v7265, %v7042
    %v7298 = vsel %vm832, %v7266, %v7044
    %v7299 = vsel %vm832, %v7267, %v7046
    %v7300 = vsel %vm832, %v7268, %v7048
    %v7301 = vsel %vm832, %v7269, %v7050
    %v7302 = vsel %vm832, %v7270, %v7052
    %v7303 = vsel %vm832, %v7271, %v7054
    %v7304 = vsel %vm832, %v7272, %v7056
    %v7305 = vsel %vm832, %v7273, %v7058
    %v7306 = vsel %vm832, %v7274, %v7060
    %v7307 = vsel %vm832, %v7275, %v7062
    %v7308 = vsel %vm832, %v7276, %v7064
    %v7309 = vsel %vm832, %v7277, %v7066
    %v7310 = vsel %vm832, %v7278, %v7068
    %v7311 = vsel %vm832, %v7279, %v7070
    %v7312 = vsel %vm832, %v7280, %v7072
    %v7313 = vsel %vm832, %v7281, %v7074
    %v7314 = vsel %vm832, %v7282, %v7076
    %v7315 = vsel %vm832, %v7283, %v7078
    %v7316 = vsel %vm832, %v7284, %v7080
    %v7317 = vsel %vm832, %v7285, %v7082
    %v7318 = vsel %vm832, %v7286, %v7084
    %v7319 = vsel %vm832, %v7287, %v7086
    %v7320 = vsel %vm832, %v7288, %v7088
    %v7321 = vsel %vm832, %v7289, %v7090
    %v7322 = vsel %vm832, %v7290, %v7092
    %v7323 = vsel %vm832, %v7291, %v7094
    %v7324 = vsel %vm832, %v7292, %v7096
    %v7325 = vsel %vm832, %v7293, %v7098
    %v7326 = vsel %vm832, %v7294, %v7100
    %v7327 = vsel %vm832, %v7295, %v7102
    %v7328 = vsel %vm832, %v7296, %v7104
    %vm7329 = vcmask 195584
    %v7330 = vsel %vm7329, %v7297, %v7170
    %v7331 = vsel %vm7329, %v7298, %v7172
    %v7332 = vsel %vm7329, %v7299, %v7174
    %v7333 = vsel %vm7329, %v7300, %v7176
    %v7334 = vsel %vm7329, %v7301, %v7178
    %v7335 = vsel %vm7329, %v7302, %v7180
    %v7336 = vsel %vm7329, %v7303, %v7182
    %v7337 = vsel %vm7329, %v7304, %v7184
    %v7338 = vsel %vm7329, %v7305, %v7186
    %v7339 = vsel %vm7329, %v7306, %v7188
    %v7340 = vsel %vm7329, %v7307, %v7190
    %v7341 = vsel %vm7329, %v7308, %v7192
    %v7342 = vsel %vm7329, %v7309, %v7194
    %v7343 = vsel %vm7329, %v7310, %v7196
    %v7344 = vsel %vm7329, %v7311, %v7198
    %v7345 = vsel %vm7329, %v7312, %v7200
    %v7346 = vsel %vm7329, %v7313, %v7202
    %v7347 = vsel %vm7329, %v7314, %v7204
    %v7348 = vsel %vm7329, %v7315, %v7206
    %v7349 = vsel %vm7329, %v7316, %v7208
    %v7350 = vsel %vm7329, %v7317, %v7210
    %v7351 = vsel %vm7329, %v7318, %v7212
    %v7352 = vsel %vm7329, %v7319, %v7214
    %v7353 = vsel %vm7329, %v7320, %v7216
    %v7354 = vsel %vm7329, %v7321, %v7218
    %v7355 = vsel %vm7329, %v7322, %v7220
    %v7356 = vsel %vm7329, %v7323, %v7222
    %v7357 = vsel %vm7329, %v7324, %v7224
    %v7358 = vsel %vm7329, %v7325, %v7226
    %v7359 = vsel %vm7329, %v7326, %v7228
    %v7360 = vsel %vm7329, %v7327, %v7230
    %v7361 = vsel %vm7329, %v7328, %v7232
    %v7362 = vpack.c.bf16 %v7331, %v7330
    %v7363 = vpack.c.bf16 %v7333, %v7332
    %v7364 = vpack.c.bf16 %v7335, %v7334
    %v7365 = vpack.c.bf16 %v7337, %v7336
    %v7366 = vpack.c.bf16 %v7339, %v7338
    %v7367 = vpack.c.bf16 %v7341, %v7340
    %v7368 = vpack.c.bf16 %v7343, %v7342
    %v7369 = vpack.c.bf16 %v7345, %v7344
    %v7370 = vpack.c.bf16 %v7347, %v7346
    %v7371 = vpack.c.bf16 %v7349, %v7348
    %v7372 = vpack.c.bf16 %v7351, %v7350
    %v7373 = vpack.c.bf16 %v7353, %v7352
    %v7374 = vpack.c.bf16 %v7355, %v7354
    %v7375 = vpack.c.bf16 %v7357, %v7356
    %v7376 = vpack.c.bf16 %v7359, %v7358
    %v7377 = vpack.c.bf16 %v7361, %v7360
    %v7378 = vld [vmem:[#allocation7] sm:$0xf]
    %v7379 = vld [vmem:[#allocation7 + $0x4] sm:$0xf]
    %v7380 = vld [vmem:[#allocation7 + $0x8] sm:$0xf]
    %v7381 = vld [vmem:[#allocation7 + $0xc] sm:$0xf]
    %v7382 = vld [vmem:[%s3] sm:$0x1]
    %v7384 = vperm.slane %v7382, 0
    %v7390 = vunpack.c.l.b16 %v7378
    %v7391 = vunpack.c.l.b16 %v7379
    %v7392 = vunpack.c.l.b16 %v7380
    %v7393 = vunpack.c.l.b16 %v7381
    %v7394 = vpack.c.b16 %v7391, %v7390
    %v7395 = vpack.c.b16 %v7393, %v7392
    %v7399 = vsel %vm197, %v7362, 0
    %v7402 = vsel %vm197, %v7363, 0
    %v7405 = vsel %vm197, %v7364, 0
    %v7408 = vsel %vm197, %v7365, 0
    %v7411 = vsel %vm197, %v7366, 0
    %v7414 = vsel %vm197, %v7367, 0
    %v7417 = vsel %vm197, %v7368, 0
    %v7420 = vsel %vm197, %v7369, 0
    %v7423 = vsel %vm197, %v7370, 0
    %v7426 = vsel %vm197, %v7371, 0
    %v7429 = vsel %vm197, %v7372, 0
    %v7432 = vsel %vm197, %v7373, 0
    %v7435 = vsel %vm197, %v7374, 0
    %v7438 = vsel %vm197, %v7375, 0
    %v7441 = vsel %vm197, %v7376, 0
    %v7444 = vsel %vm197, %v7377, 0
    %7446 = vmatpush.bf16.msra.mxu0 0
    %7447 = vmatpush.bf16.msra.mxu0 0
    %7448 = vmatpush.bf16.msra.mxu0 0
    %7449 = vmatpush.bf16.msra.mxu0 0
    %7450 = vmatpush.bf16.msra.mxu0 0
    %7451 = vmatpush.bf16.msra.mxu0 0
    %7452 = vmatpush.bf16.msra.mxu0 %v7395
    %7453 = vmatpush.bf16.msra.mxu0 %v7394
    %7454 = vmatmul.bf16.gmra.mxu0 %v7399
    %v7455 = vpop.f32.mrf.mxu0
    %v7456 = vadd.f32 %v7384, %v7455
    %v7457 = vpop.f32.mrf.mxu0
    %v7458 = vadd.f32 %v7384, %v7457
    %7459 = vmatmul.bf16.gmra.mxu0 %v7402
    %v7460 = vpop.f32.mrf.mxu0
    %v7461 = vadd.f32 %v7384, %v7460
    %v7462 = vpop.f32.mrf.mxu0
    %v7463 = vadd.f32 %v7384, %v7462
    %7464 = vmatmul.bf16.gmra.mxu0 %v7405
    %v7465 = vpop.f32.mrf.mxu0
    %v7466 = vadd.f32 %v7384, %v7465
    %v7467 = vpop.f32.mrf.mxu0
    %v7468 = vadd.f32 %v7384, %v7467
    %7469 = vmatmul.bf16.gmra.mxu0 %v7408
    %v7470 = vpop.f32.mrf.mxu0
    %v7471 = vadd.f32 %v7384, %v7470
    %v7472 = vpop.f32.mrf.mxu0
    %v7473 = vadd.f32 %v7384, %v7472
    %7474 = vmatmul.bf16.gmra.mxu0 %v7411
    %v7475 = vpop.f32.mrf.mxu0
    %v7476 = vadd.f32 %v7384, %v7475
    %v7477 = vpop.f32.mrf.mxu0
    %v7478 = vadd.f32 %v7384, %v7477
    %7479 = vmatmul.bf16.gmra.mxu0 %v7414
    %v7480 = vpop.f32.mrf.mxu0
    %v7481 = vadd.f32 %v7384, %v7480
    %v7482 = vpop.f32.mrf.mxu0
    %v7483 = vadd.f32 %v7384, %v7482
    %7484 = vmatmul.bf16.gmra.mxu0 %v7417
    %v7485 = vpop.f32.mrf.mxu0
    %v7486 = vadd.f32 %v7384, %v7485
    %v7487 = vpop.f32.mrf.mxu0
    %v7488 = vadd.f32 %v7384, %v7487
    %7489 = vmatmul.bf16.gmra.mxu0 %v7420
    %v7490 = vpop.f32.mrf.mxu0
    %v7491 = vadd.f32 %v7384, %v7490
    %v7492 = vpop.f32.mrf.mxu0
    %v7493 = vadd.f32 %v7384, %v7492
    %7494 = vmatmul.bf16.gmra.mxu0 %v7423
    %v7495 = vpop.f32.mrf.mxu0
    %v7496 = vadd.f32 %v7384, %v7495
    %v7497 = vpop.f32.mrf.mxu0
    %v7498 = vadd.f32 %v7384, %v7497
    %7499 = vmatmul.bf16.gmra.mxu0 %v7426
    %v7500 = vpop.f32.mrf.mxu0
    %v7501 = vadd.f32 %v7384, %v7500
    %v7502 = vpop.f32.mrf.mxu0
    %v7503 = vadd.f32 %v7384, %v7502
    %7504 = vmatmul.bf16.gmra.mxu0 %v7429
    %v7505 = vpop.f32.mrf.mxu0
    %v7506 = vadd.f32 %v7384, %v7505
    %v7507 = vpop.f32.mrf.mxu0
    %v7508 = vadd.f32 %v7384, %v7507
    %7509 = vmatmul.bf16.gmra.mxu0 %v7432
    %v7510 = vpop.f32.mrf.mxu0
    %v7511 = vadd.f32 %v7384, %v7510
    %v7512 = vpop.f32.mrf.mxu0
    %v7513 = vadd.f32 %v7384, %v7512
    %7514 = vmatmul.bf16.gmra.mxu0 %v7435
    %v7515 = vpop.f32.mrf.mxu0
    %v7516 = vadd.f32 %v7384, %v7515
    %v7517 = vpop.f32.mrf.mxu0
    %v7518 = vadd.f32 %v7384, %v7517
    %7519 = vmatmul.bf16.gmra.mxu0 %v7438
    %v7520 = vpop.f32.mrf.mxu0
    %v7521 = vadd.f32 %v7384, %v7520
    %v7522 = vpop.f32.mrf.mxu0
    %v7523 = vadd.f32 %v7384, %v7522
    %7524 = vmatmul.bf16.gmra.mxu0 %v7441
    %v7525 = vpop.f32.mrf.mxu0
    %v7526 = vadd.f32 %v7384, %v7525
    %v7527 = vpop.f32.mrf.mxu0
    %v7528 = vadd.f32 %v7384, %v7527
    %7529 = vmatmul.bf16.gmra.mxu0 %v7444
    %v7530 = vpop.f32.mrf.mxu0
    %v7531 = vadd.f32 %v7384, %v7530
    %v7532 = vpop.f32.mrf.mxu0
    %v7533 = vadd.f32 %v7384, %v7532
    %7534 = vdwg.mxu0
    %v7535 = vtanh.pop %v7456
    %v7536 = vtanh.pop %v7458
    %v7537 = vtanh.pop %v7461
    %v7538 = vtanh.pop %v7463
    %v7539 = vtanh.pop %v7466
    %v7540 = vtanh.pop %v7468
    %v7541 = vtanh.pop %v7471
    %v7542 = vtanh.pop %v7473
    %v7543 = vtanh.pop %v7476
    %v7544 = vtanh.pop %v7478
    %v7545 = vtanh.pop %v7481
    %v7546 = vtanh.pop %v7483
    %v7547 = vtanh.pop %v7486
    %v7548 = vtanh.pop %v7488
    %v7549 = vtanh.pop %v7491
    %v7550 = vtanh.pop %v7493
    %v7551 = vtanh.pop %v7496
    %v7552 = vtanh.pop %v7498
    %v7553 = vtanh.pop %v7501
    %v7554 = vtanh.pop %v7503
    %v7555 = vtanh.pop %v7506
    %v7556 = vtanh.pop %v7508
    %v7557 = vtanh.pop %v7511
    %v7558 = vtanh.pop %v7513
    %v7559 = vtanh.pop %v7516
    %v7560 = vtanh.pop %v7518
    %v7561 = vtanh.pop %v7521
    %v7562 = vtanh.pop %v7523
    %v7563 = vtanh.pop %v7526
    %v7564 = vtanh.pop %v7528
    %v7565 = vtanh.pop %v7531
    %v7566 = vtanh.pop %v7533
    %v7567 = vld [vmem:[%s4] sm:$0x1]
    %v7569 = vperm.slane %v7567, 0
    %v7571 = vmul.f32 %v7535, %v7569
    %v7572 = vmul.f32 %v7536, %v7569
    %v7573 = vmul.f32 %v7537, %v7569
    %v7574 = vmul.f32 %v7538, %v7569
    %v7575 = vmul.f32 %v7539, %v7569
    %v7576 = vmul.f32 %v7540, %v7569
    %v7577 = vmul.f32 %v7541, %v7569
    %v7578 = vmul.f32 %v7542, %v7569
    %v7579 = vmul.f32 %v7543, %v7569
    %v7580 = vmul.f32 %v7544, %v7569
    %v7581 = vmul.f32 %v7545, %v7569
    %v7582 = vmul.f32 %v7546, %v7569
    %v7583 = vmul.f32 %v7547, %v7569
    %v7584 = vmul.f32 %v7548, %v7569
    %v7585 = vmul.f32 %v7549, %v7569
    %v7586 = vmul.f32 %v7550, %v7569
    %v7587 = vmul.f32 %v7551, %v7569
    %v7588 = vmul.f32 %v7552, %v7569
    %v7589 = vmul.f32 %v7553, %v7569
    %v7590 = vmul.f32 %v7554, %v7569
    %v7591 = vmul.f32 %v7555, %v7569
    %v7592 = vmul.f32 %v7556, %v7569
    %v7593 = vmul.f32 %v7557, %v7569
    %v7594 = vmul.f32 %v7558, %v7569
    %v7595 = vmul.f32 %v7559, %v7569
    %v7596 = vmul.f32 %v7560, %v7569
    %v7597 = vmul.f32 %v7561, %v7569
    %v7598 = vmul.f32 %v7562, %v7569
    %v7599 = vmul.f32 %v7563, %v7569
    %v7600 = vmul.f32 %v7564, %v7569
    %v7601 = vmul.f32 %v7565, %v7569
    %v7602 = vmul.f32 %v7566, %v7569
    %v7603 = vsel %vm197, %v7571, 0.0
    %7604 = vadd.xlane.f32.xlu0 %v7603
    %v7605 = vpop.xlane.xlu0 %7604
    %v7606 = vsel %vm197, %v7572, 0.0
    %7607 = vadd.xlane.f32.xlu0 %v7606
    %v7608 = vpop.xlane.xlu0 %7607
    %v7609 = vsel %vm197, %v7573, 0.0
    %7610 = vadd.xlane.f32.xlu0 %v7609
    %v7611 = vpop.xlane.xlu0 %7610
    %v7612 = vsel %vm197, %v7574, 0.0
    %7613 = vadd.xlane.f32.xlu0 %v7612
    %v7614 = vpop.xlane.xlu0 %7613
    %v7615 = vsel %vm197, %v7575, 0.0
    %7616 = vadd.xlane.f32.xlu0 %v7615
    %v7617 = vpop.xlane.xlu0 %7616
    %v7618 = vsel %vm197, %v7576, 0.0
    %7619 = vadd.xlane.f32.xlu0 %v7618
    %v7620 = vpop.xlane.xlu0 %7619
    %v7621 = vsel %vm197, %v7577, 0.0
    %7622 = vadd.xlane.f32.xlu0 %v7621
    %v7623 = vpop.xlane.xlu0 %7622
    %v7624 = vsel %vm197, %v7578, 0.0
    %7625 = vadd.xlane.f32.xlu0 %v7624
    %v7626 = vpop.xlane.xlu0 %7625
    %v7627 = vsel %vm197, %v7579, 0.0
    %7628 = vadd.xlane.f32.xlu0 %v7627
    %v7629 = vpop.xlane.xlu0 %7628
    %v7630 = vsel %vm197, %v7580, 0.0
    %7631 = vadd.xlane.f32.xlu0 %v7630
    %v7632 = vpop.xlane.xlu0 %7631
    %v7633 = vsel %vm197, %v7581, 0.0
    %7634 = vadd.xlane.f32.xlu0 %v7633
    %v7635 = vpop.xlane.xlu0 %7634
    %v7636 = vsel %vm197, %v7582, 0.0
    %7637 = vadd.xlane.f32.xlu0 %v7636
    %v7638 = vpop.xlane.xlu0 %7637
    %v7639 = vsel %vm197, %v7583, 0.0
    %7640 = vadd.xlane.f32.xlu0 %v7639
    %v7641 = vpop.xlane.xlu0 %7640
    %v7642 = vsel %vm197, %v7584, 0.0
    %7643 = vadd.xlane.f32.xlu0 %v7642
    %v7644 = vpop.xlane.xlu0 %7643
    %v7645 = vsel %vm197, %v7585, 0.0
    %7646 = vadd.xlane.f32.xlu0 %v7645
    %v7647 = vpop.xlane.xlu0 %7646
    %v7648 = vsel %vm197, %v7586, 0.0
    %7649 = vadd.xlane.f32.xlu0 %v7648
    %v7650 = vpop.xlane.xlu0 %7649
    %v7651 = vsel %vm197, %v7587, 0.0
    %7652 = vadd.xlane.f32.xlu0 %v7651
    %v7653 = vpop.xlane.xlu0 %7652
    %v7654 = vsel %vm197, %v7588, 0.0
    %7655 = vadd.xlane.f32.xlu0 %v7654
    %v7656 = vpop.xlane.xlu0 %7655
    %v7657 = vsel %vm197, %v7589, 0.0
    %7658 = vadd.xlane.f32.xlu0 %v7657
    %v7659 = vpop.xlane.xlu0 %7658
    %v7660 = vsel %vm197, %v7590, 0.0
    %7661 = vadd.xlane.f32.xlu0 %v7660
    %v7662 = vpop.xlane.xlu0 %7661
    %v7663 = vsel %vm197, %v7591, 0.0
    %7664 = vadd.xlane.f32.xlu0 %v7663
    %v7665 = vpop.xlane.xlu0 %7664
    %v7666 = vsel %vm197, %v7592, 0.0
    %7667 = vadd.xlane.f32.xlu0 %v7666
    %v7668 = vpop.xlane.xlu0 %7667
    %v7669 = vsel %vm197, %v7593, 0.0
    %7670 = vadd.xlane.f32.xlu0 %v7669
    %v7671 = vpop.xlane.xlu0 %7670
    %v7672 = vsel %vm197, %v7594, 0.0
    %7673 = vadd.xlane.f32.xlu0 %v7672
    %v7674 = vpop.xlane.xlu0 %7673
    %v7675 = vsel %vm197, %v7595, 0.0
    %7676 = vadd.xlane.f32.xlu0 %v7675
    %v7677 = vpop.xlane.xlu0 %7676
    %v7678 = vsel %vm197, %v7596, 0.0
    %7679 = vadd.xlane.f32.xlu0 %v7678
    %v7680 = vpop.xlane.xlu0 %7679
    %v7681 = vsel %vm197, %v7597, 0.0
    %7682 = vadd.xlane.f32.xlu0 %v7681
    %v7683 = vpop.xlane.xlu0 %7682
    %v7684 = vsel %vm197, %v7598, 0.0
    %7685 = vadd.xlane.f32.xlu0 %v7684
    %v7686 = vpop.xlane.xlu0 %7685
    %v7687 = vsel %vm197, %v7599, 0.0
    %7688 = vadd.xlane.f32.xlu0 %v7687
    %v7689 = vpop.xlane.xlu0 %7688
    %v7690 = vsel %vm197, %v7600, 0.0
    %7691 = vadd.xlane.f32.xlu0 %v7690
    %v7692 = vpop.xlane.xlu0 %7691
    %v7693 = vsel %vm197, %v7601, 0.0
    %7694 = vadd.xlane.f32.xlu0 %v7693
    %v7695 = vpop.xlane.xlu0 %7694
    %v7696 = vsel %vm197, %v7602, 0.0
    %7697 = vadd.xlane.f32.xlu0 %v7696
    %v7698 = vpop.xlane.xlu0 %7697
    %v7699 = vmul.f32 %v7605, 1.442695
    %v7700 = vpow.pop %v7699
    %v7701 = vmul.f32 %v7608, 1.442695
    %v7702 = vpow.pop %v7701
    %v7703 = vmul.f32 %v7611, 1.442695
    %v7704 = vpow.pop %v7703
    %v7705 = vmul.f32 %v7614, 1.442695
    %v7706 = vpow.pop %v7705
    %v7707 = vmul.f32 %v7617, 1.442695
    %v7708 = vpow.pop %v7707
    %v7709 = vmul.f32 %v7620, 1.442695
    %v7710 = vpow.pop %v7709
    %v7711 = vmul.f32 %v7623, 1.442695
    %v7712 = vpow.pop %v7711
    %v7713 = vmul.f32 %v7626, 1.442695
    %v7714 = vpow.pop %v7713
    %v7715 = vmul.f32 %v7629, 1.442695
    %v7716 = vpow.pop %v7715
    %v7717 = vmul.f32 %v7632, 1.442695
    %v7718 = vpow.pop %v7717
    %v7719 = vmul.f32 %v7635, 1.442695
    %v7720 = vpow.pop %v7719
    %v7721 = vmul.f32 %v7638, 1.442695
    %v7722 = vpow.pop %v7721
    %v7723 = vmul.f32 %v7641, 1.442695
    %v7724 = vpow.pop %v7723
    %v7725 = vmul.f32 %v7644, 1.442695
    %v7726 = vpow.pop %v7725
    %v7727 = vmul.f32 %v7647, 1.442695
    %v7728 = vpow.pop %v7727
    %v7729 = vmul.f32 %v7650, 1.442695
    %v7730 = vpow.pop %v7729
    %v7731 = vmul.f32 %v7653, 1.442695
    %v7732 = vpow.pop %v7731
    %v7733 = vmul.f32 %v7656, 1.442695
    %v7734 = vpow.pop %v7733
    %v7735 = vmul.f32 %v7659, 1.442695
    %v7736 = vpow.pop %v7735
    %v7737 = vmul.f32 %v7662, 1.442695
    %v7738 = vpow.pop %v7737
    %v7739 = vmul.f32 %v7665, 1.442695
    %v7740 = vpow.pop %v7739
    %v7741 = vmul.f32 %v7668, 1.442695
    %v7742 = vpow.pop %v7741
    %v7743 = vmul.f32 %v7671, 1.442695
    %v7744 = vpow.pop %v7743
    %v7745 = vmul.f32 %v7674, 1.442695
    %v7746 = vpow.pop %v7745
    %v7747 = vmul.f32 %v7677, 1.442695
    %v7748 = vpow.pop %v7747
    %v7749 = vmul.f32 %v7680, 1.442695
    %v7750 = vpow.pop %v7749
    %v7751 = vmul.f32 %v7683, 1.442695
    %v7752 = vpow.pop %v7751
    %v7753 = vmul.f32 %v7686, 1.442695
    %v7754 = vpow.pop %v7753
    %v7755 = vmul.f32 %v7689, 1.442695
    %v7756 = vpow.pop %v7755
    %v7757 = vmul.f32 %v7692, 1.442695
    %v7758 = vpow.pop %v7757
    %v7759 = vmul.f32 %v7695, 1.442695
    %v7760 = vpow.pop %v7759
    %v7761 = vmul.f32 %v7698, 1.442695
    %v7762 = vpow.pop %v7761
    %v7763 = vadd.f32 %v7700, %v7702
    %v7764 = vrot.slane %v7763, 4
    %v7765 = vadd.f32 %v7763, %v7764
    %v7766 = vrot.slane %v7765, 2
    %v7767 = vadd.f32 %v7765, %v7766
    %v7768 = vrot.slane %v7767, 1
    %v7769 = vadd.f32 %v7767, %v7768
    %v7770 = vadd.f32 %v7704, %v7706
    %v7771 = vrot.slane %v7770, 4
    %v7772 = vadd.f32 %v7770, %v7771
    %v7773 = vrot.slane %v7772, 2
    %v7774 = vadd.f32 %v7772, %v7773
    %v7775 = vrot.slane %v7774, 1
    %v7776 = vadd.f32 %v7774, %v7775
    %v7777 = vadd.f32 %v7708, %v7710
    %v7778 = vrot.slane %v7777, 4
    %v7779 = vadd.f32 %v7777, %v7778
    %v7780 = vrot.slane %v7779, 2
    %v7781 = vadd.f32 %v7779, %v7780
    %v7782 = vrot.slane %v7781, 1
    %v7783 = vadd.f32 %v7781, %v7782
    %v7784 = vadd.f32 %v7712, %v7714
    %v7785 = vrot.slane %v7784, 4
    %v7786 = vadd.f32 %v7784, %v7785
    %v7787 = vrot.slane %v7786, 2
    %v7788 = vadd.f32 %v7786, %v7787
    %v7789 = vrot.slane %v7788, 1
    %v7790 = vadd.f32 %v7788, %v7789
    %v7791 = vadd.f32 %v7716, %v7718
    %v7792 = vrot.slane %v7791, 4
    %v7793 = vadd.f32 %v7791, %v7792
    %v7794 = vrot.slane %v7793, 2
    %v7795 = vadd.f32 %v7793, %v7794
    %v7796 = vrot.slane %v7795, 1
    %v7797 = vadd.f32 %v7795, %v7796
    %v7798 = vadd.f32 %v7720, %v7722
    %v7799 = vrot.slane %v7798, 4
    %v7800 = vadd.f32 %v7798, %v7799
    %v7801 = vrot.slane %v7800, 2
    %v7802 = vadd.f32 %v7800, %v7801
    %v7803 = vrot.slane %v7802, 1
    %v7804 = vadd.f32 %v7802, %v7803
    %v7805 = vadd.f32 %v7724, %v7726
    %v7806 = vrot.slane %v7805, 4
    %v7807 = vadd.f32 %v7805, %v7806
    %v7808 = vrot.slane %v7807, 2
    %v7809 = vadd.f32 %v7807, %v7808
    %v7810 = vrot.slane %v7809, 1
    %v7811 = vadd.f32 %v7809, %v7810
    %v7812 = vadd.f32 %v7728, %v7730
    %v7813 = vrot.slane %v7812, 4
    %v7814 = vadd.f32 %v7812, %v7813
    %v7815 = vrot.slane %v7814, 2
    %v7816 = vadd.f32 %v7814, %v7815
    %v7817 = vrot.slane %v7816, 1
    %v7818 = vadd.f32 %v7816, %v7817
    %v7819 = vadd.f32 %v7732, %v7734
    %v7820 = vrot.slane %v7819, 4
    %v7821 = vadd.f32 %v7819, %v7820
    %v7822 = vrot.slane %v7821, 2
    %v7823 = vadd.f32 %v7821, %v7822
    %v7824 = vrot.slane %v7823, 1
    %v7825 = vadd.f32 %v7823, %v7824
    %v7826 = vadd.f32 %v7736, %v7738
    %v7827 = vrot.slane %v7826, 4
    %v7828 = vadd.f32 %v7826, %v7827
    %v7829 = vrot.slane %v7828, 2
    %v7830 = vadd.f32 %v7828, %v7829
    %v7831 = vrot.slane %v7830, 1
    %v7832 = vadd.f32 %v7830, %v7831
    %v7833 = vadd.f32 %v7740, %v7742
    %v7834 = vrot.slane %v7833, 4
    %v7835 = vadd.f32 %v7833, %v7834
    %v7836 = vrot.slane %v7835, 2
    %v7837 = vadd.f32 %v7835, %v7836
    %v7838 = vrot.slane %v7837, 1
    %v7839 = vadd.f32 %v7837, %v7838
    %v7840 = vadd.f32 %v7744, %v7746
    %v7841 = vrot.slane %v7840, 4
    %v7842 = vadd.f32 %v7840, %v7841
    %v7843 = vrot.slane %v7842, 2
    %v7844 = vadd.f32 %v7842, %v7843
    %v7845 = vrot.slane %v7844, 1
    %v7846 = vadd.f32 %v7844, %v7845
    %v7847 = vadd.f32 %v7748, %v7750
    %v7848 = vrot.slane %v7847, 4
    %v7849 = vadd.f32 %v7847, %v7848
    %v7850 = vrot.slane %v7849, 2
    %v7851 = vadd.f32 %v7849, %v7850
    %v7852 = vrot.slane %v7851, 1
    %v7853 = vadd.f32 %v7851, %v7852
    %v7854 = vadd.f32 %v7752, %v7754
    %v7855 = vrot.slane %v7854, 4
    %v7856 = vadd.f32 %v7854, %v7855
    %v7857 = vrot.slane %v7856, 2
    %v7858 = vadd.f32 %v7856, %v7857
    %v7859 = vrot.slane %v7858, 1
    %v7860 = vadd.f32 %v7858, %v7859
    %v7861 = vadd.f32 %v7756, %v7758
    %v7862 = vrot.slane %v7861, 4
    %v7863 = vadd.f32 %v7861, %v7862
    %v7864 = vrot.slane %v7863, 2
    %v7865 = vadd.f32 %v7863, %v7864
    %v7866 = vrot.slane %v7865, 1
    %v7867 = vadd.f32 %v7865, %v7866
    %v7868 = vadd.f32 %v7760, %v7762
    %v7869 = vrot.slane %v7868, 4
    %v7870 = vadd.f32 %v7868, %v7869
    %v7871 = vrot.slane %v7870, 2
    %v7872 = vadd.f32 %v7870, %v7871
    %v7873 = vrot.slane %v7872, 1
    %v7874 = vadd.f32 %v7872, %v7873
    %v7875 = vadd.f32 %v7769, 1e-08
    %v7876 = vadd.f32 %v7776, 1e-08
    %v7877 = vadd.f32 %v7783, 1e-08
    %v7878 = vadd.f32 %v7790, 1e-08
    %v7879 = vadd.f32 %v7797, 1e-08
    %v7880 = vadd.f32 %v7804, 1e-08
    %v7881 = vadd.f32 %v7811, 1e-08
    %v7882 = vadd.f32 %v7818, 1e-08
    %v7883 = vadd.f32 %v7825, 1e-08
    %v7884 = vadd.f32 %v7832, 1e-08
    %v7885 = vadd.f32 %v7839, 1e-08
    %v7886 = vadd.f32 %v7846, 1e-08
    %v7887 = vadd.f32 %v7853, 1e-08
    %v7888 = vadd.f32 %v7860, 1e-08
    %v7889 = vadd.f32 %v7867, 1e-08
    %v7890 = vadd.f32 %v7874, 1e-08
    %v7891 = vmul.f32 %v7700, %v7330
    %v7892 = vmul.f32 %v7702, %v7331
    %v7893 = vmul.f32 %v7704, %v7332
    %v7894 = vmul.f32 %v7706, %v7333
    %v7895 = vmul.f32 %v7708, %v7334
    %v7896 = vmul.f32 %v7710, %v7335
    %v7897 = vmul.f32 %v7712, %v7336
    %v7898 = vmul.f32 %v7714, %v7337
    %v7899 = vmul.f32 %v7716, %v7338
    %v7900 = vmul.f32 %v7718, %v7339
    %v7901 = vmul.f32 %v7720, %v7340
    %v7902 = vmul.f32 %v7722, %v7341
    %v7903 = vmul.f32 %v7724, %v7342
    %v7904 = vmul.f32 %v7726, %v7343
    %v7905 = vmul.f32 %v7728, %v7344
    %v7906 = vmul.f32 %v7730, %v7345
    %v7907 = vmul.f32 %v7732, %v7346
    %v7908 = vmul.f32 %v7734, %v7347
    %v7909 = vmul.f32 %v7736, %v7348
    %v7910 = vmul.f32 %v7738, %v7349
    %v7911 = vmul.f32 %v7740, %v7350
    %v7912 = vmul.f32 %v7742, %v7351
    %v7913 = vmul.f32 %v7744, %v7352
    %v7914 = vmul.f32 %v7746, %v7353
    %v7915 = vmul.f32 %v7748, %v7354
    %v7916 = vmul.f32 %v7750, %v7355
    %v7917 = vmul.f32 %v7752, %v7356
    %v7918 = vmul.f32 %v7754, %v7357
    %v7919 = vmul.f32 %v7756, %v7358
    %v7920 = vmul.f32 %v7758, %v7359
    %v7921 = vmul.f32 %v7760, %v7360
    %v7922 = vmul.f32 %v7762, %v7361
    %v7923 = vsel %vm197, %v7891, 0.0
    %v7924 = vsel %vm197, %v7892, 0.0
    %v7925 = vadd.f32 %v7923, %v7924
    %v7926 = vrot.slane %v7925, 4
    %v7927 = vadd.f32 %v7925, %v7926
    %v7928 = vrot.slane %v7927, 2
    %v7929 = vadd.f32 %v7927, %v7928
    %v7930 = vrot.slane %v7929, 1
    %v7931 = vadd.f32 %v7929, %v7930
    %v7932 = vsel %vm197, %v7893, 0.0
    %v7933 = vsel %vm197, %v7894, 0.0
    %v7934 = vadd.f32 %v7932, %v7933
    %v7935 = vrot.slane %v7934, 4
    %v7936 = vadd.f32 %v7934, %v7935
    %v7937 = vrot.slane %v7936, 2
    %v7938 = vadd.f32 %v7936, %v7937
    %v7939 = vrot.slane %v7938, 1
    %v7940 = vadd.f32 %v7938, %v7939
    %v7941 = vsel %vm197, %v7895, 0.0
    %v7942 = vsel %vm197, %v7896, 0.0
    %v7943 = vadd.f32 %v7941, %v7942
    %v7944 = vrot.slane %v7943, 4
    %v7945 = vadd.f32 %v7943, %v7944
    %v7946 = vrot.slane %v7945, 2
    %v7947 = vadd.f32 %v7945, %v7946
    %v7948 = vrot.slane %v7947, 1
    %v7949 = vadd.f32 %v7947, %v7948
    %v7950 = vsel %vm197, %v7897, 0.0
    %v7951 = vsel %vm197, %v7898, 0.0
    %v7952 = vadd.f32 %v7950, %v7951
    %v7953 = vrot.slane %v7952, 4
    %v7954 = vadd.f32 %v7952, %v7953
    %v7955 = vrot.slane %v7954, 2
    %v7956 = vadd.f32 %v7954, %v7955
    %v7957 = vrot.slane %v7956, 1
    %v7958 = vadd.f32 %v7956, %v7957
    %v7959 = vsel %vm197, %v7899, 0.0
    %v7960 = vsel %vm197, %v7900, 0.0
    %v7961 = vadd.f32 %v7959, %v7960
    %v7962 = vrot.slane %v7961, 4
    %v7963 = vadd.f32 %v7961, %v7962
    %v7964 = vrot.slane %v7963, 2
    %v7965 = vadd.f32 %v7963, %v7964
    %v7966 = vrot.slane %v7965, 1
    %v7967 = vadd.f32 %v7965, %v7966
    %v7968 = vsel %vm197, %v7901, 0.0
    %v7969 = vsel %vm197, %v7902, 0.0
    %v7970 = vadd.f32 %v7968, %v7969
    %v7971 = vrot.slane %v7970, 4
    %v7972 = vadd.f32 %v7970, %v7971
    %v7973 = vrot.slane %v7972, 2
    %v7974 = vadd.f32 %v7972, %v7973
    %v7975 = vrot.slane %v7974, 1
    %v7976 = vadd.f32 %v7974, %v7975
    %v7977 = vsel %vm197, %v7903, 0.0
    %v7978 = vsel %vm197, %v7904, 0.0
    %v7979 = vadd.f32 %v7977, %v7978
    %v7980 = vrot.slane %v7979, 4
    %v7981 = vadd.f32 %v7979, %v7980
    %v7982 = vrot.slane %v7981, 2
    %v7983 = vadd.f32 %v7981, %v7982
    %v7984 = vrot.slane %v7983, 1
    %v7985 = vadd.f32 %v7983, %v7984
    %v7986 = vsel %vm197, %v7905, 0.0
    %v7987 = vsel %vm197, %v7906, 0.0
    %v7988 = vadd.f32 %v7986, %v7987
    %v7989 = vrot.slane %v7988, 4
    %v7990 = vadd.f32 %v7988, %v7989
    %v7991 = vrot.slane %v7990, 2
    %v7992 = vadd.f32 %v7990, %v7991
    %v7993 = vrot.slane %v7992, 1
    %v7994 = vadd.f32 %v7992, %v7993
    %v7995 = vsel %vm197, %v7907, 0.0
    %v7996 = vsel %vm197, %v7908, 0.0
    %v7997 = vadd.f32 %v7995, %v7996
    %v7998 = vrot.slane %v7997, 4
    %v7999 = vadd.f32 %v7997, %v7998
    %v8000 = vrot.slane %v7999, 2
    %v8001 = vadd.f32 %v7999, %v8000
    %v8002 = vrot.slane %v8001, 1
    %v8003 = vadd.f32 %v8001, %v8002
    %v8004 = vsel %vm197, %v7909, 0.0
    %v8005 = vsel %vm197, %v7910, 0.0
    %v8006 = vadd.f32 %v8004, %v8005
    %v8007 = vrot.slane %v8006, 4
    %v8008 = vadd.f32 %v8006, %v8007
    %v8009 = vrot.slane %v8008, 2
    %v8010 = vadd.f32 %v8008, %v8009
    %v8011 = vrot.slane %v8010, 1
    %v8012 = vadd.f32 %v8010, %v8011
    %v8013 = vsel %vm197, %v7911, 0.0
    %v8014 = vsel %vm197, %v7912, 0.0
    %v8015 = vadd.f32 %v8013, %v8014
    %v8016 = vrot.slane %v8015, 4
    %v8017 = vadd.f32 %v8015, %v8016
    %v8018 = vrot.slane %v8017, 2
    %v8019 = vadd.f32 %v8017, %v8018
    %v8020 = vrot.slane %v8019, 1
    %v8021 = vadd.f32 %v8019, %v8020
    %v8022 = vsel %vm197, %v7913, 0.0
    %v8023 = vsel %vm197, %v7914, 0.0
    %v8024 = vadd.f32 %v8022, %v8023
    %v8025 = vrot.slane %v8024, 4
    %v8026 = vadd.f32 %v8024, %v8025
    %v8027 = vrot.slane %v8026, 2
    %v8028 = vadd.f32 %v8026, %v8027
    %v8029 = vrot.slane %v8028, 1
    %v8030 = vadd.f32 %v8028, %v8029
    %v8031 = vsel %vm197, %v7915, 0.0
    %v8032 = vsel %vm197, %v7916, 0.0
    %v8033 = vadd.f32 %v8031, %v8032
    %v8034 = vrot.slane %v8033, 4
    %v8035 = vadd.f32 %v8033, %v8034
    %v8036 = vrot.slane %v8035, 2
    %v8037 = vadd.f32 %v8035, %v8036
    %v8038 = vrot.slane %v8037, 1
    %v8039 = vadd.f32 %v8037, %v8038
    %v8040 = vsel %vm197, %v7917, 0.0
    %v8041 = vsel %vm197, %v7918, 0.0
    %v8042 = vadd.f32 %v8040, %v8041
    %v8043 = vrot.slane %v8042, 4
    %v8044 = vadd.f32 %v8042, %v8043
    %v8045 = vrot.slane %v8044, 2
    %v8046 = vadd.f32 %v8044, %v8045
    %v8047 = vrot.slane %v8046, 1
    %v8048 = vadd.f32 %v8046, %v8047
    %v8049 = vsel %vm197, %v7919, 0.0
    %v8050 = vsel %vm197, %v7920, 0.0
    %v8051 = vadd.f32 %v8049, %v8050
    %v8052 = vrot.slane %v8051, 4
    %v8053 = vadd.f32 %v8051, %v8052
    %v8054 = vrot.slane %v8053, 2
    %v8055 = vadd.f32 %v8053, %v8054
    %v8056 = vrot.slane %v8055, 1
    %v8057 = vadd.f32 %v8055, %v8056
    %v8058 = vsel %vm197, %v7921, 0.0
    %v8059 = vsel %vm197, %v7922, 0.0
    %v8060 = vadd.f32 %v8058, %v8059
    %v8061 = vrot.slane %v8060, 4
    %v8062 = vadd.f32 %v8060, %v8061
    %v8063 = vrot.slane %v8062, 2
    %v8064 = vadd.f32 %v8062, %v8063
    %v8065 = vrot.slane %v8064, 1
    %v8066 = vadd.f32 %v8064, %v8065
    %v8067 = vrcp.pop %v7875
    %v8068 = vrcp.pop %v7876
    %v8069 = vrcp.pop %v7877
    %v8070 = vrcp.pop %v7878
    %v8071 = vrcp.pop %v7879
    %v8072 = vrcp.pop %v7880
    %v8073 = vrcp.pop %v7881
    %v8074 = vrcp.pop %v7882
    %v8075 = vrcp.pop %v7883
    %v8076 = vrcp.pop %v7884
    %v8077 = vrcp.pop %v7885
    %v8078 = vrcp.pop %v7886
    %v8079 = vrcp.pop %v7887
    %v8080 = vrcp.pop %v7888
    %v8081 = vrcp.pop %v7889
    %v8082 = vrcp.pop %v7890
    %v8083 = vmul.f32 %v7931, %v8067
    %v8084 = vmul.f32 %v7940, %v8068
    %v8085 = vmul.f32 %v7949, %v8069
    %v8086 = vmul.f32 %v7958, %v8070
    %v8087 = vmul.f32 %v7967, %v8071
    %v8088 = vmul.f32 %v7976, %v8072
    %v8089 = vmul.f32 %v7985, %v8073
    %v8090 = vmul.f32 %v7994, %v8074
    %v8091 = vmul.f32 %v8003, %v8075
    %v8092 = vmul.f32 %v8012, %v8076
    %v8093 = vmul.f32 %v8021, %v8077
    %v8094 = vmul.f32 %v8030, %v8078
    %v8095 = vmul.f32 %v8039, %v8079
    %v8096 = vmul.f32 %v8048, %v8080
    %v8097 = vmul.f32 %v8057, %v8081
    %v8098 = vmul.f32 %v8066, %v8082
    %vm8115 = vcmask 1041409
    %v8116 = vsel %vm8115, %v8084, %v8083
    %vm8117 = vcmask 1042434
    %v8118 = vsel %vm8117, %v8085, %v8116
    %vm8119 = vcmask 1043459
    %v8120 = vsel %vm8119, %v8086, %v8118
    %vm8121 = vcmask 1044484
    %v8122 = vsel %vm8121, %v8087, %v8120
    %vm8123 = vcmask 1045509
    %v8124 = vsel %vm8123, %v8088, %v8122
    %vm8125 = vcmask 1046534
    %v8126 = vsel %vm8125, %v8089, %v8124
    %vm8127 = vcmask 1047559
    %v8128 = vsel %vm8127, %v8090, %v8126
    %v8129 = vsel %vm8115, %v8092, %v8091
    %v8130 = vsel %vm8117, %v8093, %v8129
    %v8131 = vsel %vm8119, %v8094, %v8130
    %v8132 = vsel %vm8121, %v8095, %v8131
    %v8133 = vsel %vm8123, %v8096, %v8132
    %v8134 = vsel %vm8125, %v8097, %v8133
    %v8135 = vsel %vm8127, %v8098, %v8134
    %8138 = vst.msk [vmem:[#allocation8] sm:$0xff] %vm197, %v8128
    %8139 = vst.msk [vmem:[#allocation8 + $0x8] sm:$0xff] %vm197, %v8135
    // Predicated region
    $region34: #{tpu_custom_call.1} parent=1 // pred_check
      _
    $region35: #{tpu_custom_call.1} parent=1 // pred_check_branch
      %8141 = sbr.rel (0) target = $region37
    $region36: #{tpu_custom_call.1} parent=1 // pred_region
      %8143 = vsyncadd [#allocation4], 0
      %s8144 = sshll.u32 [#allocation8], 4
      %s8145 = int_to_ptr.vmem [resolvable:$true] %s8144
      %s8146 = sshll.u32 %s5, 4
      %s8147 = int_to_ptr.hbm [resolvable:$true] %s8146
      %8152 = dma.vmem_to_hbm [thread:$0]  %s8145, 256, %s8147, [#allocation4], 128, 128, 8
    $region37: #{tpu_custom_call.1} parent=1 // pred_fallthru
      _
    // Predicated region
    $region38: #{tpu_custom_call.1} parent=1 // pred_check
      _
    $region39: #{tpu_custom_call.1} parent=1 // pred_check_branch
      %8154 = sbr.rel (0) target = $region41
    $region40: #{tpu_custom_call.1} parent=1 // pred_region
      %8156 = dma.done [#allocation4], 256
    $region41: #{tpu_custom_call.1} parent=1 // pred_fallthru
      _
    %8157 = vsyncpa [#allocation3], 1
    %8158 = vsyncpa [#allocation6], 1
    %8159 = vsyncpa [#allocation4], 1

</llo_original>
